<compile_context>
chip_gen: v7x
topology: tpu7x:2x2x1
jax: 0.10.0
libtpu: 0.0.40
codegen_flags: <defaults>
</compile_context>

<pallas_src>
import math

import numpy as np
import jax
import jax.numpy as jnp
from jax.experimental import pallas as pl
from jax.experimental.pallas import tpu as pltpu


def _branch_conv_counts(M):
    # branch 0: one conv-bn-relu, branches 1..M-1: two (matches the PyTorch module)
    return [1 if i == 0 else 2 for i in range(M)]


# ------------------------------ fused Pallas kernel ------------------------------

def _make_skconv_kernel(H, W, C, d, M):
    HW = H * W
    K9 = 9 * C

    def kernel(x_ref, w1_ref, b1_ref, w2_ref, b2_ref,
               wfc_ref, bfc_ref, wfcs_ref, bfcs_ref,
               o_ref, pad_ref, col_ref):
        # x_ref   : (1, H, W, C)   bf16 NHWC input tile
        # w1_ref  : (9C, M*C)      bf16  fused first-conv weights of all branches
        # b1_ref  : (1, M*C)       f32
        # w2_ref  : (M-1, 9C, C)   bf16  second conv of branches 1..M-1
        # b2_ref  : (M-1, 1, C)    f32
        # wfc_ref : (C, d) f32 ; bfc_ref : (1, d) f32     squeeze fc
        # wfcs_ref: (M, d, C) f32 ; bfcs_ref: (M, 1, C)   per-branch excite fc
        # o_ref   : (1, HW, C)
        # pad_ref : VMEM (H+2, W+2, C) bf16   zero-bordered conv input
        # col_ref : VMEM (H, W, 9C)    bf16   im2col patches

        # Zero only the 1-pixel border each grid step (interior is fully
        # overwritten by every conv).  Never gate this on program_id: scratch
        # is per-core under megacore "parallel" semantics.
        pad_ref[0:1, :, :] = jnp.zeros((1, W + 2, C), jnp.bfloat16)
        pad_ref[H + 1:H + 2, :, :] = jnp.zeros((1, W + 2, C), jnp.bfloat16)
        pad_ref[:, 0:1, :] = jnp.zeros((H + 2, 1, C), jnp.bfloat16)
        pad_ref[:, W + 1:W + 2, :] = jnp.zeros((H + 2, 1, C), jnp.bfloat16)

        def build_patches(src_hwc_bf16):
            """src (H, W, C) bf16 -> (HW, 9C) bf16 im2col patch matrix."""
            pad_ref[1:H + 1, 1:W + 1, :] = src_hwc_bf16
            for kh in range(3):
                for kw in range(3):
                    t = kh * 3 + kw
                    col_ref[:, :, t * C:(t + 1) * C] = \
                        pad_ref[kh:kh + H, kw:kw + W, :]
            return col_ref[...].reshape(HW, K9)

        # ---- layer 1: first conv of every branch fused into one K=9C matmul ----
        patches = build_patches(x_ref[0])
        y1 = jnp.dot(patches, w1_ref[...], preferred_element_type=jnp.float32)
        y1 = jnp.maximum(y1 + b1_ref[...], 0.0)              # (HW, M*C) f32

        feas = []                                            # bf16 branch features
        colsum = jnp.zeros((1, C), jnp.float32)              # f32 GAP accumulator
        for m in range(M):
            fm = y1[:, m * C:(m + 1) * C]                    # (HW, C) f32
            if m >= 1:
                # second conv-bn-relu of branch m (single K=9C matmul)
                patches = build_patches(
                    fm.astype(jnp.bfloat16).reshape(H, W, C))
                fm = jnp.dot(patches, w2_ref[m - 1],
                             preferred_element_type=jnp.float32)
                fm = jnp.maximum(fm + b2_ref[m - 1], 0.0)    # (HW, C) f32
            colsum = colsum + jnp.sum(fm, axis=0, keepdims=True)
            feas.append(fm.astype(jnp.bfloat16))

        # ---- selective-kernel attention ----
        fea_s = colsum * (1.0 / HW)                          # (1, C) GAP of fea_U
        fea_z = jnp.dot(fea_s, wfc_ref[...],
                        preferred_element_type=jnp.float32) + bfc_ref[...]   # (1, d)

        logits = [jnp.dot(fea_z, wfcs_ref[m],
                          preferred_element_type=jnp.float32) + bfcs_ref[m]
                  for m in range(M)]                         # M x (1, C)

        mx = logits[0]
        for m in range(1, M):
            mx = jnp.maximum(mx, logits[m])
        exps = [jnp.exp(l - mx) for l in logits]
        denom = exps[0]
        for m in range(1, M):
            denom = denom + exps[m]
        inv = 1.0 / denom                                    # exact softmax denom

        out = feas[0] * (exps[0] * inv)                      # bf16 * f32 -> f32
        for m in range(1, M):
            out = out + feas[m] * (exps[m] * inv)
        o_ref[0] = out.astype(o_ref.dtype)

    return kernel


# ------------------------------ wrapper ------------------------------

def skconv_forward(x_nchw, params):
    """Full SKConv forward. Input/output NCHW (PyTorch convention)."""
    x = jnp.transpose(x_nchw, (0, 2, 3, 1))                  # -> NHWC
    N, H, W, C = x.shape
    wconv, bconv = params["wconv"], params["bconv"]
    wfc, bfc = params["wfc"], params["bfc"]
    wfcs, bfcs = params["wfcs"], params["bfcs"]
    M, d = wfcs.shape[0], wfc.shape[1]
    assert M >= 2, "SKConv needs at least 2 branches"
    HW = H * W
    K9 = 9 * C

    # Repack per-conv folded weights into the fused kernel layout.
    counts = _branch_conv_counts(M)
    first_idx, second_idx, idx = [], [], 0
    for br in range(M):
        first_idx.append(idx)
        if counts[br] == 2:
            second_idx.append(idx + 1)
        idx += counts[br]

    w1 = jnp.concatenate([wconv[i].reshape(K9, C) for i in first_idx], axis=1)   # (9C, M*C) bf16
    b1 = jnp.concatenate([bconv[i] for i in first_idx], axis=1)                  # (1, M*C)  f32
    w2 = jnp.stack([wconv[i].reshape(K9, C) for i in second_idx], axis=0)        # (M-1, 9C, C) bf16
    b2 = jnp.stack([bconv[i] for i in second_idx], axis=0)                       # (M-1, 1, C)  f32

    x_bf = x.astype(jnp.bfloat16)   # only ever used as a bf16 matmul operand

    kernel = _make_skconv_kernel(H, W, C, d, M)
    out = pl.pallas_call(
        kernel,
        out_shape=jax.ShapeDtypeStruct((N, HW, C), x_nchw.dtype),
        grid_spec=pltpu.PrefetchScalarGridSpec(
            num_scalar_prefetch=0,
            grid=(N,),
            in_specs=[
                pl.BlockSpec((1, H, W, C), lambda n: (n, 0, 0, 0)),
                pl.BlockSpec((K9, M * C), lambda n: (0, 0)),
                pl.BlockSpec((1, M * C), lambda n: (0, 0)),
                pl.BlockSpec((M - 1, K9, C), lambda n: (0, 0, 0)),
                pl.BlockSpec((M - 1, 1, C), lambda n: (0, 0, 0)),
                pl.BlockSpec((C, d), lambda n: (0, 0)),
                pl.BlockSpec((1, d), lambda n: (0, 0)),
                pl.BlockSpec((M, d, C), lambda n: (0, 0, 0)),
                pl.BlockSpec((M, 1, C), lambda n: (0, 0, 0)),
            ],
            out_specs=pl.BlockSpec((1, HW, C), lambda n: (n, 0, 0)),
            scratch_shapes=[
                pltpu.VMEM((H + 2, W + 2, C), jnp.bfloat16),   # padded conv input
                pltpu.VMEM((H, W, K9), jnp.bfloat16),          # im2col patches
            ],
        ),
        # TODO(synk): for production sizes set vmem_limit_bytes (v5e/v6e) or add
        #             an HW-tile grid axis (v7x two-pass) and pl.Buffered(1) on
        #             the weight specs; defaults are ample at this test size.
        compiler_params=pltpu.CompilerParams(dimension_semantics=("parallel",)),
    )(x_bf, w1, b1, w2, b2, wfc, bfc, wfcs, bfcs)

    out = out.reshape(N, H, W, C)
    return jnp.transpose(out, (0, 3, 1, 2))                  # -> NCHW


# ------------------------------ parameter init (deterministic) ------------------------------

def init_params(key, C, M, d, eps=1e-5):
    counts = _branch_conv_counts(M)
    nconv = sum(counts)

    def conv_bn_fold(k):
        ks = jax.random.split(k, 6)
        w = jax.random.normal(ks[0], (C, C, 3, 3), jnp.float32) / math.sqrt(9 * C)
        b = 0.1 * jax.random.normal(ks[1], (C,), jnp.float32)
        gamma = 1.0 + 0.1 * jax.random.normal(ks[2], (C,), jnp.float32)
        beta = 0.1 * jax.random.normal(ks[3], (C,), jnp.float32)
        mean = 0.1 * jax.random.normal(ks[4], (C,), jnp.float32)
        var = jax.random.uniform(ks[5], (C,), jnp.float32, 0.5, 1.5)
        scale = gamma / jnp.sqrt(var + eps)
        # (Cout,Cin,kh,kw) -> (kh,kw,Cin,Cout) -> (9,Cin,Cout), BN scale folded in
        w9 = jnp.transpose(w, (2, 3, 1, 0)).reshape(9, C, C) * scale[None, None, :]
        b_eff = (b - mean) * scale + beta
        return w9, b_eff.reshape(1, C)

    keys = jax.random.split(key, nconv + 2 + 2 * M)
    ki = iter(keys)

    w9s, bs = [], []
    for _ in range(nconv):
        w9, b = conv_bn_fold(next(ki))
        w9s.append(w9)
        bs.append(b)
    wconv = jnp.stack(w9s, axis=0).astype(jnp.bfloat16)       # (NCONV, 9, C, C) bf16
    bconv = jnp.stack(bs, axis=0)                             # (NCONV, 1, C)    f32

    wfc = jax.random.normal(next(ki), (C, d), jnp.float32) / math.sqrt(C)
    bfc = (0.1 * jax.random.normal(next(ki), (d,), jnp.float32)).reshape(1, d)
    wfcs = jnp.stack([jax.random.normal(next(ki), (d, C), jnp.float32) / math.sqrt(d)
                      for _ in range(M)], axis=0)             # (M, d, C)
    bfcs = jnp.stack([0.1 * jax.random.normal(next(ki), (1, C), jnp.float32)
                      for _ in range(M)], axis=0)             # (M, 1, C)

    return {"wconv": wconv, "bconv": bconv, "wfc": wfc, "bfc": bfc,
            "wfcs": wfcs, "bfcs": bfcs}


# ------------------------------ pure-JAX reference ------------------------------

def ref_forward(x_nchw, params):
    """Reference using lax.conv; same bf16-weight / f32-accumulate numerics."""
    x = jnp.transpose(x_nchw, (0, 2, 3, 1))
    N, H, W, C = x.shape
    M = params["wfcs"].shape[0]
    counts = _branch_conv_counts(M)

    def conv_bn_relu(f, idx):
        w = params["wconv"][idx].reshape(3, 3, C, C)          # HWIO, bf16
        y = jax.lax.conv_general_dilated(
            f.astype(jnp.bfloat16), w, (1, 1), "SAME",
            dimension_numbers=("NHWC", "HWIO", "NHWC"),
            preferred_element_type=jnp.float32)
        return jnp.maximum(y + params["bconv"][idx].reshape(1, 1, 1, C), 0.0)

    feas, idx = [], 0
    for br in range(M):
        f = x
        for _ in range(counts[br]):
            f = conv_bn_relu(f, idx)
            idx += 1
        feas.append(f)
    feas = jnp.stack(feas, axis=1)                            # (N, M, H, W, C)

    fea_U = feas.sum(axis=1)
    fea_s = fea_U.mean(axis=(1, 2))                           # (N, C)
    fea_z = fea_s @ params["wfc"] + params["bfc"]             # (N, d)
    logits = jnp.stack([fea_z @ params["wfcs"][m] + params["bfcs"][m, 0]
                        for m in range(M)], axis=1)           # (N, M, C)
    attn = jax.nn.softmax(logits, axis=1)
    out = (feas * attn[:, :, None, None, :]).sum(axis=1)
    return jnp.transpose(out, (0, 3, 1, 2))


# ------------------------------ main ------------------------------

if __name__ == "__main__":
    # Module hyper-params: features=32, M=2 branches, G=8 (unused in forward), r=2, L=32
    N, C, H, W = 2, 32, 16, 16
    M, r, L = 2, 2, 32
    d = max(int(C / r), L)

    key = jax.random.PRNGKey(0)
    kx, kp = jax.random.split(key)
    x = jax.random.normal(kx, (N, C, H, W), jnp.float32)
    params = init_params(kp, C, M, d)

    fwd = jax.jit(lambda xx: skconv_forward(xx, params))
    out = jax.block_until_ready(fwd(x))

    ref = ref_forward(x, params)
    assert out.shape == (N, C, H, W)
    np.testing.assert_allclose(np.asarray(out), np.asarray(ref), rtol=1e-2, atol=1e-2)

    print("KERNEL_OK")
</pallas_src>

<mosaic_0001>
module attributes {stable_mosaic.version = 11 : i64} {
  func.func @kernel(%arg0: i32, %arg1: memref<1x16x16x32xbf16, #tpu.memory_space<vmem>>, %arg2: memref<288x64xbf16, #tpu.memory_space<vmem>>, %arg3: memref<1x64xf32, #tpu.memory_space<vmem>>, %arg4: memref<1x288x32xbf16, #tpu.memory_space<vmem>>, %arg5: memref<1x1x32xf32, #tpu.memory_space<vmem>>, %arg6: memref<32x32xf32, #tpu.memory_space<vmem>>, %arg7: memref<1x32xf32, #tpu.memory_space<vmem>>, %arg8: memref<2x32x32xf32, #tpu.memory_space<vmem>>, %arg9: memref<2x1x32xf32, #tpu.memory_space<vmem>>, %arg10: memref<1x256x32xf32, #tpu.memory_space<vmem>>, %arg11: memref<18x18x32xbf16, #tpu.memory_space<vmem>>, %arg12: memref<16x16x288xbf16, #tpu.memory_space<vmem>>) attributes {dimension_semantics = [#tpu.dimension_semantics<parallel>], iteration_bounds = array<i64: 2>, scalar_prefetch = 0 : i64, scratch_operands = 2 : i64, tpu.core_type = #tpu.core_type<tc>, window_params = [{transform_indices = @transform_0, window_bounds = array<i64: 1, 16, 16, 32>}, {pipeline_mode = #tpu.pipeline_mode<synchronous>, transform_indices = @transform_1, window_bounds = array<i64: 288, 64>}, {pipeline_mode = #tpu.pipeline_mode<synchronous>, transform_indices = @transform_2, window_bounds = array<i64: 1, 64>}, {pipeline_mode = #tpu.pipeline_mode<synchronous>, transform_indices = @transform_3, window_bounds = array<i64: 1, 288, 32>}, {pipeline_mode = #tpu.pipeline_mode<synchronous>, transform_indices = @transform_4, window_bounds = array<i64: 1, 1, 32>}, {pipeline_mode = #tpu.pipeline_mode<synchronous>, transform_indices = @transform_5, window_bounds = array<i64: 32, 32>}, {pipeline_mode = #tpu.pipeline_mode<synchronous>, transform_indices = @transform_6, window_bounds = array<i64: 1, 32>}, {pipeline_mode = #tpu.pipeline_mode<synchronous>, transform_indices = @transform_7, window_bounds = array<i64: 2, 32, 32>}, {pipeline_mode = #tpu.pipeline_mode<synchronous>, transform_indices = @transform_8, window_bounds = array<i64: 2, 1, 32>}, {transform_indices = @transform_9, window_bounds = array<i64: 1, 256, 32>}]} {
    %cst = arith.constant 0.000000e+00 : bf16
    %0 = vector.broadcast %cst : bf16 to vector<1x18x32xbf16>
    %c0 = arith.constant 0 : index
    %c0_0 = arith.constant 0 : index
    %c0_1 = arith.constant 0 : index
    %1 = vector.load %arg11[%c0, %c0_0, %c0_1] : memref<18x18x32xbf16, #tpu.memory_space<vmem>>, vector<1x18x32xbf16>
    tpu.vector_store %arg11[%c0, %c0_0, %c0_1], %0 {strides = array<i32>} : memref<18x18x32xbf16, #tpu.memory_space<vmem>>, vector<1x18x32xbf16>,
    %cst_2 = arith.constant 0.000000e+00 : bf16
    %2 = vector.broadcast %cst_2 : bf16 to vector<1x18x32xbf16>
    %c17 = arith.constant 17 : index
    %c0_3 = arith.constant 0 : index
    %c0_4 = arith.constant 0 : index
    %3 = vector.load %arg11[%c17, %c0_3, %c0_4] : memref<18x18x32xbf16, #tpu.memory_space<vmem>>, vector<1x18x32xbf16>
    tpu.vector_store %arg11[%c17, %c0_3, %c0_4], %2 {strides = array<i32>} : memref<18x18x32xbf16, #tpu.memory_space<vmem>>, vector<1x18x32xbf16>,
    %cst_5 = arith.constant 0.000000e+00 : bf16
    %4 = vector.broadcast %cst_5 : bf16 to vector<18x1x32xbf16>
    %c0_6 = arith.constant 0 : index
    %c0_7 = arith.constant 0 : index
    %c0_8 = arith.constant 0 : index
    %5 = vector.load %arg11[%c0_6, %c0_7, %c0_8] : memref<18x18x32xbf16, #tpu.memory_space<vmem>>, vector<18x1x32xbf16>
    tpu.vector_store %arg11[%c0_6, %c0_7, %c0_8], %4 {strides = array<i32>} : memref<18x18x32xbf16, #tpu.memory_space<vmem>>, vector<18x1x32xbf16>,
    %cst_9 = arith.constant 0.000000e+00 : bf16
    %6 = vector.broadcast %cst_9 : bf16 to vector<18x1x32xbf16>
    %c0_10 = arith.constant 0 : index
    %c17_11 = arith.constant 17 : index
    %c0_12 = arith.constant 0 : index
    %7 = vector.load %arg11[%c0_10, %c17_11, %c0_12] : memref<18x18x32xbf16, #tpu.memory_space<vmem>>, vector<18x1x32xbf16>
    tpu.vector_store %arg11[%c0_10, %c17_11, %c0_12], %6 {strides = array<i32>} : memref<18x18x32xbf16, #tpu.memory_space<vmem>>, vector<18x1x32xbf16>,
    %c0_13 = arith.constant 0 : index
    %c0_14 = arith.constant 0 : index
    %c0_15 = arith.constant 0 : index
    %c0_16 = arith.constant 0 : index
    %8 = vector.load %arg1[%c0_13, %c0_14, %c0_15, %c0_16] : memref<1x16x16x32xbf16, #tpu.memory_space<vmem>>, vector<1x16x16x32xbf16>
    %9 = vector.shape_cast %8 : vector<1x16x16x32xbf16> to vector<16x16x32xbf16>
    %c1 = arith.constant 1 : index
    %c1_17 = arith.constant 1 : index
    %c0_18 = arith.constant 0 : index
    %10 = vector.load %arg11[%c1, %c1_17, %c0_18] : memref<18x18x32xbf16, #tpu.memory_space<vmem>>, vector<16x16x32xbf16>
    tpu.vector_store %arg11[%c1, %c1_17, %c0_18], %9 {strides = array<i32>} : memref<18x18x32xbf16, #tpu.memory_space<vmem>>, vector<16x16x32xbf16>,
    %c0_19 = arith.constant 0 : index
    %c0_20 = arith.constant 0 : index
    %c0_21 = arith.constant 0 : index
    %11 = vector.load %arg11[%c0_19, %c0_20, %c0_21] : memref<18x18x32xbf16, #tpu.memory_space<vmem>>, vector<16x16x32xbf16>
    %c0_22 = arith.constant 0 : index
    %c0_23 = arith.constant 0 : index
    %c0_24 = arith.constant 0 : index
    %12 = vector.load %arg12[%c0_22, %c0_23, %c0_24] : memref<16x16x288xbf16, #tpu.memory_space<vmem>>, vector<16x16x32xbf16>
    tpu.vector_store %arg12[%c0_22, %c0_23, %c0_24], %11 {strides = array<i32>} : memref<16x16x288xbf16, #tpu.memory_space<vmem>>, vector<16x16x32xbf16>,
    %c0_25 = arith.constant 0 : index
    %c1_26 = arith.constant 1 : index
    %c0_27 = arith.constant 0 : index
    %13 = vector.load %arg11[%c0_25, %c1_26, %c0_27] : memref<18x18x32xbf16, #tpu.memory_space<vmem>>, vector<16x16x32xbf16>
    %c0_28 = arith.constant 0 : index
    %c0_29 = arith.constant 0 : index
    %c32 = arith.constant 32 : index
    %14 = vector.load %arg12[%c0_28, %c0_29, %c32] : memref<16x16x288xbf16, #tpu.memory_space<vmem>>, vector<16x16x32xbf16>
    tpu.vector_store %arg12[%c0_28, %c0_29, %c32], %13 {strides = array<i32>} : memref<16x16x288xbf16, #tpu.memory_space<vmem>>, vector<16x16x32xbf16>,
    %c0_30 = arith.constant 0 : index
    %c2 = arith.constant 2 : index
    %c0_31 = arith.constant 0 : index
    %15 = vector.load %arg11[%c0_30, %c2, %c0_31] : memref<18x18x32xbf16, #tpu.memory_space<vmem>>, vector<16x16x32xbf16>
    %c0_32 = arith.constant 0 : index
    %c0_33 = arith.constant 0 : index
    %c64 = arith.constant 64 : index
    %16 = vector.load %arg12[%c0_32, %c0_33, %c64] : memref<16x16x288xbf16, #tpu.memory_space<vmem>>, vector<16x16x32xbf16>
    tpu.vector_store %arg12[%c0_32, %c0_33, %c64], %15 {strides = array<i32>} : memref<16x16x288xbf16, #tpu.memory_space<vmem>>, vector<16x16x32xbf16>,
    %c1_34 = arith.constant 1 : index
    %c0_35 = arith.constant 0 : index
    %c0_36 = arith.constant 0 : index
    %17 = vector.load %arg11[%c1_34, %c0_35, %c0_36] : memref<18x18x32xbf16, #tpu.memory_space<vmem>>, vector<16x16x32xbf16>
    %c0_37 = arith.constant 0 : index
    %c0_38 = arith.constant 0 : index
    %c96 = arith.constant 96 : index
    %18 = vector.load %arg12[%c0_37, %c0_38, %c96] : memref<16x16x288xbf16, #tpu.memory_space<vmem>>, vector<16x16x32xbf16>
    tpu.vector_store %arg12[%c0_37, %c0_38, %c96], %17 {strides = array<i32>} : memref<16x16x288xbf16, #tpu.memory_space<vmem>>, vector<16x16x32xbf16>,
    %c1_39 = arith.constant 1 : index
    %c1_40 = arith.constant 1 : index
    %c0_41 = arith.constant 0 : index
    %19 = vector.load %arg11[%c1_39, %c1_40, %c0_41] : memref<18x18x32xbf16, #tpu.memory_space<vmem>>, vector<16x16x32xbf16>
    %c0_42 = arith.constant 0 : index
    %c0_43 = arith.constant 0 : index
    %c128 = arith.constant 128 : index
    %20 = vector.load %arg12[%c0_42, %c0_43, %c128] : memref<16x16x288xbf16, #tpu.memory_space<vmem>>, vector<16x16x32xbf16>
    tpu.vector_store %arg12[%c0_42, %c0_43, %c128], %19 {strides = array<i32>} : memref<16x16x288xbf16, #tpu.memory_space<vmem>>, vector<16x16x32xbf16>,
    %c1_44 = arith.constant 1 : index
    %c2_45 = arith.constant 2 : index
    %c0_46 = arith.constant 0 : index
    %21 = vector.load %arg11[%c1_44, %c2_45, %c0_46] : memref<18x18x32xbf16, #tpu.memory_space<vmem>>, vector<16x16x32xbf16>
    %c0_47 = arith.constant 0 : index
    %c0_48 = arith.constant 0 : index
    %c160 = arith.constant 160 : index
    %22 = vector.load %arg12[%c0_47, %c0_48, %c160] : memref<16x16x288xbf16, #tpu.memory_space<vmem>>, vector<16x16x32xbf16>
    tpu.vector_store %arg12[%c0_47, %c0_48, %c160], %21 {strides = array<i32>} : memref<16x16x288xbf16, #tpu.memory_space<vmem>>, vector<16x16x32xbf16>,
    %c2_49 = arith.constant 2 : index
    %c0_50 = arith.constant 0 : index
    %c0_51 = arith.constant 0 : index
    %23 = vector.load %arg11[%c2_49, %c0_50, %c0_51] : memref<18x18x32xbf16, #tpu.memory_space<vmem>>, vector<16x16x32xbf16>
    %c0_52 = arith.constant 0 : index
    %c0_53 = arith.constant 0 : index
    %c192 = arith.constant 192 : index
    %24 = vector.load %arg12[%c0_52, %c0_53, %c192] : memref<16x16x288xbf16, #tpu.memory_space<vmem>>, vector<16x16x32xbf16>
    tpu.vector_store %arg12[%c0_52, %c0_53, %c192], %23 {strides = array<i32>} : memref<16x16x288xbf16, #tpu.memory_space<vmem>>, vector<16x16x32xbf16>,
    %c2_54 = arith.constant 2 : index
    %c1_55 = arith.constant 1 : index
    %c0_56 = arith.constant 0 : index
    %25 = vector.load %arg11[%c2_54, %c1_55, %c0_56] : memref<18x18x32xbf16, #tpu.memory_space<vmem>>, vector<16x16x32xbf16>
    %c0_57 = arith.constant 0 : index
    %c0_58 = arith.constant 0 : index
    %c224 = arith.constant 224 : index
    %26 = vector.load %arg12[%c0_57, %c0_58, %c224] : memref<16x16x288xbf16, #tpu.memory_space<vmem>>, vector<16x16x32xbf16>
    tpu.vector_store %arg12[%c0_57, %c0_58, %c224], %25 {strides = array<i32>} : memref<16x16x288xbf16, #tpu.memory_space<vmem>>, vector<16x16x32xbf16>,
    %c2_59 = arith.constant 2 : index
    %c2_60 = arith.constant 2 : index
    %c0_61 = arith.constant 0 : index
    %27 = vector.load %arg11[%c2_59, %c2_60, %c0_61] : memref<18x18x32xbf16, #tpu.memory_space<vmem>>, vector<16x16x32xbf16>
    %c0_62 = arith.constant 0 : index
    %c0_63 = arith.constant 0 : index
    %c256 = arith.constant 256 : index
    %28 = vector.load %arg12[%c0_62, %c0_63, %c256] : memref<16x16x288xbf16, #tpu.memory_space<vmem>>, vector<16x16x32xbf16>
    tpu.vector_store %arg12[%c0_62, %c0_63, %c256], %27 {strides = array<i32>} : memref<16x16x288xbf16, #tpu.memory_space<vmem>>, vector<16x16x32xbf16>,
    %c0_64 = arith.constant 0 : index
    %c0_65 = arith.constant 0 : index
    %c0_66 = arith.constant 0 : index
    %29 = vector.load %arg12[%c0_64, %c0_65, %c0_66] : memref<16x16x288xbf16, #tpu.memory_space<vmem>>, vector<16x16x288xbf16>
    %30 = vector.shape_cast %29 : vector<16x16x288xbf16> to vector<256x288xbf16>
    %c0_67 = arith.constant 0 : index
    %c0_68 = arith.constant 0 : index
    %31 = vector.load %arg2[%c0_67, %c0_68] : memref<288x64xbf16, #tpu.memory_space<vmem>>, vector<288x64xbf16>
    %cst_69 = arith.constant dense<0.000000e+00> : vector<256x64xf32>
    %32 = tpu.matmul %30, %31, %cst_69 {dimension_numbers = #tpu.dot_dimension_numbers<[1], [0], [0], [1], [0, 0, 1, 1], [], []>} : vector<256x288xbf16>, vector<288x64xbf16>, vector<256x64xf32> -> vector<256x64xf32>
    %c0_70 = arith.constant 0 : index
    %c0_71 = arith.constant 0 : index
    %33 = vector.load %arg3[%c0_70, %c0_71] : memref<1x64xf32, #tpu.memory_space<vmem>>, vector<1x64xf32>
    %34 = vector.broadcast %33 : vector<1x64xf32> to vector<256x64xf32>
    %35 = arith.addf %32, %34 : vector<256x64xf32>
    %cst_72 = arith.constant 0.000000e+00 : f32
    %36 = vector.broadcast %cst_72 : f32 to vector<256x64xf32>
    %37 = arith.maximumf %35, %36 : vector<256x64xf32>
    %cst_73 = arith.constant 0.000000e+00 : f32
    %38 = vector.broadcast %cst_73 : f32 to vector<1x32xf32>
    %39 = vector.extract_strided_slice %37 {offsets = [0, 0], sizes = [256, 32], strides = [1, 1]} : vector<256x64xf32> to vector<256x32xf32>
    %cst_74 = arith.constant dense<0.000000e+00> : vector<32xf32>
    %40 = vector.multi_reduction <add>, %39, %cst_74 [0] : vector<256x32xf32> to vector<32xf32>
    %41 = vector.shape_cast %40 : vector<32xf32> to vector<1x32xf32>
    %42 = arith.addf %38, %41 : vector<1x32xf32>
    %43 = arith.truncf %39 : vector<256x32xf32> to vector<256x32xbf16>
    %44 = vector.extract_strided_slice %37 {offsets = [0, 32], sizes = [256, 32], strides = [1, 1]} : vector<256x64xf32> to vector<256x32xf32>
    %45 = arith.truncf %44 : vector<256x32xf32> to vector<256x32xbf16>
    %46 = vector.shape_cast %45 : vector<256x32xbf16> to vector<16x16x32xbf16>
    %c1_75 = arith.constant 1 : index
    %c1_76 = arith.constant 1 : index
    %c0_77 = arith.constant 0 : index
    %47 = vector.load %arg11[%c1_75, %c1_76, %c0_77] : memref<18x18x32xbf16, #tpu.memory_space<vmem>>, vector<16x16x32xbf16>
    tpu.vector_store %arg11[%c1_75, %c1_76, %c0_77], %46 {strides = array<i32>} : memref<18x18x32xbf16, #tpu.memory_space<vmem>>, vector<16x16x32xbf16>,
    %c0_78 = arith.constant 0 : index
    %c0_79 = arith.constant 0 : index
    %c0_80 = arith.constant 0 : index
    %48 = vector.load %arg11[%c0_78, %c0_79, %c0_80] : memref<18x18x32xbf16, #tpu.memory_space<vmem>>, vector<16x16x32xbf16>
    %c0_81 = arith.constant 0 : index
    %c0_82 = arith.constant 0 : index
    %c0_83 = arith.constant 0 : index
    %49 = vector.load %arg12[%c0_81, %c0_82, %c0_83] : memref<16x16x288xbf16, #tpu.memory_space<vmem>>, vector<16x16x32xbf16>
    tpu.vector_store %arg12[%c0_81, %c0_82, %c0_83], %48 {strides = array<i32>} : memref<16x16x288xbf16, #tpu.memory_space<vmem>>, vector<16x16x32xbf16>,
    %c0_84 = arith.constant 0 : index
    %c1_85 = arith.constant 1 : index
    %c0_86 = arith.constant 0 : index
    %50 = vector.load %arg11[%c0_84, %c1_85, %c0_86] : memref<18x18x32xbf16, #tpu.memory_space<vmem>>, vector<16x16x32xbf16>
    %c0_87 = arith.constant 0 : index
    %c0_88 = arith.constant 0 : index
    %c32_89 = arith.constant 32 : index
    %51 = vector.load %arg12[%c0_87, %c0_88, %c32_89] : memref<16x16x288xbf16, #tpu.memory_space<vmem>>, vector<16x16x32xbf16>
    tpu.vector_store %arg12[%c0_87, %c0_88, %c32_89], %50 {strides = array<i32>} : memref<16x16x288xbf16, #tpu.memory_space<vmem>>, vector<16x16x32xbf16>,
    %c0_90 = arith.constant 0 : index
    %c2_91 = arith.constant 2 : index
    %c0_92 = arith.constant 0 : index
    %52 = vector.load %arg11[%c0_90, %c2_91, %c0_92] : memref<18x18x32xbf16, #tpu.memory_space<vmem>>, vector<16x16x32xbf16>
    %c0_93 = arith.constant 0 : index
    %c0_94 = arith.constant 0 : index
    %c64_95 = arith.constant 64 : index
    %53 = vector.load %arg12[%c0_93, %c0_94, %c64_95] : memref<16x16x288xbf16, #tpu.memory_space<vmem>>, vector<16x16x32xbf16>
    tpu.vector_store %arg12[%c0_93, %c0_94, %c64_95], %52 {strides = array<i32>} : memref<16x16x288xbf16, #tpu.memory_space<vmem>>, vector<16x16x32xbf16>,
    %c1_96 = arith.constant 1 : index
    %c0_97 = arith.constant 0 : index
    %c0_98 = arith.constant 0 : index
    %54 = vector.load %arg11[%c1_96, %c0_97, %c0_98] : memref<18x18x32xbf16, #tpu.memory_space<vmem>>, vector<16x16x32xbf16>
    %c0_99 = arith.constant 0 : index
    %c0_100 = arith.constant 0 : index
    %c96_101 = arith.constant 96 : index
    %55 = vector.load %arg12[%c0_99, %c0_100, %c96_101] : memref<16x16x288xbf16, #tpu.memory_space<vmem>>, vector<16x16x32xbf16>
    tpu.vector_store %arg12[%c0_99, %c0_100, %c96_101], %54 {strides = array<i32>} : memref<16x16x288xbf16, #tpu.memory_space<vmem>>, vector<16x16x32xbf16>,
    %c1_102 = arith.constant 1 : index
    %c1_103 = arith.constant 1 : index
    %c0_104 = arith.constant 0 : index
    %56 = vector.load %arg11[%c1_102, %c1_103, %c0_104] : memref<18x18x32xbf16, #tpu.memory_space<vmem>>, vector<16x16x32xbf16>
    %c0_105 = arith.constant 0 : index
    %c0_106 = arith.constant 0 : index
    %c128_107 = arith.constant 128 : index
    %57 = vector.load %arg12[%c0_105, %c0_106, %c128_107] : memref<16x16x288xbf16, #tpu.memory_space<vmem>>, vector<16x16x32xbf16>
    tpu.vector_store %arg12[%c0_105, %c0_106, %c128_107], %56 {strides = array<i32>} : memref<16x16x288xbf16, #tpu.memory_space<vmem>>, vector<16x16x32xbf16>,
    %c1_108 = arith.constant 1 : index
    %c2_109 = arith.constant 2 : index
    %c0_110 = arith.constant 0 : index
    %58 = vector.load %arg11[%c1_108, %c2_109, %c0_110] : memref<18x18x32xbf16, #tpu.memory_space<vmem>>, vector<16x16x32xbf16>
    %c0_111 = arith.constant 0 : index
    %c0_112 = arith.constant 0 : index
    %c160_113 = arith.constant 160 : index
    %59 = vector.load %arg12[%c0_111, %c0_112, %c160_113] : memref<16x16x288xbf16, #tpu.memory_space<vmem>>, vector<16x16x32xbf16>
    tpu.vector_store %arg12[%c0_111, %c0_112, %c160_113], %58 {strides = array<i32>} : memref<16x16x288xbf16, #tpu.memory_space<vmem>>, vector<16x16x32xbf16>,
    %c2_114 = arith.constant 2 : index
    %c0_115 = arith.constant 0 : index
    %c0_116 = arith.constant 0 : index
    %60 = vector.load %arg11[%c2_114, %c0_115, %c0_116] : memref<18x18x32xbf16, #tpu.memory_space<vmem>>, vector<16x16x32xbf16>
    %c0_117 = arith.constant 0 : index
    %c0_118 = arith.constant 0 : index
    %c192_119 = arith.constant 192 : index
    %61 = vector.load %arg12[%c0_117, %c0_118, %c192_119] : memref<16x16x288xbf16, #tpu.memory_space<vmem>>, vector<16x16x32xbf16>
    tpu.vector_store %arg12[%c0_117, %c0_118, %c192_119], %60 {strides = array<i32>} : memref<16x16x288xbf16, #tpu.memory_space<vmem>>, vector<16x16x32xbf16>,
    %c2_120 = arith.constant 2 : index
    %c1_121 = arith.constant 1 : index
    %c0_122 = arith.constant 0 : index
    %62 = vector.load %arg11[%c2_120, %c1_121, %c0_122] : memref<18x18x32xbf16, #tpu.memory_space<vmem>>, vector<16x16x32xbf16>
    %c0_123 = arith.constant 0 : index
    %c0_124 = arith.constant 0 : index
    %c224_125 = arith.constant 224 : index
    %63 = vector.load %arg12[%c0_123, %c0_124, %c224_125] : memref<16x16x288xbf16, #tpu.memory_space<vmem>>, vector<16x16x32xbf16>
    tpu.vector_store %arg12[%c0_123, %c0_124, %c224_125], %62 {strides = array<i32>} : memref<16x16x288xbf16, #tpu.memory_space<vmem>>, vector<16x16x32xbf16>,
    %c2_126 = arith.constant 2 : index
    %c2_127 = arith.constant 2 : index
    %c0_128 = arith.constant 0 : index
    %64 = vector.load %arg11[%c2_126, %c2_127, %c0_128] : memref<18x18x32xbf16, #tpu.memory_space<vmem>>, vector<16x16x32xbf16>
    %c0_129 = arith.constant 0 : index
    %c0_130 = arith.constant 0 : index
    %c256_131 = arith.constant 256 : index
    %65 = vector.load %arg12[%c0_129, %c0_130, %c256_131] : memref<16x16x288xbf16, #tpu.memory_space<vmem>>, vector<16x16x32xbf16>
    tpu.vector_store %arg12[%c0_129, %c0_130, %c256_131], %64 {strides = array<i32>} : memref<16x16x288xbf16, #tpu.memory_space<vmem>>, vector<16x16x32xbf16>,
    %c0_132 = arith.constant 0 : index
    %c0_133 = arith.constant 0 : index
    %c0_134 = arith.constant 0 : index
    %66 = vector.load %arg12[%c0_132, %c0_133, %c0_134] : memref<16x16x288xbf16, #tpu.memory_space<vmem>>, vector<16x16x288xbf16>
    %67 = vector.shape_cast %66 : vector<16x16x288xbf16> to vector<256x288xbf16>
    %c0_135 = arith.constant 0 : index
    %c0_136 = arith.constant 0 : index
    %c0_137 = arith.constant 0 : index
    %68 = vector.load %arg4[%c0_135, %c0_136, %c0_137] : memref<1x288x32xbf16, #tpu.memory_space<vmem>>, vector<1x288x32xbf16>
    %69 = vector.shape_cast %68 : vector<1x288x32xbf16> to vector<288x32xbf16>
    %cst_138 = arith.constant dense<0.000000e+00> : vector<256x32xf32>
    %70 = tpu.matmul %67, %69, %cst_138 {dimension_numbers = #tpu.dot_dimension_numbers<[1], [0], [0], [1], [0, 0, 1, 1], [], []>} : vector<256x288xbf16>, vector<288x32xbf16>, vector<256x32xf32> -> vector<256x32xf32>
    %c0_139 = arith.constant 0 : index
    %c0_140 = arith.constant 0 : index
    %c0_141 = arith.constant 0 : index
    %71 = vector.load %arg5[%c0_139, %c0_140, %c0_141] : memref<1x1x32xf32, #tpu.memory_space<vmem>>, vector<1x1x32xf32>
    %72 = vector.shape_cast %71 : vector<1x1x32xf32> to vector<1x32xf32>
    %73 = vector.broadcast %72 : vector<1x32xf32> to vector<256x32xf32>
    %74 = arith.addf %70, %73 : vector<256x32xf32>
    %cst_142 = arith.constant 0.000000e+00 : f32
    %75 = vector.broadcast %cst_142 : f32 to vector<256x32xf32>
    %76 = arith.maximumf %74, %75 : vector<256x32xf32>
    %cst_143 = arith.constant dense<0.000000e+00> : vector<32xf32>
    %77 = vector.multi_reduction <add>, %76, %cst_143 [0] : vector<256x32xf32> to vector<32xf32>
    %78 = vector.shape_cast %77 : vector<32xf32> to vector<1x32xf32>
    %79 = arith.addf %42, %78 : vector<1x32xf32>
    %80 = arith.truncf %76 : vector<256x32xf32> to vector<256x32xbf16>
    %cst_144 = arith.constant 3.906250e-03 : f32
    %81 = vector.broadcast %cst_144 : f32 to vector<1x32xf32>
    %82 = arith.mulf %79, %81 : vector<1x32xf32>
    %c0_145 = arith.constant 0 : index
    %c0_146 = arith.constant 0 : index
    %83 = vector.load %arg6[%c0_145, %c0_146] : memref<32x32xf32, #tpu.memory_space<vmem>>, vector<32x32xf32>
    %cst_147 = arith.constant dense<0.000000e+00> : vector<1x32xf32>
    %84 = tpu.matmul %82, %83, %cst_147 {dimension_numbers = #tpu.dot_dimension_numbers<[1], [0], [0], [1], [0, 0, 1, 1], [], []>} : vector<1x32xf32>, vector<32x32xf32>, vector<1x32xf32> -> vector<1x32xf32>
    %c0_148 = arith.constant 0 : index
    %c0_149 = arith.constant 0 : index
    %85 = vector.load %arg7[%c0_148, %c0_149] : memref<1x32xf32, #tpu.memory_space<vmem>>, vector<1x32xf32>
    %86 = arith.addf %84, %85 : vector<1x32xf32>
    %c0_150 = arith.constant 0 : index
    %c0_151 = arith.constant 0 : index
    %c0_152 = arith.constant 0 : index
    %87 = vector.load %arg8[%c0_150, %c0_151, %c0_152] : memref<2x32x32xf32, #tpu.memory_space<vmem>>, vector<1x32x32xf32>
    %88 = vector.shape_cast %87 : vector<1x32x32xf32> to vector<32x32xf32>
    %cst_153 = arith.constant dense<0.000000e+00> : vector<1x32xf32>
    %89 = tpu.matmul %86, %88, %cst_153 {dimension_numbers = #tpu.dot_dimension_numbers<[1], [0], [0], [1], [0, 0, 1, 1], [], []>} : vector<1x32xf32>, vector<32x32xf32>, vector<1x32xf32> -> vector<1x32xf32>
    %c0_154 = arith.constant 0 : index
    %c0_155 = arith.constant 0 : index
    %c0_156 = arith.constant 0 : index
    %90 = vector.load %arg9[%c0_154, %c0_155, %c0_156] : memref<2x1x32xf32, #tpu.memory_space<vmem>>, vector<1x1x32xf32>
    %91 = vector.shape_cast %90 : vector<1x1x32xf32> to vector<1x32xf32>
    %92 = arith.addf %89, %91 : vector<1x32xf32>
    %c1_157 = arith.constant 1 : index
    %c0_158 = arith.constant 0 : index
    %c0_159 = arith.constant 0 : index
    %93 = vector.load %arg8[%c1_157, %c0_158, %c0_159] : memref<2x32x32xf32, #tpu.memory_space<vmem>>, vector<1x32x32xf32>
    %94 = vector.shape_cast %93 : vector<1x32x32xf32> to vector<32x32xf32>
    %cst_160 = arith.constant dense<0.000000e+00> : vector<1x32xf32>
    %95 = tpu.matmul %86, %94, %cst_160 {dimension_numbers = #tpu.dot_dimension_numbers<[1], [0], [0], [1], [0, 0, 1, 1], [], []>} : vector<1x32xf32>, vector<32x32xf32>, vector<1x32xf32> -> vector<1x32xf32>
    %c1_161 = arith.constant 1 : index
    %c0_162 = arith.constant 0 : index
    %c0_163 = arith.constant 0 : index
    %96 = vector.load %arg9[%c1_161, %c0_162, %c0_163] : memref<2x1x32xf32, #tpu.memory_space<vmem>>, vector<1x1x32xf32>
    %97 = vector.shape_cast %96 : vector<1x1x32xf32> to vector<1x32xf32>
    %98 = arith.addf %95, %97 : vector<1x32xf32>
    %99 = arith.maximumf %92, %98 : vector<1x32xf32>
    %100 = arith.subf %92, %99 : vector<1x32xf32>
    %101 = math.exp %100 : vector<1x32xf32>
    %102 = arith.subf %98, %99 : vector<1x32xf32>
    %103 = math.exp %102 : vector<1x32xf32>
    %104 = arith.addf %101, %103 : vector<1x32xf32>
    %cst_164 = arith.constant 1.000000e+00 : f32
    %105 = vector.broadcast %cst_164 : f32 to vector<1x32xf32>
    %106 = arith.divf %105, %104 : vector<1x32xf32>
    %107 = arith.mulf %101, %106 : vector<1x32xf32>
    %108 = arith.extf %43 : vector<256x32xbf16> to vector<256x32xf32>
    %109 = vector.broadcast %107 : vector<1x32xf32> to vector<256x32xf32>
    %110 = arith.mulf %108, %109 : vector<256x32xf32>
    %111 = arith.mulf %103, %106 : vector<1x32xf32>
    %112 = arith.extf %80 : vector<256x32xbf16> to vector<256x32xf32>
    %113 = vector.broadcast %111 : vector<1x32xf32> to vector<256x32xf32>
    %114 = arith.mulf %112, %113 : vector<256x32xf32>
    %115 = arith.addf %110, %114 : vector<256x32xf32>
    %c0_165 = arith.constant 0 : index
    %c0_166 = arith.constant 0 : index
    %c0_167 = arith.constant 0 : index
    %116 = vector.load %arg10[%c0_165, %c0_166, %c0_167] : memref<1x256x32xf32, #tpu.memory_space<vmem>>, vector<1x256x32xf32>
    %117 = vector.shape_cast %116 : vector<1x256x32xf32> to vector<256x32xf32>
    %118 = vector.shape_cast %115 : vector<256x32xf32> to vector<1x256x32xf32>
    tpu.vector_store %arg10[%c0_165, %c0_166, %c0_167], %118 {strides = array<i32>} : memref<1x256x32xf32, #tpu.memory_space<vmem>>, vector<1x256x32xf32>,
    return
  }
  func.func @transform_0(%arg0: i32) -> (i32, i32, i32, i32) {
    %c0_i32 = arith.constant 0 : i32
    %c0_i32_0 = arith.constant 0 : i32
    %c0_i32_1 = arith.constant 0 : i32
    %c0_i32_2 = arith.constant 0 : i32
    return %arg0, %c0_i32, %c0_i32_0, %c0_i32_1 : i32, i32, i32, i32
  }
  func.func @transform_1(%arg0: i32) -> (i32, i32) {
    %c0_i32 = arith.constant 0 : i32
    %c0_i32_0 = arith.constant 0 : i32
    %c0_i32_1 = arith.constant 0 : i32
    return %c0_i32, %c0_i32_0 : i32, i32
  }
  func.func @transform_2(%arg0: i32) -> (i32, i32) {
    %c0_i32 = arith.constant 0 : i32
    %c0_i32_0 = arith.constant 0 : i32
    %c0_i32_1 = arith.constant 0 : i32
    return %c0_i32, %c0_i32_0 : i32, i32
  }
  func.func @transform_3(%arg0: i32) -> (i32, i32, i32) {
    %c0_i32 = arith.constant 0 : i32
    %c0_i32_0 = arith.constant 0 : i32
    %c0_i32_1 = arith.constant 0 : i32
    %c0_i32_2 = arith.constant 0 : i32
    return %c0_i32, %c0_i32_0, %c0_i32_1 : i32, i32, i32
  }
  func.func @transform_4(%arg0: i32) -> (i32, i32, i32) {
    %c0_i32 = arith.constant 0 : i32
    %c0_i32_0 = arith.constant 0 : i32
    %c0_i32_1 = arith.constant 0 : i32
    %c0_i32_2 = arith.constant 0 : i32
    return %c0_i32, %c0_i32_0, %c0_i32_1 : i32, i32, i32
  }
  func.func @transform_5(%arg0: i32) -> (i32, i32) {
    %c0_i32 = arith.constant 0 : i32
    %c0_i32_0 = arith.constant 0 : i32
    %c0_i32_1 = arith.constant 0 : i32
    return %c0_i32, %c0_i32_0 : i32, i32
  }
  func.func @transform_6(%arg0: i32) -> (i32, i32) {
    %c0_i32 = arith.constant 0 : i32
    %c0_i32_0 = arith.constant 0 : i32
    %c0_i32_1 = arith.constant 0 : i32
    return %c0_i32, %c0_i32_0 : i32, i32
  }
  func.func @transform_7(%arg0: i32) -> (i32, i32, i32) {
    %c0_i32 = arith.constant 0 : i32
    %c0_i32_0 = arith.constant 0 : i32
    %c0_i32_1 = arith.constant 0 : i32
    %c0_i32_2 = arith.constant 0 : i32
    return %c0_i32, %c0_i32_0, %c0_i32_1 : i32, i32, i32
  }
  func.func @transform_8(%arg0: i32) -> (i32, i32, i32) {
    %c0_i32 = arith.constant 0 : i32
    %c0_i32_0 = arith.constant 0 : i32
    %c0_i32_1 = arith.constant 0 : i32
    %c0_i32_2 = arith.constant 0 : i32
    return %c0_i32, %c0_i32_0, %c0_i32_1 : i32, i32, i32
  }
  func.func @transform_9(%arg0: i32) -> (i32, i32, i32) {
    %c0_i32 = arith.constant 0 : i32
    %c0_i32_0 = arith.constant 0 : i32
    %c0_i32_1 = arith.constant 0 : i32
    return %arg0, %c0_i32, %c0_i32_0 : i32, i32, i32
  }
}

</mosaic_0001>

<llo_original>
// kernel: _lambda_.1
$region0: #{_lambda_.1}
  #allocation0 [shape = 'u32[]', space=smem, size = 0x4, offset = 0x4, fixed_abs, tag = 'smem constant byte address 0x4 - core index']
  #allocation1 [shape = 'u32[144,128]{1,0:T(1,128)}', space=vmem, size = 0x12000, scoped, tag = 'internal scratch']
  #allocation2 [shape = 'bf16[18,18,32]{2,1,0:T(8,128)(2,1)}', space=vmem, size = 0x1b000, scoped, tag = 'scratch operand']
  #allocation3 [shape = 'bf16[16,16,288]{2,1,0:T(16,128)(2,1)}', space=vmem, size = 0x30000, scoped, tag = 'scratch operand']
  %s0 = inlined_call_operand.vmem [shape: bf16[2,16,16,32], index: 0, kind: input, shape index: {}]
  %s1 = inlined_call_operand.vmem [shape: bf16[288,64], index: 1, kind: input, shape index: {}]
  %s2 = inlined_call_operand.vmem [shape: f32[1,64], index: 2, kind: input, shape index: {}]
  %s3 = inlined_call_operand.vmem [shape: bf16[1,288,32], index: 3, kind: input, shape index: {}]
  %s4 = inlined_call_operand.vmem [shape: f32[1,1,32], index: 4, kind: input, shape index: {}]
  %s5 = inlined_call_operand.vmem [shape: f32[32,32], index: 5, kind: input, shape index: {}]
  %s6 = inlined_call_operand.vmem [shape: f32[1,32], index: 6, kind: input, shape index: {}]
  %s7 = inlined_call_operand.vmem [shape: f32[2,32,32], index: 7, kind: input, shape index: {}]
  %s8 = inlined_call_operand.vmem [shape: f32[2,1,32], index: 8, kind: input, shape index: {}]
  %s9 = inlined_call_operand.hbm [shape: f32[2,256,32], index: 9, kind: output, shape index: {}]
  %s10 = sld [smem:[#allocation0]]
  $region69: #{_lambda_.1} parent=0
    _
  %s12 = ssub.s32 1, %s10
  %s13 = scalar_select 0, %s12, %s10
  $region1: #{_lambda_.1} parent=0
    #allocation4 [shape = 'u8[262144]{0}', space=vmem, size = 0x40000, scoped, tag = 'output window, operand 0']
    #allocation5 [shape = 's32[2]{0}', space=sflag, size = 0x8, scoped, tag = 'scoped memory for _lambda_.1']
    %14 = vsyncpa [#allocation5], 0
    %s15 = scalar_lea.sflag [#allocation5], 1
    %16 = vsyncpa %s15, 0
    loop: start=0, step=1, limit=4
    $region2: #{_lambda_.1} parent=1 // loop_pre_header
      _
    $region3: #{_lambda_.1} parent=1 // loop_header
      %s18 = sphi 0, %s22
      %p19 = scmp.ge.s32.totalorder %s18, 4
      %s28 = sphi 0, %s30
      %s31 = sphi 0, %s28
      %s32 = sphi 0, %s31
      %s48 = sphi 0, %s32
      %s52 = sphi 0, %s52
      %s54 = sphi 0, %s52
      %s55 = sphi 0, %s54
      %s69 = sphi 0, %s55
      %s73 = sphi 0, %s73
      %s75 = sphi 0, %s73
      %s76 = sphi 0, %s75
      %s90 = sphi 0, %s76
      %s94 = sphi 0, %s94
      %s96 = sphi 0, %s94
      %s97 = sphi 0, %s96
      %s111 = sphi 0, %s97
      %s115 = sphi 0, %s115
      %s117 = sphi 0, %s115
      %s118 = sphi 0, %s117
      %s132 = sphi 0, %s118
      %s136 = sphi 0, %s136
      %s138 = sphi 0, %s136
      %s139 = sphi 0, %s138
      %s153 = sphi 0, %s139
      %s157 = sphi 0, %s157
      %s159 = sphi 0, %s157
      %s160 = sphi 0, %s159
      %s174 = sphi 0, %s160
      %s178 = sphi 0, %s178
      %s180 = sphi 0, %s178
      %s181 = sphi 0, %s180
      %s195 = sphi 0, %s181
      %s199 = sphi 0, %s199
      %s201 = sphi 0, %s199
      %s202 = sphi 0, %s201
      %s216 = sphi 0, %s202
      %s222 = sphi 0, %s224
      %s225 = sphi 0, %s222
      %s226 = sphi 0, %s225
      %s242 = sphi 0, %s226
    $region4: #{_lambda_.1} parent=1 // loop_header_branch
      %21 = sbr.rel (%p19) target = $region8
    $region5: #{_lambda_.1} parent=1 // loop_body
      %s23 = ssub.s32 %s18, 1
      %s24 = ssub.s32 %s18, 2
      %s25 = sadd.s32 %s18, 1
      %s26 = ssub.s32 %s18, %s25
      %p27 = scmp.eq.s32.totalorder %s26, 0
      %s29 = sadd.s32 %s28, 1
      %s30 = scalar_select %p27, %s28, %s29
      %p33 = pneg %p27
      %p34 = scmp.eq.s32.totalorder %s18, 1
      %p35 = por %p33, %p34
      %p36 = scmp.ne.s32.totalorder %s28, %s31
      %p37 = scmp.eq.s32.totalorder %s18, 0
      %p38 = por %p36, %p37
      %p39 = scmp.ne.s32.totalorder %s28, %s31
      %p40 = scmp.eq.s32.totalorder %s23, 1
      %p41 = por %p39, %p40
      %p42 = scmp.ne.s32.totalorder %s31, %s32
      %p43 = scmp.eq.s32.totalorder %s23, 0
      %p44 = por %p42, %p43
      %p45 = scmp.ne.s32.totalorder %s31, %s32
      %p46 = scmp.eq.s32.totalorder %s24, 1
      %p47 = por %p45, %p46
      %p49 = scmp.ne.s32.totalorder %s32, %s48
      %p50 = scmp.eq.s32.totalorder %s24, 0
      %p51 = por %p49, %p50
      %s53 = sadd.s32 %s52, 1
      %p56 = scmp.eq.s32.totalorder %s18, 1
      %p57 = scmp.ne.s32.totalorder %s52, %s54
      %p58 = scmp.eq.s32.totalorder %s18, 0
      %p59 = por %p57, %p58
      %p60 = scmp.ne.s32.totalorder %s52, %s54
      %p61 = scmp.eq.s32.totalorder %s23, 1
      %p62 = por %p60, %p61
      %p63 = scmp.ne.s32.totalorder %s54, %s55
      %p64 = scmp.eq.s32.totalorder %s23, 0
      %p65 = por %p63, %p64
      %p66 = scmp.ne.s32.totalorder %s54, %s55
      %p67 = scmp.eq.s32.totalorder %s24, 1
      %p68 = por %p66, %p67
      %p70 = scmp.ne.s32.totalorder %s55, %s69
      %p71 = scmp.eq.s32.totalorder %s24, 0
      %p72 = por %p70, %p71
      %s74 = sadd.s32 %s73, 1
      %p77 = scmp.eq.s32.totalorder %s18, 1
      %p78 = scmp.ne.s32.totalorder %s73, %s75
      %p79 = scmp.eq.s32.totalorder %s18, 0
      %p80 = por %p78, %p79
      %p81 = scmp.ne.s32.totalorder %s73, %s75
      %p82 = scmp.eq.s32.totalorder %s23, 1
      %p83 = por %p81, %p82
      %p84 = scmp.ne.s32.totalorder %s75, %s76
      %p85 = scmp.eq.s32.totalorder %s23, 0
      %p86 = por %p84, %p85
      %p87 = scmp.ne.s32.totalorder %s75, %s76
      %p88 = scmp.eq.s32.totalorder %s24, 1
      %p89 = por %p87, %p88
      %p91 = scmp.ne.s32.totalorder %s76, %s90
      %p92 = scmp.eq.s32.totalorder %s24, 0
      %p93 = por %p91, %p92
      %s95 = sadd.s32 %s94, 1
      %p98 = scmp.eq.s32.totalorder %s18, 1
      %p99 = scmp.ne.s32.totalorder %s94, %s96
      %p100 = scmp.eq.s32.totalorder %s18, 0
      %p101 = por %p99, %p100
      %p102 = scmp.ne.s32.totalorder %s94, %s96
      %p103 = scmp.eq.s32.totalorder %s23, 1
      %p104 = por %p102, %p103
      %p105 = scmp.ne.s32.totalorder %s96, %s97
      %p106 = scmp.eq.s32.totalorder %s23, 0
      %p107 = por %p105, %p106
      %p108 = scmp.ne.s32.totalorder %s96, %s97
      %p109 = scmp.eq.s32.totalorder %s24, 1
      %p110 = por %p108, %p109
      %p112 = scmp.ne.s32.totalorder %s97, %s111
      %p113 = scmp.eq.s32.totalorder %s24, 0
      %p114 = por %p112, %p113
      %s116 = sadd.s32 %s115, 1
      %p119 = scmp.eq.s32.totalorder %s18, 1
      %p120 = scmp.ne.s32.totalorder %s115, %s117
      %p121 = scmp.eq.s32.totalorder %s18, 0
      %p122 = por %p120, %p121
      %p123 = scmp.ne.s32.totalorder %s115, %s117
      %p124 = scmp.eq.s32.totalorder %s23, 1
      %p125 = por %p123, %p124
      %p126 = scmp.ne.s32.totalorder %s117, %s118
      %p127 = scmp.eq.s32.totalorder %s23, 0
      %p128 = por %p126, %p127
      %p129 = scmp.ne.s32.totalorder %s117, %s118
      %p130 = scmp.eq.s32.totalorder %s24, 1
      %p131 = por %p129, %p130
      %p133 = scmp.ne.s32.totalorder %s118, %s132
      %p134 = scmp.eq.s32.totalorder %s24, 0
      %p135 = por %p133, %p134
      %s137 = sadd.s32 %s136, 1
      %p140 = scmp.eq.s32.totalorder %s18, 1
      %p141 = scmp.ne.s32.totalorder %s136, %s138
      %p142 = scmp.eq.s32.totalorder %s18, 0
      %p143 = por %p141, %p142
      %p144 = scmp.ne.s32.totalorder %s136, %s138
      %p145 = scmp.eq.s32.totalorder %s23, 1
      %p146 = por %p144, %p145
      %p147 = scmp.ne.s32.totalorder %s138, %s139
      %p148 = scmp.eq.s32.totalorder %s23, 0
      %p149 = por %p147, %p148
      %p150 = scmp.ne.s32.totalorder %s138, %s139
      %p151 = scmp.eq.s32.totalorder %s24, 1
      %p152 = por %p150, %p151
      %p154 = scmp.ne.s32.totalorder %s139, %s153
      %p155 = scmp.eq.s32.totalorder %s24, 0
      %p156 = por %p154, %p155
      %s158 = sadd.s32 %s157, 1
      %p161 = scmp.eq.s32.totalorder %s18, 1
      %p162 = scmp.ne.s32.totalorder %s157, %s159
      %p163 = scmp.eq.s32.totalorder %s18, 0
      %p164 = por %p162, %p163
      %p165 = scmp.ne.s32.totalorder %s157, %s159
      %p166 = scmp.eq.s32.totalorder %s23, 1
      %p167 = por %p165, %p166
      %p168 = scmp.ne.s32.totalorder %s159, %s160
      %p169 = scmp.eq.s32.totalorder %s23, 0
      %p170 = por %p168, %p169
      %p171 = scmp.ne.s32.totalorder %s159, %s160
      %p172 = scmp.eq.s32.totalorder %s24, 1
      %p173 = por %p171, %p172
      %p175 = scmp.ne.s32.totalorder %s160, %s174
      %p176 = scmp.eq.s32.totalorder %s24, 0
      %p177 = por %p175, %p176
      %s179 = sadd.s32 %s178, 1
      %p182 = scmp.eq.s32.totalorder %s18, 1
      %p183 = scmp.ne.s32.totalorder %s178, %s180
      %p184 = scmp.eq.s32.totalorder %s18, 0
      %p185 = por %p183, %p184
      %p186 = scmp.ne.s32.totalorder %s178, %s180
      %p187 = scmp.eq.s32.totalorder %s23, 1
      %p188 = por %p186, %p187
      %p189 = scmp.ne.s32.totalorder %s180, %s181
      %p190 = scmp.eq.s32.totalorder %s23, 0
      %p191 = por %p189, %p190
      %p192 = scmp.ne.s32.totalorder %s180, %s181
      %p193 = scmp.eq.s32.totalorder %s24, 1
      %p194 = por %p192, %p193
      %p196 = scmp.ne.s32.totalorder %s181, %s195
      %p197 = scmp.eq.s32.totalorder %s24, 0
      %p198 = por %p196, %p197
      %s200 = sadd.s32 %s199, 1
      %p203 = scmp.eq.s32.totalorder %s18, 1
      %p204 = scmp.ne.s32.totalorder %s199, %s201
      %p205 = scmp.eq.s32.totalorder %s18, 0
      %p206 = por %p204, %p205
      %p207 = scmp.ne.s32.totalorder %s199, %s201
      %p208 = scmp.eq.s32.totalorder %s23, 1
      %p209 = por %p207, %p208
      %p210 = scmp.ne.s32.totalorder %s201, %s202
      %p211 = scmp.eq.s32.totalorder %s23, 0
      %p212 = por %p210, %p211
      %p213 = scmp.ne.s32.totalorder %s201, %s202
      %p214 = scmp.eq.s32.totalorder %s24, 1
      %p215 = por %p213, %p214
      %p217 = scmp.ne.s32.totalorder %s202, %s216
      %p218 = scmp.eq.s32.totalorder %s24, 0
      %p219 = por %p217, %p218
      %s220 = ssub.s32 %s18, %s25
      %p221 = scmp.eq.s32.totalorder %s220, 0
      %s223 = sadd.s32 %s222, 1
      %s224 = scalar_select %p221, %s222, %s223
      %p227 = pneg %p221
      %p228 = scmp.eq.s32.totalorder %s18, 1
      %p229 = por %p227, %p228
      %p230 = scmp.ne.s32.totalorder %s222, %s225
      %p231 = scmp.eq.s32.totalorder %s18, 0
      %p232 = por %p230, %p231
      %p233 = scmp.ne.s32.totalorder %s222, %s225
      %p234 = scmp.eq.s32.totalorder %s23, 1
      %p235 = por %p233, %p234
      %p236 = scmp.ne.s32.totalorder %s225, %s226
      %p237 = scmp.eq.s32.totalorder %s23, 0
      %p238 = por %p236, %p237
      %p239 = scmp.ne.s32.totalorder %s225, %s226
      %p240 = scmp.eq.s32.totalorder %s24, 1
      %p241 = por %p239, %p240
      %p243 = scmp.ne.s32.totalorder %s226, %s242
      %p244 = scmp.eq.s32.totalorder %s24, 0
      %p245 = por %p243, %p244
      %p246 = scmp.le.s32.totalorder 1, %s18
      %p247 = scmp.lt.s32.totalorder %s18, 3
      %p248 = pnand %p246, %p247
      %p249 = pneg %p248
      // Predicated region
      $region9: #{_lambda_.1} parent=5 // pred_check
        _
      $region10: #{_lambda_.1} parent=5 // pred_check_branch
        %251 = sbr.rel (%p248) target = $region12
      $region11: #{_lambda_.1} parent=5 // pred_region
        %s252 = ssub.s32 %s18, 1
        // Predicated region
        $region13: #{_lambda_.1} parent=11 // pred_check
          %p253 = pneg %p65
        $region14: #{_lambda_.1} parent=11 // pred_check_branch
          %255 = sbr.rel (%p253) target = $region16
        $region15: #{_lambda_.1} parent=11 // pred_region
          _
        $region16: #{_lambda_.1} parent=11 // pred_fallthru
          _
        // Predicated region
        $region17: #{_lambda_.1} parent=11 // pred_check
          %p256 = pneg %p86
        $region18: #{_lambda_.1} parent=11 // pred_check_branch
          %258 = sbr.rel (%p256) target = $region20
        $region19: #{_lambda_.1} parent=11 // pred_region
          _
        $region20: #{_lambda_.1} parent=11 // pred_fallthru
          _
        // Predicated region
        $region21: #{_lambda_.1} parent=11 // pred_check
          %p259 = pneg %p107
        $region22: #{_lambda_.1} parent=11 // pred_check_branch
          %261 = sbr.rel (%p259) target = $region24
        $region23: #{_lambda_.1} parent=11 // pred_region
          _
        $region24: #{_lambda_.1} parent=11 // pred_fallthru
          _
        // Predicated region
        $region25: #{_lambda_.1} parent=11 // pred_check
          %p262 = pneg %p128
        $region26: #{_lambda_.1} parent=11 // pred_check_branch
          %264 = sbr.rel (%p262) target = $region28
        $region27: #{_lambda_.1} parent=11 // pred_region
          _
        $region28: #{_lambda_.1} parent=11 // pred_fallthru
          _
        // Predicated region
        $region29: #{_lambda_.1} parent=11 // pred_check
          %p265 = pneg %p149
        $region30: #{_lambda_.1} parent=11 // pred_check_branch
          %267 = sbr.rel (%p265) target = $region32
        $region31: #{_lambda_.1} parent=11 // pred_region
          _
        $region32: #{_lambda_.1} parent=11 // pred_fallthru
          _
        // Predicated region
        $region33: #{_lambda_.1} parent=11 // pred_check
          %p268 = pneg %p170
        $region34: #{_lambda_.1} parent=11 // pred_check_branch
          %270 = sbr.rel (%p268) target = $region36
        $region35: #{_lambda_.1} parent=11 // pred_region
          _
        $region36: #{_lambda_.1} parent=11 // pred_fallthru
          _
        // Predicated region
        $region37: #{_lambda_.1} parent=11 // pred_check
          %p271 = pneg %p191
        $region38: #{_lambda_.1} parent=11 // pred_check_branch
          %273 = sbr.rel (%p271) target = $region40
        $region39: #{_lambda_.1} parent=11 // pred_region
          _
        $region40: #{_lambda_.1} parent=11 // pred_fallthru
          _
        // Predicated region
        $region41: #{_lambda_.1} parent=11 // pred_check
          %p274 = pneg %p212
        $region42: #{_lambda_.1} parent=11 // pred_check_branch
          %276 = sbr.rel (%p274) target = $region44
        $region43: #{_lambda_.1} parent=11 // pred_region
          _
        $region44: #{_lambda_.1} parent=11 // pred_fallthru
          _
      $region12: #{_lambda_.1} parent=5 // pred_fallthru
        _
      %p277 = scmp.lt.s32.totalorder %s18, 2
      // Predicated region
      $region45: #{_lambda_.1} parent=5 // pred_check
        %p278 = pneg %p277
      $region46: #{_lambda_.1} parent=5 // pred_check_branch
        %280 = sbr.rel (%p278) target = $region48
      $region47: #{_lambda_.1} parent=5 // pred_region
        // Predicated region
        $region49: #{_lambda_.1} parent=47 // pred_check
          %p281 = pneg %p38
        $region50: #{_lambda_.1} parent=47 // pred_check_branch
          %283 = sbr.rel (%p281) target = $region52
        $region51: #{_lambda_.1} parent=47 // pred_region
          %p284 = scmp.lt.s32.totalorder %s18, 1
          %s285 = scalar_select %p284, %s18, 1
          %s286 = smul.addr %s285, 32
          %s287 = smul.addr %s286, 4
          %s288 = scalar_lea.vmem %s0, %s287
        $region52: #{_lambda_.1} parent=47 // pred_fallthru
          _
      $region48: #{_lambda_.1} parent=5 // pred_fallthru
        _
      %p289 = scmp.le.s32.totalorder 1, %s18
      %p290 = scmp.lt.s32.totalorder %s18, 3
      %p291 = pnand %p289, %p290
      %p292 = pneg %p291
      // Predicated region
      $region53: #{_lambda_.1} parent=5 // pred_check
        _
      $region54: #{_lambda_.1} parent=5 // pred_check_branch
        %294 = sbr.rel (%p291) target = $region56
      $region55: #{_lambda_.1} parent=5 // pred_region
        %s295 = ssub.s32 %s18, 1
        %p296 = scmp.lt.s32.totalorder %s23, 1
        %s297 = scalar_select %p296, %s23, 1
        %s298 = smul.addr %s297, 32
        %s299 = smul.addr %s298, 4
        %s300 = scalar_lea.vmem %s0, %s299
        %p301 = pneg %p44
        %p302 = pneg %p41
        %p303 = pneg %p65
        %p304 = pneg %p62
        %p305 = pneg %p86
        %p306 = pneg %p83
        %p307 = pneg %p107
        %p308 = pneg %p104
        %p309 = pneg %p128
        %p310 = pneg %p125
        %p311 = pneg %p149
        %p312 = pneg %p146
        %p313 = pneg %p170
        %p314 = pneg %p167
        %p315 = pneg %p191
        %p316 = pneg %p188
        %p317 = pneg %p212
        %p318 = pneg %p209
        %p319 = pneg %p238
        %p320 = pneg %p235
        %s321 = sand.u32 %s225, 1
        %s322 = scalar_lea.sflag [#allocation5], %s321
        %s323 = sand.u32 %s225, 1
        %s324 = smul.addr %s323, 256
        %s325 = scalar_lea.vmem [#allocation4], %s324
        %p326 = scmp.lt.s32.totalorder %s23, 1
        %s327 = scalar_select %p326, %s23, 1
        %s328 = smul.addr %s327, 32
        %s329 = smul.addr %s328, 4
        %s330 = scalar_lea.vmem %s0, %s329
        %vm332 = vcmask 257024
        %333 = vst.msk [vmem:[#allocation2] sm:$0xf] %vm332, 0
        %334 = vst.msk [vmem:[#allocation2 + $0x4] sm:$0xf] %vm332, 0
        %vm335 = vcmask 253952
        %336 = vst.msk [vmem:[#allocation2 + $0x8] sm:$0x1] %vm335, 0
        %s337 = scalar_lea.vmem [#allocation2], 204
        %338 = vst.msk [vmem:[%s337] sm:$0xf] %vm332, 0
        %339 = vst.msk [vmem:[%s337 + $0x4] sm:$0xf] %vm332, 0
        %340 = vst.msk [vmem:[%s337 + $0x8] sm:$0x1] %vm335, 0
        %vm341 = vcmask 253952
        %vm342 = vsmask.f32 256
        %vm343 = vmand %vm341, %vm342
        %v344 = vld [vmem:[#allocation2] sm:$0x1]
        %v345 = vsel %vm343, 0, %v344
        %346 = vst [vmem:[#allocation2] sm:$0x1] %v345
        %v347 = vld [vmem:[#allocation2 + $0xc] sm:$0x1]
        %v348 = vsel %vm343, 0, %v347
        %349 = vst [vmem:[#allocation2 + $0xc] sm:$0x1] %v348
        %v350 = vld [vmem:[#allocation2 + $0x18] sm:$0x1]
        %v351 = vsel %vm343, 0, %v350
        %352 = vst [vmem:[#allocation2 + $0x18] sm:$0x1] %v351
        %v353 = vld [vmem:[#allocation2 + $0x24] sm:$0x1]
        %v354 = vsel %vm343, 0, %v353
        %355 = vst [vmem:[#allocation2 + $0x24] sm:$0x1] %v354
        %v356 = vld [vmem:[#allocation2 + $0x30] sm:$0x1]
        %v357 = vsel %vm343, 0, %v356
        %358 = vst [vmem:[#allocation2 + $0x30] sm:$0x1] %v357
        %v359 = vld [vmem:[#allocation2 + $0x3c] sm:$0x1]
        %v360 = vsel %vm343, 0, %v359
        %361 = vst [vmem:[#allocation2 + $0x3c] sm:$0x1] %v360
        %v362 = vld [vmem:[#allocation2 + $0x48] sm:$0x1]
        %v363 = vsel %vm343, 0, %v362
        %364 = vst [vmem:[#allocation2 + $0x48] sm:$0x1] %v363
        %v365 = vld [vmem:[#allocation2 + $0x54] sm:$0x1]
        %v366 = vsel %vm343, 0, %v365
        %367 = vst [vmem:[#allocation2 + $0x54] sm:$0x1] %v366
        %v368 = vld [vmem:[#allocation2 + $0x60] sm:$0x1]
        %v369 = vsel %vm343, 0, %v368
        %370 = vst [vmem:[#allocation2 + $0x60] sm:$0x1] %v369
        %v371 = vld [vmem:[#allocation2 + $0x6c] sm:$0x1]
        %v372 = vsel %vm343, 0, %v371
        %373 = vst [vmem:[#allocation2 + $0x6c] sm:$0x1] %v372
        %v374 = vld [vmem:[#allocation2 + $0x78] sm:$0x1]
        %v375 = vsel %vm343, 0, %v374
        %376 = vst [vmem:[#allocation2 + $0x78] sm:$0x1] %v375
        %v377 = vld [vmem:[#allocation2 + $0x84] sm:$0x1]
        %v378 = vsel %vm343, 0, %v377
        %379 = vst [vmem:[#allocation2 + $0x84] sm:$0x1] %v378
        %v380 = vld [vmem:[#allocation2 + $0x90] sm:$0x1]
        %v381 = vsel %vm343, 0, %v380
        %382 = vst [vmem:[#allocation2 + $0x90] sm:$0x1] %v381
        %v383 = vld [vmem:[#allocation2 + $0x9c] sm:$0x1]
        %v384 = vsel %vm343, 0, %v383
        %385 = vst [vmem:[#allocation2 + $0x9c] sm:$0x1] %v384
        %v386 = vld [vmem:[#allocation2 + $0xa8] sm:$0x1]
        %v387 = vsel %vm343, 0, %v386
        %388 = vst [vmem:[#allocation2 + $0xa8] sm:$0x1] %v387
        %v389 = vld [vmem:[#allocation2 + $0xb4] sm:$0x1]
        %v390 = vsel %vm343, 0, %v389
        %391 = vst [vmem:[#allocation2 + $0xb4] sm:$0x1] %v390
        %v392 = vld [vmem:[#allocation2 + $0xc0] sm:$0x1]
        %v393 = vsel %vm343, 0, %v392
        %394 = vst [vmem:[#allocation2 + $0xc0] sm:$0x1] %v393
        %v395 = vld [vmem:[#allocation2 + $0xcc] sm:$0x1]
        %v396 = vsel %vm343, 0, %v395
        %397 = vst [vmem:[#allocation2 + $0xcc] sm:$0x1] %v396
        %vm398 = vsmask.f32 7938
        %vm399 = vmand %vm341, %vm398
        %v400 = vld [vmem:[#allocation2 + $0x8] sm:$0x1]
        %v401 = vsel %vm399, 0, %v400
        %402 = vst [vmem:[#allocation2 + $0x8] sm:$0x1] %v401
        %v403 = vld [vmem:[#allocation2 + $0x14] sm:$0x1]
        %v404 = vsel %vm399, 0, %v403
        %405 = vst [vmem:[#allocation2 + $0x14] sm:$0x1] %v404
        %v406 = vld [vmem:[#allocation2 + $0x20] sm:$0x1]
        %v407 = vsel %vm399, 0, %v406
        %408 = vst [vmem:[#allocation2 + $0x20] sm:$0x1] %v407
        %v409 = vld [vmem:[#allocation2 + $0x2c] sm:$0x1]
        %v410 = vsel %vm399, 0, %v409
        %411 = vst [vmem:[#allocation2 + $0x2c] sm:$0x1] %v410
        %v412 = vld [vmem:[#allocation2 + $0x38] sm:$0x1]
        %v413 = vsel %vm399, 0, %v412
        %414 = vst [vmem:[#allocation2 + $0x38] sm:$0x1] %v413
        %v415 = vld [vmem:[#allocation2 + $0x44] sm:$0x1]
        %v416 = vsel %vm399, 0, %v415
        %417 = vst [vmem:[#allocation2 + $0x44] sm:$0x1] %v416
        %v418 = vld [vmem:[#allocation2 + $0x50] sm:$0x1]
        %v419 = vsel %vm399, 0, %v418
        %420 = vst [vmem:[#allocation2 + $0x50] sm:$0x1] %v419
        %v421 = vld [vmem:[#allocation2 + $0x5c] sm:$0x1]
        %v422 = vsel %vm399, 0, %v421
        %423 = vst [vmem:[#allocation2 + $0x5c] sm:$0x1] %v422
        %v424 = vld [vmem:[#allocation2 + $0x68] sm:$0x1]
        %v425 = vsel %vm399, 0, %v424
        %426 = vst [vmem:[#allocation2 + $0x68] sm:$0x1] %v425
        %v427 = vld [vmem:[#allocation2 + $0x74] sm:$0x1]
        %v428 = vsel %vm399, 0, %v427
        %429 = vst [vmem:[#allocation2 + $0x74] sm:$0x1] %v428
        %v430 = vld [vmem:[#allocation2 + $0x80] sm:$0x1]
        %v431 = vsel %vm399, 0, %v430
        %432 = vst [vmem:[#allocation2 + $0x80] sm:$0x1] %v431
        %v433 = vld [vmem:[#allocation2 + $0x8c] sm:$0x1]
        %v434 = vsel %vm399, 0, %v433
        %435 = vst [vmem:[#allocation2 + $0x8c] sm:$0x1] %v434
        %v436 = vld [vmem:[#allocation2 + $0x98] sm:$0x1]
        %v437 = vsel %vm399, 0, %v436
        %438 = vst [vmem:[#allocation2 + $0x98] sm:$0x1] %v437
        %v439 = vld [vmem:[#allocation2 + $0xa4] sm:$0x1]
        %v440 = vsel %vm399, 0, %v439
        %441 = vst [vmem:[#allocation2 + $0xa4] sm:$0x1] %v440
        %v442 = vld [vmem:[#allocation2 + $0xb0] sm:$0x1]
        %v443 = vsel %vm399, 0, %v442
        %444 = vst [vmem:[#allocation2 + $0xb0] sm:$0x1] %v443
        %v445 = vld [vmem:[#allocation2 + $0xbc] sm:$0x1]
        %v446 = vsel %vm399, 0, %v445
        %447 = vst [vmem:[#allocation2 + $0xbc] sm:$0x1] %v446
        %v448 = vld [vmem:[#allocation2 + $0xc8] sm:$0x1]
        %v449 = vsel %vm399, 0, %v448
        %450 = vst [vmem:[#allocation2 + $0xc8] sm:$0x1] %v449
        %v451 = vld [vmem:[#allocation2 + $0xd4] sm:$0x1]
        %v452 = vsel %vm399, 0, %v451
        %453 = vst [vmem:[#allocation2 + $0xd4] sm:$0x1] %v452
        %v454 = vld [vmem:[%s330] sm:$0xf]
        %v455 = vld [vmem:[%s330 + $0x4] sm:$0xf]
        %v456 = vld [vmem:[%s330 + $0x8] sm:$0xf]
        %v457 = vld [vmem:[%s330 + $0xc] sm:$0xf]
        %v458 = vld [vmem:[%s330 + $0x10] sm:$0xf]
        %v459 = vld [vmem:[%s330 + $0x14] sm:$0xf]
        %v460 = vld [vmem:[%s330 + $0x18] sm:$0xf]
        %v461 = vld [vmem:[%s330 + $0x1c] sm:$0xf]
        %v462 = vld [vmem:[%s330 + $0x20] sm:$0xf]
        %v463 = vld [vmem:[%s330 + $0x24] sm:$0xf]
        %v464 = vld [vmem:[%s330 + $0x28] sm:$0xf]
        %v465 = vld [vmem:[%s330 + $0x2c] sm:$0xf]
        %v466 = vld [vmem:[%s330 + $0x30] sm:$0xf]
        %v467 = vld [vmem:[%s330 + $0x34] sm:$0xf]
        %v468 = vld [vmem:[%s330 + $0x38] sm:$0xf]
        %v469 = vld [vmem:[%s330 + $0x3c] sm:$0xf]
        %v470 = vld [vmem:[%s330 + $0x40] sm:$0xf]
        %v471 = vld [vmem:[%s330 + $0x44] sm:$0xf]
        %v472 = vld [vmem:[%s330 + $0x48] sm:$0xf]
        %v473 = vld [vmem:[%s330 + $0x4c] sm:$0xf]
        %v474 = vld [vmem:[%s330 + $0x50] sm:$0xf]
        %v475 = vld [vmem:[%s330 + $0x54] sm:$0xf]
        %v476 = vld [vmem:[%s330 + $0x58] sm:$0xf]
        %v477 = vld [vmem:[%s330 + $0x5c] sm:$0xf]
        %v478 = vld [vmem:[%s330 + $0x60] sm:$0xf]
        %v479 = vld [vmem:[%s330 + $0x64] sm:$0xf]
        %v480 = vld [vmem:[%s330 + $0x68] sm:$0xf]
        %v481 = vld [vmem:[%s330 + $0x6c] sm:$0xf]
        %v482 = vld [vmem:[%s330 + $0x70] sm:$0xf]
        %v483 = vld [vmem:[%s330 + $0x74] sm:$0xf]
        %v484 = vld [vmem:[%s330 + $0x78] sm:$0xf]
        %v485 = vld [vmem:[%s330 + $0x7c] sm:$0xf]
        %vm486 = vsmask.f32 4368
        %vm487 = vmor %vm342, %vm486
        %v489 = vshrl.u32 %v454, 16
        %v491 = vrot.slane %v489, 7
        %v492 = vshll.u32 %v454, 16
        %v494 = vor.u32 %v491, %v492
        %v495 = vrot.slane %v491, 4
        %v497 = vshrl.u32 %v455, 16
        %v499 = vrot.slane %v497, 7
        %v500 = vshll.u32 %v455, 16
        %v502 = vor.u32 %v499, %v500
        %v503 = vsel %vm487, %v495, %v502
        %v504 = vrot.slane %v499, 4
        %v506 = vshrl.u32 %v456, 16
        %v508 = vrot.slane %v506, 7
        %v509 = vshll.u32 %v456, 16
        %v511 = vor.u32 %v508, %v509
        %v512 = vrot.slane %v508, 4
        %v514 = vshrl.u32 %v457, 16
        %v516 = vrot.slane %v514, 7
        %v517 = vshll.u32 %v457, 16
        %v519 = vor.u32 %v516, %v517
        %v520 = vsel %vm487, %v512, %v519
        %v521 = vrot.slane %v516, 4
        %v523 = vshrl.u32 %v458, 16
        %v525 = vrot.slane %v523, 7
        %v526 = vshll.u32 %v458, 16
        %v528 = vor.u32 %v525, %v526
        %v529 = vrot.slane %v525, 4
        %v531 = vshrl.u32 %v459, 16
        %v533 = vrot.slane %v531, 7
        %v534 = vshll.u32 %v459, 16
        %v536 = vor.u32 %v533, %v534
        %v537 = vsel %vm487, %v529, %v536
        %v538 = vrot.slane %v533, 4
        %v540 = vshrl.u32 %v460, 16
        %v542 = vrot.slane %v540, 7
        %v543 = vshll.u32 %v460, 16
        %v545 = vor.u32 %v542, %v543
        %v546 = vrot.slane %v542, 4
        %v548 = vshrl.u32 %v461, 16
        %v550 = vrot.slane %v548, 7
        %v551 = vshll.u32 %v461, 16
        %v553 = vor.u32 %v550, %v551
        %v554 = vsel %vm487, %v546, %v553
        %v555 = vrot.slane %v550, 4
        %v557 = vshrl.u32 %v462, 16
        %v559 = vrot.slane %v557, 7
        %v560 = vshll.u32 %v462, 16
        %v562 = vor.u32 %v559, %v560
        %v563 = vrot.slane %v559, 4
        %v565 = vshrl.u32 %v463, 16
        %v567 = vrot.slane %v565, 7
        %v568 = vshll.u32 %v463, 16
        %v570 = vor.u32 %v567, %v568
        %v571 = vsel %vm487, %v563, %v570
        %v572 = vrot.slane %v567, 4
        %v574 = vshrl.u32 %v464, 16
        %v576 = vrot.slane %v574, 7
        %v577 = vshll.u32 %v464, 16
        %v579 = vor.u32 %v576, %v577
        %v580 = vrot.slane %v576, 4
        %v582 = vshrl.u32 %v465, 16
        %v584 = vrot.slane %v582, 7
        %v585 = vshll.u32 %v465, 16
        %v587 = vor.u32 %v584, %v585
        %v588 = vsel %vm487, %v580, %v587
        %v589 = vrot.slane %v584, 4
        %v591 = vshrl.u32 %v466, 16
        %v593 = vrot.slane %v591, 7
        %v594 = vshll.u32 %v466, 16
        %v596 = vor.u32 %v593, %v594
        %v597 = vrot.slane %v593, 4
        %v599 = vshrl.u32 %v467, 16
        %v601 = vrot.slane %v599, 7
        %v602 = vshll.u32 %v467, 16
        %v604 = vor.u32 %v601, %v602
        %v605 = vsel %vm487, %v597, %v604
        %v606 = vrot.slane %v601, 4
        %v608 = vshrl.u32 %v468, 16
        %v610 = vrot.slane %v608, 7
        %v611 = vshll.u32 %v468, 16
        %v613 = vor.u32 %v610, %v611
        %v614 = vrot.slane %v610, 4
        %v616 = vshrl.u32 %v469, 16
        %v618 = vrot.slane %v616, 7
        %v619 = vshll.u32 %v469, 16
        %v621 = vor.u32 %v618, %v619
        %v622 = vsel %vm487, %v614, %v621
        %v623 = vrot.slane %v618, 4
        %v625 = vshrl.u32 %v470, 16
        %v627 = vrot.slane %v625, 7
        %v628 = vshll.u32 %v470, 16
        %v630 = vor.u32 %v627, %v628
        %v631 = vrot.slane %v627, 4
        %v633 = vshrl.u32 %v471, 16
        %v635 = vrot.slane %v633, 7
        %v636 = vshll.u32 %v471, 16
        %v638 = vor.u32 %v635, %v636
        %v639 = vsel %vm487, %v631, %v638
        %v640 = vrot.slane %v635, 4
        %v642 = vshrl.u32 %v472, 16
        %v644 = vrot.slane %v642, 7
        %v645 = vshll.u32 %v472, 16
        %v647 = vor.u32 %v644, %v645
        %v648 = vrot.slane %v644, 4
        %v650 = vshrl.u32 %v473, 16
        %v652 = vrot.slane %v650, 7
        %v653 = vshll.u32 %v473, 16
        %v655 = vor.u32 %v652, %v653
        %v656 = vsel %vm487, %v648, %v655
        %v657 = vrot.slane %v652, 4
        %v659 = vshrl.u32 %v474, 16
        %v661 = vrot.slane %v659, 7
        %v662 = vshll.u32 %v474, 16
        %v664 = vor.u32 %v661, %v662
        %v665 = vrot.slane %v661, 4
        %v667 = vshrl.u32 %v475, 16
        %v669 = vrot.slane %v667, 7
        %v670 = vshll.u32 %v475, 16
        %v672 = vor.u32 %v669, %v670
        %v673 = vsel %vm487, %v665, %v672
        %v674 = vrot.slane %v669, 4
        %v676 = vshrl.u32 %v476, 16
        %v678 = vrot.slane %v676, 7
        %v679 = vshll.u32 %v476, 16
        %v681 = vor.u32 %v678, %v679
        %v682 = vrot.slane %v678, 4
        %v684 = vshrl.u32 %v477, 16
        %v686 = vrot.slane %v684, 7
        %v687 = vshll.u32 %v477, 16
        %v689 = vor.u32 %v686, %v687
        %v690 = vsel %vm487, %v682, %v689
        %v691 = vrot.slane %v686, 4
        %v693 = vshrl.u32 %v478, 16
        %v695 = vrot.slane %v693, 7
        %v696 = vshll.u32 %v478, 16
        %v698 = vor.u32 %v695, %v696
        %v699 = vrot.slane %v695, 4
        %v701 = vshrl.u32 %v479, 16
        %v703 = vrot.slane %v701, 7
        %v704 = vshll.u32 %v479, 16
        %v706 = vor.u32 %v703, %v704
        %v707 = vsel %vm487, %v699, %v706
        %v708 = vrot.slane %v703, 4
        %v710 = vshrl.u32 %v480, 16
        %v712 = vrot.slane %v710, 7
        %v713 = vshll.u32 %v480, 16
        %v715 = vor.u32 %v712, %v713
        %v716 = vrot.slane %v712, 4
        %v718 = vshrl.u32 %v481, 16
        %v720 = vrot.slane %v718, 7
        %v721 = vshll.u32 %v481, 16
        %v723 = vor.u32 %v720, %v721
        %v724 = vsel %vm487, %v716, %v723
        %v725 = vrot.slane %v720, 4
        %v727 = vshrl.u32 %v482, 16
        %v729 = vrot.slane %v727, 7
        %v730 = vshll.u32 %v482, 16
        %v732 = vor.u32 %v729, %v730
        %v733 = vrot.slane %v729, 4
        %v735 = vshrl.u32 %v483, 16
        %v737 = vrot.slane %v735, 7
        %v738 = vshll.u32 %v483, 16
        %v740 = vor.u32 %v737, %v738
        %v741 = vsel %vm487, %v733, %v740
        %v742 = vrot.slane %v737, 4
        %v744 = vshrl.u32 %v484, 16
        %v746 = vrot.slane %v744, 7
        %v747 = vshll.u32 %v484, 16
        %v749 = vor.u32 %v746, %v747
        %v750 = vrot.slane %v746, 4
        %v752 = vshrl.u32 %v485, 16
        %v754 = vrot.slane %v752, 7
        %v755 = vshll.u32 %v485, 16
        %v757 = vor.u32 %v754, %v755
        %v758 = vsel %vm487, %v750, %v757
        %v759 = vrot.slane %v754, 4
        %s808 = scalar_lea.vmem [#allocation2], 12
        %vm809 = vcmask 257024
        %vm810 = vmand %vm809, %vm398
        %v811 = vld [vmem:[%s808] sm:$0xf]
        %v812 = vsel %vm810, %v494, %v811
        %813 = vst [vmem:[%s808] sm:$0xf] %v812
        %814 = vst.msk [vmem:[%s808 + $0x4] sm:$0xf] %vm332, %v503
        %v815 = vld [vmem:[%s808 + $0x8] sm:$0x1]
        %v816 = vsel %vm343, %v504, %v815
        %817 = vst [vmem:[%s808 + $0x8] sm:$0x1] %v816
        %v818 = vld [vmem:[%s808 + $0xc] sm:$0xf]
        %v819 = vsel %vm810, %v511, %v818
        %820 = vst [vmem:[%s808 + $0xc] sm:$0xf] %v819
        %821 = vst.msk [vmem:[%s808 + $0x10] sm:$0xf] %vm332, %v520
        %v822 = vld [vmem:[%s808 + $0x14] sm:$0x1]
        %v823 = vsel %vm343, %v521, %v822
        %824 = vst [vmem:[%s808 + $0x14] sm:$0x1] %v823
        %v825 = vld [vmem:[%s808 + $0x18] sm:$0xf]
        %v826 = vsel %vm810, %v528, %v825
        %827 = vst [vmem:[%s808 + $0x18] sm:$0xf] %v826
        %828 = vst.msk [vmem:[%s808 + $0x1c] sm:$0xf] %vm332, %v537
        %v829 = vld [vmem:[%s808 + $0x20] sm:$0x1]
        %v830 = vsel %vm343, %v538, %v829
        %831 = vst [vmem:[%s808 + $0x20] sm:$0x1] %v830
        %v832 = vld [vmem:[%s808 + $0x24] sm:$0xf]
        %v833 = vsel %vm810, %v545, %v832
        %834 = vst [vmem:[%s808 + $0x24] sm:$0xf] %v833
        %835 = vst.msk [vmem:[%s808 + $0x28] sm:$0xf] %vm332, %v554
        %v836 = vld [vmem:[%s808 + $0x2c] sm:$0x1]
        %v837 = vsel %vm343, %v555, %v836
        %838 = vst [vmem:[%s808 + $0x2c] sm:$0x1] %v837
        %v839 = vld [vmem:[%s808 + $0x30] sm:$0xf]
        %v840 = vsel %vm810, %v562, %v839
        %841 = vst [vmem:[%s808 + $0x30] sm:$0xf] %v840
        %842 = vst.msk [vmem:[%s808 + $0x34] sm:$0xf] %vm332, %v571
        %v843 = vld [vmem:[%s808 + $0x38] sm:$0x1]
        %v844 = vsel %vm343, %v572, %v843
        %845 = vst [vmem:[%s808 + $0x38] sm:$0x1] %v844
        %v846 = vld [vmem:[%s808 + $0x3c] sm:$0xf]
        %v847 = vsel %vm810, %v579, %v846
        %848 = vst [vmem:[%s808 + $0x3c] sm:$0xf] %v847
        %849 = vst.msk [vmem:[%s808 + $0x40] sm:$0xf] %vm332, %v588
        %v850 = vld [vmem:[%s808 + $0x44] sm:$0x1]
        %v851 = vsel %vm343, %v589, %v850
        %852 = vst [vmem:[%s808 + $0x44] sm:$0x1] %v851
        %v853 = vld [vmem:[%s808 + $0x48] sm:$0xf]
        %v854 = vsel %vm810, %v596, %v853
        %855 = vst [vmem:[%s808 + $0x48] sm:$0xf] %v854
        %856 = vst.msk [vmem:[%s808 + $0x4c] sm:$0xf] %vm332, %v605
        %v857 = vld [vmem:[%s808 + $0x50] sm:$0x1]
        %v858 = vsel %vm343, %v606, %v857
        %859 = vst [vmem:[%s808 + $0x50] sm:$0x1] %v858
        %v860 = vld [vmem:[%s808 + $0x54] sm:$0xf]
        %v861 = vsel %vm810, %v613, %v860
        %862 = vst [vmem:[%s808 + $0x54] sm:$0xf] %v861
        %863 = vst.msk [vmem:[%s808 + $0x58] sm:$0xf] %vm332, %v622
        %v864 = vld [vmem:[%s808 + $0x5c] sm:$0x1]
        %v865 = vsel %vm343, %v623, %v864
        %866 = vst [vmem:[%s808 + $0x5c] sm:$0x1] %v865
        %v867 = vld [vmem:[%s808 + $0x60] sm:$0xf]
        %v868 = vsel %vm810, %v630, %v867
        %869 = vst [vmem:[%s808 + $0x60] sm:$0xf] %v868
        %870 = vst.msk [vmem:[%s808 + $0x64] sm:$0xf] %vm332, %v639
        %v871 = vld [vmem:[%s808 + $0x68] sm:$0x1]
        %v872 = vsel %vm343, %v640, %v871
        %873 = vst [vmem:[%s808 + $0x68] sm:$0x1] %v872
        %v874 = vld [vmem:[%s808 + $0x6c] sm:$0xf]
        %v875 = vsel %vm810, %v647, %v874
        %876 = vst [vmem:[%s808 + $0x6c] sm:$0xf] %v875
        %877 = vst.msk [vmem:[%s808 + $0x70] sm:$0xf] %vm332, %v656
        %v878 = vld [vmem:[%s808 + $0x74] sm:$0x1]
        %v879 = vsel %vm343, %v657, %v878
        %880 = vst [vmem:[%s808 + $0x74] sm:$0x1] %v879
        %v881 = vld [vmem:[%s808 + $0x78] sm:$0xf]
        %v882 = vsel %vm810, %v664, %v881
        %883 = vst [vmem:[%s808 + $0x78] sm:$0xf] %v882
        %884 = vst.msk [vmem:[%s808 + $0x7c] sm:$0xf] %vm332, %v673
        %v885 = vld [vmem:[%s808 + $0x80] sm:$0x1]
        %v886 = vsel %vm343, %v674, %v885
        %887 = vst [vmem:[%s808 + $0x80] sm:$0x1] %v886
        %v888 = vld [vmem:[%s808 + $0x84] sm:$0xf]
        %v889 = vsel %vm810, %v681, %v888
        %890 = vst [vmem:[%s808 + $0x84] sm:$0xf] %v889
        %891 = vst.msk [vmem:[%s808 + $0x88] sm:$0xf] %vm332, %v690
        %v892 = vld [vmem:[%s808 + $0x8c] sm:$0x1]
        %v893 = vsel %vm343, %v691, %v892
        %894 = vst [vmem:[%s808 + $0x8c] sm:$0x1] %v893
        %v895 = vld [vmem:[%s808 + $0x90] sm:$0xf]
        %v896 = vsel %vm810, %v698, %v895
        %897 = vst [vmem:[%s808 + $0x90] sm:$0xf] %v896
        %898 = vst.msk [vmem:[%s808 + $0x94] sm:$0xf] %vm332, %v707
        %v899 = vld [vmem:[%s808 + $0x98] sm:$0x1]
        %v900 = vsel %vm343, %v708, %v899
        %901 = vst [vmem:[%s808 + $0x98] sm:$0x1] %v900
        %v902 = vld [vmem:[%s808 + $0x9c] sm:$0xf]
        %v903 = vsel %vm810, %v715, %v902
        %904 = vst [vmem:[%s808 + $0x9c] sm:$0xf] %v903
        %905 = vst.msk [vmem:[%s808 + $0xa0] sm:$0xf] %vm332, %v724
        %v906 = vld [vmem:[%s808 + $0xa4] sm:$0x1]
        %v907 = vsel %vm343, %v725, %v906
        %908 = vst [vmem:[%s808 + $0xa4] sm:$0x1] %v907
        %v909 = vld [vmem:[%s808 + $0xa8] sm:$0xf]
        %v910 = vsel %vm810, %v732, %v909
        %911 = vst [vmem:[%s808 + $0xa8] sm:$0xf] %v910
        %912 = vst.msk [vmem:[%s808 + $0xac] sm:$0xf] %vm332, %v741
        %v913 = vld [vmem:[%s808 + $0xb0] sm:$0x1]
        %v914 = vsel %vm343, %v742, %v913
        %915 = vst [vmem:[%s808 + $0xb0] sm:$0x1] %v914
        %v916 = vld [vmem:[%s808 + $0xb4] sm:$0xf]
        %v917 = vsel %vm810, %v749, %v916
        %918 = vst [vmem:[%s808 + $0xb4] sm:$0xf] %v917
        %919 = vst.msk [vmem:[%s808 + $0xb8] sm:$0xf] %vm332, %v758
        %v920 = vld [vmem:[%s808 + $0xbc] sm:$0x1]
        %v921 = vsel %vm343, %v759, %v920
        %922 = vst [vmem:[%s808 + $0xbc] sm:$0x1] %v921
        %v923 = vld [vmem:[#allocation2] sm:$0xf]
        %v924 = vld [vmem:[#allocation2 + $0x4] sm:$0xf]
        %v925 = vld [vmem:[#allocation2 + $0xc] sm:$0xf]
        %v926 = vld [vmem:[#allocation2 + $0x10] sm:$0xf]
        %v927 = vld [vmem:[#allocation2 + $0x18] sm:$0xf]
        %v928 = vld [vmem:[#allocation2 + $0x1c] sm:$0xf]
        %v929 = vld [vmem:[#allocation2 + $0x24] sm:$0xf]
        %v930 = vld [vmem:[#allocation2 + $0x28] sm:$0xf]
        %v931 = vld [vmem:[#allocation2 + $0x30] sm:$0xf]
        %v932 = vld [vmem:[#allocation2 + $0x34] sm:$0xf]
        %v933 = vld [vmem:[#allocation2 + $0x3c] sm:$0xf]
        %v934 = vld [vmem:[#allocation2 + $0x40] sm:$0xf]
        %v935 = vld [vmem:[#allocation2 + $0x48] sm:$0xf]
        %v936 = vld [vmem:[#allocation2 + $0x4c] sm:$0xf]
        %v937 = vld [vmem:[#allocation2 + $0x54] sm:$0xf]
        %v938 = vld [vmem:[#allocation2 + $0x58] sm:$0xf]
        %v939 = vld [vmem:[#allocation2 + $0x60] sm:$0xf]
        %v940 = vld [vmem:[#allocation2 + $0x64] sm:$0xf]
        %v941 = vld [vmem:[#allocation2 + $0x6c] sm:$0xf]
        %v942 = vld [vmem:[#allocation2 + $0x70] sm:$0xf]
        %v943 = vld [vmem:[#allocation2 + $0x78] sm:$0xf]
        %v944 = vld [vmem:[#allocation2 + $0x7c] sm:$0xf]
        %v945 = vld [vmem:[#allocation2 + $0x84] sm:$0xf]
        %v946 = vld [vmem:[#allocation2 + $0x88] sm:$0xf]
        %v947 = vld [vmem:[#allocation2 + $0x90] sm:$0xf]
        %v948 = vld [vmem:[#allocation2 + $0x94] sm:$0xf]
        %v949 = vld [vmem:[#allocation2 + $0x9c] sm:$0xf]
        %v950 = vld [vmem:[#allocation2 + $0xa0] sm:$0xf]
        %v951 = vld [vmem:[#allocation2 + $0xa8] sm:$0xf]
        %v952 = vld [vmem:[#allocation2 + $0xac] sm:$0xf]
        %v953 = vld [vmem:[#allocation2 + $0xb4] sm:$0xf]
        %v954 = vld [vmem:[#allocation2 + $0xb8] sm:$0xf]
        %v987 = vunpack.c.l.b16 %v923
        %v988 = vunpack.c.l.b16 %v924
        %v989 = vunpack.c.l.b16 %v925
        %v990 = vunpack.c.l.b16 %v926
        %v991 = vunpack.c.l.b16 %v927
        %v992 = vunpack.c.l.b16 %v928
        %v993 = vunpack.c.l.b16 %v929
        %v994 = vunpack.c.l.b16 %v930
        %v995 = vunpack.c.l.b16 %v931
        %v996 = vunpack.c.l.b16 %v932
        %v997 = vunpack.c.l.b16 %v933
        %v998 = vunpack.c.l.b16 %v934
        %v999 = vunpack.c.l.b16 %v935
        %v1000 = vunpack.c.l.b16 %v936
        %v1001 = vunpack.c.l.b16 %v937
        %v1002 = vunpack.c.l.b16 %v938
        %v1003 = vunpack.c.l.b16 %v939
        %v1004 = vunpack.c.l.b16 %v940
        %v1005 = vunpack.c.l.b16 %v941
        %v1006 = vunpack.c.l.b16 %v942
        %v1007 = vunpack.c.l.b16 %v943
        %v1008 = vunpack.c.l.b16 %v944
        %v1009 = vunpack.c.l.b16 %v945
        %v1010 = vunpack.c.l.b16 %v946
        %v1011 = vunpack.c.l.b16 %v947
        %v1012 = vunpack.c.l.b16 %v948
        %v1013 = vunpack.c.l.b16 %v949
        %v1014 = vunpack.c.l.b16 %v950
        %v1015 = vunpack.c.l.b16 %v951
        %v1016 = vunpack.c.l.b16 %v952
        %v1017 = vunpack.c.l.b16 %v953
        %v1018 = vunpack.c.l.b16 %v954
        %v1019 = vpack.c.b16 %v988, %v987
        %v1020 = vpack.c.b16 %v990, %v989
        %v1021 = vpack.c.b16 %v992, %v991
        %v1022 = vpack.c.b16 %v994, %v993
        %v1023 = vpack.c.b16 %v996, %v995
        %v1024 = vpack.c.b16 %v998, %v997
        %v1025 = vpack.c.b16 %v1000, %v999
        %v1026 = vpack.c.b16 %v1002, %v1001
        %v1027 = vpack.c.b16 %v1004, %v1003
        %v1028 = vpack.c.b16 %v1006, %v1005
        %v1029 = vpack.c.b16 %v1008, %v1007
        %v1030 = vpack.c.b16 %v1010, %v1009
        %v1031 = vpack.c.b16 %v1012, %v1011
        %v1032 = vpack.c.b16 %v1014, %v1013
        %v1033 = vpack.c.b16 %v1016, %v1015
        %v1034 = vpack.c.b16 %v1018, %v1017
        %vm1051 = vcmask 261120
        %1052 = vst.msk [vmem:[#allocation3] sm:$0xff] %vm1051, %v1019
        %1053 = vst.msk [vmem:[#allocation3 + $0x18] sm:$0xff] %vm1051, %v1020
        %1054 = vst.msk [vmem:[#allocation3 + $0x30] sm:$0xff] %vm1051, %v1021
        %1055 = vst.msk [vmem:[#allocation3 + $0x48] sm:$0xff] %vm1051, %v1022
        %1056 = vst.msk [vmem:[#allocation3 + $0x60] sm:$0xff] %vm1051, %v1023
        %1057 = vst.msk [vmem:[#allocation3 + $0x78] sm:$0xff] %vm1051, %v1024
        %1058 = vst.msk [vmem:[#allocation3 + $0x90] sm:$0xff] %vm1051, %v1025
        %1059 = vst.msk [vmem:[#allocation3 + $0xa8] sm:$0xff] %vm1051, %v1026
        %1060 = vst.msk [vmem:[#allocation3 + $0xc0] sm:$0xff] %vm1051, %v1027
        %1061 = vst.msk [vmem:[#allocation3 + $0xd8] sm:$0xff] %vm1051, %v1028
        %1062 = vst.msk [vmem:[#allocation3 + $0xf0] sm:$0xff] %vm1051, %v1029
        %1063 = vst.msk [vmem:[#allocation3 + $0x108] sm:$0xff] %vm1051, %v1030
        %1064 = vst.msk [vmem:[#allocation3 + $0x120] sm:$0xff] %vm1051, %v1031
        %1065 = vst.msk [vmem:[#allocation3 + $0x138] sm:$0xff] %vm1051, %v1032
        %1066 = vst.msk [vmem:[#allocation3 + $0x150] sm:$0xff] %vm1051, %v1033
        %1067 = vst.msk [vmem:[#allocation3 + $0x168] sm:$0xff] %vm1051, %v1034
        %v1068 = vld [vmem:[#allocation2] sm:$0xf]
        %v1069 = vld [vmem:[#allocation2 + $0x4] sm:$0xf]
        %v1070 = vld [vmem:[#allocation2 + $0x8] sm:$0x1]
        %v1071 = vld [vmem:[#allocation2 + $0xc] sm:$0xf]
        %v1072 = vld [vmem:[#allocation2 + $0x10] sm:$0xf]
        %v1073 = vld [vmem:[#allocation2 + $0x14] sm:$0x1]
        %v1074 = vld [vmem:[#allocation2 + $0x18] sm:$0xf]
        %v1075 = vld [vmem:[#allocation2 + $0x1c] sm:$0xf]
        %v1076 = vld [vmem:[#allocation2 + $0x20] sm:$0x1]
        %v1077 = vld [vmem:[#allocation2 + $0x24] sm:$0xf]
        %v1078 = vld [vmem:[#allocation2 + $0x28] sm:$0xf]
        %v1079 = vld [vmem:[#allocation2 + $0x2c] sm:$0x1]
        %v1080 = vld [vmem:[#allocation2 + $0x30] sm:$0xf]
        %v1081 = vld [vmem:[#allocation2 + $0x34] sm:$0xf]
        %v1082 = vld [vmem:[#allocation2 + $0x38] sm:$0x1]
        %v1083 = vld [vmem:[#allocation2 + $0x3c] sm:$0xf]
        %v1084 = vld [vmem:[#allocation2 + $0x40] sm:$0xf]
        %v1085 = vld [vmem:[#allocation2 + $0x44] sm:$0x1]
        %v1086 = vld [vmem:[#allocation2 + $0x48] sm:$0xf]
        %v1087 = vld [vmem:[#allocation2 + $0x4c] sm:$0xf]
        %v1088 = vld [vmem:[#allocation2 + $0x50] sm:$0x1]
        %v1089 = vld [vmem:[#allocation2 + $0x54] sm:$0xf]
        %v1090 = vld [vmem:[#allocation2 + $0x58] sm:$0xf]
        %v1091 = vld [vmem:[#allocation2 + $0x5c] sm:$0x1]
        %v1092 = vld [vmem:[#allocation2 + $0x60] sm:$0xf]
        %v1093 = vld [vmem:[#allocation2 + $0x64] sm:$0xf]
        %v1094 = vld [vmem:[#allocation2 + $0x68] sm:$0x1]
        %v1095 = vld [vmem:[#allocation2 + $0x6c] sm:$0xf]
        %v1096 = vld [vmem:[#allocation2 + $0x70] sm:$0xf]
        %v1097 = vld [vmem:[#allocation2 + $0x74] sm:$0x1]
        %v1098 = vld [vmem:[#allocation2 + $0x78] sm:$0xf]
        %v1099 = vld [vmem:[#allocation2 + $0x7c] sm:$0xf]
        %v1100 = vld [vmem:[#allocation2 + $0x80] sm:$0x1]
        %v1101 = vld [vmem:[#allocation2 + $0x84] sm:$0xf]
        %v1102 = vld [vmem:[#allocation2 + $0x88] sm:$0xf]
        %v1103 = vld [vmem:[#allocation2 + $0x8c] sm:$0x1]
        %v1104 = vld [vmem:[#allocation2 + $0x90] sm:$0xf]
        %v1105 = vld [vmem:[#allocation2 + $0x94] sm:$0xf]
        %v1106 = vld [vmem:[#allocation2 + $0x98] sm:$0x1]
        %v1107 = vld [vmem:[#allocation2 + $0x9c] sm:$0xf]
        %v1108 = vld [vmem:[#allocation2 + $0xa0] sm:$0xf]
        %v1109 = vld [vmem:[#allocation2 + $0xa4] sm:$0x1]
        %v1110 = vld [vmem:[#allocation2 + $0xa8] sm:$0xf]
        %v1111 = vld [vmem:[#allocation2 + $0xac] sm:$0xf]
        %v1112 = vld [vmem:[#allocation2 + $0xb0] sm:$0x1]
        %v1113 = vld [vmem:[#allocation2 + $0xb4] sm:$0xf]
        %v1114 = vld [vmem:[#allocation2 + $0xb8] sm:$0xf]
        %v1115 = vld [vmem:[#allocation2 + $0xbc] sm:$0x1]
        %v1164 = vunpack.c.l.b16 %v1068
        %v1165 = vunpack.c.l.b16 %v1069
        %v1166 = vunpack.c.l.b16 %v1070
        %v1167 = vunpack.c.l.b16 %v1071
        %v1168 = vunpack.c.l.b16 %v1072
        %v1169 = vunpack.c.l.b16 %v1073
        %v1170 = vunpack.c.l.b16 %v1074
        %v1171 = vunpack.c.l.b16 %v1075
        %v1172 = vunpack.c.l.b16 %v1076
        %v1173 = vunpack.c.l.b16 %v1077
        %v1174 = vunpack.c.l.b16 %v1078
        %v1175 = vunpack.c.l.b16 %v1079
        %v1176 = vunpack.c.l.b16 %v1080
        %v1177 = vunpack.c.l.b16 %v1081
        %v1178 = vunpack.c.l.b16 %v1082
        %v1179 = vunpack.c.l.b16 %v1083
        %v1180 = vunpack.c.l.b16 %v1084
        %v1181 = vunpack.c.l.b16 %v1085
        %v1182 = vunpack.c.l.b16 %v1086
        %v1183 = vunpack.c.l.b16 %v1087
        %v1184 = vunpack.c.l.b16 %v1088
        %v1185 = vunpack.c.l.b16 %v1089
        %v1186 = vunpack.c.l.b16 %v1090
        %v1187 = vunpack.c.l.b16 %v1091
        %v1188 = vunpack.c.l.b16 %v1092
        %v1189 = vunpack.c.l.b16 %v1093
        %v1190 = vunpack.c.l.b16 %v1094
        %v1191 = vunpack.c.l.b16 %v1095
        %v1192 = vunpack.c.l.b16 %v1096
        %v1193 = vunpack.c.l.b16 %v1097
        %v1194 = vunpack.c.l.b16 %v1098
        %v1195 = vunpack.c.l.b16 %v1099
        %v1196 = vunpack.c.l.b16 %v1100
        %v1197 = vunpack.c.l.b16 %v1101
        %v1198 = vunpack.c.l.b16 %v1102
        %v1199 = vunpack.c.l.b16 %v1103
        %v1200 = vunpack.c.l.b16 %v1104
        %v1201 = vunpack.c.l.b16 %v1105
        %v1202 = vunpack.c.l.b16 %v1106
        %v1203 = vunpack.c.l.b16 %v1107
        %v1204 = vunpack.c.l.b16 %v1108
        %v1205 = vunpack.c.l.b16 %v1109
        %v1206 = vunpack.c.l.b16 %v1110
        %v1207 = vunpack.c.l.b16 %v1111
        %v1208 = vunpack.c.l.b16 %v1112
        %v1209 = vunpack.c.l.b16 %v1113
        %v1210 = vunpack.c.l.b16 %v1114
        %v1211 = vunpack.c.l.b16 %v1115
        %v1212 = vpack.c.b16 %v1165, %v1164
        %v1213 = vpack.c.b16 %v1166, %v1166
        %v1214 = vpack.c.b16 %v1168, %v1167
        %v1215 = vpack.c.b16 %v1169, %v1169
        %v1216 = vpack.c.b16 %v1171, %v1170
        %v1217 = vpack.c.b16 %v1172, %v1172
        %v1218 = vpack.c.b16 %v1174, %v1173
        %v1219 = vpack.c.b16 %v1175, %v1175
        %v1220 = vpack.c.b16 %v1177, %v1176
        %v1221 = vpack.c.b16 %v1178, %v1178
        %v1222 = vpack.c.b16 %v1180, %v1179
        %v1223 = vpack.c.b16 %v1181, %v1181
        %v1224 = vpack.c.b16 %v1183, %v1182
        %v1225 = vpack.c.b16 %v1184, %v1184
        %v1226 = vpack.c.b16 %v1186, %v1185
        %v1227 = vpack.c.b16 %v1187, %v1187
        %v1228 = vpack.c.b16 %v1189, %v1188
        %v1229 = vpack.c.b16 %v1190, %v1190
        %v1230 = vpack.c.b16 %v1192, %v1191
        %v1231 = vpack.c.b16 %v1193, %v1193
        %v1232 = vpack.c.b16 %v1195, %v1194
        %v1233 = vpack.c.b16 %v1196, %v1196
        %v1234 = vpack.c.b16 %v1198, %v1197
        %v1235 = vpack.c.b16 %v1199, %v1199
        %v1236 = vpack.c.b16 %v1201, %v1200
        %v1237 = vpack.c.b16 %v1202, %v1202
        %v1238 = vpack.c.b16 %v1204, %v1203
        %v1239 = vpack.c.b16 %v1205, %v1205
        %v1240 = vpack.c.b16 %v1207, %v1206
        %v1241 = vpack.c.b16 %v1208, %v1208
        %v1242 = vpack.c.b16 %v1210, %v1209
        %v1243 = vpack.c.b16 %v1211, %v1211
        %vm1244 = vsmask.f32 7424
        %v1246 = vshrl.u32 %v1212, 16
        %v1248 = vshll.u32 %v1212, 16
        %v1250 = vrot.slane %v1248, 1
        %v1251 = vor.u32 %v1246, %v1250
        %v1253 = vshll.u32 %v1213, 16
        %v1255 = vrot.slane %v1253, 1
        %v1256 = vsel %vm1244, %v1251, %v1255
        %v1258 = vshrl.u32 %v1214, 16
        %v1260 = vshll.u32 %v1214, 16
        %v1262 = vrot.slane %v1260, 1
        %v1263 = vor.u32 %v1258, %v1262
        %v1265 = vshll.u32 %v1215, 16
        %v1267 = vrot.slane %v1265, 1
        %v1268 = vsel %vm1244, %v1263, %v1267
        %v1270 = vshrl.u32 %v1216, 16
        %v1272 = vshll.u32 %v1216, 16
        %v1274 = vrot.slane %v1272, 1
        %v1275 = vor.u32 %v1270, %v1274
        %v1277 = vshll.u32 %v1217, 16
        %v1279 = vrot.slane %v1277, 1
        %v1280 = vsel %vm1244, %v1275, %v1279
        %v1282 = vshrl.u32 %v1218, 16
        %v1284 = vshll.u32 %v1218, 16
        %v1286 = vrot.slane %v1284, 1
        %v1287 = vor.u32 %v1282, %v1286
        %v1289 = vshll.u32 %v1219, 16
        %v1291 = vrot.slane %v1289, 1
        %v1292 = vsel %vm1244, %v1287, %v1291
        %v1294 = vshrl.u32 %v1220, 16
        %v1296 = vshll.u32 %v1220, 16
        %v1298 = vrot.slane %v1296, 1
        %v1299 = vor.u32 %v1294, %v1298
        %v1301 = vshll.u32 %v1221, 16
        %v1303 = vrot.slane %v1301, 1
        %v1304 = vsel %vm1244, %v1299, %v1303
        %v1306 = vshrl.u32 %v1222, 16
        %v1308 = vshll.u32 %v1222, 16
        %v1310 = vrot.slane %v1308, 1
        %v1311 = vor.u32 %v1306, %v1310
        %v1313 = vshll.u32 %v1223, 16
        %v1315 = vrot.slane %v1313, 1
        %v1316 = vsel %vm1244, %v1311, %v1315
        %v1318 = vshrl.u32 %v1224, 16
        %v1320 = vshll.u32 %v1224, 16
        %v1322 = vrot.slane %v1320, 1
        %v1323 = vor.u32 %v1318, %v1322
        %v1325 = vshll.u32 %v1225, 16
        %v1327 = vrot.slane %v1325, 1
        %v1328 = vsel %vm1244, %v1323, %v1327
        %v1330 = vshrl.u32 %v1226, 16
        %v1332 = vshll.u32 %v1226, 16
        %v1334 = vrot.slane %v1332, 1
        %v1335 = vor.u32 %v1330, %v1334
        %v1337 = vshll.u32 %v1227, 16
        %v1339 = vrot.slane %v1337, 1
        %v1340 = vsel %vm1244, %v1335, %v1339
        %v1342 = vshrl.u32 %v1228, 16
        %v1344 = vshll.u32 %v1228, 16
        %v1346 = vrot.slane %v1344, 1
        %v1347 = vor.u32 %v1342, %v1346
        %v1349 = vshll.u32 %v1229, 16
        %v1351 = vrot.slane %v1349, 1
        %v1352 = vsel %vm1244, %v1347, %v1351
        %v1354 = vshrl.u32 %v1230, 16
        %v1356 = vshll.u32 %v1230, 16
        %v1358 = vrot.slane %v1356, 1
        %v1359 = vor.u32 %v1354, %v1358
        %v1361 = vshll.u32 %v1231, 16
        %v1363 = vrot.slane %v1361, 1
        %v1364 = vsel %vm1244, %v1359, %v1363
        %v1366 = vshrl.u32 %v1232, 16
        %v1368 = vshll.u32 %v1232, 16
        %v1370 = vrot.slane %v1368, 1
        %v1371 = vor.u32 %v1366, %v1370
        %v1373 = vshll.u32 %v1233, 16
        %v1375 = vrot.slane %v1373, 1
        %v1376 = vsel %vm1244, %v1371, %v1375
        %v1378 = vshrl.u32 %v1234, 16
        %v1380 = vshll.u32 %v1234, 16
        %v1382 = vrot.slane %v1380, 1
        %v1383 = vor.u32 %v1378, %v1382
        %v1385 = vshll.u32 %v1235, 16
        %v1387 = vrot.slane %v1385, 1
        %v1388 = vsel %vm1244, %v1383, %v1387
        %v1390 = vshrl.u32 %v1236, 16
        %v1392 = vshll.u32 %v1236, 16
        %v1394 = vrot.slane %v1392, 1
        %v1395 = vor.u32 %v1390, %v1394
        %v1397 = vshll.u32 %v1237, 16
        %v1399 = vrot.slane %v1397, 1
        %v1400 = vsel %vm1244, %v1395, %v1399
        %v1402 = vshrl.u32 %v1238, 16
        %v1404 = vshll.u32 %v1238, 16
        %v1406 = vrot.slane %v1404, 1
        %v1407 = vor.u32 %v1402, %v1406
        %v1409 = vshll.u32 %v1239, 16
        %v1411 = vrot.slane %v1409, 1
        %v1412 = vsel %vm1244, %v1407, %v1411
        %v1414 = vshrl.u32 %v1240, 16
        %v1416 = vshll.u32 %v1240, 16
        %v1418 = vrot.slane %v1416, 1
        %v1419 = vor.u32 %v1414, %v1418
        %v1421 = vshll.u32 %v1241, 16
        %v1423 = vrot.slane %v1421, 1
        %v1424 = vsel %vm1244, %v1419, %v1423
        %v1426 = vshrl.u32 %v1242, 16
        %v1428 = vshll.u32 %v1242, 16
        %v1430 = vrot.slane %v1428, 1
        %v1431 = vor.u32 %v1426, %v1430
        %v1433 = vshll.u32 %v1243, 16
        %v1435 = vrot.slane %v1433, 1
        %v1436 = vsel %vm1244, %v1431, %v1435
        %1437 = vrot.lane.b32.xlu0 %v1256, 32
        %v1438 = vpop.permute.xlu0 %1437
        %1439 = vrot.lane.b32.xlu0 %v1268, 32
        %v1440 = vpop.permute.xlu0 %1439
        %1441 = vrot.lane.b32.xlu0 %v1280, 32
        %v1442 = vpop.permute.xlu0 %1441
        %1443 = vrot.lane.b32.xlu0 %v1292, 32
        %v1444 = vpop.permute.xlu0 %1443
        %1445 = vrot.lane.b32.xlu0 %v1304, 32
        %v1446 = vpop.permute.xlu0 %1445
        %1447 = vrot.lane.b32.xlu0 %v1316, 32
        %v1448 = vpop.permute.xlu0 %1447
        %1449 = vrot.lane.b32.xlu0 %v1328, 32
        %v1450 = vpop.permute.xlu0 %1449
        %1451 = vrot.lane.b32.xlu0 %v1340, 32
        %v1452 = vpop.permute.xlu0 %1451
        %1453 = vrot.lane.b32.xlu0 %v1352, 32
        %v1454 = vpop.permute.xlu0 %1453
        %1455 = vrot.lane.b32.xlu0 %v1364, 32
        %v1456 = vpop.permute.xlu0 %1455
        %1457 = vrot.lane.b32.xlu0 %v1376, 32
        %v1458 = vpop.permute.xlu0 %1457
        %1459 = vrot.lane.b32.xlu0 %v1388, 32
        %v1460 = vpop.permute.xlu0 %1459
        %1461 = vrot.lane.b32.xlu0 %v1400, 32
        %v1462 = vpop.permute.xlu0 %1461
        %1463 = vrot.lane.b32.xlu0 %v1412, 32
        %v1464 = vpop.permute.xlu0 %1463
        %1465 = vrot.lane.b32.xlu0 %v1424, 32
        %v1466 = vpop.permute.xlu0 %1465
        %1467 = vrot.lane.b32.xlu0 %v1436, 32
        %v1468 = vpop.permute.xlu0 %1467
        %vm1485 = vcmask 523520
        %1486 = vst.msk [vmem:[#allocation3] sm:$0xff] %vm1485, %v1438
        %1487 = vst.msk [vmem:[#allocation3 + $0x18] sm:$0xff] %vm1485, %v1440
        %1488 = vst.msk [vmem:[#allocation3 + $0x30] sm:$0xff] %vm1485, %v1442
        %1489 = vst.msk [vmem:[#allocation3 + $0x48] sm:$0xff] %vm1485, %v1444
        %1490 = vst.msk [vmem:[#allocation3 + $0x60] sm:$0xff] %vm1485, %v1446
        %1491 = vst.msk [vmem:[#allocation3 + $0x78] sm:$0xff] %vm1485, %v1448
        %1492 = vst.msk [vmem:[#allocation3 + $0x90] sm:$0xff] %vm1485, %v1450
        %1493 = vst.msk [vmem:[#allocation3 + $0xa8] sm:$0xff] %vm1485, %v1452
        %1494 = vst.msk [vmem:[#allocation3 + $0xc0] sm:$0xff] %vm1485, %v1454
        %1495 = vst.msk [vmem:[#allocation3 + $0xd8] sm:$0xff] %vm1485, %v1456
        %1496 = vst.msk [vmem:[#allocation3 + $0xf0] sm:$0xff] %vm1485, %v1458
        %1497 = vst.msk [vmem:[#allocation3 + $0x108] sm:$0xff] %vm1485, %v1460
        %1498 = vst.msk [vmem:[#allocation3 + $0x120] sm:$0xff] %vm1485, %v1462
        %1499 = vst.msk [vmem:[#allocation3 + $0x138] sm:$0xff] %vm1485, %v1464
        %1500 = vst.msk [vmem:[#allocation3 + $0x150] sm:$0xff] %vm1485, %v1466
        %1501 = vst.msk [vmem:[#allocation3 + $0x168] sm:$0xff] %vm1485, %v1468
        %v1502 = vld [vmem:[#allocation2] sm:$0xe]
        %v1503 = vld [vmem:[#allocation2 + $0x4] sm:$0xf]
        %v1504 = vld [vmem:[#allocation2 + $0x8] sm:$0x1]
        %v1505 = vld [vmem:[#allocation2 + $0xc] sm:$0xe]
        %v1506 = vld [vmem:[#allocation2 + $0x10] sm:$0xf]
        %v1507 = vld [vmem:[#allocation2 + $0x14] sm:$0x1]
        %v1508 = vld [vmem:[#allocation2 + $0x18] sm:$0xe]
        %v1509 = vld [vmem:[#allocation2 + $0x1c] sm:$0xf]
        %v1510 = vld [vmem:[#allocation2 + $0x20] sm:$0x1]
        %v1511 = vld [vmem:[#allocation2 + $0x24] sm:$0xe]
        %v1512 = vld [vmem:[#allocation2 + $0x28] sm:$0xf]
        %v1513 = vld [vmem:[#allocation2 + $0x2c] sm:$0x1]
        %v1514 = vld [vmem:[#allocation2 + $0x30] sm:$0xe]
        %v1515 = vld [vmem:[#allocation2 + $0x34] sm:$0xf]
        %v1516 = vld [vmem:[#allocation2 + $0x38] sm:$0x1]
        %v1517 = vld [vmem:[#allocation2 + $0x3c] sm:$0xe]
        %v1518 = vld [vmem:[#allocation2 + $0x40] sm:$0xf]
        %v1519 = vld [vmem:[#allocation2 + $0x44] sm:$0x1]
        %v1520 = vld [vmem:[#allocation2 + $0x48] sm:$0xe]
        %v1521 = vld [vmem:[#allocation2 + $0x4c] sm:$0xf]
        %v1522 = vld [vmem:[#allocation2 + $0x50] sm:$0x1]
        %v1523 = vld [vmem:[#allocation2 + $0x54] sm:$0xe]
        %v1524 = vld [vmem:[#allocation2 + $0x58] sm:$0xf]
        %v1525 = vld [vmem:[#allocation2 + $0x5c] sm:$0x1]
        %v1526 = vld [vmem:[#allocation2 + $0x60] sm:$0xe]
        %v1527 = vld [vmem:[#allocation2 + $0x64] sm:$0xf]
        %v1528 = vld [vmem:[#allocation2 + $0x68] sm:$0x1]
        %v1529 = vld [vmem:[#allocation2 + $0x6c] sm:$0xe]
        %v1530 = vld [vmem:[#allocation2 + $0x70] sm:$0xf]
        %v1531 = vld [vmem:[#allocation2 + $0x74] sm:$0x1]
        %v1532 = vld [vmem:[#allocation2 + $0x78] sm:$0xe]
        %v1533 = vld [vmem:[#allocation2 + $0x7c] sm:$0xf]
        %v1534 = vld [vmem:[#allocation2 + $0x80] sm:$0x1]
        %v1535 = vld [vmem:[#allocation2 + $0x84] sm:$0xe]
        %v1536 = vld [vmem:[#allocation2 + $0x88] sm:$0xf]
        %v1537 = vld [vmem:[#allocation2 + $0x8c] sm:$0x1]
        %v1538 = vld [vmem:[#allocation2 + $0x90] sm:$0xe]
        %v1539 = vld [vmem:[#allocation2 + $0x94] sm:$0xf]
        %v1540 = vld [vmem:[#allocation2 + $0x98] sm:$0x1]
        %v1541 = vld [vmem:[#allocation2 + $0x9c] sm:$0xe]
        %v1542 = vld [vmem:[#allocation2 + $0xa0] sm:$0xf]
        %v1543 = vld [vmem:[#allocation2 + $0xa4] sm:$0x1]
        %v1544 = vld [vmem:[#allocation2 + $0xa8] sm:$0xe]
        %v1545 = vld [vmem:[#allocation2 + $0xac] sm:$0xf]
        %v1546 = vld [vmem:[#allocation2 + $0xb0] sm:$0x1]
        %v1547 = vld [vmem:[#allocation2 + $0xb4] sm:$0xe]
        %v1548 = vld [vmem:[#allocation2 + $0xb8] sm:$0xf]
        %v1549 = vld [vmem:[#allocation2 + $0xbc] sm:$0x1]
        %v1598 = vunpack.c.l.b16 %v1502
        %v1599 = vunpack.c.l.b16 %v1503
        %v1600 = vunpack.c.l.b16 %v1504
        %v1601 = vunpack.c.l.b16 %v1505
        %v1602 = vunpack.c.l.b16 %v1506
        %v1603 = vunpack.c.l.b16 %v1507
        %v1604 = vunpack.c.l.b16 %v1508
        %v1605 = vunpack.c.l.b16 %v1509
        %v1606 = vunpack.c.l.b16 %v1510
        %v1607 = vunpack.c.l.b16 %v1511
        %v1608 = vunpack.c.l.b16 %v1512
        %v1609 = vunpack.c.l.b16 %v1513
        %v1610 = vunpack.c.l.b16 %v1514
        %v1611 = vunpack.c.l.b16 %v1515
        %v1612 = vunpack.c.l.b16 %v1516
        %v1613 = vunpack.c.l.b16 %v1517
        %v1614 = vunpack.c.l.b16 %v1518
        %v1615 = vunpack.c.l.b16 %v1519
        %v1616 = vunpack.c.l.b16 %v1520
        %v1617 = vunpack.c.l.b16 %v1521
        %v1618 = vunpack.c.l.b16 %v1522
        %v1619 = vunpack.c.l.b16 %v1523
        %v1620 = vunpack.c.l.b16 %v1524
        %v1621 = vunpack.c.l.b16 %v1525
        %v1622 = vunpack.c.l.b16 %v1526
        %v1623 = vunpack.c.l.b16 %v1527
        %v1624 = vunpack.c.l.b16 %v1528
        %v1625 = vunpack.c.l.b16 %v1529
        %v1626 = vunpack.c.l.b16 %v1530
        %v1627 = vunpack.c.l.b16 %v1531
        %v1628 = vunpack.c.l.b16 %v1532
        %v1629 = vunpack.c.l.b16 %v1533
        %v1630 = vunpack.c.l.b16 %v1534
        %v1631 = vunpack.c.l.b16 %v1535
        %v1632 = vunpack.c.l.b16 %v1536
        %v1633 = vunpack.c.l.b16 %v1537
        %v1634 = vunpack.c.l.b16 %v1538
        %v1635 = vunpack.c.l.b16 %v1539
        %v1636 = vunpack.c.l.b16 %v1540
        %v1637 = vunpack.c.l.b16 %v1541
        %v1638 = vunpack.c.l.b16 %v1542
        %v1639 = vunpack.c.l.b16 %v1543
        %v1640 = vunpack.c.l.b16 %v1544
        %v1641 = vunpack.c.l.b16 %v1545
        %v1642 = vunpack.c.l.b16 %v1546
        %v1643 = vunpack.c.l.b16 %v1547
        %v1644 = vunpack.c.l.b16 %v1548
        %v1645 = vunpack.c.l.b16 %v1549
        %v1646 = vpack.c.b16 %v1599, %v1598
        %v1647 = vpack.c.b16 %v1600, %v1600
        %v1648 = vpack.c.b16 %v1602, %v1601
        %v1649 = vpack.c.b16 %v1603, %v1603
        %v1650 = vpack.c.b16 %v1605, %v1604
        %v1651 = vpack.c.b16 %v1606, %v1606
        %v1652 = vpack.c.b16 %v1608, %v1607
        %v1653 = vpack.c.b16 %v1609, %v1609
        %v1654 = vpack.c.b16 %v1611, %v1610
        %v1655 = vpack.c.b16 %v1612, %v1612
        %v1656 = vpack.c.b16 %v1614, %v1613
        %v1657 = vpack.c.b16 %v1615, %v1615
        %v1658 = vpack.c.b16 %v1617, %v1616
        %v1659 = vpack.c.b16 %v1618, %v1618
        %v1660 = vpack.c.b16 %v1620, %v1619
        %v1661 = vpack.c.b16 %v1621, %v1621
        %v1662 = vpack.c.b16 %v1623, %v1622
        %v1663 = vpack.c.b16 %v1624, %v1624
        %v1664 = vpack.c.b16 %v1626, %v1625
        %v1665 = vpack.c.b16 %v1627, %v1627
        %v1666 = vpack.c.b16 %v1629, %v1628
        %v1667 = vpack.c.b16 %v1630, %v1630
        %v1668 = vpack.c.b16 %v1632, %v1631
        %v1669 = vpack.c.b16 %v1633, %v1633
        %v1670 = vpack.c.b16 %v1635, %v1634
        %v1671 = vpack.c.b16 %v1636, %v1636
        %v1672 = vpack.c.b16 %v1638, %v1637
        %v1673 = vpack.c.b16 %v1639, %v1639
        %v1674 = vpack.c.b16 %v1641, %v1640
        %v1675 = vpack.c.b16 %v1642, %v1642
        %v1676 = vpack.c.b16 %v1644, %v1643
        %v1677 = vpack.c.b16 %v1645, %v1645
        %vm1678 = vcmask 1046528
        %v1679 = vrot.slane %v1646, 1
        %v1680 = vrot.slane %v1647, 1
        %v1681 = vsel %vm1678, %v1679, %v1680
        %v1682 = vrot.slane %v1648, 1
        %v1683 = vrot.slane %v1649, 1
        %v1684 = vsel %vm1678, %v1682, %v1683
        %v1685 = vrot.slane %v1650, 1
        %v1686 = vrot.slane %v1651, 1
        %v1687 = vsel %vm1678, %v1685, %v1686
        %v1688 = vrot.slane %v1652, 1
        %v1689 = vrot.slane %v1653, 1
        %v1690 = vsel %vm1678, %v1688, %v1689
        %v1691 = vrot.slane %v1654, 1
        %v1692 = vrot.slane %v1655, 1
        %v1693 = vsel %vm1678, %v1691, %v1692
        %v1694 = vrot.slane %v1656, 1
        %v1695 = vrot.slane %v1657, 1
        %v1696 = vsel %vm1678, %v1694, %v1695
        %v1697 = vrot.slane %v1658, 1
        %v1698 = vrot.slane %v1659, 1
        %v1699 = vsel %vm1678, %v1697, %v1698
        %v1700 = vrot.slane %v1660, 1
        %v1701 = vrot.slane %v1661, 1
        %v1702 = vsel %vm1678, %v1700, %v1701
        %v1703 = vrot.slane %v1662, 1
        %v1704 = vrot.slane %v1663, 1
        %v1705 = vsel %vm1678, %v1703, %v1704
        %v1706 = vrot.slane %v1664, 1
        %v1707 = vrot.slane %v1665, 1
        %v1708 = vsel %vm1678, %v1706, %v1707
        %v1709 = vrot.slane %v1666, 1
        %v1710 = vrot.slane %v1667, 1
        %v1711 = vsel %vm1678, %v1709, %v1710
        %v1712 = vrot.slane %v1668, 1
        %v1713 = vrot.slane %v1669, 1
        %v1714 = vsel %vm1678, %v1712, %v1713
        %v1715 = vrot.slane %v1670, 1
        %v1716 = vrot.slane %v1671, 1
        %v1717 = vsel %vm1678, %v1715, %v1716
        %v1718 = vrot.slane %v1672, 1
        %v1719 = vrot.slane %v1673, 1
        %v1720 = vsel %vm1678, %v1718, %v1719
        %v1721 = vrot.slane %v1674, 1
        %v1722 = vrot.slane %v1675, 1
        %v1723 = vsel %vm1678, %v1721, %v1722
        %v1724 = vrot.slane %v1676, 1
        %v1725 = vrot.slane %v1677, 1
        %v1726 = vsel %vm1678, %v1724, %v1725
        %1727 = vrot.lane.b32.xlu0 %v1681, 64
        %v1728 = vpop.permute.xlu0 %1727
        %1729 = vrot.lane.b32.xlu0 %v1684, 64
        %v1730 = vpop.permute.xlu0 %1729
        %1731 = vrot.lane.b32.xlu0 %v1687, 64
        %v1732 = vpop.permute.xlu0 %1731
        %1733 = vrot.lane.b32.xlu0 %v1690, 64
        %v1734 = vpop.permute.xlu0 %1733
        %1735 = vrot.lane.b32.xlu0 %v1693, 64
        %v1736 = vpop.permute.xlu0 %1735
        %1737 = vrot.lane.b32.xlu0 %v1696, 64
        %v1738 = vpop.permute.xlu0 %1737
        %1739 = vrot.lane.b32.xlu0 %v1699, 64
        %v1740 = vpop.permute.xlu0 %1739
        %1741 = vrot.lane.b32.xlu0 %v1702, 64
        %v1742 = vpop.permute.xlu0 %1741
        %1743 = vrot.lane.b32.xlu0 %v1705, 64
        %v1744 = vpop.permute.xlu0 %1743
        %1745 = vrot.lane.b32.xlu0 %v1708, 64
        %v1746 = vpop.permute.xlu0 %1745
        %1747 = vrot.lane.b32.xlu0 %v1711, 64
        %v1748 = vpop.permute.xlu0 %1747
        %1749 = vrot.lane.b32.xlu0 %v1714, 64
        %v1750 = vpop.permute.xlu0 %1749
        %1751 = vrot.lane.b32.xlu0 %v1717, 64
        %v1752 = vpop.permute.xlu0 %1751
        %1753 = vrot.lane.b32.xlu0 %v1720, 64
        %v1754 = vpop.permute.xlu0 %1753
        %1755 = vrot.lane.b32.xlu0 %v1723, 64
        %v1756 = vpop.permute.xlu0 %1755
        %1757 = vrot.lane.b32.xlu0 %v1726, 64
        %v1758 = vpop.permute.xlu0 %1757
        %vm1775 = vcmask 785920
        %1776 = vst.msk [vmem:[#allocation3] sm:$0xff] %vm1775, %v1728
        %1777 = vst.msk [vmem:[#allocation3 + $0x18] sm:$0xff] %vm1775, %v1730
        %1778 = vst.msk [vmem:[#allocation3 + $0x30] sm:$0xff] %vm1775, %v1732
        %1779 = vst.msk [vmem:[#allocation3 + $0x48] sm:$0xff] %vm1775, %v1734
        %1780 = vst.msk [vmem:[#allocation3 + $0x60] sm:$0xff] %vm1775, %v1736
        %1781 = vst.msk [vmem:[#allocation3 + $0x78] sm:$0xff] %vm1775, %v1738
        %1782 = vst.msk [vmem:[#allocation3 + $0x90] sm:$0xff] %vm1775, %v1740
        %1783 = vst.msk [vmem:[#allocation3 + $0xa8] sm:$0xff] %vm1775, %v1742
        %1784 = vst.msk [vmem:[#allocation3 + $0xc0] sm:$0xff] %vm1775, %v1744
        %1785 = vst.msk [vmem:[#allocation3 + $0xd8] sm:$0xff] %vm1775, %v1746
        %1786 = vst.msk [vmem:[#allocation3 + $0xf0] sm:$0xff] %vm1775, %v1748
        %1787 = vst.msk [vmem:[#allocation3 + $0x108] sm:$0xff] %vm1775, %v1750
        %1788 = vst.msk [vmem:[#allocation3 + $0x120] sm:$0xff] %vm1775, %v1752
        %1789 = vst.msk [vmem:[#allocation3 + $0x138] sm:$0xff] %vm1775, %v1754
        %1790 = vst.msk [vmem:[#allocation3 + $0x150] sm:$0xff] %vm1775, %v1756
        %1791 = vst.msk [vmem:[#allocation3 + $0x168] sm:$0xff] %vm1775, %v1758
        %v1792 = vld [vmem:[%s808] sm:$0xf]
        %v1793 = vld [vmem:[%s808 + $0x4] sm:$0xf]
        %v1794 = vld [vmem:[%s808 + $0xc] sm:$0xf]
        %v1795 = vld [vmem:[%s808 + $0x10] sm:$0xf]
        %v1796 = vld [vmem:[%s808 + $0x18] sm:$0xf]
        %v1797 = vld [vmem:[%s808 + $0x1c] sm:$0xf]
        %v1798 = vld [vmem:[%s808 + $0x24] sm:$0xf]
        %v1799 = vld [vmem:[%s808 + $0x28] sm:$0xf]
        %v1800 = vld [vmem:[%s808 + $0x30] sm:$0xf]
        %v1801 = vld [vmem:[%s808 + $0x34] sm:$0xf]
        %v1802 = vld [vmem:[%s808 + $0x3c] sm:$0xf]
        %v1803 = vld [vmem:[%s808 + $0x40] sm:$0xf]
        %v1804 = vld [vmem:[%s808 + $0x48] sm:$0xf]
        %v1805 = vld [vmem:[%s808 + $0x4c] sm:$0xf]
        %v1806 = vld [vmem:[%s808 + $0x54] sm:$0xf]
        %v1807 = vld [vmem:[%s808 + $0x58] sm:$0xf]
        %v1808 = vld [vmem:[%s808 + $0x60] sm:$0xf]
        %v1809 = vld [vmem:[%s808 + $0x64] sm:$0xf]
        %v1810 = vld [vmem:[%s808 + $0x6c] sm:$0xf]
        %v1811 = vld [vmem:[%s808 + $0x70] sm:$0xf]
        %v1812 = vld [vmem:[%s808 + $0x78] sm:$0xf]
        %v1813 = vld [vmem:[%s808 + $0x7c] sm:$0xf]
        %v1814 = vld [vmem:[%s808 + $0x84] sm:$0xf]
        %v1815 = vld [vmem:[%s808 + $0x88] sm:$0xf]
        %v1816 = vld [vmem:[%s808 + $0x90] sm:$0xf]
        %v1817 = vld [vmem:[%s808 + $0x94] sm:$0xf]
        %v1818 = vld [vmem:[%s808 + $0x9c] sm:$0xf]
        %v1819 = vld [vmem:[%s808 + $0xa0] sm:$0xf]
        %v1820 = vld [vmem:[%s808 + $0xa8] sm:$0xf]
        %v1821 = vld [vmem:[%s808 + $0xac] sm:$0xf]
        %v1822 = vld [vmem:[%s808 + $0xb4] sm:$0xf]
        %v1823 = vld [vmem:[%s808 + $0xb8] sm:$0xf]
        %v1856 = vunpack.c.l.b16 %v1792
        %v1857 = vunpack.c.l.b16 %v1793
        %v1858 = vunpack.c.l.b16 %v1794
        %v1859 = vunpack.c.l.b16 %v1795
        %v1860 = vunpack.c.l.b16 %v1796
        %v1861 = vunpack.c.l.b16 %v1797
        %v1862 = vunpack.c.l.b16 %v1798
        %v1863 = vunpack.c.l.b16 %v1799
        %v1864 = vunpack.c.l.b16 %v1800
        %v1865 = vunpack.c.l.b16 %v1801
        %v1866 = vunpack.c.l.b16 %v1802
        %v1867 = vunpack.c.l.b16 %v1803
        %v1868 = vunpack.c.l.b16 %v1804
        %v1869 = vunpack.c.l.b16 %v1805
        %v1870 = vunpack.c.l.b16 %v1806
        %v1871 = vunpack.c.l.b16 %v1807
        %v1872 = vunpack.c.l.b16 %v1808
        %v1873 = vunpack.c.l.b16 %v1809
        %v1874 = vunpack.c.l.b16 %v1810
        %v1875 = vunpack.c.l.b16 %v1811
        %v1876 = vunpack.c.l.b16 %v1812
        %v1877 = vunpack.c.l.b16 %v1813
        %v1878 = vunpack.c.l.b16 %v1814
        %v1879 = vunpack.c.l.b16 %v1815
        %v1880 = vunpack.c.l.b16 %v1816
        %v1881 = vunpack.c.l.b16 %v1817
        %v1882 = vunpack.c.l.b16 %v1818
        %v1883 = vunpack.c.l.b16 %v1819
        %v1884 = vunpack.c.l.b16 %v1820
        %v1885 = vunpack.c.l.b16 %v1821
        %v1886 = vunpack.c.l.b16 %v1822
        %v1887 = vunpack.c.l.b16 %v1823
        %v1888 = vpack.c.b16 %v1857, %v1856
        %v1889 = vpack.c.b16 %v1859, %v1858
        %v1890 = vpack.c.b16 %v1861, %v1860
        %v1891 = vpack.c.b16 %v1863, %v1862
        %v1892 = vpack.c.b16 %v1865, %v1864
        %v1893 = vpack.c.b16 %v1867, %v1866
        %v1894 = vpack.c.b16 %v1869, %v1868
        %v1895 = vpack.c.b16 %v1871, %v1870
        %v1896 = vpack.c.b16 %v1873, %v1872
        %v1897 = vpack.c.b16 %v1875, %v1874
        %v1898 = vpack.c.b16 %v1877, %v1876
        %v1899 = vpack.c.b16 %v1879, %v1878
        %v1900 = vpack.c.b16 %v1881, %v1880
        %v1901 = vpack.c.b16 %v1883, %v1882
        %v1902 = vpack.c.b16 %v1885, %v1884
        %v1903 = vpack.c.b16 %v1887, %v1886
        %1904 = vrot.lane.b32.xlu0 %v1888, 96
        %v1905 = vpop.permute.xlu0 %1904
        %1906 = vrot.lane.b32.xlu0 %v1889, 96
        %v1907 = vpop.permute.xlu0 %1906
        %1908 = vrot.lane.b32.xlu0 %v1890, 96
        %v1909 = vpop.permute.xlu0 %1908
        %1910 = vrot.lane.b32.xlu0 %v1891, 96
        %v1911 = vpop.permute.xlu0 %1910
        %1912 = vrot.lane.b32.xlu0 %v1892, 96
        %v1913 = vpop.permute.xlu0 %1912
        %1914 = vrot.lane.b32.xlu0 %v1893, 96
        %v1915 = vpop.permute.xlu0 %1914
        %1916 = vrot.lane.b32.xlu0 %v1894, 96
        %v1917 = vpop.permute.xlu0 %1916
        %1918 = vrot.lane.b32.xlu0 %v1895, 96
        %v1919 = vpop.permute.xlu0 %1918
        %1920 = vrot.lane.b32.xlu0 %v1896, 96
        %v1921 = vpop.permute.xlu0 %1920
        %1922 = vrot.lane.b32.xlu0 %v1897, 96
        %v1923 = vpop.permute.xlu0 %1922
        %1924 = vrot.lane.b32.xlu0 %v1898, 96
        %v1925 = vpop.permute.xlu0 %1924
        %1926 = vrot.lane.b32.xlu0 %v1899, 96
        %v1927 = vpop.permute.xlu0 %1926
        %1928 = vrot.lane.b32.xlu0 %v1900, 96
        %v1929 = vpop.permute.xlu0 %1928
        %1930 = vrot.lane.b32.xlu0 %v1901, 96
        %v1931 = vpop.permute.xlu0 %1930
        %1932 = vrot.lane.b32.xlu0 %v1902, 96
        %v1933 = vpop.permute.xlu0 %1932
        %1934 = vrot.lane.b32.xlu0 %v1903, 96
        %v1935 = vpop.permute.xlu0 %1934
        %vm1952 = vcmask 1048320
        %1953 = vst.msk [vmem:[#allocation3] sm:$0xff] %vm1952, %v1905
        %1954 = vst.msk [vmem:[#allocation3 + $0x18] sm:$0xff] %vm1952, %v1907
        %1955 = vst.msk [vmem:[#allocation3 + $0x30] sm:$0xff] %vm1952, %v1909
        %1956 = vst.msk [vmem:[#allocation3 + $0x48] sm:$0xff] %vm1952, %v1911
        %1957 = vst.msk [vmem:[#allocation3 + $0x60] sm:$0xff] %vm1952, %v1913
        %1958 = vst.msk [vmem:[#allocation3 + $0x78] sm:$0xff] %vm1952, %v1915
        %1959 = vst.msk [vmem:[#allocation3 + $0x90] sm:$0xff] %vm1952, %v1917
        %1960 = vst.msk [vmem:[#allocation3 + $0xa8] sm:$0xff] %vm1952, %v1919
        %1961 = vst.msk [vmem:[#allocation3 + $0xc0] sm:$0xff] %vm1952, %v1921
        %1962 = vst.msk [vmem:[#allocation3 + $0xd8] sm:$0xff] %vm1952, %v1923
        %1963 = vst.msk [vmem:[#allocation3 + $0xf0] sm:$0xff] %vm1952, %v1925
        %1964 = vst.msk [vmem:[#allocation3 + $0x108] sm:$0xff] %vm1952, %v1927
        %1965 = vst.msk [vmem:[#allocation3 + $0x120] sm:$0xff] %vm1952, %v1929
        %1966 = vst.msk [vmem:[#allocation3 + $0x138] sm:$0xff] %vm1952, %v1931
        %1967 = vst.msk [vmem:[#allocation3 + $0x150] sm:$0xff] %vm1952, %v1933
        %1968 = vst.msk [vmem:[#allocation3 + $0x168] sm:$0xff] %vm1952, %v1935
        %v1969 = vld [vmem:[%s808] sm:$0xf]
        %v1970 = vld [vmem:[%s808 + $0x4] sm:$0xf]
        %v1971 = vld [vmem:[%s808 + $0x8] sm:$0x1]
        %v1972 = vld [vmem:[%s808 + $0xc] sm:$0xf]
        %v1973 = vld [vmem:[%s808 + $0x10] sm:$0xf]
        %v1974 = vld [vmem:[%s808 + $0x14] sm:$0x1]
        %v1975 = vld [vmem:[%s808 + $0x18] sm:$0xf]
        %v1976 = vld [vmem:[%s808 + $0x1c] sm:$0xf]
        %v1977 = vld [vmem:[%s808 + $0x20] sm:$0x1]
        %v1978 = vld [vmem:[%s808 + $0x24] sm:$0xf]
        %v1979 = vld [vmem:[%s808 + $0x28] sm:$0xf]
        %v1980 = vld [vmem:[%s808 + $0x2c] sm:$0x1]
        %v1981 = vld [vmem:[%s808 + $0x30] sm:$0xf]
        %v1982 = vld [vmem:[%s808 + $0x34] sm:$0xf]
        %v1983 = vld [vmem:[%s808 + $0x38] sm:$0x1]
        %v1984 = vld [vmem:[%s808 + $0x3c] sm:$0xf]
        %v1985 = vld [vmem:[%s808 + $0x40] sm:$0xf]
        %v1986 = vld [vmem:[%s808 + $0x44] sm:$0x1]
        %v1987 = vld [vmem:[%s808 + $0x48] sm:$0xf]
        %v1988 = vld [vmem:[%s808 + $0x4c] sm:$0xf]
        %v1989 = vld [vmem:[%s808 + $0x50] sm:$0x1]
        %v1990 = vld [vmem:[%s808 + $0x54] sm:$0xf]
        %v1991 = vld [vmem:[%s808 + $0x58] sm:$0xf]
        %v1992 = vld [vmem:[%s808 + $0x5c] sm:$0x1]
        %v1993 = vld [vmem:[%s808 + $0x60] sm:$0xf]
        %v1994 = vld [vmem:[%s808 + $0x64] sm:$0xf]
        %v1995 = vld [vmem:[%s808 + $0x68] sm:$0x1]
        %v1996 = vld [vmem:[%s808 + $0x6c] sm:$0xf]
        %v1997 = vld [vmem:[%s808 + $0x70] sm:$0xf]
        %v1998 = vld [vmem:[%s808 + $0x74] sm:$0x1]
        %v1999 = vld [vmem:[%s808 + $0x78] sm:$0xf]
        %v2000 = vld [vmem:[%s808 + $0x7c] sm:$0xf]
        %v2001 = vld [vmem:[%s808 + $0x80] sm:$0x1]
        %v2002 = vld [vmem:[%s808 + $0x84] sm:$0xf]
        %v2003 = vld [vmem:[%s808 + $0x88] sm:$0xf]
        %v2004 = vld [vmem:[%s808 + $0x8c] sm:$0x1]
        %v2005 = vld [vmem:[%s808 + $0x90] sm:$0xf]
        %v2006 = vld [vmem:[%s808 + $0x94] sm:$0xf]
        %v2007 = vld [vmem:[%s808 + $0x98] sm:$0x1]
        %v2008 = vld [vmem:[%s808 + $0x9c] sm:$0xf]
        %v2009 = vld [vmem:[%s808 + $0xa0] sm:$0xf]
        %v2010 = vld [vmem:[%s808 + $0xa4] sm:$0x1]
        %v2011 = vld [vmem:[%s808 + $0xa8] sm:$0xf]
        %v2012 = vld [vmem:[%s808 + $0xac] sm:$0xf]
        %v2013 = vld [vmem:[%s808 + $0xb0] sm:$0x1]
        %v2014 = vld [vmem:[%s808 + $0xb4] sm:$0xf]
        %v2015 = vld [vmem:[%s808 + $0xb8] sm:$0xf]
        %v2016 = vld [vmem:[%s808 + $0xbc] sm:$0x1]
        %v2065 = vunpack.c.l.b16 %v1969
        %v2066 = vunpack.c.l.b16 %v1970
        %v2067 = vunpack.c.l.b16 %v1971
        %v2068 = vunpack.c.l.b16 %v1972
        %v2069 = vunpack.c.l.b16 %v1973
        %v2070 = vunpack.c.l.b16 %v1974
        %v2071 = vunpack.c.l.b16 %v1975
        %v2072 = vunpack.c.l.b16 %v1976
        %v2073 = vunpack.c.l.b16 %v1977
        %v2074 = vunpack.c.l.b16 %v1978
        %v2075 = vunpack.c.l.b16 %v1979
        %v2076 = vunpack.c.l.b16 %v1980
        %v2077 = vunpack.c.l.b16 %v1981
        %v2078 = vunpack.c.l.b16 %v1982
        %v2079 = vunpack.c.l.b16 %v1983
        %v2080 = vunpack.c.l.b16 %v1984
        %v2081 = vunpack.c.l.b16 %v1985
        %v2082 = vunpack.c.l.b16 %v1986
        %v2083 = vunpack.c.l.b16 %v1987
        %v2084 = vunpack.c.l.b16 %v1988
        %v2085 = vunpack.c.l.b16 %v1989
        %v2086 = vunpack.c.l.b16 %v1990
        %v2087 = vunpack.c.l.b16 %v1991
        %v2088 = vunpack.c.l.b16 %v1992
        %v2089 = vunpack.c.l.b16 %v1993
        %v2090 = vunpack.c.l.b16 %v1994
        %v2091 = vunpack.c.l.b16 %v1995
        %v2092 = vunpack.c.l.b16 %v1996
        %v2093 = vunpack.c.l.b16 %v1997
        %v2094 = vunpack.c.l.b16 %v1998
        %v2095 = vunpack.c.l.b16 %v1999
        %v2096 = vunpack.c.l.b16 %v2000
        %v2097 = vunpack.c.l.b16 %v2001
        %v2098 = vunpack.c.l.b16 %v2002
        %v2099 = vunpack.c.l.b16 %v2003
        %v2100 = vunpack.c.l.b16 %v2004
        %v2101 = vunpack.c.l.b16 %v2005
        %v2102 = vunpack.c.l.b16 %v2006
        %v2103 = vunpack.c.l.b16 %v2007
        %v2104 = vunpack.c.l.b16 %v2008
        %v2105 = vunpack.c.l.b16 %v2009
        %v2106 = vunpack.c.l.b16 %v2010
        %v2107 = vunpack.c.l.b16 %v2011
        %v2108 = vunpack.c.l.b16 %v2012
        %v2109 = vunpack.c.l.b16 %v2013
        %v2110 = vunpack.c.l.b16 %v2014
        %v2111 = vunpack.c.l.b16 %v2015
        %v2112 = vunpack.c.l.b16 %v2016
        %v2113 = vpack.c.b16 %v2066, %v2065
        %v2114 = vpack.c.b16 %v2067, %v2067
        %v2115 = vpack.c.b16 %v2069, %v2068
        %v2116 = vpack.c.b16 %v2070, %v2070
        %v2117 = vpack.c.b16 %v2072, %v2071
        %v2118 = vpack.c.b16 %v2073, %v2073
        %v2119 = vpack.c.b16 %v2075, %v2074
        %v2120 = vpack.c.b16 %v2076, %v2076
        %v2121 = vpack.c.b16 %v2078, %v2077
        %v2122 = vpack.c.b16 %v2079, %v2079
        %v2123 = vpack.c.b16 %v2081, %v2080
        %v2124 = vpack.c.b16 %v2082, %v2082
        %v2125 = vpack.c.b16 %v2084, %v2083
        %v2126 = vpack.c.b16 %v2085, %v2085
        %v2127 = vpack.c.b16 %v2087, %v2086
        %v2128 = vpack.c.b16 %v2088, %v2088
        %v2129 = vpack.c.b16 %v2090, %v2089
        %v2130 = vpack.c.b16 %v2091, %v2091
        %v2131 = vpack.c.b16 %v2093, %v2092
        %v2132 = vpack.c.b16 %v2094, %v2094
        %v2133 = vpack.c.b16 %v2096, %v2095
        %v2134 = vpack.c.b16 %v2097, %v2097
        %v2135 = vpack.c.b16 %v2099, %v2098
        %v2136 = vpack.c.b16 %v2100, %v2100
        %v2137 = vpack.c.b16 %v2102, %v2101
        %v2138 = vpack.c.b16 %v2103, %v2103
        %v2139 = vpack.c.b16 %v2105, %v2104
        %v2140 = vpack.c.b16 %v2106, %v2106
        %v2141 = vpack.c.b16 %v2108, %v2107
        %v2142 = vpack.c.b16 %v2109, %v2109
        %v2143 = vpack.c.b16 %v2111, %v2110
        %v2144 = vpack.c.b16 %v2112, %v2112
        %v2146 = vshrl.u32 %v2113, 16
        %v2148 = vshll.u32 %v2113, 16
        %v2150 = vrot.slane %v2148, 1
        %v2151 = vor.u32 %v2146, %v2150
        %v2153 = vshll.u32 %v2114, 16
        %v2155 = vrot.slane %v2153, 1
        %v2156 = vsel %vm1244, %v2151, %v2155
        %v2158 = vshrl.u32 %v2115, 16
        %v2160 = vshll.u32 %v2115, 16
        %v2162 = vrot.slane %v2160, 1
        %v2163 = vor.u32 %v2158, %v2162
        %v2165 = vshll.u32 %v2116, 16
        %v2167 = vrot.slane %v2165, 1
        %v2168 = vsel %vm1244, %v2163, %v2167
        %v2170 = vshrl.u32 %v2117, 16
        %v2172 = vshll.u32 %v2117, 16
        %v2174 = vrot.slane %v2172, 1
        %v2175 = vor.u32 %v2170, %v2174
        %v2177 = vshll.u32 %v2118, 16
        %v2179 = vrot.slane %v2177, 1
        %v2180 = vsel %vm1244, %v2175, %v2179
        %v2182 = vshrl.u32 %v2119, 16
        %v2184 = vshll.u32 %v2119, 16
        %v2186 = vrot.slane %v2184, 1
        %v2187 = vor.u32 %v2182, %v2186
        %v2189 = vshll.u32 %v2120, 16
        %v2191 = vrot.slane %v2189, 1
        %v2192 = vsel %vm1244, %v2187, %v2191
        %v2194 = vshrl.u32 %v2121, 16
        %v2196 = vshll.u32 %v2121, 16
        %v2198 = vrot.slane %v2196, 1
        %v2199 = vor.u32 %v2194, %v2198
        %v2201 = vshll.u32 %v2122, 16
        %v2203 = vrot.slane %v2201, 1
        %v2204 = vsel %vm1244, %v2199, %v2203
        %v2206 = vshrl.u32 %v2123, 16
        %v2208 = vshll.u32 %v2123, 16
        %v2210 = vrot.slane %v2208, 1
        %v2211 = vor.u32 %v2206, %v2210
        %v2213 = vshll.u32 %v2124, 16
        %v2215 = vrot.slane %v2213, 1
        %v2216 = vsel %vm1244, %v2211, %v2215
        %v2218 = vshrl.u32 %v2125, 16
        %v2220 = vshll.u32 %v2125, 16
        %v2222 = vrot.slane %v2220, 1
        %v2223 = vor.u32 %v2218, %v2222
        %v2225 = vshll.u32 %v2126, 16
        %v2227 = vrot.slane %v2225, 1
        %v2228 = vsel %vm1244, %v2223, %v2227
        %v2230 = vshrl.u32 %v2127, 16
        %v2232 = vshll.u32 %v2127, 16
        %v2234 = vrot.slane %v2232, 1
        %v2235 = vor.u32 %v2230, %v2234
        %v2237 = vshll.u32 %v2128, 16
        %v2239 = vrot.slane %v2237, 1
        %v2240 = vsel %vm1244, %v2235, %v2239
        %v2242 = vshrl.u32 %v2129, 16
        %v2244 = vshll.u32 %v2129, 16
        %v2246 = vrot.slane %v2244, 1
        %v2247 = vor.u32 %v2242, %v2246
        %v2249 = vshll.u32 %v2130, 16
        %v2251 = vrot.slane %v2249, 1
        %v2252 = vsel %vm1244, %v2247, %v2251
        %v2254 = vshrl.u32 %v2131, 16
        %v2256 = vshll.u32 %v2131, 16
        %v2258 = vrot.slane %v2256, 1
        %v2259 = vor.u32 %v2254, %v2258
        %v2261 = vshll.u32 %v2132, 16
        %v2263 = vrot.slane %v2261, 1
        %v2264 = vsel %vm1244, %v2259, %v2263
        %v2266 = vshrl.u32 %v2133, 16
        %v2268 = vshll.u32 %v2133, 16
        %v2270 = vrot.slane %v2268, 1
        %v2271 = vor.u32 %v2266, %v2270
        %v2273 = vshll.u32 %v2134, 16
        %v2275 = vrot.slane %v2273, 1
        %v2276 = vsel %vm1244, %v2271, %v2275
        %v2278 = vshrl.u32 %v2135, 16
        %v2280 = vshll.u32 %v2135, 16
        %v2282 = vrot.slane %v2280, 1
        %v2283 = vor.u32 %v2278, %v2282
        %v2285 = vshll.u32 %v2136, 16
        %v2287 = vrot.slane %v2285, 1
        %v2288 = vsel %vm1244, %v2283, %v2287
        %v2290 = vshrl.u32 %v2137, 16
        %v2292 = vshll.u32 %v2137, 16
        %v2294 = vrot.slane %v2292, 1
        %v2295 = vor.u32 %v2290, %v2294
        %v2297 = vshll.u32 %v2138, 16
        %v2299 = vrot.slane %v2297, 1
        %v2300 = vsel %vm1244, %v2295, %v2299
        %v2302 = vshrl.u32 %v2139, 16
        %v2304 = vshll.u32 %v2139, 16
        %v2306 = vrot.slane %v2304, 1
        %v2307 = vor.u32 %v2302, %v2306
        %v2309 = vshll.u32 %v2140, 16
        %v2311 = vrot.slane %v2309, 1
        %v2312 = vsel %vm1244, %v2307, %v2311
        %v2314 = vshrl.u32 %v2141, 16
        %v2316 = vshll.u32 %v2141, 16
        %v2318 = vrot.slane %v2316, 1
        %v2319 = vor.u32 %v2314, %v2318
        %v2321 = vshll.u32 %v2142, 16
        %v2323 = vrot.slane %v2321, 1
        %v2324 = vsel %vm1244, %v2319, %v2323
        %v2326 = vshrl.u32 %v2143, 16
        %v2328 = vshll.u32 %v2143, 16
        %v2330 = vrot.slane %v2328, 1
        %v2331 = vor.u32 %v2326, %v2330
        %v2333 = vshll.u32 %v2144, 16
        %v2335 = vrot.slane %v2333, 1
        %v2336 = vsel %vm1244, %v2331, %v2335
        %2353 = vst.msk [vmem:[#allocation3 + $0x8] sm:$0xff] %vm1051, %v2156
        %2354 = vst.msk [vmem:[#allocation3 + $0x20] sm:$0xff] %vm1051, %v2168
        %2355 = vst.msk [vmem:[#allocation3 + $0x38] sm:$0xff] %vm1051, %v2180
        %2356 = vst.msk [vmem:[#allocation3 + $0x50] sm:$0xff] %vm1051, %v2192
        %2357 = vst.msk [vmem:[#allocation3 + $0x68] sm:$0xff] %vm1051, %v2204
        %2358 = vst.msk [vmem:[#allocation3 + $0x80] sm:$0xff] %vm1051, %v2216
        %2359 = vst.msk [vmem:[#allocation3 + $0x98] sm:$0xff] %vm1051, %v2228
        %2360 = vst.msk [vmem:[#allocation3 + $0xb0] sm:$0xff] %vm1051, %v2240
        %2361 = vst.msk [vmem:[#allocation3 + $0xc8] sm:$0xff] %vm1051, %v2252
        %2362 = vst.msk [vmem:[#allocation3 + $0xe0] sm:$0xff] %vm1051, %v2264
        %2363 = vst.msk [vmem:[#allocation3 + $0xf8] sm:$0xff] %vm1051, %v2276
        %2364 = vst.msk [vmem:[#allocation3 + $0x110] sm:$0xff] %vm1051, %v2288
        %2365 = vst.msk [vmem:[#allocation3 + $0x128] sm:$0xff] %vm1051, %v2300
        %2366 = vst.msk [vmem:[#allocation3 + $0x140] sm:$0xff] %vm1051, %v2312
        %2367 = vst.msk [vmem:[#allocation3 + $0x158] sm:$0xff] %vm1051, %v2324
        %2368 = vst.msk [vmem:[#allocation3 + $0x170] sm:$0xff] %vm1051, %v2336
        %v2369 = vld [vmem:[%s808] sm:$0xe]
        %v2370 = vld [vmem:[%s808 + $0x4] sm:$0xf]
        %v2371 = vld [vmem:[%s808 + $0x8] sm:$0x1]
        %v2372 = vld [vmem:[%s808 + $0xc] sm:$0xe]
        %v2373 = vld [vmem:[%s808 + $0x10] sm:$0xf]
        %v2374 = vld [vmem:[%s808 + $0x14] sm:$0x1]
        %v2375 = vld [vmem:[%s808 + $0x18] sm:$0xe]
        %v2376 = vld [vmem:[%s808 + $0x1c] sm:$0xf]
        %v2377 = vld [vmem:[%s808 + $0x20] sm:$0x1]
        %v2378 = vld [vmem:[%s808 + $0x24] sm:$0xe]
        %v2379 = vld [vmem:[%s808 + $0x28] sm:$0xf]
        %v2380 = vld [vmem:[%s808 + $0x2c] sm:$0x1]
        %v2381 = vld [vmem:[%s808 + $0x30] sm:$0xe]
        %v2382 = vld [vmem:[%s808 + $0x34] sm:$0xf]
        %v2383 = vld [vmem:[%s808 + $0x38] sm:$0x1]
        %v2384 = vld [vmem:[%s808 + $0x3c] sm:$0xe]
        %v2385 = vld [vmem:[%s808 + $0x40] sm:$0xf]
        %v2386 = vld [vmem:[%s808 + $0x44] sm:$0x1]
        %v2387 = vld [vmem:[%s808 + $0x48] sm:$0xe]
        %v2388 = vld [vmem:[%s808 + $0x4c] sm:$0xf]
        %v2389 = vld [vmem:[%s808 + $0x50] sm:$0x1]
        %v2390 = vld [vmem:[%s808 + $0x54] sm:$0xe]
        %v2391 = vld [vmem:[%s808 + $0x58] sm:$0xf]
        %v2392 = vld [vmem:[%s808 + $0x5c] sm:$0x1]
        %v2393 = vld [vmem:[%s808 + $0x60] sm:$0xe]
        %v2394 = vld [vmem:[%s808 + $0x64] sm:$0xf]
        %v2395 = vld [vmem:[%s808 + $0x68] sm:$0x1]
        %v2396 = vld [vmem:[%s808 + $0x6c] sm:$0xe]
        %v2397 = vld [vmem:[%s808 + $0x70] sm:$0xf]
        %v2398 = vld [vmem:[%s808 + $0x74] sm:$0x1]
        %v2399 = vld [vmem:[%s808 + $0x78] sm:$0xe]
        %v2400 = vld [vmem:[%s808 + $0x7c] sm:$0xf]
        %v2401 = vld [vmem:[%s808 + $0x80] sm:$0x1]
        %v2402 = vld [vmem:[%s808 + $0x84] sm:$0xe]
        %v2403 = vld [vmem:[%s808 + $0x88] sm:$0xf]
        %v2404 = vld [vmem:[%s808 + $0x8c] sm:$0x1]
        %v2405 = vld [vmem:[%s808 + $0x90] sm:$0xe]
        %v2406 = vld [vmem:[%s808 + $0x94] sm:$0xf]
        %v2407 = vld [vmem:[%s808 + $0x98] sm:$0x1]
        %v2408 = vld [vmem:[%s808 + $0x9c] sm:$0xe]
        %v2409 = vld [vmem:[%s808 + $0xa0] sm:$0xf]
        %v2410 = vld [vmem:[%s808 + $0xa4] sm:$0x1]
        %v2411 = vld [vmem:[%s808 + $0xa8] sm:$0xe]
        %v2412 = vld [vmem:[%s808 + $0xac] sm:$0xf]
        %v2413 = vld [vmem:[%s808 + $0xb0] sm:$0x1]
        %v2414 = vld [vmem:[%s808 + $0xb4] sm:$0xe]
        %v2415 = vld [vmem:[%s808 + $0xb8] sm:$0xf]
        %v2416 = vld [vmem:[%s808 + $0xbc] sm:$0x1]
        %v2465 = vunpack.c.l.b16 %v2369
        %v2466 = vunpack.c.l.b16 %v2370
        %v2467 = vunpack.c.l.b16 %v2371
        %v2468 = vunpack.c.l.b16 %v2372
        %v2469 = vunpack.c.l.b16 %v2373
        %v2470 = vunpack.c.l.b16 %v2374
        %v2471 = vunpack.c.l.b16 %v2375
        %v2472 = vunpack.c.l.b16 %v2376
        %v2473 = vunpack.c.l.b16 %v2377
        %v2474 = vunpack.c.l.b16 %v2378
        %v2475 = vunpack.c.l.b16 %v2379
        %v2476 = vunpack.c.l.b16 %v2380
        %v2477 = vunpack.c.l.b16 %v2381
        %v2478 = vunpack.c.l.b16 %v2382
        %v2479 = vunpack.c.l.b16 %v2383
        %v2480 = vunpack.c.l.b16 %v2384
        %v2481 = vunpack.c.l.b16 %v2385
        %v2482 = vunpack.c.l.b16 %v2386
        %v2483 = vunpack.c.l.b16 %v2387
        %v2484 = vunpack.c.l.b16 %v2388
        %v2485 = vunpack.c.l.b16 %v2389
        %v2486 = vunpack.c.l.b16 %v2390
        %v2487 = vunpack.c.l.b16 %v2391
        %v2488 = vunpack.c.l.b16 %v2392
        %v2489 = vunpack.c.l.b16 %v2393
        %v2490 = vunpack.c.l.b16 %v2394
        %v2491 = vunpack.c.l.b16 %v2395
        %v2492 = vunpack.c.l.b16 %v2396
        %v2493 = vunpack.c.l.b16 %v2397
        %v2494 = vunpack.c.l.b16 %v2398
        %v2495 = vunpack.c.l.b16 %v2399
        %v2496 = vunpack.c.l.b16 %v2400
        %v2497 = vunpack.c.l.b16 %v2401
        %v2498 = vunpack.c.l.b16 %v2402
        %v2499 = vunpack.c.l.b16 %v2403
        %v2500 = vunpack.c.l.b16 %v2404
        %v2501 = vunpack.c.l.b16 %v2405
        %v2502 = vunpack.c.l.b16 %v2406
        %v2503 = vunpack.c.l.b16 %v2407
        %v2504 = vunpack.c.l.b16 %v2408
        %v2505 = vunpack.c.l.b16 %v2409
        %v2506 = vunpack.c.l.b16 %v2410
        %v2507 = vunpack.c.l.b16 %v2411
        %v2508 = vunpack.c.l.b16 %v2412
        %v2509 = vunpack.c.l.b16 %v2413
        %v2510 = vunpack.c.l.b16 %v2414
        %v2511 = vunpack.c.l.b16 %v2415
        %v2512 = vunpack.c.l.b16 %v2416
        %v2513 = vpack.c.b16 %v2466, %v2465
        %v2514 = vpack.c.b16 %v2467, %v2467
        %v2515 = vpack.c.b16 %v2469, %v2468
        %v2516 = vpack.c.b16 %v2470, %v2470
        %v2517 = vpack.c.b16 %v2472, %v2471
        %v2518 = vpack.c.b16 %v2473, %v2473
        %v2519 = vpack.c.b16 %v2475, %v2474
        %v2520 = vpack.c.b16 %v2476, %v2476
        %v2521 = vpack.c.b16 %v2478, %v2477
        %v2522 = vpack.c.b16 %v2479, %v2479
        %v2523 = vpack.c.b16 %v2481, %v2480
        %v2524 = vpack.c.b16 %v2482, %v2482
        %v2525 = vpack.c.b16 %v2484, %v2483
        %v2526 = vpack.c.b16 %v2485, %v2485
        %v2527 = vpack.c.b16 %v2487, %v2486
        %v2528 = vpack.c.b16 %v2488, %v2488
        %v2529 = vpack.c.b16 %v2490, %v2489
        %v2530 = vpack.c.b16 %v2491, %v2491
        %v2531 = vpack.c.b16 %v2493, %v2492
        %v2532 = vpack.c.b16 %v2494, %v2494
        %v2533 = vpack.c.b16 %v2496, %v2495
        %v2534 = vpack.c.b16 %v2497, %v2497
        %v2535 = vpack.c.b16 %v2499, %v2498
        %v2536 = vpack.c.b16 %v2500, %v2500
        %v2537 = vpack.c.b16 %v2502, %v2501
        %v2538 = vpack.c.b16 %v2503, %v2503
        %v2539 = vpack.c.b16 %v2505, %v2504
        %v2540 = vpack.c.b16 %v2506, %v2506
        %v2541 = vpack.c.b16 %v2508, %v2507
        %v2542 = vpack.c.b16 %v2509, %v2509
        %v2543 = vpack.c.b16 %v2511, %v2510
        %v2544 = vpack.c.b16 %v2512, %v2512
        %v2545 = vrot.slane %v2513, 1
        %v2546 = vrot.slane %v2514, 1
        %v2547 = vsel %vm1678, %v2545, %v2546
        %v2548 = vrot.slane %v2515, 1
        %v2549 = vrot.slane %v2516, 1
        %v2550 = vsel %vm1678, %v2548, %v2549
        %v2551 = vrot.slane %v2517, 1
        %v2552 = vrot.slane %v2518, 1
        %v2553 = vsel %vm1678, %v2551, %v2552
        %v2554 = vrot.slane %v2519, 1
        %v2555 = vrot.slane %v2520, 1
        %v2556 = vsel %vm1678, %v2554, %v2555
        %v2557 = vrot.slane %v2521, 1
        %v2558 = vrot.slane %v2522, 1
        %v2559 = vsel %vm1678, %v2557, %v2558
        %v2560 = vrot.slane %v2523, 1
        %v2561 = vrot.slane %v2524, 1
        %v2562 = vsel %vm1678, %v2560, %v2561
        %v2563 = vrot.slane %v2525, 1
        %v2564 = vrot.slane %v2526, 1
        %v2565 = vsel %vm1678, %v2563, %v2564
        %v2566 = vrot.slane %v2527, 1
        %v2567 = vrot.slane %v2528, 1
        %v2568 = vsel %vm1678, %v2566, %v2567
        %v2569 = vrot.slane %v2529, 1
        %v2570 = vrot.slane %v2530, 1
        %v2571 = vsel %vm1678, %v2569, %v2570
        %v2572 = vrot.slane %v2531, 1
        %v2573 = vrot.slane %v2532, 1
        %v2574 = vsel %vm1678, %v2572, %v2573
        %v2575 = vrot.slane %v2533, 1
        %v2576 = vrot.slane %v2534, 1
        %v2577 = vsel %vm1678, %v2575, %v2576
        %v2578 = vrot.slane %v2535, 1
        %v2579 = vrot.slane %v2536, 1
        %v2580 = vsel %vm1678, %v2578, %v2579
        %v2581 = vrot.slane %v2537, 1
        %v2582 = vrot.slane %v2538, 1
        %v2583 = vsel %vm1678, %v2581, %v2582
        %v2584 = vrot.slane %v2539, 1
        %v2585 = vrot.slane %v2540, 1
        %v2586 = vsel %vm1678, %v2584, %v2585
        %v2587 = vrot.slane %v2541, 1
        %v2588 = vrot.slane %v2542, 1
        %v2589 = vsel %vm1678, %v2587, %v2588
        %v2590 = vrot.slane %v2543, 1
        %v2591 = vrot.slane %v2544, 1
        %v2592 = vsel %vm1678, %v2590, %v2591
        %2593 = vrot.lane.b32.xlu0 %v2547, 32
        %v2594 = vpop.permute.xlu0 %2593
        %2595 = vrot.lane.b32.xlu0 %v2550, 32
        %v2596 = vpop.permute.xlu0 %2595
        %2597 = vrot.lane.b32.xlu0 %v2553, 32
        %v2598 = vpop.permute.xlu0 %2597
        %2599 = vrot.lane.b32.xlu0 %v2556, 32
        %v2600 = vpop.permute.xlu0 %2599
        %2601 = vrot.lane.b32.xlu0 %v2559, 32
        %v2602 = vpop.permute.xlu0 %2601
        %2603 = vrot.lane.b32.xlu0 %v2562, 32
        %v2604 = vpop.permute.xlu0 %2603
        %2605 = vrot.lane.b32.xlu0 %v2565, 32
        %v2606 = vpop.permute.xlu0 %2605
        %2607 = vrot.lane.b32.xlu0 %v2568, 32
        %v2608 = vpop.permute.xlu0 %2607
        %2609 = vrot.lane.b32.xlu0 %v2571, 32
        %v2610 = vpop.permute.xlu0 %2609
        %2611 = vrot.lane.b32.xlu0 %v2574, 32
        %v2612 = vpop.permute.xlu0 %2611
        %2613 = vrot.lane.b32.xlu0 %v2577, 32
        %v2614 = vpop.permute.xlu0 %2613
        %2615 = vrot.lane.b32.xlu0 %v2580, 32
        %v2616 = vpop.permute.xlu0 %2615
        %2617 = vrot.lane.b32.xlu0 %v2583, 32
        %v2618 = vpop.permute.xlu0 %2617
        %2619 = vrot.lane.b32.xlu0 %v2586, 32
        %v2620 = vpop.permute.xlu0 %2619
        %2621 = vrot.lane.b32.xlu0 %v2589, 32
        %v2622 = vpop.permute.xlu0 %2621
        %2623 = vrot.lane.b32.xlu0 %v2592, 32
        %v2624 = vpop.permute.xlu0 %2623
        %2641 = vst.msk [vmem:[#allocation3 + $0x8] sm:$0xff] %vm1485, %v2594
        %2642 = vst.msk [vmem:[#allocation3 + $0x20] sm:$0xff] %vm1485, %v2596
        %2643 = vst.msk [vmem:[#allocation3 + $0x38] sm:$0xff] %vm1485, %v2598
        %2644 = vst.msk [vmem:[#allocation3 + $0x50] sm:$0xff] %vm1485, %v2600
        %2645 = vst.msk [vmem:[#allocation3 + $0x68] sm:$0xff] %vm1485, %v2602
        %2646 = vst.msk [vmem:[#allocation3 + $0x80] sm:$0xff] %vm1485, %v2604
        %2647 = vst.msk [vmem:[#allocation3 + $0x98] sm:$0xff] %vm1485, %v2606
        %2648 = vst.msk [vmem:[#allocation3 + $0xb0] sm:$0xff] %vm1485, %v2608
        %2649 = vst.msk [vmem:[#allocation3 + $0xc8] sm:$0xff] %vm1485, %v2610
        %2650 = vst.msk [vmem:[#allocation3 + $0xe0] sm:$0xff] %vm1485, %v2612
        %2651 = vst.msk [vmem:[#allocation3 + $0xf8] sm:$0xff] %vm1485, %v2614
        %2652 = vst.msk [vmem:[#allocation3 + $0x110] sm:$0xff] %vm1485, %v2616
        %2653 = vst.msk [vmem:[#allocation3 + $0x128] sm:$0xff] %vm1485, %v2618
        %2654 = vst.msk [vmem:[#allocation3 + $0x140] sm:$0xff] %vm1485, %v2620
        %2655 = vst.msk [vmem:[#allocation3 + $0x158] sm:$0xff] %vm1485, %v2622
        %2656 = vst.msk [vmem:[#allocation3 + $0x170] sm:$0xff] %vm1485, %v2624
        %s2657 = scalar_lea.vmem [#allocation2], 24
        %v2658 = vld [vmem:[%s2657] sm:$0xf]
        %v2659 = vld [vmem:[%s2657 + $0x4] sm:$0xf]
        %v2660 = vld [vmem:[%s2657 + $0xc] sm:$0xf]
        %v2661 = vld [vmem:[%s2657 + $0x10] sm:$0xf]
        %v2662 = vld [vmem:[%s2657 + $0x18] sm:$0xf]
        %v2663 = vld [vmem:[%s2657 + $0x1c] sm:$0xf]
        %v2664 = vld [vmem:[%s2657 + $0x24] sm:$0xf]
        %v2665 = vld [vmem:[%s2657 + $0x28] sm:$0xf]
        %v2666 = vld [vmem:[%s2657 + $0x30] sm:$0xf]
        %v2667 = vld [vmem:[%s2657 + $0x34] sm:$0xf]
        %v2668 = vld [vmem:[%s2657 + $0x3c] sm:$0xf]
        %v2669 = vld [vmem:[%s2657 + $0x40] sm:$0xf]
        %v2670 = vld [vmem:[%s2657 + $0x48] sm:$0xf]
        %v2671 = vld [vmem:[%s2657 + $0x4c] sm:$0xf]
        %v2672 = vld [vmem:[%s2657 + $0x54] sm:$0xf]
        %v2673 = vld [vmem:[%s2657 + $0x58] sm:$0xf]
        %v2674 = vld [vmem:[%s2657 + $0x60] sm:$0xf]
        %v2675 = vld [vmem:[%s2657 + $0x64] sm:$0xf]
        %v2676 = vld [vmem:[%s2657 + $0x6c] sm:$0xf]
        %v2677 = vld [vmem:[%s2657 + $0x70] sm:$0xf]
        %v2678 = vld [vmem:[%s2657 + $0x78] sm:$0xf]
        %v2679 = vld [vmem:[%s2657 + $0x7c] sm:$0xf]
        %v2680 = vld [vmem:[%s2657 + $0x84] sm:$0xf]
        %v2681 = vld [vmem:[%s2657 + $0x88] sm:$0xf]
        %v2682 = vld [vmem:[%s2657 + $0x90] sm:$0xf]
        %v2683 = vld [vmem:[%s2657 + $0x94] sm:$0xf]
        %v2684 = vld [vmem:[%s2657 + $0x9c] sm:$0xf]
        %v2685 = vld [vmem:[%s2657 + $0xa0] sm:$0xf]
        %v2686 = vld [vmem:[%s2657 + $0xa8] sm:$0xf]
        %v2687 = vld [vmem:[%s2657 + $0xac] sm:$0xf]
        %v2688 = vld [vmem:[%s2657 + $0xb4] sm:$0xf]
        %v2689 = vld [vmem:[%s2657 + $0xb8] sm:$0xf]
        %v2722 = vunpack.c.l.b16 %v2658
        %v2723 = vunpack.c.l.b16 %v2659
        %v2724 = vunpack.c.l.b16 %v2660
        %v2725 = vunpack.c.l.b16 %v2661
        %v2726 = vunpack.c.l.b16 %v2662
        %v2727 = vunpack.c.l.b16 %v2663
        %v2728 = vunpack.c.l.b16 %v2664
        %v2729 = vunpack.c.l.b16 %v2665
        %v2730 = vunpack.c.l.b16 %v2666
        %v2731 = vunpack.c.l.b16 %v2667
        %v2732 = vunpack.c.l.b16 %v2668
        %v2733 = vunpack.c.l.b16 %v2669
        %v2734 = vunpack.c.l.b16 %v2670
        %v2735 = vunpack.c.l.b16 %v2671
        %v2736 = vunpack.c.l.b16 %v2672
        %v2737 = vunpack.c.l.b16 %v2673
        %v2738 = vunpack.c.l.b16 %v2674
        %v2739 = vunpack.c.l.b16 %v2675
        %v2740 = vunpack.c.l.b16 %v2676
        %v2741 = vunpack.c.l.b16 %v2677
        %v2742 = vunpack.c.l.b16 %v2678
        %v2743 = vunpack.c.l.b16 %v2679
        %v2744 = vunpack.c.l.b16 %v2680
        %v2745 = vunpack.c.l.b16 %v2681
        %v2746 = vunpack.c.l.b16 %v2682
        %v2747 = vunpack.c.l.b16 %v2683
        %v2748 = vunpack.c.l.b16 %v2684
        %v2749 = vunpack.c.l.b16 %v2685
        %v2750 = vunpack.c.l.b16 %v2686
        %v2751 = vunpack.c.l.b16 %v2687
        %v2752 = vunpack.c.l.b16 %v2688
        %v2753 = vunpack.c.l.b16 %v2689
        %v2754 = vpack.c.b16 %v2723, %v2722
        %v2755 = vpack.c.b16 %v2725, %v2724
        %v2756 = vpack.c.b16 %v2727, %v2726
        %v2757 = vpack.c.b16 %v2729, %v2728
        %v2758 = vpack.c.b16 %v2731, %v2730
        %v2759 = vpack.c.b16 %v2733, %v2732
        %v2760 = vpack.c.b16 %v2735, %v2734
        %v2761 = vpack.c.b16 %v2737, %v2736
        %v2762 = vpack.c.b16 %v2739, %v2738
        %v2763 = vpack.c.b16 %v2741, %v2740
        %v2764 = vpack.c.b16 %v2743, %v2742
        %v2765 = vpack.c.b16 %v2745, %v2744
        %v2766 = vpack.c.b16 %v2747, %v2746
        %v2767 = vpack.c.b16 %v2749, %v2748
        %v2768 = vpack.c.b16 %v2751, %v2750
        %v2769 = vpack.c.b16 %v2753, %v2752
        %2770 = vrot.lane.b32.xlu0 %v2754, 64
        %v2771 = vpop.permute.xlu0 %2770
        %2772 = vrot.lane.b32.xlu0 %v2755, 64
        %v2773 = vpop.permute.xlu0 %2772
        %2774 = vrot.lane.b32.xlu0 %v2756, 64
        %v2775 = vpop.permute.xlu0 %2774
        %2776 = vrot.lane.b32.xlu0 %v2757, 64
        %v2777 = vpop.permute.xlu0 %2776
        %2778 = vrot.lane.b32.xlu0 %v2758, 64
        %v2779 = vpop.permute.xlu0 %2778
        %2780 = vrot.lane.b32.xlu0 %v2759, 64
        %v2781 = vpop.permute.xlu0 %2780
        %2782 = vrot.lane.b32.xlu0 %v2760, 64
        %v2783 = vpop.permute.xlu0 %2782
        %2784 = vrot.lane.b32.xlu0 %v2761, 64
        %v2785 = vpop.permute.xlu0 %2784
        %2786 = vrot.lane.b32.xlu0 %v2762, 64
        %v2787 = vpop.permute.xlu0 %2786
        %2788 = vrot.lane.b32.xlu0 %v2763, 64
        %v2789 = vpop.permute.xlu0 %2788
        %2790 = vrot.lane.b32.xlu0 %v2764, 64
        %v2791 = vpop.permute.xlu0 %2790
        %2792 = vrot.lane.b32.xlu0 %v2765, 64
        %v2793 = vpop.permute.xlu0 %2792
        %2794 = vrot.lane.b32.xlu0 %v2766, 64
        %v2795 = vpop.permute.xlu0 %2794
        %2796 = vrot.lane.b32.xlu0 %v2767, 64
        %v2797 = vpop.permute.xlu0 %2796
        %2798 = vrot.lane.b32.xlu0 %v2768, 64
        %v2799 = vpop.permute.xlu0 %2798
        %2800 = vrot.lane.b32.xlu0 %v2769, 64
        %v2801 = vpop.permute.xlu0 %2800
        %2818 = vst.msk [vmem:[#allocation3 + $0x8] sm:$0xff] %vm1775, %v2771
        %2819 = vst.msk [vmem:[#allocation3 + $0x20] sm:$0xff] %vm1775, %v2773
        %2820 = vst.msk [vmem:[#allocation3 + $0x38] sm:$0xff] %vm1775, %v2775
        %2821 = vst.msk [vmem:[#allocation3 + $0x50] sm:$0xff] %vm1775, %v2777
        %2822 = vst.msk [vmem:[#allocation3 + $0x68] sm:$0xff] %vm1775, %v2779
        %2823 = vst.msk [vmem:[#allocation3 + $0x80] sm:$0xff] %vm1775, %v2781
        %2824 = vst.msk [vmem:[#allocation3 + $0x98] sm:$0xff] %vm1775, %v2783
        %2825 = vst.msk [vmem:[#allocation3 + $0xb0] sm:$0xff] %vm1775, %v2785
        %2826 = vst.msk [vmem:[#allocation3 + $0xc8] sm:$0xff] %vm1775, %v2787
        %2827 = vst.msk [vmem:[#allocation3 + $0xe0] sm:$0xff] %vm1775, %v2789
        %2828 = vst.msk [vmem:[#allocation3 + $0xf8] sm:$0xff] %vm1775, %v2791
        %2829 = vst.msk [vmem:[#allocation3 + $0x110] sm:$0xff] %vm1775, %v2793
        %2830 = vst.msk [vmem:[#allocation3 + $0x128] sm:$0xff] %vm1775, %v2795
        %2831 = vst.msk [vmem:[#allocation3 + $0x140] sm:$0xff] %vm1775, %v2797
        %2832 = vst.msk [vmem:[#allocation3 + $0x158] sm:$0xff] %vm1775, %v2799
        %2833 = vst.msk [vmem:[#allocation3 + $0x170] sm:$0xff] %vm1775, %v2801
        %v2834 = vld [vmem:[%s2657] sm:$0xf]
        %v2835 = vld [vmem:[%s2657 + $0x4] sm:$0xf]
        %v2836 = vld [vmem:[%s2657 + $0x8] sm:$0x1]
        %v2837 = vld [vmem:[%s2657 + $0xc] sm:$0xf]
        %v2838 = vld [vmem:[%s2657 + $0x10] sm:$0xf]
        %v2839 = vld [vmem:[%s2657 + $0x14] sm:$0x1]
        %v2840 = vld [vmem:[%s2657 + $0x18] sm:$0xf]
        %v2841 = vld [vmem:[%s2657 + $0x1c] sm:$0xf]
        %v2842 = vld [vmem:[%s2657 + $0x20] sm:$0x1]
        %v2843 = vld [vmem:[%s2657 + $0x24] sm:$0xf]
        %v2844 = vld [vmem:[%s2657 + $0x28] sm:$0xf]
        %v2845 = vld [vmem:[%s2657 + $0x2c] sm:$0x1]
        %v2846 = vld [vmem:[%s2657 + $0x30] sm:$0xf]
        %v2847 = vld [vmem:[%s2657 + $0x34] sm:$0xf]
        %v2848 = vld [vmem:[%s2657 + $0x38] sm:$0x1]
        %v2849 = vld [vmem:[%s2657 + $0x3c] sm:$0xf]
        %v2850 = vld [vmem:[%s2657 + $0x40] sm:$0xf]
        %v2851 = vld [vmem:[%s2657 + $0x44] sm:$0x1]
        %v2852 = vld [vmem:[%s2657 + $0x48] sm:$0xf]
        %v2853 = vld [vmem:[%s2657 + $0x4c] sm:$0xf]
        %v2854 = vld [vmem:[%s2657 + $0x50] sm:$0x1]
        %v2855 = vld [vmem:[%s2657 + $0x54] sm:$0xf]
        %v2856 = vld [vmem:[%s2657 + $0x58] sm:$0xf]
        %v2857 = vld [vmem:[%s2657 + $0x5c] sm:$0x1]
        %v2858 = vld [vmem:[%s2657 + $0x60] sm:$0xf]
        %v2859 = vld [vmem:[%s2657 + $0x64] sm:$0xf]
        %v2860 = vld [vmem:[%s2657 + $0x68] sm:$0x1]
        %v2861 = vld [vmem:[%s2657 + $0x6c] sm:$0xf]
        %v2862 = vld [vmem:[%s2657 + $0x70] sm:$0xf]
        %v2863 = vld [vmem:[%s2657 + $0x74] sm:$0x1]
        %v2864 = vld [vmem:[%s2657 + $0x78] sm:$0xf]
        %v2865 = vld [vmem:[%s2657 + $0x7c] sm:$0xf]
        %v2866 = vld [vmem:[%s2657 + $0x80] sm:$0x1]
        %v2867 = vld [vmem:[%s2657 + $0x84] sm:$0xf]
        %v2868 = vld [vmem:[%s2657 + $0x88] sm:$0xf]
        %v2869 = vld [vmem:[%s2657 + $0x8c] sm:$0x1]
        %v2870 = vld [vmem:[%s2657 + $0x90] sm:$0xf]
        %v2871 = vld [vmem:[%s2657 + $0x94] sm:$0xf]
        %v2872 = vld [vmem:[%s2657 + $0x98] sm:$0x1]
        %v2873 = vld [vmem:[%s2657 + $0x9c] sm:$0xf]
        %v2874 = vld [vmem:[%s2657 + $0xa0] sm:$0xf]
        %v2875 = vld [vmem:[%s2657 + $0xa4] sm:$0x1]
        %v2876 = vld [vmem:[%s2657 + $0xa8] sm:$0xf]
        %v2877 = vld [vmem:[%s2657 + $0xac] sm:$0xf]
        %v2878 = vld [vmem:[%s2657 + $0xb0] sm:$0x1]
        %v2879 = vld [vmem:[%s2657 + $0xb4] sm:$0xf]
        %v2880 = vld [vmem:[%s2657 + $0xb8] sm:$0xf]
        %v2881 = vld [vmem:[%s2657 + $0xbc] sm:$0x1]
        %v2930 = vunpack.c.l.b16 %v2834
        %v2931 = vunpack.c.l.b16 %v2835
        %v2932 = vunpack.c.l.b16 %v2836
        %v2933 = vunpack.c.l.b16 %v2837
        %v2934 = vunpack.c.l.b16 %v2838
        %v2935 = vunpack.c.l.b16 %v2839
        %v2936 = vunpack.c.l.b16 %v2840
        %v2937 = vunpack.c.l.b16 %v2841
        %v2938 = vunpack.c.l.b16 %v2842
        %v2939 = vunpack.c.l.b16 %v2843
        %v2940 = vunpack.c.l.b16 %v2844
        %v2941 = vunpack.c.l.b16 %v2845
        %v2942 = vunpack.c.l.b16 %v2846
        %v2943 = vunpack.c.l.b16 %v2847
        %v2944 = vunpack.c.l.b16 %v2848
        %v2945 = vunpack.c.l.b16 %v2849
        %v2946 = vunpack.c.l.b16 %v2850
        %v2947 = vunpack.c.l.b16 %v2851
        %v2948 = vunpack.c.l.b16 %v2852
        %v2949 = vunpack.c.l.b16 %v2853
        %v2950 = vunpack.c.l.b16 %v2854
        %v2951 = vunpack.c.l.b16 %v2855
        %v2952 = vunpack.c.l.b16 %v2856
        %v2953 = vunpack.c.l.b16 %v2857
        %v2954 = vunpack.c.l.b16 %v2858
        %v2955 = vunpack.c.l.b16 %v2859
        %v2956 = vunpack.c.l.b16 %v2860
        %v2957 = vunpack.c.l.b16 %v2861
        %v2958 = vunpack.c.l.b16 %v2862
        %v2959 = vunpack.c.l.b16 %v2863
        %v2960 = vunpack.c.l.b16 %v2864
        %v2961 = vunpack.c.l.b16 %v2865
        %v2962 = vunpack.c.l.b16 %v2866
        %v2963 = vunpack.c.l.b16 %v2867
        %v2964 = vunpack.c.l.b16 %v2868
        %v2965 = vunpack.c.l.b16 %v2869
        %v2966 = vunpack.c.l.b16 %v2870
        %v2967 = vunpack.c.l.b16 %v2871
        %v2968 = vunpack.c.l.b16 %v2872
        %v2969 = vunpack.c.l.b16 %v2873
        %v2970 = vunpack.c.l.b16 %v2874
        %v2971 = vunpack.c.l.b16 %v2875
        %v2972 = vunpack.c.l.b16 %v2876
        %v2973 = vunpack.c.l.b16 %v2877
        %v2974 = vunpack.c.l.b16 %v2878
        %v2975 = vunpack.c.l.b16 %v2879
        %v2976 = vunpack.c.l.b16 %v2880
        %v2977 = vunpack.c.l.b16 %v2881
        %v2978 = vpack.c.b16 %v2931, %v2930
        %v2979 = vpack.c.b16 %v2932, %v2932
        %v2980 = vpack.c.b16 %v2934, %v2933
        %v2981 = vpack.c.b16 %v2935, %v2935
        %v2982 = vpack.c.b16 %v2937, %v2936
        %v2983 = vpack.c.b16 %v2938, %v2938
        %v2984 = vpack.c.b16 %v2940, %v2939
        %v2985 = vpack.c.b16 %v2941, %v2941
        %v2986 = vpack.c.b16 %v2943, %v2942
        %v2987 = vpack.c.b16 %v2944, %v2944
        %v2988 = vpack.c.b16 %v2946, %v2945
        %v2989 = vpack.c.b16 %v2947, %v2947
        %v2990 = vpack.c.b16 %v2949, %v2948
        %v2991 = vpack.c.b16 %v2950, %v2950
        %v2992 = vpack.c.b16 %v2952, %v2951
        %v2993 = vpack.c.b16 %v2953, %v2953
        %v2994 = vpack.c.b16 %v2955, %v2954
        %v2995 = vpack.c.b16 %v2956, %v2956
        %v2996 = vpack.c.b16 %v2958, %v2957
        %v2997 = vpack.c.b16 %v2959, %v2959
        %v2998 = vpack.c.b16 %v2961, %v2960
        %v2999 = vpack.c.b16 %v2962, %v2962
        %v3000 = vpack.c.b16 %v2964, %v2963
        %v3001 = vpack.c.b16 %v2965, %v2965
        %v3002 = vpack.c.b16 %v2967, %v2966
        %v3003 = vpack.c.b16 %v2968, %v2968
        %v3004 = vpack.c.b16 %v2970, %v2969
        %v3005 = vpack.c.b16 %v2971, %v2971
        %v3006 = vpack.c.b16 %v2973, %v2972
        %v3007 = vpack.c.b16 %v2974, %v2974
        %v3008 = vpack.c.b16 %v2976, %v2975
        %v3009 = vpack.c.b16 %v2977, %v2977
        %v3011 = vshrl.u32 %v2978, 16
        %v3013 = vshll.u32 %v2978, 16
        %v3015 = vrot.slane %v3013, 1
        %v3016 = vor.u32 %v3011, %v3015
        %v3018 = vshll.u32 %v2979, 16
        %v3020 = vrot.slane %v3018, 1
        %v3021 = vsel %vm1244, %v3016, %v3020
        %v3023 = vshrl.u32 %v2980, 16
        %v3025 = vshll.u32 %v2980, 16
        %v3027 = vrot.slane %v3025, 1
        %v3028 = vor.u32 %v3023, %v3027
        %v3030 = vshll.u32 %v2981, 16
        %v3032 = vrot.slane %v3030, 1
        %v3033 = vsel %vm1244, %v3028, %v3032
        %v3035 = vshrl.u32 %v2982, 16
        %v3037 = vshll.u32 %v2982, 16
        %v3039 = vrot.slane %v3037, 1
        %v3040 = vor.u32 %v3035, %v3039
        %v3042 = vshll.u32 %v2983, 16
        %v3044 = vrot.slane %v3042, 1
        %v3045 = vsel %vm1244, %v3040, %v3044
        %v3047 = vshrl.u32 %v2984, 16
        %v3049 = vshll.u32 %v2984, 16
        %v3051 = vrot.slane %v3049, 1
        %v3052 = vor.u32 %v3047, %v3051
        %v3054 = vshll.u32 %v2985, 16
        %v3056 = vrot.slane %v3054, 1
        %v3057 = vsel %vm1244, %v3052, %v3056
        %v3059 = vshrl.u32 %v2986, 16
        %v3061 = vshll.u32 %v2986, 16
        %v3063 = vrot.slane %v3061, 1
        %v3064 = vor.u32 %v3059, %v3063
        %v3066 = vshll.u32 %v2987, 16
        %v3068 = vrot.slane %v3066, 1
        %v3069 = vsel %vm1244, %v3064, %v3068
        %v3071 = vshrl.u32 %v2988, 16
        %v3073 = vshll.u32 %v2988, 16
        %v3075 = vrot.slane %v3073, 1
        %v3076 = vor.u32 %v3071, %v3075
        %v3078 = vshll.u32 %v2989, 16
        %v3080 = vrot.slane %v3078, 1
        %v3081 = vsel %vm1244, %v3076, %v3080
        %v3083 = vshrl.u32 %v2990, 16
        %v3085 = vshll.u32 %v2990, 16
        %v3087 = vrot.slane %v3085, 1
        %v3088 = vor.u32 %v3083, %v3087
        %v3090 = vshll.u32 %v2991, 16
        %v3092 = vrot.slane %v3090, 1
        %v3093 = vsel %vm1244, %v3088, %v3092
        %v3095 = vshrl.u32 %v2992, 16
        %v3097 = vshll.u32 %v2992, 16
        %v3099 = vrot.slane %v3097, 1
        %v3100 = vor.u32 %v3095, %v3099
        %v3102 = vshll.u32 %v2993, 16
        %v3104 = vrot.slane %v3102, 1
        %v3105 = vsel %vm1244, %v3100, %v3104
        %v3107 = vshrl.u32 %v2994, 16
        %v3109 = vshll.u32 %v2994, 16
        %v3111 = vrot.slane %v3109, 1
        %v3112 = vor.u32 %v3107, %v3111
        %v3114 = vshll.u32 %v2995, 16
        %v3116 = vrot.slane %v3114, 1
        %v3117 = vsel %vm1244, %v3112, %v3116
        %v3119 = vshrl.u32 %v2996, 16
        %v3121 = vshll.u32 %v2996, 16
        %v3123 = vrot.slane %v3121, 1
        %v3124 = vor.u32 %v3119, %v3123
        %v3126 = vshll.u32 %v2997, 16
        %v3128 = vrot.slane %v3126, 1
        %v3129 = vsel %vm1244, %v3124, %v3128
        %v3131 = vshrl.u32 %v2998, 16
        %v3133 = vshll.u32 %v2998, 16
        %v3135 = vrot.slane %v3133, 1
        %v3136 = vor.u32 %v3131, %v3135
        %v3138 = vshll.u32 %v2999, 16
        %v3140 = vrot.slane %v3138, 1
        %v3141 = vsel %vm1244, %v3136, %v3140
        %v3143 = vshrl.u32 %v3000, 16
        %v3145 = vshll.u32 %v3000, 16
        %v3147 = vrot.slane %v3145, 1
        %v3148 = vor.u32 %v3143, %v3147
        %v3150 = vshll.u32 %v3001, 16
        %v3152 = vrot.slane %v3150, 1
        %v3153 = vsel %vm1244, %v3148, %v3152
        %v3155 = vshrl.u32 %v3002, 16
        %v3157 = vshll.u32 %v3002, 16
        %v3159 = vrot.slane %v3157, 1
        %v3160 = vor.u32 %v3155, %v3159
        %v3162 = vshll.u32 %v3003, 16
        %v3164 = vrot.slane %v3162, 1
        %v3165 = vsel %vm1244, %v3160, %v3164
        %v3167 = vshrl.u32 %v3004, 16
        %v3169 = vshll.u32 %v3004, 16
        %v3171 = vrot.slane %v3169, 1
        %v3172 = vor.u32 %v3167, %v3171
        %v3174 = vshll.u32 %v3005, 16
        %v3176 = vrot.slane %v3174, 1
        %v3177 = vsel %vm1244, %v3172, %v3176
        %v3179 = vshrl.u32 %v3006, 16
        %v3181 = vshll.u32 %v3006, 16
        %v3183 = vrot.slane %v3181, 1
        %v3184 = vor.u32 %v3179, %v3183
        %v3186 = vshll.u32 %v3007, 16
        %v3188 = vrot.slane %v3186, 1
        %v3189 = vsel %vm1244, %v3184, %v3188
        %v3191 = vshrl.u32 %v3008, 16
        %v3193 = vshll.u32 %v3008, 16
        %v3195 = vrot.slane %v3193, 1
        %v3196 = vor.u32 %v3191, %v3195
        %v3198 = vshll.u32 %v3009, 16
        %v3200 = vrot.slane %v3198, 1
        %v3201 = vsel %vm1244, %v3196, %v3200
        %3202 = vrot.lane.b32.xlu0 %v3021, 96
        %v3203 = vpop.permute.xlu0 %3202
        %3204 = vrot.lane.b32.xlu0 %v3033, 96
        %v3205 = vpop.permute.xlu0 %3204
        %3206 = vrot.lane.b32.xlu0 %v3045, 96
        %v3207 = vpop.permute.xlu0 %3206
        %3208 = vrot.lane.b32.xlu0 %v3057, 96
        %v3209 = vpop.permute.xlu0 %3208
        %3210 = vrot.lane.b32.xlu0 %v3069, 96
        %v3211 = vpop.permute.xlu0 %3210
        %3212 = vrot.lane.b32.xlu0 %v3081, 96
        %v3213 = vpop.permute.xlu0 %3212
        %3214 = vrot.lane.b32.xlu0 %v3093, 96
        %v3215 = vpop.permute.xlu0 %3214
        %3216 = vrot.lane.b32.xlu0 %v3105, 96
        %v3217 = vpop.permute.xlu0 %3216
        %3218 = vrot.lane.b32.xlu0 %v3117, 96
        %v3219 = vpop.permute.xlu0 %3218
        %3220 = vrot.lane.b32.xlu0 %v3129, 96
        %v3221 = vpop.permute.xlu0 %3220
        %3222 = vrot.lane.b32.xlu0 %v3141, 96
        %v3223 = vpop.permute.xlu0 %3222
        %3224 = vrot.lane.b32.xlu0 %v3153, 96
        %v3225 = vpop.permute.xlu0 %3224
        %3226 = vrot.lane.b32.xlu0 %v3165, 96
        %v3227 = vpop.permute.xlu0 %3226
        %3228 = vrot.lane.b32.xlu0 %v3177, 96
        %v3229 = vpop.permute.xlu0 %3228
        %3230 = vrot.lane.b32.xlu0 %v3189, 96
        %v3231 = vpop.permute.xlu0 %3230
        %3232 = vrot.lane.b32.xlu0 %v3201, 96
        %v3233 = vpop.permute.xlu0 %3232
        %3250 = vst.msk [vmem:[#allocation3 + $0x8] sm:$0xff] %vm1952, %v3203
        %3251 = vst.msk [vmem:[#allocation3 + $0x20] sm:$0xff] %vm1952, %v3205
        %3252 = vst.msk [vmem:[#allocation3 + $0x38] sm:$0xff] %vm1952, %v3207
        %3253 = vst.msk [vmem:[#allocation3 + $0x50] sm:$0xff] %vm1952, %v3209
        %3254 = vst.msk [vmem:[#allocation3 + $0x68] sm:$0xff] %vm1952, %v3211
        %3255 = vst.msk [vmem:[#allocation3 + $0x80] sm:$0xff] %vm1952, %v3213
        %3256 = vst.msk [vmem:[#allocation3 + $0x98] sm:$0xff] %vm1952, %v3215
        %3257 = vst.msk [vmem:[#allocation3 + $0xb0] sm:$0xff] %vm1952, %v3217
        %3258 = vst.msk [vmem:[#allocation3 + $0xc8] sm:$0xff] %vm1952, %v3219
        %3259 = vst.msk [vmem:[#allocation3 + $0xe0] sm:$0xff] %vm1952, %v3221
        %3260 = vst.msk [vmem:[#allocation3 + $0xf8] sm:$0xff] %vm1952, %v3223
        %3261 = vst.msk [vmem:[#allocation3 + $0x110] sm:$0xff] %vm1952, %v3225
        %3262 = vst.msk [vmem:[#allocation3 + $0x128] sm:$0xff] %vm1952, %v3227
        %3263 = vst.msk [vmem:[#allocation3 + $0x140] sm:$0xff] %vm1952, %v3229
        %3264 = vst.msk [vmem:[#allocation3 + $0x158] sm:$0xff] %vm1952, %v3231
        %3265 = vst.msk [vmem:[#allocation3 + $0x170] sm:$0xff] %vm1952, %v3233
        %v3266 = vld [vmem:[%s2657] sm:$0xe]
        %v3267 = vld [vmem:[%s2657 + $0x4] sm:$0xf]
        %v3268 = vld [vmem:[%s2657 + $0x8] sm:$0x1]
        %v3269 = vld [vmem:[%s2657 + $0xc] sm:$0xe]
        %v3270 = vld [vmem:[%s2657 + $0x10] sm:$0xf]
        %v3271 = vld [vmem:[%s2657 + $0x14] sm:$0x1]
        %v3272 = vld [vmem:[%s2657 + $0x18] sm:$0xe]
        %v3273 = vld [vmem:[%s2657 + $0x1c] sm:$0xf]
        %v3274 = vld [vmem:[%s2657 + $0x20] sm:$0x1]
        %v3275 = vld [vmem:[%s2657 + $0x24] sm:$0xe]
        %v3276 = vld [vmem:[%s2657 + $0x28] sm:$0xf]
        %v3277 = vld [vmem:[%s2657 + $0x2c] sm:$0x1]
        %v3278 = vld [vmem:[%s2657 + $0x30] sm:$0xe]
        %v3279 = vld [vmem:[%s2657 + $0x34] sm:$0xf]
        %v3280 = vld [vmem:[%s2657 + $0x38] sm:$0x1]
        %v3281 = vld [vmem:[%s2657 + $0x3c] sm:$0xe]
        %v3282 = vld [vmem:[%s2657 + $0x40] sm:$0xf]
        %v3283 = vld [vmem:[%s2657 + $0x44] sm:$0x1]
        %v3284 = vld [vmem:[%s2657 + $0x48] sm:$0xe]
        %v3285 = vld [vmem:[%s2657 + $0x4c] sm:$0xf]
        %v3286 = vld [vmem:[%s2657 + $0x50] sm:$0x1]
        %v3287 = vld [vmem:[%s2657 + $0x54] sm:$0xe]
        %v3288 = vld [vmem:[%s2657 + $0x58] sm:$0xf]
        %v3289 = vld [vmem:[%s2657 + $0x5c] sm:$0x1]
        %v3290 = vld [vmem:[%s2657 + $0x60] sm:$0xe]
        %v3291 = vld [vmem:[%s2657 + $0x64] sm:$0xf]
        %v3292 = vld [vmem:[%s2657 + $0x68] sm:$0x1]
        %v3293 = vld [vmem:[%s2657 + $0x6c] sm:$0xe]
        %v3294 = vld [vmem:[%s2657 + $0x70] sm:$0xf]
        %v3295 = vld [vmem:[%s2657 + $0x74] sm:$0x1]
        %v3296 = vld [vmem:[%s2657 + $0x78] sm:$0xe]
        %v3297 = vld [vmem:[%s2657 + $0x7c] sm:$0xf]
        %v3298 = vld [vmem:[%s2657 + $0x80] sm:$0x1]
        %v3299 = vld [vmem:[%s2657 + $0x84] sm:$0xe]
        %v3300 = vld [vmem:[%s2657 + $0x88] sm:$0xf]
        %v3301 = vld [vmem:[%s2657 + $0x8c] sm:$0x1]
        %v3302 = vld [vmem:[%s2657 + $0x90] sm:$0xe]
        %v3303 = vld [vmem:[%s2657 + $0x94] sm:$0xf]
        %v3304 = vld [vmem:[%s2657 + $0x98] sm:$0x1]
        %v3305 = vld [vmem:[%s2657 + $0x9c] sm:$0xe]
        %v3306 = vld [vmem:[%s2657 + $0xa0] sm:$0xf]
        %v3307 = vld [vmem:[%s2657 + $0xa4] sm:$0x1]
        %v3308 = vld [vmem:[%s2657 + $0xa8] sm:$0xe]
        %v3309 = vld [vmem:[%s2657 + $0xac] sm:$0xf]
        %v3310 = vld [vmem:[%s2657 + $0xb0] sm:$0x1]
        %v3311 = vld [vmem:[%s2657 + $0xb4] sm:$0xe]
        %v3312 = vld [vmem:[%s2657 + $0xb8] sm:$0xf]
        %v3313 = vld [vmem:[%s2657 + $0xbc] sm:$0x1]
        %v3362 = vunpack.c.l.b16 %v3266
        %v3363 = vunpack.c.l.b16 %v3267
        %v3364 = vunpack.c.l.b16 %v3268
        %v3365 = vunpack.c.l.b16 %v3269
        %v3366 = vunpack.c.l.b16 %v3270
        %v3367 = vunpack.c.l.b16 %v3271
        %v3368 = vunpack.c.l.b16 %v3272
        %v3369 = vunpack.c.l.b16 %v3273
        %v3370 = vunpack.c.l.b16 %v3274
        %v3371 = vunpack.c.l.b16 %v3275
        %v3372 = vunpack.c.l.b16 %v3276
        %v3373 = vunpack.c.l.b16 %v3277
        %v3374 = vunpack.c.l.b16 %v3278
        %v3375 = vunpack.c.l.b16 %v3279
        %v3376 = vunpack.c.l.b16 %v3280
        %v3377 = vunpack.c.l.b16 %v3281
        %v3378 = vunpack.c.l.b16 %v3282
        %v3379 = vunpack.c.l.b16 %v3283
        %v3380 = vunpack.c.l.b16 %v3284
        %v3381 = vunpack.c.l.b16 %v3285
        %v3382 = vunpack.c.l.b16 %v3286
        %v3383 = vunpack.c.l.b16 %v3287
        %v3384 = vunpack.c.l.b16 %v3288
        %v3385 = vunpack.c.l.b16 %v3289
        %v3386 = vunpack.c.l.b16 %v3290
        %v3387 = vunpack.c.l.b16 %v3291
        %v3388 = vunpack.c.l.b16 %v3292
        %v3389 = vunpack.c.l.b16 %v3293
        %v3390 = vunpack.c.l.b16 %v3294
        %v3391 = vunpack.c.l.b16 %v3295
        %v3392 = vunpack.c.l.b16 %v3296
        %v3393 = vunpack.c.l.b16 %v3297
        %v3394 = vunpack.c.l.b16 %v3298
        %v3395 = vunpack.c.l.b16 %v3299
        %v3396 = vunpack.c.l.b16 %v3300
        %v3397 = vunpack.c.l.b16 %v3301
        %v3398 = vunpack.c.l.b16 %v3302
        %v3399 = vunpack.c.l.b16 %v3303
        %v3400 = vunpack.c.l.b16 %v3304
        %v3401 = vunpack.c.l.b16 %v3305
        %v3402 = vunpack.c.l.b16 %v3306
        %v3403 = vunpack.c.l.b16 %v3307
        %v3404 = vunpack.c.l.b16 %v3308
        %v3405 = vunpack.c.l.b16 %v3309
        %v3406 = vunpack.c.l.b16 %v3310
        %v3407 = vunpack.c.l.b16 %v3311
        %v3408 = vunpack.c.l.b16 %v3312
        %v3409 = vunpack.c.l.b16 %v3313
        %v3410 = vpack.c.b16 %v3363, %v3362
        %v3411 = vpack.c.b16 %v3364, %v3364
        %v3412 = vpack.c.b16 %v3366, %v3365
        %v3413 = vpack.c.b16 %v3367, %v3367
        %v3414 = vpack.c.b16 %v3369, %v3368
        %v3415 = vpack.c.b16 %v3370, %v3370
        %v3416 = vpack.c.b16 %v3372, %v3371
        %v3417 = vpack.c.b16 %v3373, %v3373
        %v3418 = vpack.c.b16 %v3375, %v3374
        %v3419 = vpack.c.b16 %v3376, %v3376
        %v3420 = vpack.c.b16 %v3378, %v3377
        %v3421 = vpack.c.b16 %v3379, %v3379
        %v3422 = vpack.c.b16 %v3381, %v3380
        %v3423 = vpack.c.b16 %v3382, %v3382
        %v3424 = vpack.c.b16 %v3384, %v3383
        %v3425 = vpack.c.b16 %v3385, %v3385
        %v3426 = vpack.c.b16 %v3387, %v3386
        %v3427 = vpack.c.b16 %v3388, %v3388
        %v3428 = vpack.c.b16 %v3390, %v3389
        %v3429 = vpack.c.b16 %v3391, %v3391
        %v3430 = vpack.c.b16 %v3393, %v3392
        %v3431 = vpack.c.b16 %v3394, %v3394
        %v3432 = vpack.c.b16 %v3396, %v3395
        %v3433 = vpack.c.b16 %v3397, %v3397
        %v3434 = vpack.c.b16 %v3399, %v3398
        %v3435 = vpack.c.b16 %v3400, %v3400
        %v3436 = vpack.c.b16 %v3402, %v3401
        %v3437 = vpack.c.b16 %v3403, %v3403
        %v3438 = vpack.c.b16 %v3405, %v3404
        %v3439 = vpack.c.b16 %v3406, %v3406
        %v3440 = vpack.c.b16 %v3408, %v3407
        %v3441 = vpack.c.b16 %v3409, %v3409
        %v3442 = vrot.slane %v3410, 1
        %v3443 = vrot.slane %v3411, 1
        %v3444 = vsel %vm1678, %v3442, %v3443
        %v3445 = vrot.slane %v3412, 1
        %v3446 = vrot.slane %v3413, 1
        %v3447 = vsel %vm1678, %v3445, %v3446
        %v3448 = vrot.slane %v3414, 1
        %v3449 = vrot.slane %v3415, 1
        %v3450 = vsel %vm1678, %v3448, %v3449
        %v3451 = vrot.slane %v3416, 1
        %v3452 = vrot.slane %v3417, 1
        %v3453 = vsel %vm1678, %v3451, %v3452
        %v3454 = vrot.slane %v3418, 1
        %v3455 = vrot.slane %v3419, 1
        %v3456 = vsel %vm1678, %v3454, %v3455
        %v3457 = vrot.slane %v3420, 1
        %v3458 = vrot.slane %v3421, 1
        %v3459 = vsel %vm1678, %v3457, %v3458
        %v3460 = vrot.slane %v3422, 1
        %v3461 = vrot.slane %v3423, 1
        %v3462 = vsel %vm1678, %v3460, %v3461
        %v3463 = vrot.slane %v3424, 1
        %v3464 = vrot.slane %v3425, 1
        %v3465 = vsel %vm1678, %v3463, %v3464
        %v3466 = vrot.slane %v3426, 1
        %v3467 = vrot.slane %v3427, 1
        %v3468 = vsel %vm1678, %v3466, %v3467
        %v3469 = vrot.slane %v3428, 1
        %v3470 = vrot.slane %v3429, 1
        %v3471 = vsel %vm1678, %v3469, %v3470
        %v3472 = vrot.slane %v3430, 1
        %v3473 = vrot.slane %v3431, 1
        %v3474 = vsel %vm1678, %v3472, %v3473
        %v3475 = vrot.slane %v3432, 1
        %v3476 = vrot.slane %v3433, 1
        %v3477 = vsel %vm1678, %v3475, %v3476
        %v3478 = vrot.slane %v3434, 1
        %v3479 = vrot.slane %v3435, 1
        %v3480 = vsel %vm1678, %v3478, %v3479
        %v3481 = vrot.slane %v3436, 1
        %v3482 = vrot.slane %v3437, 1
        %v3483 = vsel %vm1678, %v3481, %v3482
        %v3484 = vrot.slane %v3438, 1
        %v3485 = vrot.slane %v3439, 1
        %v3486 = vsel %vm1678, %v3484, %v3485
        %v3487 = vrot.slane %v3440, 1
        %v3488 = vrot.slane %v3441, 1
        %v3489 = vsel %vm1678, %v3487, %v3488
        %3506 = vst.msk [vmem:[#allocation3 + $0x10] sm:$0xff] %vm1051, %v3444
        %3507 = vst.msk [vmem:[#allocation3 + $0x28] sm:$0xff] %vm1051, %v3447
        %3508 = vst.msk [vmem:[#allocation3 + $0x40] sm:$0xff] %vm1051, %v3450
        %3509 = vst.msk [vmem:[#allocation3 + $0x58] sm:$0xff] %vm1051, %v3453
        %3510 = vst.msk [vmem:[#allocation3 + $0x70] sm:$0xff] %vm1051, %v3456
        %3511 = vst.msk [vmem:[#allocation3 + $0x88] sm:$0xff] %vm1051, %v3459
        %3512 = vst.msk [vmem:[#allocation3 + $0xa0] sm:$0xff] %vm1051, %v3462
        %3513 = vst.msk [vmem:[#allocation3 + $0xb8] sm:$0xff] %vm1051, %v3465
        %3514 = vst.msk [vmem:[#allocation3 + $0xd0] sm:$0xff] %vm1051, %v3468
        %3515 = vst.msk [vmem:[#allocation3 + $0xe8] sm:$0xff] %vm1051, %v3471
        %3516 = vst.msk [vmem:[#allocation3 + $0x100] sm:$0xff] %vm1051, %v3474
        %3517 = vst.msk [vmem:[#allocation3 + $0x118] sm:$0xff] %vm1051, %v3477
        %3518 = vst.msk [vmem:[#allocation3 + $0x130] sm:$0xff] %vm1051, %v3480
        %3519 = vst.msk [vmem:[#allocation3 + $0x148] sm:$0xff] %vm1051, %v3483
        %3520 = vst.msk [vmem:[#allocation3 + $0x160] sm:$0xff] %vm1051, %v3486
        %3521 = vst.msk [vmem:[#allocation3 + $0x178] sm:$0xff] %vm1051, %v3489
        %v3522 = vld [vmem:[#allocation3] sm:$0xff]
        %v3523 = vld [vmem:[#allocation3 + $0x8] sm:$0xff]
        %v3524 = vld [vmem:[#allocation3 + $0x10] sm:$0xff]
        %v3525 = vld [vmem:[#allocation3 + $0x18] sm:$0xff]
        %v3526 = vld [vmem:[#allocation3 + $0x20] sm:$0xff]
        %v3527 = vld [vmem:[#allocation3 + $0x28] sm:$0xff]
        %v3528 = vld [vmem:[#allocation3 + $0x30] sm:$0xff]
        %v3529 = vld [vmem:[#allocation3 + $0x38] sm:$0xff]
        %v3530 = vld [vmem:[#allocation3 + $0x40] sm:$0xff]
        %v3531 = vld [vmem:[#allocation3 + $0x48] sm:$0xff]
        %v3532 = vld [vmem:[#allocation3 + $0x50] sm:$0xff]
        %v3533 = vld [vmem:[#allocation3 + $0x58] sm:$0xff]
        %v3534 = vld [vmem:[#allocation3 + $0x60] sm:$0xff]
        %v3535 = vld [vmem:[#allocation3 + $0x68] sm:$0xff]
        %v3536 = vld [vmem:[#allocation3 + $0x70] sm:$0xff]
        %v3537 = vld [vmem:[#allocation3 + $0x78] sm:$0xff]
        %v3538 = vld [vmem:[#allocation3 + $0x80] sm:$0xff]
        %v3539 = vld [vmem:[#allocation3 + $0x88] sm:$0xff]
        %v3540 = vld [vmem:[#allocation3 + $0x90] sm:$0xff]
        %v3541 = vld [vmem:[#allocation3 + $0x98] sm:$0xff]
        %v3542 = vld [vmem:[#allocation3 + $0xa0] sm:$0xff]
        %v3543 = vld [vmem:[#allocation3 + $0xa8] sm:$0xff]
        %v3544 = vld [vmem:[#allocation3 + $0xb0] sm:$0xff]
        %v3545 = vld [vmem:[#allocation3 + $0xb8] sm:$0xff]
        %v3546 = vld [vmem:[#allocation3 + $0xc0] sm:$0xff]
        %v3547 = vld [vmem:[#allocation3 + $0xc8] sm:$0xff]
        %v3548 = vld [vmem:[#allocation3 + $0xd0] sm:$0xff]
        %v3549 = vld [vmem:[#allocation3 + $0xd8] sm:$0xff]
        %v3550 = vld [vmem:[#allocation3 + $0xe0] sm:$0xff]
        %v3551 = vld [vmem:[#allocation3 + $0xe8] sm:$0xff]
        %v3552 = vld [vmem:[#allocation3 + $0xf0] sm:$0xff]
        %v3553 = vld [vmem:[#allocation3 + $0xf8] sm:$0xff]
        %v3554 = vld [vmem:[#allocation3 + $0x100] sm:$0xff]
        %v3555 = vld [vmem:[#allocation3 + $0x108] sm:$0xff]
        %v3556 = vld [vmem:[#allocation3 + $0x110] sm:$0xff]
        %v3557 = vld [vmem:[#allocation3 + $0x118] sm:$0xff]
        %v3558 = vld [vmem:[#allocation3 + $0x120] sm:$0xff]
        %v3559 = vld [vmem:[#allocation3 + $0x128] sm:$0xff]
        %v3560 = vld [vmem:[#allocation3 + $0x130] sm:$0xff]
        %v3561 = vld [vmem:[#allocation3 + $0x138] sm:$0xff]
        %v3562 = vld [vmem:[#allocation3 + $0x140] sm:$0xff]
        %v3563 = vld [vmem:[#allocation3 + $0x148] sm:$0xff]
        %v3564 = vld [vmem:[#allocation3 + $0x150] sm:$0xff]
        %v3565 = vld [vmem:[#allocation3 + $0x158] sm:$0xff]
        %v3566 = vld [vmem:[#allocation3 + $0x160] sm:$0xff]
        %v3567 = vld [vmem:[#allocation3 + $0x168] sm:$0xff]
        %v3568 = vld [vmem:[#allocation3 + $0x170] sm:$0xff]
        %v3569 = vld [vmem:[#allocation3 + $0x178] sm:$0xff]
        %v3570 = vld [vmem:[%s1] sm:$0xf]
        %v3571 = vld [vmem:[%s1 + $0x4] sm:$0xf]
        %v3572 = vld [vmem:[%s1 + $0x8] sm:$0xf]
        %v3573 = vld [vmem:[%s1 + $0xc] sm:$0xf]
        %v3574 = vld [vmem:[%s1 + $0x10] sm:$0xf]
        %v3575 = vld [vmem:[%s1 + $0x14] sm:$0xf]
        %v3576 = vld [vmem:[%s1 + $0x18] sm:$0xf]
        %v3577 = vld [vmem:[%s1 + $0x1c] sm:$0xf]
        %v3578 = vld [vmem:[%s1 + $0x20] sm:$0xf]
        %v3579 = vld [vmem:[%s1 + $0x24] sm:$0xf]
        %v3580 = vld [vmem:[%s1 + $0x28] sm:$0xf]
        %v3581 = vld [vmem:[%s1 + $0x2c] sm:$0xf]
        %v3582 = vld [vmem:[%s1 + $0x30] sm:$0xf]
        %v3583 = vld [vmem:[%s1 + $0x34] sm:$0xf]
        %v3584 = vld [vmem:[%s1 + $0x38] sm:$0xf]
        %v3585 = vld [vmem:[%s1 + $0x3c] sm:$0xf]
        %v3586 = vld [vmem:[%s1 + $0x40] sm:$0xf]
        %v3587 = vld [vmem:[%s1 + $0x44] sm:$0xf]
        %v3588 = vld [vmem:[%s1 + $0x48] sm:$0xf]
        %v3589 = vld [vmem:[%s1 + $0x4c] sm:$0xf]
        %v3590 = vld [vmem:[%s1 + $0x50] sm:$0xf]
        %v3591 = vld [vmem:[%s1 + $0x54] sm:$0xf]
        %v3592 = vld [vmem:[%s1 + $0x58] sm:$0xf]
        %v3593 = vld [vmem:[%s1 + $0x5c] sm:$0xf]
        %v3594 = vld [vmem:[%s1 + $0x60] sm:$0xf]
        %v3595 = vld [vmem:[%s1 + $0x64] sm:$0xf]
        %v3596 = vld [vmem:[%s1 + $0x68] sm:$0xf]
        %v3597 = vld [vmem:[%s1 + $0x6c] sm:$0xf]
        %v3598 = vld [vmem:[%s1 + $0x70] sm:$0xf]
        %v3599 = vld [vmem:[%s1 + $0x74] sm:$0xf]
        %v3600 = vld [vmem:[%s1 + $0x78] sm:$0xf]
        %v3601 = vld [vmem:[%s1 + $0x7c] sm:$0xf]
        %v3602 = vld [vmem:[%s1 + $0x80] sm:$0xf]
        %v3603 = vld [vmem:[%s1 + $0x84] sm:$0xf]
        %v3604 = vld [vmem:[%s1 + $0x88] sm:$0xf]
        %v3605 = vld [vmem:[%s1 + $0x8c] sm:$0xf]
        %v3606 = vld [vmem:[%s2] sm:$0x1]
        %v3608 = vlaneseq
        %v3609 = vshrl.u32 %v3608, 7
        %v3610 = vsub.s32 0, %v3609
        %v3611 = vrot.slane %v3606, %v3610
        %v3649 = vunpack.c.l.b16 %v3570
        %v3650 = vunpack.c.l.b16 %v3571
        %v3651 = vunpack.c.l.b16 %v3572
        %v3652 = vunpack.c.l.b16 %v3573
        %v3653 = vunpack.c.l.b16 %v3574
        %v3654 = vunpack.c.l.b16 %v3575
        %v3655 = vunpack.c.l.b16 %v3576
        %v3656 = vunpack.c.l.b16 %v3577
        %v3657 = vunpack.c.l.b16 %v3578
        %v3658 = vunpack.c.l.b16 %v3579
        %v3659 = vunpack.c.l.b16 %v3580
        %v3660 = vunpack.c.l.b16 %v3581
        %v3661 = vunpack.c.l.b16 %v3582
        %v3662 = vunpack.c.l.b16 %v3583
        %v3663 = vunpack.c.l.b16 %v3584
        %v3664 = vunpack.c.l.b16 %v3585
        %v3665 = vunpack.c.l.b16 %v3586
        %v3666 = vunpack.c.l.b16 %v3587
        %v3667 = vunpack.c.l.b16 %v3588
        %v3668 = vunpack.c.l.b16 %v3589
        %v3669 = vunpack.c.l.b16 %v3590
        %v3670 = vunpack.c.l.b16 %v3591
        %v3671 = vunpack.c.l.b16 %v3592
        %v3672 = vunpack.c.l.b16 %v3593
        %v3673 = vunpack.c.l.b16 %v3594
        %v3674 = vunpack.c.l.b16 %v3595
        %v3675 = vunpack.c.l.b16 %v3596
        %v3676 = vunpack.c.l.b16 %v3597
        %v3677 = vunpack.c.l.b16 %v3598
        %v3678 = vunpack.c.l.b16 %v3599
        %v3679 = vunpack.c.l.b16 %v3600
        %v3680 = vunpack.c.l.b16 %v3601
        %v3681 = vunpack.c.l.b16 %v3602
        %v3682 = vunpack.c.l.b16 %v3603
        %v3683 = vunpack.c.l.b16 %v3604
        %v3684 = vunpack.c.l.b16 %v3605
        %v3685 = vpack.c.b16 %v3650, %v3649
        %v3686 = vpack.c.b16 %v3652, %v3651
        %v3687 = vpack.c.b16 %v3654, %v3653
        %v3688 = vpack.c.b16 %v3656, %v3655
        %v3689 = vpack.c.b16 %v3658, %v3657
        %v3690 = vpack.c.b16 %v3660, %v3659
        %v3691 = vpack.c.b16 %v3662, %v3661
        %v3692 = vpack.c.b16 %v3664, %v3663
        %v3693 = vpack.c.b16 %v3666, %v3665
        %v3694 = vpack.c.b16 %v3668, %v3667
        %v3695 = vpack.c.b16 %v3670, %v3669
        %v3696 = vpack.c.b16 %v3672, %v3671
        %v3697 = vpack.c.b16 %v3674, %v3673
        %v3698 = vpack.c.b16 %v3676, %v3675
        %v3699 = vpack.c.b16 %v3678, %v3677
        %v3700 = vpack.c.b16 %v3680, %v3679
        %v3701 = vpack.c.b16 %v3682, %v3681
        %v3702 = vpack.c.b16 %v3684, %v3683
        %v3722 = vsel %vm1051, %v3524, 0
        %v3725 = vsel %vm1051, %v3527, 0
        %v3728 = vsel %vm1051, %v3530, 0
        %v3731 = vsel %vm1051, %v3533, 0
        %v3734 = vsel %vm1051, %v3536, 0
        %v3737 = vsel %vm1051, %v3539, 0
        %v3740 = vsel %vm1051, %v3542, 0
        %v3743 = vsel %vm1051, %v3545, 0
        %v3746 = vsel %vm1051, %v3548, 0
        %v3749 = vsel %vm1051, %v3551, 0
        %v3752 = vsel %vm1051, %v3554, 0
        %v3755 = vsel %vm1051, %v3557, 0
        %v3758 = vsel %vm1051, %v3560, 0
        %v3761 = vsel %vm1051, %v3563, 0
        %v3764 = vsel %vm1051, %v3566, 0
        %v3767 = vsel %vm1051, %v3569, 0
        %3769 = vmatprep.subr.bf16.mxu0 0
        %3770 = vmatpush1.bf16.msra.mxu0 %v3685
        %3771 = vmatprep.subr.bf16.mxu0 0
        %3772 = vmatpush1.bf16.msra.mxu0 %v3686
        %3773 = vmatprep.subr.bf16.mxu0 0
        %3774 = vmatpush1.bf16.msra.mxu0 %v3687
        %3775 = vmatprep.subr.bf16.mxu0 0
        %3776 = vmatpush1.bf16.msra.mxu0 %v3688
        %3777 = vmatprep.subr.bf16.mxu0 0
        %3778 = vmatpush1.bf16.msra.mxu0 %v3689
        %3779 = vmatprep.subr.bf16.mxu0 0
        %3780 = vmatpush1.bf16.msra.mxu0 %v3690
        %3781 = vmatprep.subr.bf16.mxu0 0
        %3782 = vmatpush1.bf16.msra.mxu0 %v3691
        %3783 = vmatprep.subr.bf16.mxu0 0
        %3784 = vmatpush1.bf16.msra.mxu0 %v3692
        %3785 = vmatprep.subr.bf16.mxu0 0
        %3786 = vmatpush1.bf16.msra.mxu0 %v3693
        %3787 = vmatprep.subr.bf16.mxu0 0
        %3788 = vmatpush1.bf16.msra.mxu0 %v3694
        %3789 = vmatprep.subr.bf16.mxu0 0
        %3790 = vmatpush1.bf16.msra.mxu0 %v3695
        %3791 = vmatprep.subr.bf16.mxu0 0
        %3792 = vmatpush1.bf16.msra.mxu0 %v3696
        %3793 = vmatprep.subr.bf16.mxu0 0
        %3794 = vmatpush1.bf16.msra.mxu0 %v3697
        %3795 = vmatprep.subr.bf16.mxu0 0
        %3796 = vmatpush1.bf16.msra.mxu0 %v3698
        %3797 = vmatprep.subr.bf16.mxu0 0
        %3798 = vmatpush1.bf16.msra.mxu0 %v3699
        %3799 = vmatprep.subr.bf16.mxu0 0
        %3800 = vmatpush1.bf16.msra.mxu0 %v3700
        %3801 = vmatprep.mubr.bf16.mxu0 %v3523
        %3802 = vmatmul.mubr.bf16.gmra.mrb[0].mxu0 %v3522
        %v3803 = vpop.f32.mrb[0].mxu0
        %v3804 = vadd.f32 %v3611, %v3803
        %v3805 = vpop.f32.mrb[0].mxu0
        %v3806 = vpop.f32.mrb[0].mxu0
        %v3807 = vadd.f32 %v3611, %v3806
        %v3808 = vpop.f32.mrb[0].mxu0
        %3809 = vmatprep.mubr.bf16.mxu0 %v3526
        %3810 = vmatmul.mubr.bf16.gmra.mrb[0].mxu0 %v3525
        %v3811 = vpop.f32.mrb[0].mxu0
        %v3812 = vadd.f32 %v3611, %v3811
        %v3813 = vpop.f32.mrb[0].mxu0
        %v3814 = vpop.f32.mrb[0].mxu0
        %v3815 = vadd.f32 %v3611, %v3814
        %v3816 = vpop.f32.mrb[0].mxu0
        %3817 = vmatprep.mubr.bf16.mxu0 %v3529
        %3818 = vmatmul.mubr.bf16.gmra.mrb[0].mxu0 %v3528
        %v3819 = vpop.f32.mrb[0].mxu0
        %v3820 = vadd.f32 %v3611, %v3819
        %v3821 = vpop.f32.mrb[0].mxu0
        %v3822 = vpop.f32.mrb[0].mxu0
        %v3823 = vadd.f32 %v3611, %v3822
        %v3824 = vpop.f32.mrb[0].mxu0
        %3825 = vmatprep.mubr.bf16.mxu0 %v3532
        %3826 = vmatmul.mubr.bf16.gmra.mrb[0].mxu0 %v3531
        %v3827 = vpop.f32.mrb[0].mxu0
        %v3828 = vadd.f32 %v3611, %v3827
        %v3829 = vpop.f32.mrb[0].mxu0
        %v3830 = vpop.f32.mrb[0].mxu0
        %v3831 = vadd.f32 %v3611, %v3830
        %v3832 = vpop.f32.mrb[0].mxu0
        %3833 = vmatprep.mubr.bf16.mxu0 %v3535
        %3834 = vmatmul.mubr.bf16.gmra.mrb[0].mxu0 %v3534
        %v3835 = vpop.f32.mrb[0].mxu0
        %v3836 = vadd.f32 %v3611, %v3835
        %v3837 = vpop.f32.mrb[0].mxu0
        %v3838 = vpop.f32.mrb[0].mxu0
        %v3839 = vadd.f32 %v3611, %v3838
        %v3840 = vpop.f32.mrb[0].mxu0
        %3841 = vmatprep.mubr.bf16.mxu0 %v3538
        %3842 = vmatmul.mubr.bf16.gmra.mrb[0].mxu0 %v3537
        %v3843 = vpop.f32.mrb[0].mxu0
        %v3844 = vadd.f32 %v3611, %v3843
        %v3845 = vpop.f32.mrb[0].mxu0
        %v3846 = vpop.f32.mrb[0].mxu0
        %v3847 = vadd.f32 %v3611, %v3846
        %v3848 = vpop.f32.mrb[0].mxu0
        %3849 = vmatprep.mubr.bf16.mxu0 %v3541
        %3850 = vmatmul.mubr.bf16.gmra.mrb[0].mxu0 %v3540
        %v3851 = vpop.f32.mrb[0].mxu0
        %v3852 = vadd.f32 %v3611, %v3851
        %v3853 = vpop.f32.mrb[0].mxu0
        %v3854 = vpop.f32.mrb[0].mxu0
        %v3855 = vadd.f32 %v3611, %v3854
        %v3856 = vpop.f32.mrb[0].mxu0
        %3857 = vmatprep.mubr.bf16.mxu0 %v3544
        %3858 = vmatmul.mubr.bf16.gmra.mrb[0].mxu0 %v3543
        %v3859 = vpop.f32.mrb[0].mxu0
        %v3860 = vadd.f32 %v3611, %v3859
        %v3861 = vpop.f32.mrb[0].mxu0
        %v3862 = vpop.f32.mrb[0].mxu0
        %v3863 = vadd.f32 %v3611, %v3862
        %v3864 = vpop.f32.mrb[0].mxu0
        %3865 = vmatprep.mubr.bf16.mxu0 %v3547
        %3866 = vmatmul.mubr.bf16.gmra.mrb[0].mxu0 %v3546
        %v3867 = vpop.f32.mrb[0].mxu0
        %v3868 = vadd.f32 %v3611, %v3867
        %v3869 = vpop.f32.mrb[0].mxu0
        %v3870 = vpop.f32.mrb[0].mxu0
        %v3871 = vadd.f32 %v3611, %v3870
        %v3872 = vpop.f32.mrb[0].mxu0
        %3873 = vmatprep.mubr.bf16.mxu0 %v3550
        %3874 = vmatmul.mubr.bf16.gmra.mrb[0].mxu0 %v3549
        %v3875 = vpop.f32.mrb[0].mxu0
        %v3876 = vadd.f32 %v3611, %v3875
        %v3877 = vpop.f32.mrb[0].mxu0
        %v3878 = vpop.f32.mrb[0].mxu0
        %v3879 = vadd.f32 %v3611, %v3878
        %v3880 = vpop.f32.mrb[0].mxu0
        %3881 = vmatprep.mubr.bf16.mxu0 %v3553
        %3882 = vmatmul.mubr.bf16.gmra.mrb[0].mxu0 %v3552
        %v3883 = vpop.f32.mrb[0].mxu0
        %v3884 = vadd.f32 %v3611, %v3883
        %v3885 = vpop.f32.mrb[0].mxu0
        %v3886 = vpop.f32.mrb[0].mxu0
        %v3887 = vadd.f32 %v3611, %v3886
        %v3888 = vpop.f32.mrb[0].mxu0
        %3889 = vmatprep.mubr.bf16.mxu0 %v3556
        %3890 = vmatmul.mubr.bf16.gmra.mrb[0].mxu0 %v3555
        %v3891 = vpop.f32.mrb[0].mxu0
        %v3892 = vadd.f32 %v3611, %v3891
        %v3893 = vpop.f32.mrb[0].mxu0
        %v3894 = vpop.f32.mrb[0].mxu0
        %v3895 = vadd.f32 %v3611, %v3894
        %v3896 = vpop.f32.mrb[0].mxu0
        %3897 = vmatprep.mubr.bf16.mxu0 %v3559
        %3898 = vmatmul.mubr.bf16.gmra.mrb[0].mxu0 %v3558
        %v3899 = vpop.f32.mrb[0].mxu0
        %v3900 = vadd.f32 %v3611, %v3899
        %v3901 = vpop.f32.mrb[0].mxu0
        %v3902 = vpop.f32.mrb[0].mxu0
        %v3903 = vadd.f32 %v3611, %v3902
        %v3904 = vpop.f32.mrb[0].mxu0
        %3905 = vmatprep.mubr.bf16.mxu0 %v3562
        %3906 = vmatmul.mubr.bf16.gmra.mrb[0].mxu0 %v3561
        %v3907 = vpop.f32.mrb[0].mxu0
        %v3908 = vadd.f32 %v3611, %v3907
        %v3909 = vpop.f32.mrb[0].mxu0
        %v3910 = vpop.f32.mrb[0].mxu0
        %v3911 = vadd.f32 %v3611, %v3910
        %v3912 = vpop.f32.mrb[0].mxu0
        %3913 = vmatprep.mubr.bf16.mxu0 %v3565
        %3914 = vmatmul.mubr.bf16.gmra.mrb[0].mxu0 %v3564
        %v3915 = vpop.f32.mrb[0].mxu0
        %v3916 = vadd.f32 %v3611, %v3915
        %v3917 = vpop.f32.mrb[0].mxu0
        %v3918 = vpop.f32.mrb[0].mxu0
        %v3919 = vadd.f32 %v3611, %v3918
        %v3920 = vpop.f32.mrb[0].mxu0
        %3921 = vmatprep.mubr.bf16.mxu0 %v3568
        %3922 = vmatmul.mubr.bf16.gmra.mrb[0].mxu0 %v3567
        %v3923 = vpop.f32.mrb[0].mxu0
        %v3924 = vadd.f32 %v3611, %v3923
        %v3925 = vpop.f32.mrb[0].mxu0
        %v3926 = vpop.f32.mrb[0].mxu0
        %v3927 = vadd.f32 %v3611, %v3926
        %v3928 = vpop.f32.mrb[0].mxu0
        %3929 = vdwg.mxu0
        %3930 = vmatprep.subr.bf16.mxu0 0
        %3931 = vmatpush1.bf16.msra.mxu0 %v3701
        %3932 = vmatprep.subr.bf16.mxu0 0
        %3933 = vmatpush1.bf16.msra.mxu0 %v3702
        %3934 = vmatprep.subr.bf16.mxu0 0
        %3935 = vmatpush1.bf16.msra.mxu0 0
        %3936 = vmatprep.subr.bf16.mxu0 0
        %3937 = vmatpush1.bf16.msra.mxu0 0
        %3938 = vmatprep.subr.bf16.mxu0 0
        %3939 = vmatpush1.bf16.msra.mxu0 0
        %3940 = vmatprep.subr.bf16.mxu0 0
        %3941 = vmatpush1.bf16.msra.mxu0 0
        %3942 = vmatprep.subr.bf16.mxu0 0
        %3943 = vmatpush1.bf16.msra.mxu0 0
        %3944 = vmatprep.subr.bf16.mxu0 0
        %3945 = vmatpush1.bf16.msra.mxu0 0
        %3946 = vmatprep.subr.bf16.mxu0 0
        %3947 = vmatpush1.bf16.msra.mxu0 0
        %3948 = vmatprep.subr.bf16.mxu0 0
        %3949 = vmatpush1.bf16.msra.mxu0 0
        %3950 = vmatprep.subr.bf16.mxu0 0
        %3951 = vmatpush1.bf16.msra.mxu0 0
        %3952 = vmatprep.subr.bf16.mxu0 0
        %3953 = vmatpush1.bf16.msra.mxu0 0
        %3954 = vmatprep.subr.bf16.mxu0 0
        %3955 = vmatpush1.bf16.msra.mxu0 0
        %3956 = vmatprep.subr.bf16.mxu0 0
        %3957 = vmatpush1.bf16.msra.mxu0 0
        %3958 = vmatprep.subr.bf16.mxu0 0
        %3959 = vmatpush1.bf16.msra.mxu0 0
        %3960 = vmatprep.subr.bf16.mxu0 0
        %3961 = vmatpush1.bf16.msra.mxu0 0
        %3962 = vmatprep.mubr.bf16.mxu0 0
        %3963 = vmatmul.mubr.bf16.gmra.mrb[0].mxu0 %v3722
        %v3964 = vpop.f32.mrb[0].mxu0
        %v3965 = vadd.f32 %v3804, %v3964
        %v3966 = vpop.f32.mrb[0].mxu0
        %v3967 = vpop.f32.mrb[0].mxu0
        %v3968 = vadd.f32 %v3807, %v3967
        %v3969 = vpop.f32.mrb[0].mxu0
        %3970 = vmatprep.mubr.bf16.mxu0 0
        %3971 = vmatmul.mubr.bf16.gmra.mrb[0].mxu0 %v3725
        %v3972 = vpop.f32.mrb[0].mxu0
        %v3973 = vadd.f32 %v3812, %v3972
        %v3974 = vpop.f32.mrb[0].mxu0
        %v3975 = vpop.f32.mrb[0].mxu0
        %v3976 = vadd.f32 %v3815, %v3975
        %v3977 = vpop.f32.mrb[0].mxu0
        %3978 = vmatprep.mubr.bf16.mxu0 0
        %3979 = vmatmul.mubr.bf16.gmra.mrb[0].mxu0 %v3728
        %v3980 = vpop.f32.mrb[0].mxu0
        %v3981 = vadd.f32 %v3820, %v3980
        %v3982 = vpop.f32.mrb[0].mxu0
        %v3983 = vpop.f32.mrb[0].mxu0
        %v3984 = vadd.f32 %v3823, %v3983
        %v3985 = vpop.f32.mrb[0].mxu0
        %3986 = vmatprep.mubr.bf16.mxu0 0
        %3987 = vmatmul.mubr.bf16.gmra.mrb[0].mxu0 %v3731
        %v3988 = vpop.f32.mrb[0].mxu0
        %v3989 = vadd.f32 %v3828, %v3988
        %v3990 = vpop.f32.mrb[0].mxu0
        %v3991 = vpop.f32.mrb[0].mxu0
        %v3992 = vadd.f32 %v3831, %v3991
        %v3993 = vpop.f32.mrb[0].mxu0
        %3994 = vmatprep.mubr.bf16.mxu0 0
        %3995 = vmatmul.mubr.bf16.gmra.mrb[0].mxu0 %v3734
        %v3996 = vpop.f32.mrb[0].mxu0
        %v3997 = vadd.f32 %v3836, %v3996
        %v3998 = vpop.f32.mrb[0].mxu0
        %v3999 = vpop.f32.mrb[0].mxu0
        %v4000 = vadd.f32 %v3839, %v3999
        %v4001 = vpop.f32.mrb[0].mxu0
        %4002 = vmatprep.mubr.bf16.mxu0 0
        %4003 = vmatmul.mubr.bf16.gmra.mrb[0].mxu0 %v3737
        %v4004 = vpop.f32.mrb[0].mxu0
        %v4005 = vadd.f32 %v3844, %v4004
        %v4006 = vpop.f32.mrb[0].mxu0
        %v4007 = vpop.f32.mrb[0].mxu0
        %v4008 = vadd.f32 %v3847, %v4007
        %v4009 = vpop.f32.mrb[0].mxu0
        %4010 = vmatprep.mubr.bf16.mxu0 0
        %4011 = vmatmul.mubr.bf16.gmra.mrb[0].mxu0 %v3740
        %v4012 = vpop.f32.mrb[0].mxu0
        %v4013 = vadd.f32 %v3852, %v4012
        %v4014 = vpop.f32.mrb[0].mxu0
        %v4015 = vpop.f32.mrb[0].mxu0
        %v4016 = vadd.f32 %v3855, %v4015
        %v4017 = vpop.f32.mrb[0].mxu0
        %4018 = vmatprep.mubr.bf16.mxu0 0
        %4019 = vmatmul.mubr.bf16.gmra.mrb[0].mxu0 %v3743
        %v4020 = vpop.f32.mrb[0].mxu0
        %v4021 = vadd.f32 %v3860, %v4020
        %v4022 = vpop.f32.mrb[0].mxu0
        %v4023 = vpop.f32.mrb[0].mxu0
        %v4024 = vadd.f32 %v3863, %v4023
        %v4025 = vpop.f32.mrb[0].mxu0
        %4026 = vmatprep.mubr.bf16.mxu0 0
        %4027 = vmatmul.mubr.bf16.gmra.mrb[0].mxu0 %v3746
        %v4028 = vpop.f32.mrb[0].mxu0
        %v4029 = vadd.f32 %v3868, %v4028
        %v4030 = vpop.f32.mrb[0].mxu0
        %v4031 = vpop.f32.mrb[0].mxu0
        %v4032 = vadd.f32 %v3871, %v4031
        %v4033 = vpop.f32.mrb[0].mxu0
        %4034 = vmatprep.mubr.bf16.mxu0 0
        %4035 = vmatmul.mubr.bf16.gmra.mrb[0].mxu0 %v3749
        %v4036 = vpop.f32.mrb[0].mxu0
        %v4037 = vadd.f32 %v3876, %v4036
        %v4038 = vpop.f32.mrb[0].mxu0
        %v4039 = vpop.f32.mrb[0].mxu0
        %v4040 = vadd.f32 %v3879, %v4039
        %v4041 = vpop.f32.mrb[0].mxu0
        %4042 = vmatprep.mubr.bf16.mxu0 0
        %4043 = vmatmul.mubr.bf16.gmra.mrb[0].mxu0 %v3752
        %v4044 = vpop.f32.mrb[0].mxu0
        %v4045 = vadd.f32 %v3884, %v4044
        %v4046 = vpop.f32.mrb[0].mxu0
        %v4047 = vpop.f32.mrb[0].mxu0
        %v4048 = vadd.f32 %v3887, %v4047
        %v4049 = vpop.f32.mrb[0].mxu0
        %4050 = vmatprep.mubr.bf16.mxu0 0
        %4051 = vmatmul.mubr.bf16.gmra.mrb[0].mxu0 %v3755
        %v4052 = vpop.f32.mrb[0].mxu0
        %v4053 = vadd.f32 %v3892, %v4052
        %v4054 = vpop.f32.mrb[0].mxu0
        %v4055 = vpop.f32.mrb[0].mxu0
        %v4056 = vadd.f32 %v3895, %v4055
        %v4057 = vpop.f32.mrb[0].mxu0
        %4058 = vmatprep.mubr.bf16.mxu0 0
        %4059 = vmatmul.mubr.bf16.gmra.mrb[0].mxu0 %v3758
        %v4060 = vpop.f32.mrb[0].mxu0
        %v4061 = vadd.f32 %v3900, %v4060
        %v4062 = vpop.f32.mrb[0].mxu0
        %v4063 = vpop.f32.mrb[0].mxu0
        %v4064 = vadd.f32 %v3903, %v4063
        %v4065 = vpop.f32.mrb[0].mxu0
        %4066 = vmatprep.mubr.bf16.mxu0 0
        %4067 = vmatmul.mubr.bf16.gmra.mrb[0].mxu0 %v3761
        %v4068 = vpop.f32.mrb[0].mxu0
        %v4069 = vadd.f32 %v3908, %v4068
        %v4070 = vpop.f32.mrb[0].mxu0
        %v4071 = vpop.f32.mrb[0].mxu0
        %v4072 = vadd.f32 %v3911, %v4071
        %v4073 = vpop.f32.mrb[0].mxu0
        %4074 = vmatprep.mubr.bf16.mxu0 0
        %4075 = vmatmul.mubr.bf16.gmra.mrb[0].mxu0 %v3764
        %v4076 = vpop.f32.mrb[0].mxu0
        %v4077 = vadd.f32 %v3916, %v4076
        %v4078 = vpop.f32.mrb[0].mxu0
        %v4079 = vpop.f32.mrb[0].mxu0
        %v4080 = vadd.f32 %v3919, %v4079
        %v4081 = vpop.f32.mrb[0].mxu0
        %4082 = vmatprep.mubr.bf16.mxu0 0
        %4083 = vmatmul.mubr.bf16.gmra.mrb[0].mxu0 %v3767
        %v4084 = vpop.f32.mrb[0].mxu0
        %v4085 = vadd.f32 %v3924, %v4084
        %v4086 = vpop.f32.mrb[0].mxu0
        %v4087 = vpop.f32.mrb[0].mxu0
        %v4088 = vadd.f32 %v3927, %v4087
        %v4089 = vpop.f32.mrb[0].mxu0
        %4090 = vdwg.mxu0
        %v4091 = vmax.f32 %v3965, 0.0
        %v4092 = vmax.f32 %v3968, 0.0
        %v4093 = vmax.f32 %v3973, 0.0
        %v4094 = vmax.f32 %v3976, 0.0
        %v4095 = vmax.f32 %v3981, 0.0
        %v4096 = vmax.f32 %v3984, 0.0
        %v4097 = vmax.f32 %v3989, 0.0
        %v4098 = vmax.f32 %v3992, 0.0
        %v4099 = vmax.f32 %v3997, 0.0
        %v4100 = vmax.f32 %v4000, 0.0
        %v4101 = vmax.f32 %v4005, 0.0
        %v4102 = vmax.f32 %v4008, 0.0
        %v4103 = vmax.f32 %v4013, 0.0
        %v4104 = vmax.f32 %v4016, 0.0
        %v4105 = vmax.f32 %v4021, 0.0
        %v4106 = vmax.f32 %v4024, 0.0
        %v4107 = vmax.f32 %v4029, 0.0
        %v4108 = vmax.f32 %v4032, 0.0
        %v4109 = vmax.f32 %v4037, 0.0
        %v4110 = vmax.f32 %v4040, 0.0
        %v4111 = vmax.f32 %v4045, 0.0
        %v4112 = vmax.f32 %v4048, 0.0
        %v4113 = vmax.f32 %v4053, 0.0
        %v4114 = vmax.f32 %v4056, 0.0
        %v4115 = vmax.f32 %v4061, 0.0
        %v4116 = vmax.f32 %v4064, 0.0
        %v4117 = vmax.f32 %v4069, 0.0
        %v4118 = vmax.f32 %v4072, 0.0
        %v4119 = vmax.f32 %v4077, 0.0
        %v4120 = vmax.f32 %v4080, 0.0
        %v4121 = vmax.f32 %v4085, 0.0
        %v4122 = vmax.f32 %v4088, 0.0
        %v4123 = vsel %vm1051, %v4091, 0.0
        %v4124 = vsel %vm1051, %v4092, 0.0
        %v4125 = vadd.f32 %v4123, %v4124
        %v4126 = vsel %vm1051, %v4093, 0.0
        %v4127 = vadd.f32 %v4125, %v4126
        %v4128 = vsel %vm1051, %v4094, 0.0
        %v4129 = vadd.f32 %v4127, %v4128
        %v4130 = vsel %vm1051, %v4095, 0.0
        %v4131 = vadd.f32 %v4129, %v4130
        %v4132 = vsel %vm1051, %v4096, 0.0
        %v4133 = vadd.f32 %v4131, %v4132
        %v4134 = vsel %vm1051, %v4097, 0.0
        %v4135 = vadd.f32 %v4133, %v4134
        %v4136 = vsel %vm1051, %v4098, 0.0
        %v4137 = vadd.f32 %v4135, %v4136
        %v4138 = vsel %vm1051, %v4099, 0.0
        %v4139 = vadd.f32 %v4137, %v4138
        %v4140 = vsel %vm1051, %v4100, 0.0
        %v4141 = vadd.f32 %v4139, %v4140
        %v4142 = vsel %vm1051, %v4101, 0.0
        %v4143 = vadd.f32 %v4141, %v4142
        %v4144 = vsel %vm1051, %v4102, 0.0
        %v4145 = vadd.f32 %v4143, %v4144
        %v4146 = vsel %vm1051, %v4103, 0.0
        %v4147 = vadd.f32 %v4145, %v4146
        %v4148 = vsel %vm1051, %v4104, 0.0
        %v4149 = vadd.f32 %v4147, %v4148
        %v4150 = vsel %vm1051, %v4105, 0.0
        %v4151 = vadd.f32 %v4149, %v4150
        %v4152 = vsel %vm1051, %v4106, 0.0
        %v4153 = vadd.f32 %v4151, %v4152
        %v4154 = vsel %vm1051, %v4107, 0.0
        %v4155 = vadd.f32 %v4153, %v4154
        %v4156 = vsel %vm1051, %v4108, 0.0
        %v4157 = vadd.f32 %v4155, %v4156
        %v4158 = vsel %vm1051, %v4109, 0.0
        %v4159 = vadd.f32 %v4157, %v4158
        %v4160 = vsel %vm1051, %v4110, 0.0
        %v4161 = vadd.f32 %v4159, %v4160
        %v4162 = vsel %vm1051, %v4111, 0.0
        %v4163 = vadd.f32 %v4161, %v4162
        %v4164 = vsel %vm1051, %v4112, 0.0
        %v4165 = vadd.f32 %v4163, %v4164
        %v4166 = vsel %vm1051, %v4113, 0.0
        %v4167 = vadd.f32 %v4165, %v4166
        %v4168 = vsel %vm1051, %v4114, 0.0
        %v4169 = vadd.f32 %v4167, %v4168
        %v4170 = vsel %vm1051, %v4115, 0.0
        %v4171 = vadd.f32 %v4169, %v4170
        %v4172 = vsel %vm1051, %v4116, 0.0
        %v4173 = vadd.f32 %v4171, %v4172
        %v4174 = vsel %vm1051, %v4117, 0.0
        %v4175 = vadd.f32 %v4173, %v4174
        %v4176 = vsel %vm1051, %v4118, 0.0
        %v4177 = vadd.f32 %v4175, %v4176
        %v4178 = vsel %vm1051, %v4119, 0.0
        %v4179 = vadd.f32 %v4177, %v4178
        %v4180 = vsel %vm1051, %v4120, 0.0
        %v4181 = vadd.f32 %v4179, %v4180
        %v4182 = vsel %vm1051, %v4121, 0.0
        %v4183 = vadd.f32 %v4181, %v4182
        %v4184 = vsel %vm1051, %v4122, 0.0
        %v4185 = vadd.f32 %v4183, %v4184
        %v4186 = vrot.slane %v4185, 4
        %v4187 = vadd.f32 %v4185, %v4186
        %v4188 = vrot.slane %v4187, 2
        %v4189 = vadd.f32 %v4187, %v4188
        %v4190 = vrot.slane %v4189, 1
        %v4191 = vadd.f32 %v4189, %v4190
        %v4192 = vadd.f32 %v4191, 0.0
        %v4193 = vpack.c.bf16 %v4092, %v4091
        %v4194 = vpack.c.bf16 %v4094, %v4093
        %v4195 = vpack.c.bf16 %v4096, %v4095
        %v4196 = vpack.c.bf16 %v4098, %v4097
        %v4197 = vpack.c.bf16 %v4100, %v4099
        %v4198 = vpack.c.bf16 %v4102, %v4101
        %v4199 = vpack.c.bf16 %v4104, %v4103
        %v4200 = vpack.c.bf16 %v4106, %v4105
        %v4201 = vpack.c.bf16 %v4108, %v4107
        %v4202 = vpack.c.bf16 %v4110, %v4109
        %v4203 = vpack.c.bf16 %v4112, %v4111
        %v4204 = vpack.c.bf16 %v4114, %v4113
        %v4205 = vpack.c.bf16 %v4116, %v4115
        %v4206 = vpack.c.bf16 %v4118, %v4117
        %v4207 = vpack.c.bf16 %v4120, %v4119
        %v4208 = vpack.c.bf16 %v4122, %v4121
        %v4225 = vunpack.c.l.b16 %v4193
        %v4226 = vunpack.c.h.b16 %v4193
        %v4227 = vunpack.c.l.b16 %v4194
        %v4228 = vunpack.c.h.b16 %v4194
        %v4229 = vunpack.c.l.b16 %v4195
        %v4230 = vunpack.c.h.b16 %v4195
        %v4231 = vunpack.c.l.b16 %v4196
        %v4232 = vunpack.c.h.b16 %v4196
        %v4233 = vunpack.c.l.b16 %v4197
        %v4234 = vunpack.c.h.b16 %v4197
        %v4235 = vunpack.c.l.b16 %v4198
        %v4236 = vunpack.c.h.b16 %v4198
        %v4237 = vunpack.c.l.b16 %v4199
        %v4238 = vunpack.c.h.b16 %v4199
        %v4239 = vunpack.c.l.b16 %v4200
        %v4240 = vunpack.c.h.b16 %v4200
        %v4241 = vunpack.c.l.b16 %v4201
        %v4242 = vunpack.c.h.b16 %v4201
        %v4243 = vunpack.c.l.b16 %v4202
        %v4244 = vunpack.c.h.b16 %v4202
        %v4245 = vunpack.c.l.b16 %v4203
        %v4246 = vunpack.c.h.b16 %v4203
        %v4247 = vunpack.c.l.b16 %v4204
        %v4248 = vunpack.c.h.b16 %v4204
        %v4249 = vunpack.c.l.b16 %v4205
        %v4250 = vunpack.c.h.b16 %v4205
        %v4251 = vunpack.c.l.b16 %v4206
        %v4252 = vunpack.c.h.b16 %v4206
        %v4253 = vunpack.c.l.b16 %v4207
        %v4254 = vunpack.c.h.b16 %v4207
        %v4255 = vunpack.c.l.b16 %v4208
        %v4256 = vunpack.c.h.b16 %v4208
        %v4257 = vpack.c.b16 %v4225, %v4225
        %v4258 = vpack.c.b16 %v4226, %v4226
        %v4259 = vpack.c.b16 %v4227, %v4227
        %v4260 = vpack.c.b16 %v4228, %v4228
        %v4261 = vpack.c.b16 %v4229, %v4229
        %v4262 = vpack.c.b16 %v4230, %v4230
        %v4263 = vpack.c.b16 %v4231, %v4231
        %v4264 = vpack.c.b16 %v4232, %v4232
        %v4265 = vpack.c.b16 %v4233, %v4233
        %v4266 = vpack.c.b16 %v4234, %v4234
        %v4267 = vpack.c.b16 %v4235, %v4235
        %v4268 = vpack.c.b16 %v4236, %v4236
        %v4269 = vpack.c.b16 %v4237, %v4237
        %v4270 = vpack.c.b16 %v4238, %v4238
        %v4271 = vpack.c.b16 %v4239, %v4239
        %v4272 = vpack.c.b16 %v4240, %v4240
        %v4273 = vpack.c.b16 %v4241, %v4241
        %v4274 = vpack.c.b16 %v4242, %v4242
        %v4275 = vpack.c.b16 %v4243, %v4243
        %v4276 = vpack.c.b16 %v4244, %v4244
        %v4277 = vpack.c.b16 %v4245, %v4245
        %v4278 = vpack.c.b16 %v4246, %v4246
        %v4279 = vpack.c.b16 %v4247, %v4247
        %v4280 = vpack.c.b16 %v4248, %v4248
        %v4281 = vpack.c.b16 %v4249, %v4249
        %v4282 = vpack.c.b16 %v4250, %v4250
        %v4283 = vpack.c.b16 %v4251, %v4251
        %v4284 = vpack.c.b16 %v4252, %v4252
        %v4285 = vpack.c.b16 %v4253, %v4253
        %v4286 = vpack.c.b16 %v4254, %v4254
        %v4287 = vpack.c.b16 %v4255, %v4255
        %v4288 = vpack.c.b16 %v4256, %v4256
        %v4290 = vshrl.u32 %v4257, 16
        %v4292 = vrot.slane %v4290, 7
        %v4293 = vshll.u32 %v4257, 16
        %v4295 = vor.u32 %v4292, %v4293
        %v4296 = vrot.slane %v4292, 4
        %v4298 = vshrl.u32 %v4258, 16
        %v4300 = vrot.slane %v4298, 7
        %v4301 = vshll.u32 %v4258, 16
        %v4303 = vor.u32 %v4300, %v4301
        %v4304 = vsel %vm487, %v4296, %v4303
        %v4305 = vrot.slane %v4300, 4
        %v4307 = vshrl.u32 %v4259, 16
        %v4309 = vrot.slane %v4307, 7
        %v4310 = vshll.u32 %v4259, 16
        %v4312 = vor.u32 %v4309, %v4310
        %v4313 = vrot.slane %v4309, 4
        %v4315 = vshrl.u32 %v4260, 16
        %v4317 = vrot.slane %v4315, 7
        %v4318 = vshll.u32 %v4260, 16
        %v4320 = vor.u32 %v4317, %v4318
        %v4321 = vsel %vm487, %v4313, %v4320
        %v4322 = vrot.slane %v4317, 4
        %v4324 = vshrl.u32 %v4261, 16
        %v4326 = vrot.slane %v4324, 7
        %v4327 = vshll.u32 %v4261, 16
        %v4329 = vor.u32 %v4326, %v4327
        %v4330 = vrot.slane %v4326, 4
        %v4332 = vshrl.u32 %v4262, 16
        %v4334 = vrot.slane %v4332, 7
        %v4335 = vshll.u32 %v4262, 16
        %v4337 = vor.u32 %v4334, %v4335
        %v4338 = vsel %vm487, %v4330, %v4337
        %v4339 = vrot.slane %v4334, 4
        %v4341 = vshrl.u32 %v4263, 16
        %v4343 = vrot.slane %v4341, 7
        %v4344 = vshll.u32 %v4263, 16
        %v4346 = vor.u32 %v4343, %v4344
        %v4347 = vrot.slane %v4343, 4
        %v4349 = vshrl.u32 %v4264, 16
        %v4351 = vrot.slane %v4349, 7
        %v4352 = vshll.u32 %v4264, 16
        %v4354 = vor.u32 %v4351, %v4352
        %v4355 = vsel %vm487, %v4347, %v4354
        %v4356 = vrot.slane %v4351, 4
        %v4358 = vshrl.u32 %v4265, 16
        %v4360 = vrot.slane %v4358, 7
        %v4361 = vshll.u32 %v4265, 16
        %v4363 = vor.u32 %v4360, %v4361
        %v4364 = vrot.slane %v4360, 4
        %v4366 = vshrl.u32 %v4266, 16
        %v4368 = vrot.slane %v4366, 7
        %v4369 = vshll.u32 %v4266, 16
        %v4371 = vor.u32 %v4368, %v4369
        %v4372 = vsel %vm487, %v4364, %v4371
        %v4373 = vrot.slane %v4368, 4
        %v4375 = vshrl.u32 %v4267, 16
        %v4377 = vrot.slane %v4375, 7
        %v4378 = vshll.u32 %v4267, 16
        %v4380 = vor.u32 %v4377, %v4378
        %v4381 = vrot.slane %v4377, 4
        %v4383 = vshrl.u32 %v4268, 16
        %v4385 = vrot.slane %v4383, 7
        %v4386 = vshll.u32 %v4268, 16
        %v4388 = vor.u32 %v4385, %v4386
        %v4389 = vsel %vm487, %v4381, %v4388
        %v4390 = vrot.slane %v4385, 4
        %v4392 = vshrl.u32 %v4269, 16
        %v4394 = vrot.slane %v4392, 7
        %v4395 = vshll.u32 %v4269, 16
        %v4397 = vor.u32 %v4394, %v4395
        %v4398 = vrot.slane %v4394, 4
        %v4400 = vshrl.u32 %v4270, 16
        %v4402 = vrot.slane %v4400, 7
        %v4403 = vshll.u32 %v4270, 16
        %v4405 = vor.u32 %v4402, %v4403
        %v4406 = vsel %vm487, %v4398, %v4405
        %v4407 = vrot.slane %v4402, 4
        %v4409 = vshrl.u32 %v4271, 16
        %v4411 = vrot.slane %v4409, 7
        %v4412 = vshll.u32 %v4271, 16
        %v4414 = vor.u32 %v4411, %v4412
        %v4415 = vrot.slane %v4411, 4
        %v4417 = vshrl.u32 %v4272, 16
        %v4419 = vrot.slane %v4417, 7
        %v4420 = vshll.u32 %v4272, 16
        %v4422 = vor.u32 %v4419, %v4420
        %v4423 = vsel %vm487, %v4415, %v4422
        %v4424 = vrot.slane %v4419, 4
        %v4426 = vshrl.u32 %v4273, 16
        %v4428 = vrot.slane %v4426, 7
        %v4429 = vshll.u32 %v4273, 16
        %v4431 = vor.u32 %v4428, %v4429
        %v4432 = vrot.slane %v4428, 4
        %v4434 = vshrl.u32 %v4274, 16
        %v4436 = vrot.slane %v4434, 7
        %v4437 = vshll.u32 %v4274, 16
        %v4439 = vor.u32 %v4436, %v4437
        %v4440 = vsel %vm487, %v4432, %v4439
        %v4441 = vrot.slane %v4436, 4
        %v4443 = vshrl.u32 %v4275, 16
        %v4445 = vrot.slane %v4443, 7
        %v4446 = vshll.u32 %v4275, 16
        %v4448 = vor.u32 %v4445, %v4446
        %v4449 = vrot.slane %v4445, 4
        %v4451 = vshrl.u32 %v4276, 16
        %v4453 = vrot.slane %v4451, 7
        %v4454 = vshll.u32 %v4276, 16
        %v4456 = vor.u32 %v4453, %v4454
        %v4457 = vsel %vm487, %v4449, %v4456
        %v4458 = vrot.slane %v4453, 4
        %v4460 = vshrl.u32 %v4277, 16
        %v4462 = vrot.slane %v4460, 7
        %v4463 = vshll.u32 %v4277, 16
        %v4465 = vor.u32 %v4462, %v4463
        %v4466 = vrot.slane %v4462, 4
        %v4468 = vshrl.u32 %v4278, 16
        %v4470 = vrot.slane %v4468, 7
        %v4471 = vshll.u32 %v4278, 16
        %v4473 = vor.u32 %v4470, %v4471
        %v4474 = vsel %vm487, %v4466, %v4473
        %v4475 = vrot.slane %v4470, 4
        %v4477 = vshrl.u32 %v4279, 16
        %v4479 = vrot.slane %v4477, 7
        %v4480 = vshll.u32 %v4279, 16
        %v4482 = vor.u32 %v4479, %v4480
        %v4483 = vrot.slane %v4479, 4
        %v4485 = vshrl.u32 %v4280, 16
        %v4487 = vrot.slane %v4485, 7
        %v4488 = vshll.u32 %v4280, 16
        %v4490 = vor.u32 %v4487, %v4488
        %v4491 = vsel %vm487, %v4483, %v4490
        %v4492 = vrot.slane %v4487, 4
        %v4494 = vshrl.u32 %v4281, 16
        %v4496 = vrot.slane %v4494, 7
        %v4497 = vshll.u32 %v4281, 16
        %v4499 = vor.u32 %v4496, %v4497
        %v4500 = vrot.slane %v4496, 4
        %v4502 = vshrl.u32 %v4282, 16
        %v4504 = vrot.slane %v4502, 7
        %v4505 = vshll.u32 %v4282, 16
        %v4507 = vor.u32 %v4504, %v4505
        %v4508 = vsel %vm487, %v4500, %v4507
        %v4509 = vrot.slane %v4504, 4
        %v4511 = vshrl.u32 %v4283, 16
        %v4513 = vrot.slane %v4511, 7
        %v4514 = vshll.u32 %v4283, 16
        %v4516 = vor.u32 %v4513, %v4514
        %v4517 = vrot.slane %v4513, 4
        %v4519 = vshrl.u32 %v4284, 16
        %v4521 = vrot.slane %v4519, 7
        %v4522 = vshll.u32 %v4284, 16
        %v4524 = vor.u32 %v4521, %v4522
        %v4525 = vsel %vm487, %v4517, %v4524
        %v4526 = vrot.slane %v4521, 4
        %v4528 = vshrl.u32 %v4285, 16
        %v4530 = vrot.slane %v4528, 7
        %v4531 = vshll.u32 %v4285, 16
        %v4533 = vor.u32 %v4530, %v4531
        %v4534 = vrot.slane %v4530, 4
        %v4536 = vshrl.u32 %v4286, 16
        %v4538 = vrot.slane %v4536, 7
        %v4539 = vshll.u32 %v4286, 16
        %v4541 = vor.u32 %v4538, %v4539
        %v4542 = vsel %vm487, %v4534, %v4541
        %v4543 = vrot.slane %v4538, 4
        %v4545 = vshrl.u32 %v4287, 16
        %v4547 = vrot.slane %v4545, 7
        %v4548 = vshll.u32 %v4287, 16
        %v4550 = vor.u32 %v4547, %v4548
        %v4551 = vrot.slane %v4547, 4
        %v4553 = vshrl.u32 %v4288, 16
        %v4555 = vrot.slane %v4553, 7
        %v4556 = vshll.u32 %v4288, 16
        %v4558 = vor.u32 %v4555, %v4556
        %v4559 = vsel %vm487, %v4551, %v4558
        %v4560 = vrot.slane %v4555, 4
        %4561 = vrot.lane.b32.xlu0 %v4295, 96
        %v4562 = vpop.permute.xlu0 %4561
        %4563 = vrot.lane.b32.xlu0 %v4304, 96
        %v4564 = vpop.permute.xlu0 %4563
        %4565 = vrot.lane.b32.xlu0 %v4305, 96
        %v4566 = vpop.permute.xlu0 %4565
        %4567 = vrot.lane.b32.xlu0 %v4312, 96
        %v4568 = vpop.permute.xlu0 %4567
        %4569 = vrot.lane.b32.xlu0 %v4321, 96
        %v4570 = vpop.permute.xlu0 %4569
        %4571 = vrot.lane.b32.xlu0 %v4322, 96
        %v4572 = vpop.permute.xlu0 %4571
        %4573 = vrot.lane.b32.xlu0 %v4329, 96
        %v4574 = vpop.permute.xlu0 %4573
        %4575 = vrot.lane.b32.xlu0 %v4338, 96
        %v4576 = vpop.permute.xlu0 %4575
        %4577 = vrot.lane.b32.xlu0 %v4339, 96
        %v4578 = vpop.permute.xlu0 %4577
        %4579 = vrot.lane.b32.xlu0 %v4346, 96
        %v4580 = vpop.permute.xlu0 %4579
        %4581 = vrot.lane.b32.xlu0 %v4355, 96
        %v4582 = vpop.permute.xlu0 %4581
        %4583 = vrot.lane.b32.xlu0 %v4356, 96
        %v4584 = vpop.permute.xlu0 %4583
        %4585 = vrot.lane.b32.xlu0 %v4363, 96
        %v4586 = vpop.permute.xlu0 %4585
        %4587 = vrot.lane.b32.xlu0 %v4372, 96
        %v4588 = vpop.permute.xlu0 %4587
        %4589 = vrot.lane.b32.xlu0 %v4373, 96
        %v4590 = vpop.permute.xlu0 %4589
        %4591 = vrot.lane.b32.xlu0 %v4380, 96
        %v4592 = vpop.permute.xlu0 %4591
        %4593 = vrot.lane.b32.xlu0 %v4389, 96
        %v4594 = vpop.permute.xlu0 %4593
        %4595 = vrot.lane.b32.xlu0 %v4390, 96
        %v4596 = vpop.permute.xlu0 %4595
        %4597 = vrot.lane.b32.xlu0 %v4397, 96
        %v4598 = vpop.permute.xlu0 %4597
        %4599 = vrot.lane.b32.xlu0 %v4406, 96
        %v4600 = vpop.permute.xlu0 %4599
        %4601 = vrot.lane.b32.xlu0 %v4407, 96
        %v4602 = vpop.permute.xlu0 %4601
        %4603 = vrot.lane.b32.xlu0 %v4414, 96
        %v4604 = vpop.permute.xlu0 %4603
        %4605 = vrot.lane.b32.xlu0 %v4423, 96
        %v4606 = vpop.permute.xlu0 %4605
        %4607 = vrot.lane.b32.xlu0 %v4424, 96
        %v4608 = vpop.permute.xlu0 %4607
        %4609 = vrot.lane.b32.xlu0 %v4431, 96
        %v4610 = vpop.permute.xlu0 %4609
        %4611 = vrot.lane.b32.xlu0 %v4440, 96
        %v4612 = vpop.permute.xlu0 %4611
        %4613 = vrot.lane.b32.xlu0 %v4441, 96
        %v4614 = vpop.permute.xlu0 %4613
        %4615 = vrot.lane.b32.xlu0 %v4448, 96
        %v4616 = vpop.permute.xlu0 %4615
        %4617 = vrot.lane.b32.xlu0 %v4457, 96
        %v4618 = vpop.permute.xlu0 %4617
        %4619 = vrot.lane.b32.xlu0 %v4458, 96
        %v4620 = vpop.permute.xlu0 %4619
        %4621 = vrot.lane.b32.xlu0 %v4465, 96
        %v4622 = vpop.permute.xlu0 %4621
        %4623 = vrot.lane.b32.xlu0 %v4474, 96
        %v4624 = vpop.permute.xlu0 %4623
        %4625 = vrot.lane.b32.xlu0 %v4475, 96
        %v4626 = vpop.permute.xlu0 %4625
        %4627 = vrot.lane.b32.xlu0 %v4482, 96
        %v4628 = vpop.permute.xlu0 %4627
        %4629 = vrot.lane.b32.xlu0 %v4491, 96
        %v4630 = vpop.permute.xlu0 %4629
        %4631 = vrot.lane.b32.xlu0 %v4492, 96
        %v4632 = vpop.permute.xlu0 %4631
        %4633 = vrot.lane.b32.xlu0 %v4499, 96
        %v4634 = vpop.permute.xlu0 %4633
        %4635 = vrot.lane.b32.xlu0 %v4508, 96
        %v4636 = vpop.permute.xlu0 %4635
        %4637 = vrot.lane.b32.xlu0 %v4509, 96
        %v4638 = vpop.permute.xlu0 %4637
        %4639 = vrot.lane.b32.xlu0 %v4516, 96
        %v4640 = vpop.permute.xlu0 %4639
        %4641 = vrot.lane.b32.xlu0 %v4525, 96
        %v4642 = vpop.permute.xlu0 %4641
        %4643 = vrot.lane.b32.xlu0 %v4526, 96
        %v4644 = vpop.permute.xlu0 %4643
        %4645 = vrot.lane.b32.xlu0 %v4533, 96
        %v4646 = vpop.permute.xlu0 %4645
        %4647 = vrot.lane.b32.xlu0 %v4542, 96
        %v4648 = vpop.permute.xlu0 %4647
        %4649 = vrot.lane.b32.xlu0 %v4543, 96
        %v4650 = vpop.permute.xlu0 %4649
        %4651 = vrot.lane.b32.xlu0 %v4550, 96
        %v4652 = vpop.permute.xlu0 %4651
        %4653 = vrot.lane.b32.xlu0 %v4559, 96
        %v4654 = vpop.permute.xlu0 %4653
        %4655 = vrot.lane.b32.xlu0 %v4560, 96
        %v4656 = vpop.permute.xlu0 %4655
        %v4705 = vld [vmem:[%s808] sm:$0xf]
        %v4706 = vsel %vm810, %v4562, %v4705
        %4707 = vst [vmem:[%s808] sm:$0xf] %v4706
        %4708 = vst.msk [vmem:[%s808 + $0x4] sm:$0xf] %vm332, %v4564
        %v4709 = vld [vmem:[%s808 + $0x8] sm:$0x1]
        %v4710 = vsel %vm343, %v4566, %v4709
        %4711 = vst [vmem:[%s808 + $0x8] sm:$0x1] %v4710
        %v4712 = vld [vmem:[%s808 + $0xc] sm:$0xf]
        %v4713 = vsel %vm810, %v4568, %v4712
        %4714 = vst [vmem:[%s808 + $0xc] sm:$0xf] %v4713
        %4715 = vst.msk [vmem:[%s808 + $0x10] sm:$0xf] %vm332, %v4570
        %v4716 = vld [vmem:[%s808 + $0x14] sm:$0x1]
        %v4717 = vsel %vm343, %v4572, %v4716
        %4718 = vst [vmem:[%s808 + $0x14] sm:$0x1] %v4717
        %v4719 = vld [vmem:[%s808 + $0x18] sm:$0xf]
        %v4720 = vsel %vm810, %v4574, %v4719
        %4721 = vst [vmem:[%s808 + $0x18] sm:$0xf] %v4720
        %4722 = vst.msk [vmem:[%s808 + $0x1c] sm:$0xf] %vm332, %v4576
        %v4723 = vld [vmem:[%s808 + $0x20] sm:$0x1]
        %v4724 = vsel %vm343, %v4578, %v4723
        %4725 = vst [vmem:[%s808 + $0x20] sm:$0x1] %v4724
        %v4726 = vld [vmem:[%s808 + $0x24] sm:$0xf]
        %v4727 = vsel %vm810, %v4580, %v4726
        %4728 = vst [vmem:[%s808 + $0x24] sm:$0xf] %v4727
        %4729 = vst.msk [vmem:[%s808 + $0x28] sm:$0xf] %vm332, %v4582
        %v4730 = vld [vmem:[%s808 + $0x2c] sm:$0x1]
        %v4731 = vsel %vm343, %v4584, %v4730
        %4732 = vst [vmem:[%s808 + $0x2c] sm:$0x1] %v4731
        %v4733 = vld [vmem:[%s808 + $0x30] sm:$0xf]
        %v4734 = vsel %vm810, %v4586, %v4733
        %4735 = vst [vmem:[%s808 + $0x30] sm:$0xf] %v4734
        %4736 = vst.msk [vmem:[%s808 + $0x34] sm:$0xf] %vm332, %v4588
        %v4737 = vld [vmem:[%s808 + $0x38] sm:$0x1]
        %v4738 = vsel %vm343, %v4590, %v4737
        %4739 = vst [vmem:[%s808 + $0x38] sm:$0x1] %v4738
        %v4740 = vld [vmem:[%s808 + $0x3c] sm:$0xf]
        %v4741 = vsel %vm810, %v4592, %v4740
        %4742 = vst [vmem:[%s808 + $0x3c] sm:$0xf] %v4741
        %4743 = vst.msk [vmem:[%s808 + $0x40] sm:$0xf] %vm332, %v4594
        %v4744 = vld [vmem:[%s808 + $0x44] sm:$0x1]
        %v4745 = vsel %vm343, %v4596, %v4744
        %4746 = vst [vmem:[%s808 + $0x44] sm:$0x1] %v4745
        %v4747 = vld [vmem:[%s808 + $0x48] sm:$0xf]
        %v4748 = vsel %vm810, %v4598, %v4747
        %4749 = vst [vmem:[%s808 + $0x48] sm:$0xf] %v4748
        %4750 = vst.msk [vmem:[%s808 + $0x4c] sm:$0xf] %vm332, %v4600
        %v4751 = vld [vmem:[%s808 + $0x50] sm:$0x1]
        %v4752 = vsel %vm343, %v4602, %v4751
        %4753 = vst [vmem:[%s808 + $0x50] sm:$0x1] %v4752
        %v4754 = vld [vmem:[%s808 + $0x54] sm:$0xf]
        %v4755 = vsel %vm810, %v4604, %v4754
        %4756 = vst [vmem:[%s808 + $0x54] sm:$0xf] %v4755
        %4757 = vst.msk [vmem:[%s808 + $0x58] sm:$0xf] %vm332, %v4606
        %v4758 = vld [vmem:[%s808 + $0x5c] sm:$0x1]
        %v4759 = vsel %vm343, %v4608, %v4758
        %4760 = vst [vmem:[%s808 + $0x5c] sm:$0x1] %v4759
        %v4761 = vld [vmem:[%s808 + $0x60] sm:$0xf]
        %v4762 = vsel %vm810, %v4610, %v4761
        %4763 = vst [vmem:[%s808 + $0x60] sm:$0xf] %v4762
        %4764 = vst.msk [vmem:[%s808 + $0x64] sm:$0xf] %vm332, %v4612
        %v4765 = vld [vmem:[%s808 + $0x68] sm:$0x1]
        %v4766 = vsel %vm343, %v4614, %v4765
        %4767 = vst [vmem:[%s808 + $0x68] sm:$0x1] %v4766
        %v4768 = vld [vmem:[%s808 + $0x6c] sm:$0xf]
        %v4769 = vsel %vm810, %v4616, %v4768
        %4770 = vst [vmem:[%s808 + $0x6c] sm:$0xf] %v4769
        %4771 = vst.msk [vmem:[%s808 + $0x70] sm:$0xf] %vm332, %v4618
        %v4772 = vld [vmem:[%s808 + $0x74] sm:$0x1]
        %v4773 = vsel %vm343, %v4620, %v4772
        %4774 = vst [vmem:[%s808 + $0x74] sm:$0x1] %v4773
        %v4775 = vld [vmem:[%s808 + $0x78] sm:$0xf]
        %v4776 = vsel %vm810, %v4622, %v4775
        %4777 = vst [vmem:[%s808 + $0x78] sm:$0xf] %v4776
        %4778 = vst.msk [vmem:[%s808 + $0x7c] sm:$0xf] %vm332, %v4624
        %v4779 = vld [vmem:[%s808 + $0x80] sm:$0x1]
        %v4780 = vsel %vm343, %v4626, %v4779
        %4781 = vst [vmem:[%s808 + $0x80] sm:$0x1] %v4780
        %v4782 = vld [vmem:[%s808 + $0x84] sm:$0xf]
        %v4783 = vsel %vm810, %v4628, %v4782
        %4784 = vst [vmem:[%s808 + $0x84] sm:$0xf] %v4783
        %4785 = vst.msk [vmem:[%s808 + $0x88] sm:$0xf] %vm332, %v4630
        %v4786 = vld [vmem:[%s808 + $0x8c] sm:$0x1]
        %v4787 = vsel %vm343, %v4632, %v4786
        %4788 = vst [vmem:[%s808 + $0x8c] sm:$0x1] %v4787
        %v4789 = vld [vmem:[%s808 + $0x90] sm:$0xf]
        %v4790 = vsel %vm810, %v4634, %v4789
        %4791 = vst [vmem:[%s808 + $0x90] sm:$0xf] %v4790
        %4792 = vst.msk [vmem:[%s808 + $0x94] sm:$0xf] %vm332, %v4636
        %v4793 = vld [vmem:[%s808 + $0x98] sm:$0x1]
        %v4794 = vsel %vm343, %v4638, %v4793
        %4795 = vst [vmem:[%s808 + $0x98] sm:$0x1] %v4794
        %v4796 = vld [vmem:[%s808 + $0x9c] sm:$0xf]
        %v4797 = vsel %vm810, %v4640, %v4796
        %4798 = vst [vmem:[%s808 + $0x9c] sm:$0xf] %v4797
        %4799 = vst.msk [vmem:[%s808 + $0xa0] sm:$0xf] %vm332, %v4642
        %v4800 = vld [vmem:[%s808 + $0xa4] sm:$0x1]
        %v4801 = vsel %vm343, %v4644, %v4800
        %4802 = vst [vmem:[%s808 + $0xa4] sm:$0x1] %v4801
        %v4803 = vld [vmem:[%s808 + $0xa8] sm:$0xf]
        %v4804 = vsel %vm810, %v4646, %v4803
        %4805 = vst [vmem:[%s808 + $0xa8] sm:$0xf] %v4804
        %4806 = vst.msk [vmem:[%s808 + $0xac] sm:$0xf] %vm332, %v4648
        %v4807 = vld [vmem:[%s808 + $0xb0] sm:$0x1]
        %v4808 = vsel %vm343, %v4650, %v4807
        %4809 = vst [vmem:[%s808 + $0xb0] sm:$0x1] %v4808
        %v4810 = vld [vmem:[%s808 + $0xb4] sm:$0xf]
        %v4811 = vsel %vm810, %v4652, %v4810
        %4812 = vst [vmem:[%s808 + $0xb4] sm:$0xf] %v4811
        %4813 = vst.msk [vmem:[%s808 + $0xb8] sm:$0xf] %vm332, %v4654
        %v4814 = vld [vmem:[%s808 + $0xbc] sm:$0x1]
        %v4815 = vsel %vm343, %v4656, %v4814
        %4816 = vst [vmem:[%s808 + $0xbc] sm:$0x1] %v4815
        %v4817 = vld [vmem:[#allocation2] sm:$0xf]
        %v4818 = vld [vmem:[#allocation2 + $0x4] sm:$0xf]
        %v4819 = vld [vmem:[#allocation2 + $0xc] sm:$0xf]
        %v4820 = vld [vmem:[#allocation2 + $0x10] sm:$0xf]
        %v4821 = vld [vmem:[#allocation2 + $0x18] sm:$0xf]
        %v4822 = vld [vmem:[#allocation2 + $0x1c] sm:$0xf]
        %v4823 = vld [vmem:[#allocation2 + $0x24] sm:$0xf]
        %v4824 = vld [vmem:[#allocation2 + $0x28] sm:$0xf]
        %v4825 = vld [vmem:[#allocation2 + $0x30] sm:$0xf]
        %v4826 = vld [vmem:[#allocation2 + $0x34] sm:$0xf]
        %v4827 = vld [vmem:[#allocation2 + $0x3c] sm:$0xf]
        %v4828 = vld [vmem:[#allocation2 + $0x40] sm:$0xf]
        %v4829 = vld [vmem:[#allocation2 + $0x48] sm:$0xf]
        %v4830 = vld [vmem:[#allocation2 + $0x4c] sm:$0xf]
        %v4831 = vld [vmem:[#allocation2 + $0x54] sm:$0xf]
        %v4832 = vld [vmem:[#allocation2 + $0x58] sm:$0xf]
        %v4833 = vld [vmem:[#allocation2 + $0x60] sm:$0xf]
        %v4834 = vld [vmem:[#allocation2 + $0x64] sm:$0xf]
        %v4835 = vld [vmem:[#allocation2 + $0x6c] sm:$0xf]
        %v4836 = vld [vmem:[#allocation2 + $0x70] sm:$0xf]
        %v4837 = vld [vmem:[#allocation2 + $0x78] sm:$0xf]
        %v4838 = vld [vmem:[#allocation2 + $0x7c] sm:$0xf]
        %v4839 = vld [vmem:[#allocation2 + $0x84] sm:$0xf]
        %v4840 = vld [vmem:[#allocation2 + $0x88] sm:$0xf]
        %v4841 = vld [vmem:[#allocation2 + $0x90] sm:$0xf]
        %v4842 = vld [vmem:[#allocation2 + $0x94] sm:$0xf]
        %v4843 = vld [vmem:[#allocation2 + $0x9c] sm:$0xf]
        %v4844 = vld [vmem:[#allocation2 + $0xa0] sm:$0xf]
        %v4845 = vld [vmem:[#allocation2 + $0xa8] sm:$0xf]
        %v4846 = vld [vmem:[#allocation2 + $0xac] sm:$0xf]
        %v4847 = vld [vmem:[#allocation2 + $0xb4] sm:$0xf]
        %v4848 = vld [vmem:[#allocation2 + $0xb8] sm:$0xf]
        %v4881 = vunpack.c.l.b16 %v4817
        %v4882 = vunpack.c.l.b16 %v4818
        %v4883 = vunpack.c.l.b16 %v4819
        %v4884 = vunpack.c.l.b16 %v4820
        %v4885 = vunpack.c.l.b16 %v4821
        %v4886 = vunpack.c.l.b16 %v4822
        %v4887 = vunpack.c.l.b16 %v4823
        %v4888 = vunpack.c.l.b16 %v4824
        %v4889 = vunpack.c.l.b16 %v4825
        %v4890 = vunpack.c.l.b16 %v4826
        %v4891 = vunpack.c.l.b16 %v4827
        %v4892 = vunpack.c.l.b16 %v4828
        %v4893 = vunpack.c.l.b16 %v4829
        %v4894 = vunpack.c.l.b16 %v4830
        %v4895 = vunpack.c.l.b16 %v4831
        %v4896 = vunpack.c.l.b16 %v4832
        %v4897 = vunpack.c.l.b16 %v4833
        %v4898 = vunpack.c.l.b16 %v4834
        %v4899 = vunpack.c.l.b16 %v4835
        %v4900 = vunpack.c.l.b16 %v4836
        %v4901 = vunpack.c.l.b16 %v4837
        %v4902 = vunpack.c.l.b16 %v4838
        %v4903 = vunpack.c.l.b16 %v4839
        %v4904 = vunpack.c.l.b16 %v4840
        %v4905 = vunpack.c.l.b16 %v4841
        %v4906 = vunpack.c.l.b16 %v4842
        %v4907 = vunpack.c.l.b16 %v4843
        %v4908 = vunpack.c.l.b16 %v4844
        %v4909 = vunpack.c.l.b16 %v4845
        %v4910 = vunpack.c.l.b16 %v4846
        %v4911 = vunpack.c.l.b16 %v4847
        %v4912 = vunpack.c.l.b16 %v4848
        %v4913 = vpack.c.b16 %v4882, %v4881
        %v4914 = vpack.c.b16 %v4884, %v4883
        %v4915 = vpack.c.b16 %v4886, %v4885
        %v4916 = vpack.c.b16 %v4888, %v4887
        %v4917 = vpack.c.b16 %v4890, %v4889
        %v4918 = vpack.c.b16 %v4892, %v4891
        %v4919 = vpack.c.b16 %v4894, %v4893
        %v4920 = vpack.c.b16 %v4896, %v4895
        %v4921 = vpack.c.b16 %v4898, %v4897
        %v4922 = vpack.c.b16 %v4900, %v4899
        %v4923 = vpack.c.b16 %v4902, %v4901
        %v4924 = vpack.c.b16 %v4904, %v4903
        %v4925 = vpack.c.b16 %v4906, %v4905
        %v4926 = vpack.c.b16 %v4908, %v4907
        %v4927 = vpack.c.b16 %v4910, %v4909
        %v4928 = vpack.c.b16 %v4912, %v4911
        %4945 = vst.msk [vmem:[#allocation3] sm:$0xff] %vm1051, %v4913
        %4946 = vst.msk [vmem:[#allocation3 + $0x18] sm:$0xff] %vm1051, %v4914
        %4947 = vst.msk [vmem:[#allocation3 + $0x30] sm:$0xff] %vm1051, %v4915
        %4948 = vst.msk [vmem:[#allocation3 + $0x48] sm:$0xff] %vm1051, %v4916
        %4949 = vst.msk [vmem:[#allocation3 + $0x60] sm:$0xff] %vm1051, %v4917
        %4950 = vst.msk [vmem:[#allocation3 + $0x78] sm:$0xff] %vm1051, %v4918
        %4951 = vst.msk [vmem:[#allocation3 + $0x90] sm:$0xff] %vm1051, %v4919
        %4952 = vst.msk [vmem:[#allocation3 + $0xa8] sm:$0xff] %vm1051, %v4920
        %4953 = vst.msk [vmem:[#allocation3 + $0xc0] sm:$0xff] %vm1051, %v4921
        %4954 = vst.msk [vmem:[#allocation3 + $0xd8] sm:$0xff] %vm1051, %v4922
        %4955 = vst.msk [vmem:[#allocation3 + $0xf0] sm:$0xff] %vm1051, %v4923
        %4956 = vst.msk [vmem:[#allocation3 + $0x108] sm:$0xff] %vm1051, %v4924
        %4957 = vst.msk [vmem:[#allocation3 + $0x120] sm:$0xff] %vm1051, %v4925
        %4958 = vst.msk [vmem:[#allocation3 + $0x138] sm:$0xff] %vm1051, %v4926
        %4959 = vst.msk [vmem:[#allocation3 + $0x150] sm:$0xff] %vm1051, %v4927
        %4960 = vst.msk [vmem:[#allocation3 + $0x168] sm:$0xff] %vm1051, %v4928
        %v4961 = vld [vmem:[#allocation2] sm:$0xf]
        %v4962 = vld [vmem:[#allocation2 + $0x4] sm:$0xf]
        %v4963 = vld [vmem:[#allocation2 + $0x8] sm:$0x1]
        %v4964 = vld [vmem:[#allocation2 + $0xc] sm:$0xf]
        %v4965 = vld [vmem:[#allocation2 + $0x10] sm:$0xf]
        %v4966 = vld [vmem:[#allocation2 + $0x14] sm:$0x1]
        %v4967 = vld [vmem:[#allocation2 + $0x18] sm:$0xf]
        %v4968 = vld [vmem:[#allocation2 + $0x1c] sm:$0xf]
        %v4969 = vld [vmem:[#allocation2 + $0x20] sm:$0x1]
        %v4970 = vld [vmem:[#allocation2 + $0x24] sm:$0xf]
        %v4971 = vld [vmem:[#allocation2 + $0x28] sm:$0xf]
        %v4972 = vld [vmem:[#allocation2 + $0x2c] sm:$0x1]
        %v4973 = vld [vmem:[#allocation2 + $0x30] sm:$0xf]
        %v4974 = vld [vmem:[#allocation2 + $0x34] sm:$0xf]
        %v4975 = vld [vmem:[#allocation2 + $0x38] sm:$0x1]
        %v4976 = vld [vmem:[#allocation2 + $0x3c] sm:$0xf]
        %v4977 = vld [vmem:[#allocation2 + $0x40] sm:$0xf]
        %v4978 = vld [vmem:[#allocation2 + $0x44] sm:$0x1]
        %v4979 = vld [vmem:[#allocation2 + $0x48] sm:$0xf]
        %v4980 = vld [vmem:[#allocation2 + $0x4c] sm:$0xf]
        %v4981 = vld [vmem:[#allocation2 + $0x50] sm:$0x1]
        %v4982 = vld [vmem:[#allocation2 + $0x54] sm:$0xf]
        %v4983 = vld [vmem:[#allocation2 + $0x58] sm:$0xf]
        %v4984 = vld [vmem:[#allocation2 + $0x5c] sm:$0x1]
        %v4985 = vld [vmem:[#allocation2 + $0x60] sm:$0xf]
        %v4986 = vld [vmem:[#allocation2 + $0x64] sm:$0xf]
        %v4987 = vld [vmem:[#allocation2 + $0x68] sm:$0x1]
        %v4988 = vld [vmem:[#allocation2 + $0x6c] sm:$0xf]
        %v4989 = vld [vmem:[#allocation2 + $0x70] sm:$0xf]
        %v4990 = vld [vmem:[#allocation2 + $0x74] sm:$0x1]
        %v4991 = vld [vmem:[#allocation2 + $0x78] sm:$0xf]
        %v4992 = vld [vmem:[#allocation2 + $0x7c] sm:$0xf]
        %v4993 = vld [vmem:[#allocation2 + $0x80] sm:$0x1]
        %v4994 = vld [vmem:[#allocation2 + $0x84] sm:$0xf]
        %v4995 = vld [vmem:[#allocation2 + $0x88] sm:$0xf]
        %v4996 = vld [vmem:[#allocation2 + $0x8c] sm:$0x1]
        %v4997 = vld [vmem:[#allocation2 + $0x90] sm:$0xf]
        %v4998 = vld [vmem:[#allocation2 + $0x94] sm:$0xf]
        %v4999 = vld [vmem:[#allocation2 + $0x98] sm:$0x1]
        %v5000 = vld [vmem:[#allocation2 + $0x9c] sm:$0xf]
        %v5001 = vld [vmem:[#allocation2 + $0xa0] sm:$0xf]
        %v5002 = vld [vmem:[#allocation2 + $0xa4] sm:$0x1]
        %v5003 = vld [vmem:[#allocation2 + $0xa8] sm:$0xf]
        %v5004 = vld [vmem:[#allocation2 + $0xac] sm:$0xf]
        %v5005 = vld [vmem:[#allocation2 + $0xb0] sm:$0x1]
        %v5006 = vld [vmem:[#allocation2 + $0xb4] sm:$0xf]
        %v5007 = vld [vmem:[#allocation2 + $0xb8] sm:$0xf]
        %v5008 = vld [vmem:[#allocation2 + $0xbc] sm:$0x1]
        %v5057 = vunpack.c.l.b16 %v4961
        %v5058 = vunpack.c.l.b16 %v4962
        %v5059 = vunpack.c.l.b16 %v4963
        %v5060 = vunpack.c.l.b16 %v4964
        %v5061 = vunpack.c.l.b16 %v4965
        %v5062 = vunpack.c.l.b16 %v4966
        %v5063 = vunpack.c.l.b16 %v4967
        %v5064 = vunpack.c.l.b16 %v4968
        %v5065 = vunpack.c.l.b16 %v4969
        %v5066 = vunpack.c.l.b16 %v4970
        %v5067 = vunpack.c.l.b16 %v4971
        %v5068 = vunpack.c.l.b16 %v4972
        %v5069 = vunpack.c.l.b16 %v4973
        %v5070 = vunpack.c.l.b16 %v4974
        %v5071 = vunpack.c.l.b16 %v4975
        %v5072 = vunpack.c.l.b16 %v4976
        %v5073 = vunpack.c.l.b16 %v4977
        %v5074 = vunpack.c.l.b16 %v4978
        %v5075 = vunpack.c.l.b16 %v4979
        %v5076 = vunpack.c.l.b16 %v4980
        %v5077 = vunpack.c.l.b16 %v4981
        %v5078 = vunpack.c.l.b16 %v4982
        %v5079 = vunpack.c.l.b16 %v4983
        %v5080 = vunpack.c.l.b16 %v4984
        %v5081 = vunpack.c.l.b16 %v4985
        %v5082 = vunpack.c.l.b16 %v4986
        %v5083 = vunpack.c.l.b16 %v4987
        %v5084 = vunpack.c.l.b16 %v4988
        %v5085 = vunpack.c.l.b16 %v4989
        %v5086 = vunpack.c.l.b16 %v4990
        %v5087 = vunpack.c.l.b16 %v4991
        %v5088 = vunpack.c.l.b16 %v4992
        %v5089 = vunpack.c.l.b16 %v4993
        %v5090 = vunpack.c.l.b16 %v4994
        %v5091 = vunpack.c.l.b16 %v4995
        %v5092 = vunpack.c.l.b16 %v4996
        %v5093 = vunpack.c.l.b16 %v4997
        %v5094 = vunpack.c.l.b16 %v4998
        %v5095 = vunpack.c.l.b16 %v4999
        %v5096 = vunpack.c.l.b16 %v5000
        %v5097 = vunpack.c.l.b16 %v5001
        %v5098 = vunpack.c.l.b16 %v5002
        %v5099 = vunpack.c.l.b16 %v5003
        %v5100 = vunpack.c.l.b16 %v5004
        %v5101 = vunpack.c.l.b16 %v5005
        %v5102 = vunpack.c.l.b16 %v5006
        %v5103 = vunpack.c.l.b16 %v5007
        %v5104 = vunpack.c.l.b16 %v5008
        %v5105 = vpack.c.b16 %v5058, %v5057
        %v5106 = vpack.c.b16 %v5059, %v5059
        %v5107 = vpack.c.b16 %v5061, %v5060
        %v5108 = vpack.c.b16 %v5062, %v5062
        %v5109 = vpack.c.b16 %v5064, %v5063
        %v5110 = vpack.c.b16 %v5065, %v5065
        %v5111 = vpack.c.b16 %v5067, %v5066
        %v5112 = vpack.c.b16 %v5068, %v5068
        %v5113 = vpack.c.b16 %v5070, %v5069
        %v5114 = vpack.c.b16 %v5071, %v5071
        %v5115 = vpack.c.b16 %v5073, %v5072
        %v5116 = vpack.c.b16 %v5074, %v5074
        %v5117 = vpack.c.b16 %v5076, %v5075
        %v5118 = vpack.c.b16 %v5077, %v5077
        %v5119 = vpack.c.b16 %v5079, %v5078
        %v5120 = vpack.c.b16 %v5080, %v5080
        %v5121 = vpack.c.b16 %v5082, %v5081
        %v5122 = vpack.c.b16 %v5083, %v5083
        %v5123 = vpack.c.b16 %v5085, %v5084
        %v5124 = vpack.c.b16 %v5086, %v5086
        %v5125 = vpack.c.b16 %v5088, %v5087
        %v5126 = vpack.c.b16 %v5089, %v5089
        %v5127 = vpack.c.b16 %v5091, %v5090
        %v5128 = vpack.c.b16 %v5092, %v5092
        %v5129 = vpack.c.b16 %v5094, %v5093
        %v5130 = vpack.c.b16 %v5095, %v5095
        %v5131 = vpack.c.b16 %v5097, %v5096
        %v5132 = vpack.c.b16 %v5098, %v5098
        %v5133 = vpack.c.b16 %v5100, %v5099
        %v5134 = vpack.c.b16 %v5101, %v5101
        %v5135 = vpack.c.b16 %v5103, %v5102
        %v5136 = vpack.c.b16 %v5104, %v5104
        %v5138 = vshrl.u32 %v5105, 16
        %v5140 = vshll.u32 %v5105, 16
        %v5142 = vrot.slane %v5140, 1
        %v5143 = vor.u32 %v5138, %v5142
        %v5145 = vshll.u32 %v5106, 16
        %v5147 = vrot.slane %v5145, 1
        %v5148 = vsel %vm1244, %v5143, %v5147
        %v5150 = vshrl.u32 %v5107, 16
        %v5152 = vshll.u32 %v5107, 16
        %v5154 = vrot.slane %v5152, 1
        %v5155 = vor.u32 %v5150, %v5154
        %v5157 = vshll.u32 %v5108, 16
        %v5159 = vrot.slane %v5157, 1
        %v5160 = vsel %vm1244, %v5155, %v5159
        %v5162 = vshrl.u32 %v5109, 16
        %v5164 = vshll.u32 %v5109, 16
        %v5166 = vrot.slane %v5164, 1
        %v5167 = vor.u32 %v5162, %v5166
        %v5169 = vshll.u32 %v5110, 16
        %v5171 = vrot.slane %v5169, 1
        %v5172 = vsel %vm1244, %v5167, %v5171
        %v5174 = vshrl.u32 %v5111, 16
        %v5176 = vshll.u32 %v5111, 16
        %v5178 = vrot.slane %v5176, 1
        %v5179 = vor.u32 %v5174, %v5178
        %v5181 = vshll.u32 %v5112, 16
        %v5183 = vrot.slane %v5181, 1
        %v5184 = vsel %vm1244, %v5179, %v5183
        %v5186 = vshrl.u32 %v5113, 16
        %v5188 = vshll.u32 %v5113, 16
        %v5190 = vrot.slane %v5188, 1
        %v5191 = vor.u32 %v5186, %v5190
        %v5193 = vshll.u32 %v5114, 16
        %v5195 = vrot.slane %v5193, 1
        %v5196 = vsel %vm1244, %v5191, %v5195
        %v5198 = vshrl.u32 %v5115, 16
        %v5200 = vshll.u32 %v5115, 16
        %v5202 = vrot.slane %v5200, 1
        %v5203 = vor.u32 %v5198, %v5202
        %v5205 = vshll.u32 %v5116, 16
        %v5207 = vrot.slane %v5205, 1
        %v5208 = vsel %vm1244, %v5203, %v5207
        %v5210 = vshrl.u32 %v5117, 16
        %v5212 = vshll.u32 %v5117, 16
        %v5214 = vrot.slane %v5212, 1
        %v5215 = vor.u32 %v5210, %v5214
        %v5217 = vshll.u32 %v5118, 16
        %v5219 = vrot.slane %v5217, 1
        %v5220 = vsel %vm1244, %v5215, %v5219
        %v5222 = vshrl.u32 %v5119, 16
        %v5224 = vshll.u32 %v5119, 16
        %v5226 = vrot.slane %v5224, 1
        %v5227 = vor.u32 %v5222, %v5226
        %v5229 = vshll.u32 %v5120, 16
        %v5231 = vrot.slane %v5229, 1
        %v5232 = vsel %vm1244, %v5227, %v5231
        %v5234 = vshrl.u32 %v5121, 16
        %v5236 = vshll.u32 %v5121, 16
        %v5238 = vrot.slane %v5236, 1
        %v5239 = vor.u32 %v5234, %v5238
        %v5241 = vshll.u32 %v5122, 16
        %v5243 = vrot.slane %v5241, 1
        %v5244 = vsel %vm1244, %v5239, %v5243
        %v5246 = vshrl.u32 %v5123, 16
        %v5248 = vshll.u32 %v5123, 16
        %v5250 = vrot.slane %v5248, 1
        %v5251 = vor.u32 %v5246, %v5250
        %v5253 = vshll.u32 %v5124, 16
        %v5255 = vrot.slane %v5253, 1
        %v5256 = vsel %vm1244, %v5251, %v5255
        %v5258 = vshrl.u32 %v5125, 16
        %v5260 = vshll.u32 %v5125, 16
        %v5262 = vrot.slane %v5260, 1
        %v5263 = vor.u32 %v5258, %v5262
        %v5265 = vshll.u32 %v5126, 16
        %v5267 = vrot.slane %v5265, 1
        %v5268 = vsel %vm1244, %v5263, %v5267
        %v5270 = vshrl.u32 %v5127, 16
        %v5272 = vshll.u32 %v5127, 16
        %v5274 = vrot.slane %v5272, 1
        %v5275 = vor.u32 %v5270, %v5274
        %v5277 = vshll.u32 %v5128, 16
        %v5279 = vrot.slane %v5277, 1
        %v5280 = vsel %vm1244, %v5275, %v5279
        %v5282 = vshrl.u32 %v5129, 16
        %v5284 = vshll.u32 %v5129, 16
        %v5286 = vrot.slane %v5284, 1
        %v5287 = vor.u32 %v5282, %v5286
        %v5289 = vshll.u32 %v5130, 16
        %v5291 = vrot.slane %v5289, 1
        %v5292 = vsel %vm1244, %v5287, %v5291
        %v5294 = vshrl.u32 %v5131, 16
        %v5296 = vshll.u32 %v5131, 16
        %v5298 = vrot.slane %v5296, 1
        %v5299 = vor.u32 %v5294, %v5298
        %v5301 = vshll.u32 %v5132, 16
        %v5303 = vrot.slane %v5301, 1
        %v5304 = vsel %vm1244, %v5299, %v5303
        %v5306 = vshrl.u32 %v5133, 16
        %v5308 = vshll.u32 %v5133, 16
        %v5310 = vrot.slane %v5308, 1
        %v5311 = vor.u32 %v5306, %v5310
        %v5313 = vshll.u32 %v5134, 16
        %v5315 = vrot.slane %v5313, 1
        %v5316 = vsel %vm1244, %v5311, %v5315
        %v5318 = vshrl.u32 %v5135, 16
        %v5320 = vshll.u32 %v5135, 16
        %v5322 = vrot.slane %v5320, 1
        %v5323 = vor.u32 %v5318, %v5322
        %v5325 = vshll.u32 %v5136, 16
        %v5327 = vrot.slane %v5325, 1
        %v5328 = vsel %vm1244, %v5323, %v5327
        %5329 = vrot.lane.b32.xlu0 %v5148, 32
        %v5330 = vpop.permute.xlu0 %5329
        %5331 = vrot.lane.b32.xlu0 %v5160, 32
        %v5332 = vpop.permute.xlu0 %5331
        %5333 = vrot.lane.b32.xlu0 %v5172, 32
        %v5334 = vpop.permute.xlu0 %5333
        %5335 = vrot.lane.b32.xlu0 %v5184, 32
        %v5336 = vpop.permute.xlu0 %5335
        %5337 = vrot.lane.b32.xlu0 %v5196, 32
        %v5338 = vpop.permute.xlu0 %5337
        %5339 = vrot.lane.b32.xlu0 %v5208, 32
        %v5340 = vpop.permute.xlu0 %5339
        %5341 = vrot.lane.b32.xlu0 %v5220, 32
        %v5342 = vpop.permute.xlu0 %5341
        %5343 = vrot.lane.b32.xlu0 %v5232, 32
        %v5344 = vpop.permute.xlu0 %5343
        %5345 = vrot.lane.b32.xlu0 %v5244, 32
        %v5346 = vpop.permute.xlu0 %5345
        %5347 = vrot.lane.b32.xlu0 %v5256, 32
        %v5348 = vpop.permute.xlu0 %5347
        %5349 = vrot.lane.b32.xlu0 %v5268, 32
        %v5350 = vpop.permute.xlu0 %5349
        %5351 = vrot.lane.b32.xlu0 %v5280, 32
        %v5352 = vpop.permute.xlu0 %5351
        %5353 = vrot.lane.b32.xlu0 %v5292, 32
        %v5354 = vpop.permute.xlu0 %5353
        %5355 = vrot.lane.b32.xlu0 %v5304, 32
        %v5356 = vpop.permute.xlu0 %5355
        %5357 = vrot.lane.b32.xlu0 %v5316, 32
        %v5358 = vpop.permute.xlu0 %5357
        %5359 = vrot.lane.b32.xlu0 %v5328, 32
        %v5360 = vpop.permute.xlu0 %5359
        %5377 = vst.msk [vmem:[#allocation3] sm:$0xff] %vm1485, %v5330
        %5378 = vst.msk [vmem:[#allocation3 + $0x18] sm:$0xff] %vm1485, %v5332
        %5379 = vst.msk [vmem:[#allocation3 + $0x30] sm:$0xff] %vm1485, %v5334
        %5380 = vst.msk [vmem:[#allocation3 + $0x48] sm:$0xff] %vm1485, %v5336
        %5381 = vst.msk [vmem:[#allocation3 + $0x60] sm:$0xff] %vm1485, %v5338
        %5382 = vst.msk [vmem:[#allocation3 + $0x78] sm:$0xff] %vm1485, %v5340
        %5383 = vst.msk [vmem:[#allocation3 + $0x90] sm:$0xff] %vm1485, %v5342
        %5384 = vst.msk [vmem:[#allocation3 + $0xa8] sm:$0xff] %vm1485, %v5344
        %5385 = vst.msk [vmem:[#allocation3 + $0xc0] sm:$0xff] %vm1485, %v5346
        %5386 = vst.msk [vmem:[#allocation3 + $0xd8] sm:$0xff] %vm1485, %v5348
        %5387 = vst.msk [vmem:[#allocation3 + $0xf0] sm:$0xff] %vm1485, %v5350
        %5388 = vst.msk [vmem:[#allocation3 + $0x108] sm:$0xff] %vm1485, %v5352
        %5389 = vst.msk [vmem:[#allocation3 + $0x120] sm:$0xff] %vm1485, %v5354
        %5390 = vst.msk [vmem:[#allocation3 + $0x138] sm:$0xff] %vm1485, %v5356
        %5391 = vst.msk [vmem:[#allocation3 + $0x150] sm:$0xff] %vm1485, %v5358
        %5392 = vst.msk [vmem:[#allocation3 + $0x168] sm:$0xff] %vm1485, %v5360
        %v5393 = vld [vmem:[#allocation2] sm:$0xe]
        %v5394 = vld [vmem:[#allocation2 + $0x4] sm:$0xf]
        %v5395 = vld [vmem:[#allocation2 + $0x8] sm:$0x1]
        %v5396 = vld [vmem:[#allocation2 + $0xc] sm:$0xe]
        %v5397 = vld [vmem:[#allocation2 + $0x10] sm:$0xf]
        %v5398 = vld [vmem:[#allocation2 + $0x14] sm:$0x1]
        %v5399 = vld [vmem:[#allocation2 + $0x18] sm:$0xe]
        %v5400 = vld [vmem:[#allocation2 + $0x1c] sm:$0xf]
        %v5401 = vld [vmem:[#allocation2 + $0x20] sm:$0x1]
        %v5402 = vld [vmem:[#allocation2 + $0x24] sm:$0xe]
        %v5403 = vld [vmem:[#allocation2 + $0x28] sm:$0xf]
        %v5404 = vld [vmem:[#allocation2 + $0x2c] sm:$0x1]
        %v5405 = vld [vmem:[#allocation2 + $0x30] sm:$0xe]
        %v5406 = vld [vmem:[#allocation2 + $0x34] sm:$0xf]
        %v5407 = vld [vmem:[#allocation2 + $0x38] sm:$0x1]
        %v5408 = vld [vmem:[#allocation2 + $0x3c] sm:$0xe]
        %v5409 = vld [vmem:[#allocation2 + $0x40] sm:$0xf]
        %v5410 = vld [vmem:[#allocation2 + $0x44] sm:$0x1]
        %v5411 = vld [vmem:[#allocation2 + $0x48] sm:$0xe]
        %v5412 = vld [vmem:[#allocation2 + $0x4c] sm:$0xf]
        %v5413 = vld [vmem:[#allocation2 + $0x50] sm:$0x1]
        %v5414 = vld [vmem:[#allocation2 + $0x54] sm:$0xe]
        %v5415 = vld [vmem:[#allocation2 + $0x58] sm:$0xf]
        %v5416 = vld [vmem:[#allocation2 + $0x5c] sm:$0x1]
        %v5417 = vld [vmem:[#allocation2 + $0x60] sm:$0xe]
        %v5418 = vld [vmem:[#allocation2 + $0x64] sm:$0xf]
        %v5419 = vld [vmem:[#allocation2 + $0x68] sm:$0x1]
        %v5420 = vld [vmem:[#allocation2 + $0x6c] sm:$0xe]
        %v5421 = vld [vmem:[#allocation2 + $0x70] sm:$0xf]
        %v5422 = vld [vmem:[#allocation2 + $0x74] sm:$0x1]
        %v5423 = vld [vmem:[#allocation2 + $0x78] sm:$0xe]
        %v5424 = vld [vmem:[#allocation2 + $0x7c] sm:$0xf]
        %v5425 = vld [vmem:[#allocation2 + $0x80] sm:$0x1]
        %v5426 = vld [vmem:[#allocation2 + $0x84] sm:$0xe]
        %v5427 = vld [vmem:[#allocation2 + $0x88] sm:$0xf]
        %v5428 = vld [vmem:[#allocation2 + $0x8c] sm:$0x1]
        %v5429 = vld [vmem:[#allocation2 + $0x90] sm:$0xe]
        %v5430 = vld [vmem:[#allocation2 + $0x94] sm:$0xf]
        %v5431 = vld [vmem:[#allocation2 + $0x98] sm:$0x1]
        %v5432 = vld [vmem:[#allocation2 + $0x9c] sm:$0xe]
        %v5433 = vld [vmem:[#allocation2 + $0xa0] sm:$0xf]
        %v5434 = vld [vmem:[#allocation2 + $0xa4] sm:$0x1]
        %v5435 = vld [vmem:[#allocation2 + $0xa8] sm:$0xe]
        %v5436 = vld [vmem:[#allocation2 + $0xac] sm:$0xf]
        %v5437 = vld [vmem:[#allocation2 + $0xb0] sm:$0x1]
        %v5438 = vld [vmem:[#allocation2 + $0xb4] sm:$0xe]
        %v5439 = vld [vmem:[#allocation2 + $0xb8] sm:$0xf]
        %v5440 = vld [vmem:[#allocation2 + $0xbc] sm:$0x1]
        %v5489 = vunpack.c.l.b16 %v5393
        %v5490 = vunpack.c.l.b16 %v5394
        %v5491 = vunpack.c.l.b16 %v5395
        %v5492 = vunpack.c.l.b16 %v5396
        %v5493 = vunpack.c.l.b16 %v5397
        %v5494 = vunpack.c.l.b16 %v5398
        %v5495 = vunpack.c.l.b16 %v5399
        %v5496 = vunpack.c.l.b16 %v5400
        %v5497 = vunpack.c.l.b16 %v5401
        %v5498 = vunpack.c.l.b16 %v5402
        %v5499 = vunpack.c.l.b16 %v5403
        %v5500 = vunpack.c.l.b16 %v5404
        %v5501 = vunpack.c.l.b16 %v5405
        %v5502 = vunpack.c.l.b16 %v5406
        %v5503 = vunpack.c.l.b16 %v5407
        %v5504 = vunpack.c.l.b16 %v5408
        %v5505 = vunpack.c.l.b16 %v5409
        %v5506 = vunpack.c.l.b16 %v5410
        %v5507 = vunpack.c.l.b16 %v5411
        %v5508 = vunpack.c.l.b16 %v5412
        %v5509 = vunpack.c.l.b16 %v5413
        %v5510 = vunpack.c.l.b16 %v5414
        %v5511 = vunpack.c.l.b16 %v5415
        %v5512 = vunpack.c.l.b16 %v5416
        %v5513 = vunpack.c.l.b16 %v5417
        %v5514 = vunpack.c.l.b16 %v5418
        %v5515 = vunpack.c.l.b16 %v5419
        %v5516 = vunpack.c.l.b16 %v5420
        %v5517 = vunpack.c.l.b16 %v5421
        %v5518 = vunpack.c.l.b16 %v5422
        %v5519 = vunpack.c.l.b16 %v5423
        %v5520 = vunpack.c.l.b16 %v5424
        %v5521 = vunpack.c.l.b16 %v5425
        %v5522 = vunpack.c.l.b16 %v5426
        %v5523 = vunpack.c.l.b16 %v5427
        %v5524 = vunpack.c.l.b16 %v5428
        %v5525 = vunpack.c.l.b16 %v5429
        %v5526 = vunpack.c.l.b16 %v5430
        %v5527 = vunpack.c.l.b16 %v5431
        %v5528 = vunpack.c.l.b16 %v5432
        %v5529 = vunpack.c.l.b16 %v5433
        %v5530 = vunpack.c.l.b16 %v5434
        %v5531 = vunpack.c.l.b16 %v5435
        %v5532 = vunpack.c.l.b16 %v5436
        %v5533 = vunpack.c.l.b16 %v5437
        %v5534 = vunpack.c.l.b16 %v5438
        %v5535 = vunpack.c.l.b16 %v5439
        %v5536 = vunpack.c.l.b16 %v5440
        %v5537 = vpack.c.b16 %v5490, %v5489
        %v5538 = vpack.c.b16 %v5491, %v5491
        %v5539 = vpack.c.b16 %v5493, %v5492
        %v5540 = vpack.c.b16 %v5494, %v5494
        %v5541 = vpack.c.b16 %v5496, %v5495
        %v5542 = vpack.c.b16 %v5497, %v5497
        %v5543 = vpack.c.b16 %v5499, %v5498
        %v5544 = vpack.c.b16 %v5500, %v5500
        %v5545 = vpack.c.b16 %v5502, %v5501
        %v5546 = vpack.c.b16 %v5503, %v5503
        %v5547 = vpack.c.b16 %v5505, %v5504
        %v5548 = vpack.c.b16 %v5506, %v5506
        %v5549 = vpack.c.b16 %v5508, %v5507
        %v5550 = vpack.c.b16 %v5509, %v5509
        %v5551 = vpack.c.b16 %v5511, %v5510
        %v5552 = vpack.c.b16 %v5512, %v5512
        %v5553 = vpack.c.b16 %v5514, %v5513
        %v5554 = vpack.c.b16 %v5515, %v5515
        %v5555 = vpack.c.b16 %v5517, %v5516
        %v5556 = vpack.c.b16 %v5518, %v5518
        %v5557 = vpack.c.b16 %v5520, %v5519
        %v5558 = vpack.c.b16 %v5521, %v5521
        %v5559 = vpack.c.b16 %v5523, %v5522
        %v5560 = vpack.c.b16 %v5524, %v5524
        %v5561 = vpack.c.b16 %v5526, %v5525
        %v5562 = vpack.c.b16 %v5527, %v5527
        %v5563 = vpack.c.b16 %v5529, %v5528
        %v5564 = vpack.c.b16 %v5530, %v5530
        %v5565 = vpack.c.b16 %v5532, %v5531
        %v5566 = vpack.c.b16 %v5533, %v5533
        %v5567 = vpack.c.b16 %v5535, %v5534
        %v5568 = vpack.c.b16 %v5536, %v5536
        %v5569 = vrot.slane %v5537, 1
        %v5570 = vrot.slane %v5538, 1
        %v5571 = vsel %vm1678, %v5569, %v5570
        %v5572 = vrot.slane %v5539, 1
        %v5573 = vrot.slane %v5540, 1
        %v5574 = vsel %vm1678, %v5572, %v5573
        %v5575 = vrot.slane %v5541, 1
        %v5576 = vrot.slane %v5542, 1
        %v5577 = vsel %vm1678, %v5575, %v5576
        %v5578 = vrot.slane %v5543, 1
        %v5579 = vrot.slane %v5544, 1
        %v5580 = vsel %vm1678, %v5578, %v5579
        %v5581 = vrot.slane %v5545, 1
        %v5582 = vrot.slane %v5546, 1
        %v5583 = vsel %vm1678, %v5581, %v5582
        %v5584 = vrot.slane %v5547, 1
        %v5585 = vrot.slane %v5548, 1
        %v5586 = vsel %vm1678, %v5584, %v5585
        %v5587 = vrot.slane %v5549, 1
        %v5588 = vrot.slane %v5550, 1
        %v5589 = vsel %vm1678, %v5587, %v5588
        %v5590 = vrot.slane %v5551, 1
        %v5591 = vrot.slane %v5552, 1
        %v5592 = vsel %vm1678, %v5590, %v5591
        %v5593 = vrot.slane %v5553, 1
        %v5594 = vrot.slane %v5554, 1
        %v5595 = vsel %vm1678, %v5593, %v5594
        %v5596 = vrot.slane %v5555, 1
        %v5597 = vrot.slane %v5556, 1
        %v5598 = vsel %vm1678, %v5596, %v5597
        %v5599 = vrot.slane %v5557, 1
        %v5600 = vrot.slane %v5558, 1
        %v5601 = vsel %vm1678, %v5599, %v5600
        %v5602 = vrot.slane %v5559, 1
        %v5603 = vrot.slane %v5560, 1
        %v5604 = vsel %vm1678, %v5602, %v5603
        %v5605 = vrot.slane %v5561, 1
        %v5606 = vrot.slane %v5562, 1
        %v5607 = vsel %vm1678, %v5605, %v5606
        %v5608 = vrot.slane %v5563, 1
        %v5609 = vrot.slane %v5564, 1
        %v5610 = vsel %vm1678, %v5608, %v5609
        %v5611 = vrot.slane %v5565, 1
        %v5612 = vrot.slane %v5566, 1
        %v5613 = vsel %vm1678, %v5611, %v5612
        %v5614 = vrot.slane %v5567, 1
        %v5615 = vrot.slane %v5568, 1
        %v5616 = vsel %vm1678, %v5614, %v5615
        %5617 = vrot.lane.b32.xlu0 %v5571, 64
        %v5618 = vpop.permute.xlu0 %5617
        %5619 = vrot.lane.b32.xlu0 %v5574, 64
        %v5620 = vpop.permute.xlu0 %5619
        %5621 = vrot.lane.b32.xlu0 %v5577, 64
        %v5622 = vpop.permute.xlu0 %5621
        %5623 = vrot.lane.b32.xlu0 %v5580, 64
        %v5624 = vpop.permute.xlu0 %5623
        %5625 = vrot.lane.b32.xlu0 %v5583, 64
        %v5626 = vpop.permute.xlu0 %5625
        %5627 = vrot.lane.b32.xlu0 %v5586, 64
        %v5628 = vpop.permute.xlu0 %5627
        %5629 = vrot.lane.b32.xlu0 %v5589, 64
        %v5630 = vpop.permute.xlu0 %5629
        %5631 = vrot.lane.b32.xlu0 %v5592, 64
        %v5632 = vpop.permute.xlu0 %5631
        %5633 = vrot.lane.b32.xlu0 %v5595, 64
        %v5634 = vpop.permute.xlu0 %5633
        %5635 = vrot.lane.b32.xlu0 %v5598, 64
        %v5636 = vpop.permute.xlu0 %5635
        %5637 = vrot.lane.b32.xlu0 %v5601, 64
        %v5638 = vpop.permute.xlu0 %5637
        %5639 = vrot.lane.b32.xlu0 %v5604, 64
        %v5640 = vpop.permute.xlu0 %5639
        %5641 = vrot.lane.b32.xlu0 %v5607, 64
        %v5642 = vpop.permute.xlu0 %5641
        %5643 = vrot.lane.b32.xlu0 %v5610, 64
        %v5644 = vpop.permute.xlu0 %5643
        %5645 = vrot.lane.b32.xlu0 %v5613, 64
        %v5646 = vpop.permute.xlu0 %5645
        %5647 = vrot.lane.b32.xlu0 %v5616, 64
        %v5648 = vpop.permute.xlu0 %5647
        %5665 = vst.msk [vmem:[#allocation3] sm:$0xff] %vm1775, %v5618
        %5666 = vst.msk [vmem:[#allocation3 + $0x18] sm:$0xff] %vm1775, %v5620
        %5667 = vst.msk [vmem:[#allocation3 + $0x30] sm:$0xff] %vm1775, %v5622
        %5668 = vst.msk [vmem:[#allocation3 + $0x48] sm:$0xff] %vm1775, %v5624
        %5669 = vst.msk [vmem:[#allocation3 + $0x60] sm:$0xff] %vm1775, %v5626
        %5670 = vst.msk [vmem:[#allocation3 + $0x78] sm:$0xff] %vm1775, %v5628
        %5671 = vst.msk [vmem:[#allocation3 + $0x90] sm:$0xff] %vm1775, %v5630
        %5672 = vst.msk [vmem:[#allocation3 + $0xa8] sm:$0xff] %vm1775, %v5632
        %5673 = vst.msk [vmem:[#allocation3 + $0xc0] sm:$0xff] %vm1775, %v5634
        %5674 = vst.msk [vmem:[#allocation3 + $0xd8] sm:$0xff] %vm1775, %v5636
        %5675 = vst.msk [vmem:[#allocation3 + $0xf0] sm:$0xff] %vm1775, %v5638
        %5676 = vst.msk [vmem:[#allocation3 + $0x108] sm:$0xff] %vm1775, %v5640
        %5677 = vst.msk [vmem:[#allocation3 + $0x120] sm:$0xff] %vm1775, %v5642
        %5678 = vst.msk [vmem:[#allocation3 + $0x138] sm:$0xff] %vm1775, %v5644
        %5679 = vst.msk [vmem:[#allocation3 + $0x150] sm:$0xff] %vm1775, %v5646
        %5680 = vst.msk [vmem:[#allocation3 + $0x168] sm:$0xff] %vm1775, %v5648
        %v5681 = vld [vmem:[%s808] sm:$0xf]
        %v5682 = vld [vmem:[%s808 + $0x4] sm:$0xf]
        %v5683 = vld [vmem:[%s808 + $0xc] sm:$0xf]
        %v5684 = vld [vmem:[%s808 + $0x10] sm:$0xf]
        %v5685 = vld [vmem:[%s808 + $0x18] sm:$0xf]
        %v5686 = vld [vmem:[%s808 + $0x1c] sm:$0xf]
        %v5687 = vld [vmem:[%s808 + $0x24] sm:$0xf]
        %v5688 = vld [vmem:[%s808 + $0x28] sm:$0xf]
        %v5689 = vld [vmem:[%s808 + $0x30] sm:$0xf]
        %v5690 = vld [vmem:[%s808 + $0x34] sm:$0xf]
        %v5691 = vld [vmem:[%s808 + $0x3c] sm:$0xf]
        %v5692 = vld [vmem:[%s808 + $0x40] sm:$0xf]
        %v5693 = vld [vmem:[%s808 + $0x48] sm:$0xf]
        %v5694 = vld [vmem:[%s808 + $0x4c] sm:$0xf]
        %v5695 = vld [vmem:[%s808 + $0x54] sm:$0xf]
        %v5696 = vld [vmem:[%s808 + $0x58] sm:$0xf]
        %v5697 = vld [vmem:[%s808 + $0x60] sm:$0xf]
        %v5698 = vld [vmem:[%s808 + $0x64] sm:$0xf]
        %v5699 = vld [vmem:[%s808 + $0x6c] sm:$0xf]
        %v5700 = vld [vmem:[%s808 + $0x70] sm:$0xf]
        %v5701 = vld [vmem:[%s808 + $0x78] sm:$0xf]
        %v5702 = vld [vmem:[%s808 + $0x7c] sm:$0xf]
        %v5703 = vld [vmem:[%s808 + $0x84] sm:$0xf]
        %v5704 = vld [vmem:[%s808 + $0x88] sm:$0xf]
        %v5705 = vld [vmem:[%s808 + $0x90] sm:$0xf]
        %v5706 = vld [vmem:[%s808 + $0x94] sm:$0xf]
        %v5707 = vld [vmem:[%s808 + $0x9c] sm:$0xf]
        %v5708 = vld [vmem:[%s808 + $0xa0] sm:$0xf]
        %v5709 = vld [vmem:[%s808 + $0xa8] sm:$0xf]
        %v5710 = vld [vmem:[%s808 + $0xac] sm:$0xf]
        %v5711 = vld [vmem:[%s808 + $0xb4] sm:$0xf]
        %v5712 = vld [vmem:[%s808 + $0xb8] sm:$0xf]
        %v5745 = vunpack.c.l.b16 %v5681
        %v5746 = vunpack.c.l.b16 %v5682
        %v5747 = vunpack.c.l.b16 %v5683
        %v5748 = vunpack.c.l.b16 %v5684
        %v5749 = vunpack.c.l.b16 %v5685
        %v5750 = vunpack.c.l.b16 %v5686
        %v5751 = vunpack.c.l.b16 %v5687
        %v5752 = vunpack.c.l.b16 %v5688
        %v5753 = vunpack.c.l.b16 %v5689
        %v5754 = vunpack.c.l.b16 %v5690
        %v5755 = vunpack.c.l.b16 %v5691
        %v5756 = vunpack.c.l.b16 %v5692
        %v5757 = vunpack.c.l.b16 %v5693
        %v5758 = vunpack.c.l.b16 %v5694
        %v5759 = vunpack.c.l.b16 %v5695
        %v5760 = vunpack.c.l.b16 %v5696
        %v5761 = vunpack.c.l.b16 %v5697
        %v5762 = vunpack.c.l.b16 %v5698
        %v5763 = vunpack.c.l.b16 %v5699
        %v5764 = vunpack.c.l.b16 %v5700
        %v5765 = vunpack.c.l.b16 %v5701
        %v5766 = vunpack.c.l.b16 %v5702
        %v5767 = vunpack.c.l.b16 %v5703
        %v5768 = vunpack.c.l.b16 %v5704
        %v5769 = vunpack.c.l.b16 %v5705
        %v5770 = vunpack.c.l.b16 %v5706
        %v5771 = vunpack.c.l.b16 %v5707
        %v5772 = vunpack.c.l.b16 %v5708
        %v5773 = vunpack.c.l.b16 %v5709
        %v5774 = vunpack.c.l.b16 %v5710
        %v5775 = vunpack.c.l.b16 %v5711
        %v5776 = vunpack.c.l.b16 %v5712
        %v5777 = vpack.c.b16 %v5746, %v5745
        %v5778 = vpack.c.b16 %v5748, %v5747
        %v5779 = vpack.c.b16 %v5750, %v5749
        %v5780 = vpack.c.b16 %v5752, %v5751
        %v5781 = vpack.c.b16 %v5754, %v5753
        %v5782 = vpack.c.b16 %v5756, %v5755
        %v5783 = vpack.c.b16 %v5758, %v5757
        %v5784 = vpack.c.b16 %v5760, %v5759
        %v5785 = vpack.c.b16 %v5762, %v5761
        %v5786 = vpack.c.b16 %v5764, %v5763
        %v5787 = vpack.c.b16 %v5766, %v5765
        %v5788 = vpack.c.b16 %v5768, %v5767
        %v5789 = vpack.c.b16 %v5770, %v5769
        %v5790 = vpack.c.b16 %v5772, %v5771
        %v5791 = vpack.c.b16 %v5774, %v5773
        %v5792 = vpack.c.b16 %v5776, %v5775
        %5793 = vrot.lane.b32.xlu0 %v5777, 96
        %v5794 = vpop.permute.xlu0 %5793
        %5795 = vrot.lane.b32.xlu0 %v5778, 96
        %v5796 = vpop.permute.xlu0 %5795
        %5797 = vrot.lane.b32.xlu0 %v5779, 96
        %v5798 = vpop.permute.xlu0 %5797
        %5799 = vrot.lane.b32.xlu0 %v5780, 96
        %v5800 = vpop.permute.xlu0 %5799
        %5801 = vrot.lane.b32.xlu0 %v5781, 96
        %v5802 = vpop.permute.xlu0 %5801
        %5803 = vrot.lane.b32.xlu0 %v5782, 96
        %v5804 = vpop.permute.xlu0 %5803
        %5805 = vrot.lane.b32.xlu0 %v5783, 96
        %v5806 = vpop.permute.xlu0 %5805
        %5807 = vrot.lane.b32.xlu0 %v5784, 96
        %v5808 = vpop.permute.xlu0 %5807
        %5809 = vrot.lane.b32.xlu0 %v5785, 96
        %v5810 = vpop.permute.xlu0 %5809
        %5811 = vrot.lane.b32.xlu0 %v5786, 96
        %v5812 = vpop.permute.xlu0 %5811
        %5813 = vrot.lane.b32.xlu0 %v5787, 96
        %v5814 = vpop.permute.xlu0 %5813
        %5815 = vrot.lane.b32.xlu0 %v5788, 96
        %v5816 = vpop.permute.xlu0 %5815
        %5817 = vrot.lane.b32.xlu0 %v5789, 96
        %v5818 = vpop.permute.xlu0 %5817
        %5819 = vrot.lane.b32.xlu0 %v5790, 96
        %v5820 = vpop.permute.xlu0 %5819
        %5821 = vrot.lane.b32.xlu0 %v5791, 96
        %v5822 = vpop.permute.xlu0 %5821
        %5823 = vrot.lane.b32.xlu0 %v5792, 96
        %v5824 = vpop.permute.xlu0 %5823
        %5841 = vst.msk [vmem:[#allocation3] sm:$0xff] %vm1952, %v5794
        %5842 = vst.msk [vmem:[#allocation3 + $0x18] sm:$0xff] %vm1952, %v5796
        %5843 = vst.msk [vmem:[#allocation3 + $0x30] sm:$0xff] %vm1952, %v5798
        %5844 = vst.msk [vmem:[#allocation3 + $0x48] sm:$0xff] %vm1952, %v5800
        %5845 = vst.msk [vmem:[#allocation3 + $0x60] sm:$0xff] %vm1952, %v5802
        %5846 = vst.msk [vmem:[#allocation3 + $0x78] sm:$0xff] %vm1952, %v5804
        %5847 = vst.msk [vmem:[#allocation3 + $0x90] sm:$0xff] %vm1952, %v5806
        %5848 = vst.msk [vmem:[#allocation3 + $0xa8] sm:$0xff] %vm1952, %v5808
        %5849 = vst.msk [vmem:[#allocation3 + $0xc0] sm:$0xff] %vm1952, %v5810
        %5850 = vst.msk [vmem:[#allocation3 + $0xd8] sm:$0xff] %vm1952, %v5812
        %5851 = vst.msk [vmem:[#allocation3 + $0xf0] sm:$0xff] %vm1952, %v5814
        %5852 = vst.msk [vmem:[#allocation3 + $0x108] sm:$0xff] %vm1952, %v5816
        %5853 = vst.msk [vmem:[#allocation3 + $0x120] sm:$0xff] %vm1952, %v5818
        %5854 = vst.msk [vmem:[#allocation3 + $0x138] sm:$0xff] %vm1952, %v5820
        %5855 = vst.msk [vmem:[#allocation3 + $0x150] sm:$0xff] %vm1952, %v5822
        %5856 = vst.msk [vmem:[#allocation3 + $0x168] sm:$0xff] %vm1952, %v5824
        %v5857 = vld [vmem:[%s808] sm:$0xf]
        %v5858 = vld [vmem:[%s808 + $0x4] sm:$0xf]
        %v5859 = vld [vmem:[%s808 + $0x8] sm:$0x1]
        %v5860 = vld [vmem:[%s808 + $0xc] sm:$0xf]
        %v5861 = vld [vmem:[%s808 + $0x10] sm:$0xf]
        %v5862 = vld [vmem:[%s808 + $0x14] sm:$0x1]
        %v5863 = vld [vmem:[%s808 + $0x18] sm:$0xf]
        %v5864 = vld [vmem:[%s808 + $0x1c] sm:$0xf]
        %v5865 = vld [vmem:[%s808 + $0x20] sm:$0x1]
        %v5866 = vld [vmem:[%s808 + $0x24] sm:$0xf]
        %v5867 = vld [vmem:[%s808 + $0x28] sm:$0xf]
        %v5868 = vld [vmem:[%s808 + $0x2c] sm:$0x1]
        %v5869 = vld [vmem:[%s808 + $0x30] sm:$0xf]
        %v5870 = vld [vmem:[%s808 + $0x34] sm:$0xf]
        %v5871 = vld [vmem:[%s808 + $0x38] sm:$0x1]
        %v5872 = vld [vmem:[%s808 + $0x3c] sm:$0xf]
        %v5873 = vld [vmem:[%s808 + $0x40] sm:$0xf]
        %v5874 = vld [vmem:[%s808 + $0x44] sm:$0x1]
        %v5875 = vld [vmem:[%s808 + $0x48] sm:$0xf]
        %v5876 = vld [vmem:[%s808 + $0x4c] sm:$0xf]
        %v5877 = vld [vmem:[%s808 + $0x50] sm:$0x1]
        %v5878 = vld [vmem:[%s808 + $0x54] sm:$0xf]
        %v5879 = vld [vmem:[%s808 + $0x58] sm:$0xf]
        %v5880 = vld [vmem:[%s808 + $0x5c] sm:$0x1]
        %v5881 = vld [vmem:[%s808 + $0x60] sm:$0xf]
        %v5882 = vld [vmem:[%s808 + $0x64] sm:$0xf]
        %v5883 = vld [vmem:[%s808 + $0x68] sm:$0x1]
        %v5884 = vld [vmem:[%s808 + $0x6c] sm:$0xf]
        %v5885 = vld [vmem:[%s808 + $0x70] sm:$0xf]
        %v5886 = vld [vmem:[%s808 + $0x74] sm:$0x1]
        %v5887 = vld [vmem:[%s808 + $0x78] sm:$0xf]
        %v5888 = vld [vmem:[%s808 + $0x7c] sm:$0xf]
        %v5889 = vld [vmem:[%s808 + $0x80] sm:$0x1]
        %v5890 = vld [vmem:[%s808 + $0x84] sm:$0xf]
        %v5891 = vld [vmem:[%s808 + $0x88] sm:$0xf]
        %v5892 = vld [vmem:[%s808 + $0x8c] sm:$0x1]
        %v5893 = vld [vmem:[%s808 + $0x90] sm:$0xf]
        %v5894 = vld [vmem:[%s808 + $0x94] sm:$0xf]
        %v5895 = vld [vmem:[%s808 + $0x98] sm:$0x1]
        %v5896 = vld [vmem:[%s808 + $0x9c] sm:$0xf]
        %v5897 = vld [vmem:[%s808 + $0xa0] sm:$0xf]
        %v5898 = vld [vmem:[%s808 + $0xa4] sm:$0x1]
        %v5899 = vld [vmem:[%s808 + $0xa8] sm:$0xf]
        %v5900 = vld [vmem:[%s808 + $0xac] sm:$0xf]
        %v5901 = vld [vmem:[%s808 + $0xb0] sm:$0x1]
        %v5902 = vld [vmem:[%s808 + $0xb4] sm:$0xf]
        %v5903 = vld [vmem:[%s808 + $0xb8] sm:$0xf]
        %v5904 = vld [vmem:[%s808 + $0xbc] sm:$0x1]
        %v5953 = vunpack.c.l.b16 %v5857
        %v5954 = vunpack.c.l.b16 %v5858
        %v5955 = vunpack.c.l.b16 %v5859
        %v5956 = vunpack.c.l.b16 %v5860
        %v5957 = vunpack.c.l.b16 %v5861
        %v5958 = vunpack.c.l.b16 %v5862
        %v5959 = vunpack.c.l.b16 %v5863
        %v5960 = vunpack.c.l.b16 %v5864
        %v5961 = vunpack.c.l.b16 %v5865
        %v5962 = vunpack.c.l.b16 %v5866
        %v5963 = vunpack.c.l.b16 %v5867
        %v5964 = vunpack.c.l.b16 %v5868
        %v5965 = vunpack.c.l.b16 %v5869
        %v5966 = vunpack.c.l.b16 %v5870
        %v5967 = vunpack.c.l.b16 %v5871
        %v5968 = vunpack.c.l.b16 %v5872
        %v5969 = vunpack.c.l.b16 %v5873
        %v5970 = vunpack.c.l.b16 %v5874
        %v5971 = vunpack.c.l.b16 %v5875
        %v5972 = vunpack.c.l.b16 %v5876
        %v5973 = vunpack.c.l.b16 %v5877
        %v5974 = vunpack.c.l.b16 %v5878
        %v5975 = vunpack.c.l.b16 %v5879
        %v5976 = vunpack.c.l.b16 %v5880
        %v5977 = vunpack.c.l.b16 %v5881
        %v5978 = vunpack.c.l.b16 %v5882
        %v5979 = vunpack.c.l.b16 %v5883
        %v5980 = vunpack.c.l.b16 %v5884
        %v5981 = vunpack.c.l.b16 %v5885
        %v5982 = vunpack.c.l.b16 %v5886
        %v5983 = vunpack.c.l.b16 %v5887
        %v5984 = vunpack.c.l.b16 %v5888
        %v5985 = vunpack.c.l.b16 %v5889
        %v5986 = vunpack.c.l.b16 %v5890
        %v5987 = vunpack.c.l.b16 %v5891
        %v5988 = vunpack.c.l.b16 %v5892
        %v5989 = vunpack.c.l.b16 %v5893
        %v5990 = vunpack.c.l.b16 %v5894
        %v5991 = vunpack.c.l.b16 %v5895
        %v5992 = vunpack.c.l.b16 %v5896
        %v5993 = vunpack.c.l.b16 %v5897
        %v5994 = vunpack.c.l.b16 %v5898
        %v5995 = vunpack.c.l.b16 %v5899
        %v5996 = vunpack.c.l.b16 %v5900
        %v5997 = vunpack.c.l.b16 %v5901
        %v5998 = vunpack.c.l.b16 %v5902
        %v5999 = vunpack.c.l.b16 %v5903
        %v6000 = vunpack.c.l.b16 %v5904
        %v6001 = vpack.c.b16 %v5954, %v5953
        %v6002 = vpack.c.b16 %v5955, %v5955
        %v6003 = vpack.c.b16 %v5957, %v5956
        %v6004 = vpack.c.b16 %v5958, %v5958
        %v6005 = vpack.c.b16 %v5960, %v5959
        %v6006 = vpack.c.b16 %v5961, %v5961
        %v6007 = vpack.c.b16 %v5963, %v5962
        %v6008 = vpack.c.b16 %v5964, %v5964
        %v6009 = vpack.c.b16 %v5966, %v5965
        %v6010 = vpack.c.b16 %v5967, %v5967
        %v6011 = vpack.c.b16 %v5969, %v5968
        %v6012 = vpack.c.b16 %v5970, %v5970
        %v6013 = vpack.c.b16 %v5972, %v5971
        %v6014 = vpack.c.b16 %v5973, %v5973
        %v6015 = vpack.c.b16 %v5975, %v5974
        %v6016 = vpack.c.b16 %v5976, %v5976
        %v6017 = vpack.c.b16 %v5978, %v5977
        %v6018 = vpack.c.b16 %v5979, %v5979
        %v6019 = vpack.c.b16 %v5981, %v5980
        %v6020 = vpack.c.b16 %v5982, %v5982
        %v6021 = vpack.c.b16 %v5984, %v5983
        %v6022 = vpack.c.b16 %v5985, %v5985
        %v6023 = vpack.c.b16 %v5987, %v5986
        %v6024 = vpack.c.b16 %v5988, %v5988
        %v6025 = vpack.c.b16 %v5990, %v5989
        %v6026 = vpack.c.b16 %v5991, %v5991
        %v6027 = vpack.c.b16 %v5993, %v5992
        %v6028 = vpack.c.b16 %v5994, %v5994
        %v6029 = vpack.c.b16 %v5996, %v5995
        %v6030 = vpack.c.b16 %v5997, %v5997
        %v6031 = vpack.c.b16 %v5999, %v5998
        %v6032 = vpack.c.b16 %v6000, %v6000
        %v6034 = vshrl.u32 %v6001, 16
        %v6036 = vshll.u32 %v6001, 16
        %v6038 = vrot.slane %v6036, 1
        %v6039 = vor.u32 %v6034, %v6038
        %v6041 = vshll.u32 %v6002, 16
        %v6043 = vrot.slane %v6041, 1
        %v6044 = vsel %vm1244, %v6039, %v6043
        %v6046 = vshrl.u32 %v6003, 16
        %v6048 = vshll.u32 %v6003, 16
        %v6050 = vrot.slane %v6048, 1
        %v6051 = vor.u32 %v6046, %v6050
        %v6053 = vshll.u32 %v6004, 16
        %v6055 = vrot.slane %v6053, 1
        %v6056 = vsel %vm1244, %v6051, %v6055
        %v6058 = vshrl.u32 %v6005, 16
        %v6060 = vshll.u32 %v6005, 16
        %v6062 = vrot.slane %v6060, 1
        %v6063 = vor.u32 %v6058, %v6062
        %v6065 = vshll.u32 %v6006, 16
        %v6067 = vrot.slane %v6065, 1
        %v6068 = vsel %vm1244, %v6063, %v6067
        %v6070 = vshrl.u32 %v6007, 16
        %v6072 = vshll.u32 %v6007, 16
        %v6074 = vrot.slane %v6072, 1
        %v6075 = vor.u32 %v6070, %v6074
        %v6077 = vshll.u32 %v6008, 16
        %v6079 = vrot.slane %v6077, 1
        %v6080 = vsel %vm1244, %v6075, %v6079
        %v6082 = vshrl.u32 %v6009, 16
        %v6084 = vshll.u32 %v6009, 16
        %v6086 = vrot.slane %v6084, 1
        %v6087 = vor.u32 %v6082, %v6086
        %v6089 = vshll.u32 %v6010, 16
        %v6091 = vrot.slane %v6089, 1
        %v6092 = vsel %vm1244, %v6087, %v6091
        %v6094 = vshrl.u32 %v6011, 16
        %v6096 = vshll.u32 %v6011, 16
        %v6098 = vrot.slane %v6096, 1
        %v6099 = vor.u32 %v6094, %v6098
        %v6101 = vshll.u32 %v6012, 16
        %v6103 = vrot.slane %v6101, 1
        %v6104 = vsel %vm1244, %v6099, %v6103
        %v6106 = vshrl.u32 %v6013, 16
        %v6108 = vshll.u32 %v6013, 16
        %v6110 = vrot.slane %v6108, 1
        %v6111 = vor.u32 %v6106, %v6110
        %v6113 = vshll.u32 %v6014, 16
        %v6115 = vrot.slane %v6113, 1
        %v6116 = vsel %vm1244, %v6111, %v6115
        %v6118 = vshrl.u32 %v6015, 16
        %v6120 = vshll.u32 %v6015, 16
        %v6122 = vrot.slane %v6120, 1
        %v6123 = vor.u32 %v6118, %v6122
        %v6125 = vshll.u32 %v6016, 16
        %v6127 = vrot.slane %v6125, 1
        %v6128 = vsel %vm1244, %v6123, %v6127
        %v6130 = vshrl.u32 %v6017, 16
        %v6132 = vshll.u32 %v6017, 16
        %v6134 = vrot.slane %v6132, 1
        %v6135 = vor.u32 %v6130, %v6134
        %v6137 = vshll.u32 %v6018, 16
        %v6139 = vrot.slane %v6137, 1
        %v6140 = vsel %vm1244, %v6135, %v6139
        %v6142 = vshrl.u32 %v6019, 16
        %v6144 = vshll.u32 %v6019, 16
        %v6146 = vrot.slane %v6144, 1
        %v6147 = vor.u32 %v6142, %v6146
        %v6149 = vshll.u32 %v6020, 16
        %v6151 = vrot.slane %v6149, 1
        %v6152 = vsel %vm1244, %v6147, %v6151
        %v6154 = vshrl.u32 %v6021, 16
        %v6156 = vshll.u32 %v6021, 16
        %v6158 = vrot.slane %v6156, 1
        %v6159 = vor.u32 %v6154, %v6158
        %v6161 = vshll.u32 %v6022, 16
        %v6163 = vrot.slane %v6161, 1
        %v6164 = vsel %vm1244, %v6159, %v6163
        %v6166 = vshrl.u32 %v6023, 16
        %v6168 = vshll.u32 %v6023, 16
        %v6170 = vrot.slane %v6168, 1
        %v6171 = vor.u32 %v6166, %v6170
        %v6173 = vshll.u32 %v6024, 16
        %v6175 = vrot.slane %v6173, 1
        %v6176 = vsel %vm1244, %v6171, %v6175
        %v6178 = vshrl.u32 %v6025, 16
        %v6180 = vshll.u32 %v6025, 16
        %v6182 = vrot.slane %v6180, 1
        %v6183 = vor.u32 %v6178, %v6182
        %v6185 = vshll.u32 %v6026, 16
        %v6187 = vrot.slane %v6185, 1
        %v6188 = vsel %vm1244, %v6183, %v6187
        %v6190 = vshrl.u32 %v6027, 16
        %v6192 = vshll.u32 %v6027, 16
        %v6194 = vrot.slane %v6192, 1
        %v6195 = vor.u32 %v6190, %v6194
        %v6197 = vshll.u32 %v6028, 16
        %v6199 = vrot.slane %v6197, 1
        %v6200 = vsel %vm1244, %v6195, %v6199
        %v6202 = vshrl.u32 %v6029, 16
        %v6204 = vshll.u32 %v6029, 16
        %v6206 = vrot.slane %v6204, 1
        %v6207 = vor.u32 %v6202, %v6206
        %v6209 = vshll.u32 %v6030, 16
        %v6211 = vrot.slane %v6209, 1
        %v6212 = vsel %vm1244, %v6207, %v6211
        %v6214 = vshrl.u32 %v6031, 16
        %v6216 = vshll.u32 %v6031, 16
        %v6218 = vrot.slane %v6216, 1
        %v6219 = vor.u32 %v6214, %v6218
        %v6221 = vshll.u32 %v6032, 16
        %v6223 = vrot.slane %v6221, 1
        %v6224 = vsel %vm1244, %v6219, %v6223
        %6241 = vst.msk [vmem:[#allocation3 + $0x8] sm:$0xff] %vm1051, %v6044
        %6242 = vst.msk [vmem:[#allocation3 + $0x20] sm:$0xff] %vm1051, %v6056
        %6243 = vst.msk [vmem:[#allocation3 + $0x38] sm:$0xff] %vm1051, %v6068
        %6244 = vst.msk [vmem:[#allocation3 + $0x50] sm:$0xff] %vm1051, %v6080
        %6245 = vst.msk [vmem:[#allocation3 + $0x68] sm:$0xff] %vm1051, %v6092
        %6246 = vst.msk [vmem:[#allocation3 + $0x80] sm:$0xff] %vm1051, %v6104
        %6247 = vst.msk [vmem:[#allocation3 + $0x98] sm:$0xff] %vm1051, %v6116
        %6248 = vst.msk [vmem:[#allocation3 + $0xb0] sm:$0xff] %vm1051, %v6128
        %6249 = vst.msk [vmem:[#allocation3 + $0xc8] sm:$0xff] %vm1051, %v6140
        %6250 = vst.msk [vmem:[#allocation3 + $0xe0] sm:$0xff] %vm1051, %v6152
        %6251 = vst.msk [vmem:[#allocation3 + $0xf8] sm:$0xff] %vm1051, %v6164
        %6252 = vst.msk [vmem:[#allocation3 + $0x110] sm:$0xff] %vm1051, %v6176
        %6253 = vst.msk [vmem:[#allocation3 + $0x128] sm:$0xff] %vm1051, %v6188
        %6254 = vst.msk [vmem:[#allocation3 + $0x140] sm:$0xff] %vm1051, %v6200
        %6255 = vst.msk [vmem:[#allocation3 + $0x158] sm:$0xff] %vm1051, %v6212
        %6256 = vst.msk [vmem:[#allocation3 + $0x170] sm:$0xff] %vm1051, %v6224
        %v6257 = vld [vmem:[%s808] sm:$0xe]
        %v6258 = vld [vmem:[%s808 + $0x4] sm:$0xf]
        %v6259 = vld [vmem:[%s808 + $0x8] sm:$0x1]
        %v6260 = vld [vmem:[%s808 + $0xc] sm:$0xe]
        %v6261 = vld [vmem:[%s808 + $0x10] sm:$0xf]
        %v6262 = vld [vmem:[%s808 + $0x14] sm:$0x1]
        %v6263 = vld [vmem:[%s808 + $0x18] sm:$0xe]
        %v6264 = vld [vmem:[%s808 + $0x1c] sm:$0xf]
        %v6265 = vld [vmem:[%s808 + $0x20] sm:$0x1]
        %v6266 = vld [vmem:[%s808 + $0x24] sm:$0xe]
        %v6267 = vld [vmem:[%s808 + $0x28] sm:$0xf]
        %v6268 = vld [vmem:[%s808 + $0x2c] sm:$0x1]
        %v6269 = vld [vmem:[%s808 + $0x30] sm:$0xe]
        %v6270 = vld [vmem:[%s808 + $0x34] sm:$0xf]
        %v6271 = vld [vmem:[%s808 + $0x38] sm:$0x1]
        %v6272 = vld [vmem:[%s808 + $0x3c] sm:$0xe]
        %v6273 = vld [vmem:[%s808 + $0x40] sm:$0xf]
        %v6274 = vld [vmem:[%s808 + $0x44] sm:$0x1]
        %v6275 = vld [vmem:[%s808 + $0x48] sm:$0xe]
        %v6276 = vld [vmem:[%s808 + $0x4c] sm:$0xf]
        %v6277 = vld [vmem:[%s808 + $0x50] sm:$0x1]
        %v6278 = vld [vmem:[%s808 + $0x54] sm:$0xe]
        %v6279 = vld [vmem:[%s808 + $0x58] sm:$0xf]
        %v6280 = vld [vmem:[%s808 + $0x5c] sm:$0x1]
        %v6281 = vld [vmem:[%s808 + $0x60] sm:$0xe]
        %v6282 = vld [vmem:[%s808 + $0x64] sm:$0xf]
        %v6283 = vld [vmem:[%s808 + $0x68] sm:$0x1]
        %v6284 = vld [vmem:[%s808 + $0x6c] sm:$0xe]
        %v6285 = vld [vmem:[%s808 + $0x70] sm:$0xf]
        %v6286 = vld [vmem:[%s808 + $0x74] sm:$0x1]
        %v6287 = vld [vmem:[%s808 + $0x78] sm:$0xe]
        %v6288 = vld [vmem:[%s808 + $0x7c] sm:$0xf]
        %v6289 = vld [vmem:[%s808 + $0x80] sm:$0x1]
        %v6290 = vld [vmem:[%s808 + $0x84] sm:$0xe]
        %v6291 = vld [vmem:[%s808 + $0x88] sm:$0xf]
        %v6292 = vld [vmem:[%s808 + $0x8c] sm:$0x1]
        %v6293 = vld [vmem:[%s808 + $0x90] sm:$0xe]
        %v6294 = vld [vmem:[%s808 + $0x94] sm:$0xf]
        %v6295 = vld [vmem:[%s808 + $0x98] sm:$0x1]
        %v6296 = vld [vmem:[%s808 + $0x9c] sm:$0xe]
        %v6297 = vld [vmem:[%s808 + $0xa0] sm:$0xf]
        %v6298 = vld [vmem:[%s808 + $0xa4] sm:$0x1]
        %v6299 = vld [vmem:[%s808 + $0xa8] sm:$0xe]
        %v6300 = vld [vmem:[%s808 + $0xac] sm:$0xf]
        %v6301 = vld [vmem:[%s808 + $0xb0] sm:$0x1]
        %v6302 = vld [vmem:[%s808 + $0xb4] sm:$0xe]
        %v6303 = vld [vmem:[%s808 + $0xb8] sm:$0xf]
        %v6304 = vld [vmem:[%s808 + $0xbc] sm:$0x1]
        %v6353 = vunpack.c.l.b16 %v6257
        %v6354 = vunpack.c.l.b16 %v6258
        %v6355 = vunpack.c.l.b16 %v6259
        %v6356 = vunpack.c.l.b16 %v6260
        %v6357 = vunpack.c.l.b16 %v6261
        %v6358 = vunpack.c.l.b16 %v6262
        %v6359 = vunpack.c.l.b16 %v6263
        %v6360 = vunpack.c.l.b16 %v6264
        %v6361 = vunpack.c.l.b16 %v6265
        %v6362 = vunpack.c.l.b16 %v6266
        %v6363 = vunpack.c.l.b16 %v6267
        %v6364 = vunpack.c.l.b16 %v6268
        %v6365 = vunpack.c.l.b16 %v6269
        %v6366 = vunpack.c.l.b16 %v6270
        %v6367 = vunpack.c.l.b16 %v6271
        %v6368 = vunpack.c.l.b16 %v6272
        %v6369 = vunpack.c.l.b16 %v6273
        %v6370 = vunpack.c.l.b16 %v6274
        %v6371 = vunpack.c.l.b16 %v6275
        %v6372 = vunpack.c.l.b16 %v6276
        %v6373 = vunpack.c.l.b16 %v6277
        %v6374 = vunpack.c.l.b16 %v6278
        %v6375 = vunpack.c.l.b16 %v6279
        %v6376 = vunpack.c.l.b16 %v6280
        %v6377 = vunpack.c.l.b16 %v6281
        %v6378 = vunpack.c.l.b16 %v6282
        %v6379 = vunpack.c.l.b16 %v6283
        %v6380 = vunpack.c.l.b16 %v6284
        %v6381 = vunpack.c.l.b16 %v6285
        %v6382 = vunpack.c.l.b16 %v6286
        %v6383 = vunpack.c.l.b16 %v6287
        %v6384 = vunpack.c.l.b16 %v6288
        %v6385 = vunpack.c.l.b16 %v6289
        %v6386 = vunpack.c.l.b16 %v6290
        %v6387 = vunpack.c.l.b16 %v6291
        %v6388 = vunpack.c.l.b16 %v6292
        %v6389 = vunpack.c.l.b16 %v6293
        %v6390 = vunpack.c.l.b16 %v6294
        %v6391 = vunpack.c.l.b16 %v6295
        %v6392 = vunpack.c.l.b16 %v6296
        %v6393 = vunpack.c.l.b16 %v6297
        %v6394 = vunpack.c.l.b16 %v6298
        %v6395 = vunpack.c.l.b16 %v6299
        %v6396 = vunpack.c.l.b16 %v6300
        %v6397 = vunpack.c.l.b16 %v6301
        %v6398 = vunpack.c.l.b16 %v6302
        %v6399 = vunpack.c.l.b16 %v6303
        %v6400 = vunpack.c.l.b16 %v6304
        %v6401 = vpack.c.b16 %v6354, %v6353
        %v6402 = vpack.c.b16 %v6355, %v6355
        %v6403 = vpack.c.b16 %v6357, %v6356
        %v6404 = vpack.c.b16 %v6358, %v6358
        %v6405 = vpack.c.b16 %v6360, %v6359
        %v6406 = vpack.c.b16 %v6361, %v6361
        %v6407 = vpack.c.b16 %v6363, %v6362
        %v6408 = vpack.c.b16 %v6364, %v6364
        %v6409 = vpack.c.b16 %v6366, %v6365
        %v6410 = vpack.c.b16 %v6367, %v6367
        %v6411 = vpack.c.b16 %v6369, %v6368
        %v6412 = vpack.c.b16 %v6370, %v6370
        %v6413 = vpack.c.b16 %v6372, %v6371
        %v6414 = vpack.c.b16 %v6373, %v6373
        %v6415 = vpack.c.b16 %v6375, %v6374
        %v6416 = vpack.c.b16 %v6376, %v6376
        %v6417 = vpack.c.b16 %v6378, %v6377
        %v6418 = vpack.c.b16 %v6379, %v6379
        %v6419 = vpack.c.b16 %v6381, %v6380
        %v6420 = vpack.c.b16 %v6382, %v6382
        %v6421 = vpack.c.b16 %v6384, %v6383
        %v6422 = vpack.c.b16 %v6385, %v6385
        %v6423 = vpack.c.b16 %v6387, %v6386
        %v6424 = vpack.c.b16 %v6388, %v6388
        %v6425 = vpack.c.b16 %v6390, %v6389
        %v6426 = vpack.c.b16 %v6391, %v6391
        %v6427 = vpack.c.b16 %v6393, %v6392
        %v6428 = vpack.c.b16 %v6394, %v6394
        %v6429 = vpack.c.b16 %v6396, %v6395
        %v6430 = vpack.c.b16 %v6397, %v6397
        %v6431 = vpack.c.b16 %v6399, %v6398
        %v6432 = vpack.c.b16 %v6400, %v6400
        %v6433 = vrot.slane %v6401, 1
        %v6434 = vrot.slane %v6402, 1
        %v6435 = vsel %vm1678, %v6433, %v6434
        %v6436 = vrot.slane %v6403, 1
        %v6437 = vrot.slane %v6404, 1
        %v6438 = vsel %vm1678, %v6436, %v6437
        %v6439 = vrot.slane %v6405, 1
        %v6440 = vrot.slane %v6406, 1
        %v6441 = vsel %vm1678, %v6439, %v6440
        %v6442 = vrot.slane %v6407, 1
        %v6443 = vrot.slane %v6408, 1
        %v6444 = vsel %vm1678, %v6442, %v6443
        %v6445 = vrot.slane %v6409, 1
        %v6446 = vrot.slane %v6410, 1
        %v6447 = vsel %vm1678, %v6445, %v6446
        %v6448 = vrot.slane %v6411, 1
        %v6449 = vrot.slane %v6412, 1
        %v6450 = vsel %vm1678, %v6448, %v6449
        %v6451 = vrot.slane %v6413, 1
        %v6452 = vrot.slane %v6414, 1
        %v6453 = vsel %vm1678, %v6451, %v6452
        %v6454 = vrot.slane %v6415, 1
        %v6455 = vrot.slane %v6416, 1
        %v6456 = vsel %vm1678, %v6454, %v6455
        %v6457 = vrot.slane %v6417, 1
        %v6458 = vrot.slane %v6418, 1
        %v6459 = vsel %vm1678, %v6457, %v6458
        %v6460 = vrot.slane %v6419, 1
        %v6461 = vrot.slane %v6420, 1
        %v6462 = vsel %vm1678, %v6460, %v6461
        %v6463 = vrot.slane %v6421, 1
        %v6464 = vrot.slane %v6422, 1
        %v6465 = vsel %vm1678, %v6463, %v6464
        %v6466 = vrot.slane %v6423, 1
        %v6467 = vrot.slane %v6424, 1
        %v6468 = vsel %vm1678, %v6466, %v6467
        %v6469 = vrot.slane %v6425, 1
        %v6470 = vrot.slane %v6426, 1
        %v6471 = vsel %vm1678, %v6469, %v6470
        %v6472 = vrot.slane %v6427, 1
        %v6473 = vrot.slane %v6428, 1
        %v6474 = vsel %vm1678, %v6472, %v6473
        %v6475 = vrot.slane %v6429, 1
        %v6476 = vrot.slane %v6430, 1
        %v6477 = vsel %vm1678, %v6475, %v6476
        %v6478 = vrot.slane %v6431, 1
        %v6479 = vrot.slane %v6432, 1
        %v6480 = vsel %vm1678, %v6478, %v6479
        %6481 = vrot.lane.b32.xlu0 %v6435, 32
        %v6482 = vpop.permute.xlu0 %6481
        %6483 = vrot.lane.b32.xlu0 %v6438, 32
        %v6484 = vpop.permute.xlu0 %6483
        %6485 = vrot.lane.b32.xlu0 %v6441, 32
        %v6486 = vpop.permute.xlu0 %6485
        %6487 = vrot.lane.b32.xlu0 %v6444, 32
        %v6488 = vpop.permute.xlu0 %6487
        %6489 = vrot.lane.b32.xlu0 %v6447, 32
        %v6490 = vpop.permute.xlu0 %6489
        %6491 = vrot.lane.b32.xlu0 %v6450, 32
        %v6492 = vpop.permute.xlu0 %6491
        %6493 = vrot.lane.b32.xlu0 %v6453, 32
        %v6494 = vpop.permute.xlu0 %6493
        %6495 = vrot.lane.b32.xlu0 %v6456, 32
        %v6496 = vpop.permute.xlu0 %6495
        %6497 = vrot.lane.b32.xlu0 %v6459, 32
        %v6498 = vpop.permute.xlu0 %6497
        %6499 = vrot.lane.b32.xlu0 %v6462, 32
        %v6500 = vpop.permute.xlu0 %6499
        %6501 = vrot.lane.b32.xlu0 %v6465, 32
        %v6502 = vpop.permute.xlu0 %6501
        %6503 = vrot.lane.b32.xlu0 %v6468, 32
        %v6504 = vpop.permute.xlu0 %6503
        %6505 = vrot.lane.b32.xlu0 %v6471, 32
        %v6506 = vpop.permute.xlu0 %6505
        %6507 = vrot.lane.b32.xlu0 %v6474, 32
        %v6508 = vpop.permute.xlu0 %6507
        %6509 = vrot.lane.b32.xlu0 %v6477, 32
        %v6510 = vpop.permute.xlu0 %6509
        %6511 = vrot.lane.b32.xlu0 %v6480, 32
        %v6512 = vpop.permute.xlu0 %6511
        %6529 = vst.msk [vmem:[#allocation3 + $0x8] sm:$0xff] %vm1485, %v6482
        %6530 = vst.msk [vmem:[#allocation3 + $0x20] sm:$0xff] %vm1485, %v6484
        %6531 = vst.msk [vmem:[#allocation3 + $0x38] sm:$0xff] %vm1485, %v6486
        %6532 = vst.msk [vmem:[#allocation3 + $0x50] sm:$0xff] %vm1485, %v6488
        %6533 = vst.msk [vmem:[#allocation3 + $0x68] sm:$0xff] %vm1485, %v6490
        %6534 = vst.msk [vmem:[#allocation3 + $0x80] sm:$0xff] %vm1485, %v6492
        %6535 = vst.msk [vmem:[#allocation3 + $0x98] sm:$0xff] %vm1485, %v6494
        %6536 = vst.msk [vmem:[#allocation3 + $0xb0] sm:$0xff] %vm1485, %v6496
        %6537 = vst.msk [vmem:[#allocation3 + $0xc8] sm:$0xff] %vm1485, %v6498
        %6538 = vst.msk [vmem:[#allocation3 + $0xe0] sm:$0xff] %vm1485, %v6500
        %6539 = vst.msk [vmem:[#allocation3 + $0xf8] sm:$0xff] %vm1485, %v6502
        %6540 = vst.msk [vmem:[#allocation3 + $0x110] sm:$0xff] %vm1485, %v6504
        %6541 = vst.msk [vmem:[#allocation3 + $0x128] sm:$0xff] %vm1485, %v6506
        %6542 = vst.msk [vmem:[#allocation3 + $0x140] sm:$0xff] %vm1485, %v6508
        %6543 = vst.msk [vmem:[#allocation3 + $0x158] sm:$0xff] %vm1485, %v6510
        %6544 = vst.msk [vmem:[#allocation3 + $0x170] sm:$0xff] %vm1485, %v6512
        %v6545 = vld [vmem:[%s2657] sm:$0xf]
        %v6546 = vld [vmem:[%s2657 + $0x4] sm:$0xf]
        %v6547 = vld [vmem:[%s2657 + $0xc] sm:$0xf]
        %v6548 = vld [vmem:[%s2657 + $0x10] sm:$0xf]
        %v6549 = vld [vmem:[%s2657 + $0x18] sm:$0xf]
        %v6550 = vld [vmem:[%s2657 + $0x1c] sm:$0xf]
        %v6551 = vld [vmem:[%s2657 + $0x24] sm:$0xf]
        %v6552 = vld [vmem:[%s2657 + $0x28] sm:$0xf]
        %v6553 = vld [vmem:[%s2657 + $0x30] sm:$0xf]
        %v6554 = vld [vmem:[%s2657 + $0x34] sm:$0xf]
        %v6555 = vld [vmem:[%s2657 + $0x3c] sm:$0xf]
        %v6556 = vld [vmem:[%s2657 + $0x40] sm:$0xf]
        %v6557 = vld [vmem:[%s2657 + $0x48] sm:$0xf]
        %v6558 = vld [vmem:[%s2657 + $0x4c] sm:$0xf]
        %v6559 = vld [vmem:[%s2657 + $0x54] sm:$0xf]
        %v6560 = vld [vmem:[%s2657 + $0x58] sm:$0xf]
        %v6561 = vld [vmem:[%s2657 + $0x60] sm:$0xf]
        %v6562 = vld [vmem:[%s2657 + $0x64] sm:$0xf]
        %v6563 = vld [vmem:[%s2657 + $0x6c] sm:$0xf]
        %v6564 = vld [vmem:[%s2657 + $0x70] sm:$0xf]
        %v6565 = vld [vmem:[%s2657 + $0x78] sm:$0xf]
        %v6566 = vld [vmem:[%s2657 + $0x7c] sm:$0xf]
        %v6567 = vld [vmem:[%s2657 + $0x84] sm:$0xf]
        %v6568 = vld [vmem:[%s2657 + $0x88] sm:$0xf]
        %v6569 = vld [vmem:[%s2657 + $0x90] sm:$0xf]
        %v6570 = vld [vmem:[%s2657 + $0x94] sm:$0xf]
        %v6571 = vld [vmem:[%s2657 + $0x9c] sm:$0xf]
        %v6572 = vld [vmem:[%s2657 + $0xa0] sm:$0xf]
        %v6573 = vld [vmem:[%s2657 + $0xa8] sm:$0xf]
        %v6574 = vld [vmem:[%s2657 + $0xac] sm:$0xf]
        %v6575 = vld [vmem:[%s2657 + $0xb4] sm:$0xf]
        %v6576 = vld [vmem:[%s2657 + $0xb8] sm:$0xf]
        %v6609 = vunpack.c.l.b16 %v6545
        %v6610 = vunpack.c.l.b16 %v6546
        %v6611 = vunpack.c.l.b16 %v6547
        %v6612 = vunpack.c.l.b16 %v6548
        %v6613 = vunpack.c.l.b16 %v6549
        %v6614 = vunpack.c.l.b16 %v6550
        %v6615 = vunpack.c.l.b16 %v6551
        %v6616 = vunpack.c.l.b16 %v6552
        %v6617 = vunpack.c.l.b16 %v6553
        %v6618 = vunpack.c.l.b16 %v6554
        %v6619 = vunpack.c.l.b16 %v6555
        %v6620 = vunpack.c.l.b16 %v6556
        %v6621 = vunpack.c.l.b16 %v6557
        %v6622 = vunpack.c.l.b16 %v6558
        %v6623 = vunpack.c.l.b16 %v6559
        %v6624 = vunpack.c.l.b16 %v6560
        %v6625 = vunpack.c.l.b16 %v6561
        %v6626 = vunpack.c.l.b16 %v6562
        %v6627 = vunpack.c.l.b16 %v6563
        %v6628 = vunpack.c.l.b16 %v6564
        %v6629 = vunpack.c.l.b16 %v6565
        %v6630 = vunpack.c.l.b16 %v6566
        %v6631 = vunpack.c.l.b16 %v6567
        %v6632 = vunpack.c.l.b16 %v6568
        %v6633 = vunpack.c.l.b16 %v6569
        %v6634 = vunpack.c.l.b16 %v6570
        %v6635 = vunpack.c.l.b16 %v6571
        %v6636 = vunpack.c.l.b16 %v6572
        %v6637 = vunpack.c.l.b16 %v6573
        %v6638 = vunpack.c.l.b16 %v6574
        %v6639 = vunpack.c.l.b16 %v6575
        %v6640 = vunpack.c.l.b16 %v6576
        %v6641 = vpack.c.b16 %v6610, %v6609
        %v6642 = vpack.c.b16 %v6612, %v6611
        %v6643 = vpack.c.b16 %v6614, %v6613
        %v6644 = vpack.c.b16 %v6616, %v6615
        %v6645 = vpack.c.b16 %v6618, %v6617
        %v6646 = vpack.c.b16 %v6620, %v6619
        %v6647 = vpack.c.b16 %v6622, %v6621
        %v6648 = vpack.c.b16 %v6624, %v6623
        %v6649 = vpack.c.b16 %v6626, %v6625
        %v6650 = vpack.c.b16 %v6628, %v6627
        %v6651 = vpack.c.b16 %v6630, %v6629
        %v6652 = vpack.c.b16 %v6632, %v6631
        %v6653 = vpack.c.b16 %v6634, %v6633
        %v6654 = vpack.c.b16 %v6636, %v6635
        %v6655 = vpack.c.b16 %v6638, %v6637
        %v6656 = vpack.c.b16 %v6640, %v6639
        %6657 = vrot.lane.b32.xlu0 %v6641, 64
        %v6658 = vpop.permute.xlu0 %6657
        %6659 = vrot.lane.b32.xlu0 %v6642, 64
        %v6660 = vpop.permute.xlu0 %6659
        %6661 = vrot.lane.b32.xlu0 %v6643, 64
        %v6662 = vpop.permute.xlu0 %6661
        %6663 = vrot.lane.b32.xlu0 %v6644, 64
        %v6664 = vpop.permute.xlu0 %6663
        %6665 = vrot.lane.b32.xlu0 %v6645, 64
        %v6666 = vpop.permute.xlu0 %6665
        %6667 = vrot.lane.b32.xlu0 %v6646, 64
        %v6668 = vpop.permute.xlu0 %6667
        %6669 = vrot.lane.b32.xlu0 %v6647, 64
        %v6670 = vpop.permute.xlu0 %6669
        %6671 = vrot.lane.b32.xlu0 %v6648, 64
        %v6672 = vpop.permute.xlu0 %6671
        %6673 = vrot.lane.b32.xlu0 %v6649, 64
        %v6674 = vpop.permute.xlu0 %6673
        %6675 = vrot.lane.b32.xlu0 %v6650, 64
        %v6676 = vpop.permute.xlu0 %6675
        %6677 = vrot.lane.b32.xlu0 %v6651, 64
        %v6678 = vpop.permute.xlu0 %6677
        %6679 = vrot.lane.b32.xlu0 %v6652, 64
        %v6680 = vpop.permute.xlu0 %6679
        %6681 = vrot.lane.b32.xlu0 %v6653, 64
        %v6682 = vpop.permute.xlu0 %6681
        %6683 = vrot.lane.b32.xlu0 %v6654, 64
        %v6684 = vpop.permute.xlu0 %6683
        %6685 = vrot.lane.b32.xlu0 %v6655, 64
        %v6686 = vpop.permute.xlu0 %6685
        %6687 = vrot.lane.b32.xlu0 %v6656, 64
        %v6688 = vpop.permute.xlu0 %6687
        %6705 = vst.msk [vmem:[#allocation3 + $0x8] sm:$0xff] %vm1775, %v6658
        %6706 = vst.msk [vmem:[#allocation3 + $0x20] sm:$0xff] %vm1775, %v6660
        %6707 = vst.msk [vmem:[#allocation3 + $0x38] sm:$0xff] %vm1775, %v6662
        %6708 = vst.msk [vmem:[#allocation3 + $0x50] sm:$0xff] %vm1775, %v6664
        %6709 = vst.msk [vmem:[#allocation3 + $0x68] sm:$0xff] %vm1775, %v6666
        %6710 = vst.msk [vmem:[#allocation3 + $0x80] sm:$0xff] %vm1775, %v6668
        %6711 = vst.msk [vmem:[#allocation3 + $0x98] sm:$0xff] %vm1775, %v6670
        %6712 = vst.msk [vmem:[#allocation3 + $0xb0] sm:$0xff] %vm1775, %v6672
        %6713 = vst.msk [vmem:[#allocation3 + $0xc8] sm:$0xff] %vm1775, %v6674
        %6714 = vst.msk [vmem:[#allocation3 + $0xe0] sm:$0xff] %vm1775, %v6676
        %6715 = vst.msk [vmem:[#allocation3 + $0xf8] sm:$0xff] %vm1775, %v6678
        %6716 = vst.msk [vmem:[#allocation3 + $0x110] sm:$0xff] %vm1775, %v6680
        %6717 = vst.msk [vmem:[#allocation3 + $0x128] sm:$0xff] %vm1775, %v6682
        %6718 = vst.msk [vmem:[#allocation3 + $0x140] sm:$0xff] %vm1775, %v6684
        %6719 = vst.msk [vmem:[#allocation3 + $0x158] sm:$0xff] %vm1775, %v6686
        %6720 = vst.msk [vmem:[#allocation3 + $0x170] sm:$0xff] %vm1775, %v6688
        %v6721 = vld [vmem:[%s2657] sm:$0xf]
        %v6722 = vld [vmem:[%s2657 + $0x4] sm:$0xf]
        %v6723 = vld [vmem:[%s2657 + $0x8] sm:$0x1]
        %v6724 = vld [vmem:[%s2657 + $0xc] sm:$0xf]
        %v6725 = vld [vmem:[%s2657 + $0x10] sm:$0xf]
        %v6726 = vld [vmem:[%s2657 + $0x14] sm:$0x1]
        %v6727 = vld [vmem:[%s2657 + $0x18] sm:$0xf]
        %v6728 = vld [vmem:[%s2657 + $0x1c] sm:$0xf]
        %v6729 = vld [vmem:[%s2657 + $0x20] sm:$0x1]
        %v6730 = vld [vmem:[%s2657 + $0x24] sm:$0xf]
        %v6731 = vld [vmem:[%s2657 + $0x28] sm:$0xf]
        %v6732 = vld [vmem:[%s2657 + $0x2c] sm:$0x1]
        %v6733 = vld [vmem:[%s2657 + $0x30] sm:$0xf]
        %v6734 = vld [vmem:[%s2657 + $0x34] sm:$0xf]
        %v6735 = vld [vmem:[%s2657 + $0x38] sm:$0x1]
        %v6736 = vld [vmem:[%s2657 + $0x3c] sm:$0xf]
        %v6737 = vld [vmem:[%s2657 + $0x40] sm:$0xf]
        %v6738 = vld [vmem:[%s2657 + $0x44] sm:$0x1]
        %v6739 = vld [vmem:[%s2657 + $0x48] sm:$0xf]
        %v6740 = vld [vmem:[%s2657 + $0x4c] sm:$0xf]
        %v6741 = vld [vmem:[%s2657 + $0x50] sm:$0x1]
        %v6742 = vld [vmem:[%s2657 + $0x54] sm:$0xf]
        %v6743 = vld [vmem:[%s2657 + $0x58] sm:$0xf]
        %v6744 = vld [vmem:[%s2657 + $0x5c] sm:$0x1]
        %v6745 = vld [vmem:[%s2657 + $0x60] sm:$0xf]
        %v6746 = vld [vmem:[%s2657 + $0x64] sm:$0xf]
        %v6747 = vld [vmem:[%s2657 + $0x68] sm:$0x1]
        %v6748 = vld [vmem:[%s2657 + $0x6c] sm:$0xf]
        %v6749 = vld [vmem:[%s2657 + $0x70] sm:$0xf]
        %v6750 = vld [vmem:[%s2657 + $0x74] sm:$0x1]
        %v6751 = vld [vmem:[%s2657 + $0x78] sm:$0xf]
        %v6752 = vld [vmem:[%s2657 + $0x7c] sm:$0xf]
        %v6753 = vld [vmem:[%s2657 + $0x80] sm:$0x1]
        %v6754 = vld [vmem:[%s2657 + $0x84] sm:$0xf]
        %v6755 = vld [vmem:[%s2657 + $0x88] sm:$0xf]
        %v6756 = vld [vmem:[%s2657 + $0x8c] sm:$0x1]
        %v6757 = vld [vmem:[%s2657 + $0x90] sm:$0xf]
        %v6758 = vld [vmem:[%s2657 + $0x94] sm:$0xf]
        %v6759 = vld [vmem:[%s2657 + $0x98] sm:$0x1]
        %v6760 = vld [vmem:[%s2657 + $0x9c] sm:$0xf]
        %v6761 = vld [vmem:[%s2657 + $0xa0] sm:$0xf]
        %v6762 = vld [vmem:[%s2657 + $0xa4] sm:$0x1]
        %v6763 = vld [vmem:[%s2657 + $0xa8] sm:$0xf]
        %v6764 = vld [vmem:[%s2657 + $0xac] sm:$0xf]
        %v6765 = vld [vmem:[%s2657 + $0xb0] sm:$0x1]
        %v6766 = vld [vmem:[%s2657 + $0xb4] sm:$0xf]
        %v6767 = vld [vmem:[%s2657 + $0xb8] sm:$0xf]
        %v6768 = vld [vmem:[%s2657 + $0xbc] sm:$0x1]
        %v6817 = vunpack.c.l.b16 %v6721
        %v6818 = vunpack.c.l.b16 %v6722
        %v6819 = vunpack.c.l.b16 %v6723
        %v6820 = vunpack.c.l.b16 %v6724
        %v6821 = vunpack.c.l.b16 %v6725
        %v6822 = vunpack.c.l.b16 %v6726
        %v6823 = vunpack.c.l.b16 %v6727
        %v6824 = vunpack.c.l.b16 %v6728
        %v6825 = vunpack.c.l.b16 %v6729
        %v6826 = vunpack.c.l.b16 %v6730
        %v6827 = vunpack.c.l.b16 %v6731
        %v6828 = vunpack.c.l.b16 %v6732
        %v6829 = vunpack.c.l.b16 %v6733
        %v6830 = vunpack.c.l.b16 %v6734
        %v6831 = vunpack.c.l.b16 %v6735
        %v6832 = vunpack.c.l.b16 %v6736
        %v6833 = vunpack.c.l.b16 %v6737
        %v6834 = vunpack.c.l.b16 %v6738
        %v6835 = vunpack.c.l.b16 %v6739
        %v6836 = vunpack.c.l.b16 %v6740
        %v6837 = vunpack.c.l.b16 %v6741
        %v6838 = vunpack.c.l.b16 %v6742
        %v6839 = vunpack.c.l.b16 %v6743
        %v6840 = vunpack.c.l.b16 %v6744
        %v6841 = vunpack.c.l.b16 %v6745
        %v6842 = vunpack.c.l.b16 %v6746
        %v6843 = vunpack.c.l.b16 %v6747
        %v6844 = vunpack.c.l.b16 %v6748
        %v6845 = vunpack.c.l.b16 %v6749
        %v6846 = vunpack.c.l.b16 %v6750
        %v6847 = vunpack.c.l.b16 %v6751
        %v6848 = vunpack.c.l.b16 %v6752
        %v6849 = vunpack.c.l.b16 %v6753
        %v6850 = vunpack.c.l.b16 %v6754
        %v6851 = vunpack.c.l.b16 %v6755
        %v6852 = vunpack.c.l.b16 %v6756
        %v6853 = vunpack.c.l.b16 %v6757
        %v6854 = vunpack.c.l.b16 %v6758
        %v6855 = vunpack.c.l.b16 %v6759
        %v6856 = vunpack.c.l.b16 %v6760
        %v6857 = vunpack.c.l.b16 %v6761
        %v6858 = vunpack.c.l.b16 %v6762
        %v6859 = vunpack.c.l.b16 %v6763
        %v6860 = vunpack.c.l.b16 %v6764
        %v6861 = vunpack.c.l.b16 %v6765
        %v6862 = vunpack.c.l.b16 %v6766
        %v6863 = vunpack.c.l.b16 %v6767
        %v6864 = vunpack.c.l.b16 %v6768
        %v6865 = vpack.c.b16 %v6818, %v6817
        %v6866 = vpack.c.b16 %v6819, %v6819
        %v6867 = vpack.c.b16 %v6821, %v6820
        %v6868 = vpack.c.b16 %v6822, %v6822
        %v6869 = vpack.c.b16 %v6824, %v6823
        %v6870 = vpack.c.b16 %v6825, %v6825
        %v6871 = vpack.c.b16 %v6827, %v6826
        %v6872 = vpack.c.b16 %v6828, %v6828
        %v6873 = vpack.c.b16 %v6830, %v6829
        %v6874 = vpack.c.b16 %v6831, %v6831
        %v6875 = vpack.c.b16 %v6833, %v6832
        %v6876 = vpack.c.b16 %v6834, %v6834
        %v6877 = vpack.c.b16 %v6836, %v6835
        %v6878 = vpack.c.b16 %v6837, %v6837
        %v6879 = vpack.c.b16 %v6839, %v6838
        %v6880 = vpack.c.b16 %v6840, %v6840
        %v6881 = vpack.c.b16 %v6842, %v6841
        %v6882 = vpack.c.b16 %v6843, %v6843
        %v6883 = vpack.c.b16 %v6845, %v6844
        %v6884 = vpack.c.b16 %v6846, %v6846
        %v6885 = vpack.c.b16 %v6848, %v6847
        %v6886 = vpack.c.b16 %v6849, %v6849
        %v6887 = vpack.c.b16 %v6851, %v6850
        %v6888 = vpack.c.b16 %v6852, %v6852
        %v6889 = vpack.c.b16 %v6854, %v6853
        %v6890 = vpack.c.b16 %v6855, %v6855
        %v6891 = vpack.c.b16 %v6857, %v6856
        %v6892 = vpack.c.b16 %v6858, %v6858
        %v6893 = vpack.c.b16 %v6860, %v6859
        %v6894 = vpack.c.b16 %v6861, %v6861
        %v6895 = vpack.c.b16 %v6863, %v6862
        %v6896 = vpack.c.b16 %v6864, %v6864
        %v6898 = vshrl.u32 %v6865, 16
        %v6900 = vshll.u32 %v6865, 16
        %v6902 = vrot.slane %v6900, 1
        %v6903 = vor.u32 %v6898, %v6902
        %v6905 = vshll.u32 %v6866, 16
        %v6907 = vrot.slane %v6905, 1
        %v6908 = vsel %vm1244, %v6903, %v6907
        %v6910 = vshrl.u32 %v6867, 16
        %v6912 = vshll.u32 %v6867, 16
        %v6914 = vrot.slane %v6912, 1
        %v6915 = vor.u32 %v6910, %v6914
        %v6917 = vshll.u32 %v6868, 16
        %v6919 = vrot.slane %v6917, 1
        %v6920 = vsel %vm1244, %v6915, %v6919
        %v6922 = vshrl.u32 %v6869, 16
        %v6924 = vshll.u32 %v6869, 16
        %v6926 = vrot.slane %v6924, 1
        %v6927 = vor.u32 %v6922, %v6926
        %v6929 = vshll.u32 %v6870, 16
        %v6931 = vrot.slane %v6929, 1
        %v6932 = vsel %vm1244, %v6927, %v6931
        %v6934 = vshrl.u32 %v6871, 16
        %v6936 = vshll.u32 %v6871, 16
        %v6938 = vrot.slane %v6936, 1
        %v6939 = vor.u32 %v6934, %v6938
        %v6941 = vshll.u32 %v6872, 16
        %v6943 = vrot.slane %v6941, 1
        %v6944 = vsel %vm1244, %v6939, %v6943
        %v6946 = vshrl.u32 %v6873, 16
        %v6948 = vshll.u32 %v6873, 16
        %v6950 = vrot.slane %v6948, 1
        %v6951 = vor.u32 %v6946, %v6950
        %v6953 = vshll.u32 %v6874, 16
        %v6955 = vrot.slane %v6953, 1
        %v6956 = vsel %vm1244, %v6951, %v6955
        %v6958 = vshrl.u32 %v6875, 16
        %v6960 = vshll.u32 %v6875, 16
        %v6962 = vrot.slane %v6960, 1
        %v6963 = vor.u32 %v6958, %v6962
        %v6965 = vshll.u32 %v6876, 16
        %v6967 = vrot.slane %v6965, 1
        %v6968 = vsel %vm1244, %v6963, %v6967
        %v6970 = vshrl.u32 %v6877, 16
        %v6972 = vshll.u32 %v6877, 16
        %v6974 = vrot.slane %v6972, 1
        %v6975 = vor.u32 %v6970, %v6974
        %v6977 = vshll.u32 %v6878, 16
        %v6979 = vrot.slane %v6977, 1
        %v6980 = vsel %vm1244, %v6975, %v6979
        %v6982 = vshrl.u32 %v6879, 16
        %v6984 = vshll.u32 %v6879, 16
        %v6986 = vrot.slane %v6984, 1
        %v6987 = vor.u32 %v6982, %v6986
        %v6989 = vshll.u32 %v6880, 16
        %v6991 = vrot.slane %v6989, 1
        %v6992 = vsel %vm1244, %v6987, %v6991
        %v6994 = vshrl.u32 %v6881, 16
        %v6996 = vshll.u32 %v6881, 16
        %v6998 = vrot.slane %v6996, 1
        %v6999 = vor.u32 %v6994, %v6998
        %v7001 = vshll.u32 %v6882, 16
        %v7003 = vrot.slane %v7001, 1
        %v7004 = vsel %vm1244, %v6999, %v7003
        %v7006 = vshrl.u32 %v6883, 16
        %v7008 = vshll.u32 %v6883, 16
        %v7010 = vrot.slane %v7008, 1
        %v7011 = vor.u32 %v7006, %v7010
        %v7013 = vshll.u32 %v6884, 16
        %v7015 = vrot.slane %v7013, 1
        %v7016 = vsel %vm1244, %v7011, %v7015
        %v7018 = vshrl.u32 %v6885, 16
        %v7020 = vshll.u32 %v6885, 16
        %v7022 = vrot.slane %v7020, 1
        %v7023 = vor.u32 %v7018, %v7022
        %v7025 = vshll.u32 %v6886, 16
        %v7027 = vrot.slane %v7025, 1
        %v7028 = vsel %vm1244, %v7023, %v7027
        %v7030 = vshrl.u32 %v6887, 16
        %v7032 = vshll.u32 %v6887, 16
        %v7034 = vrot.slane %v7032, 1
        %v7035 = vor.u32 %v7030, %v7034
        %v7037 = vshll.u32 %v6888, 16
        %v7039 = vrot.slane %v7037, 1
        %v7040 = vsel %vm1244, %v7035, %v7039
        %v7042 = vshrl.u32 %v6889, 16
        %v7044 = vshll.u32 %v6889, 16
        %v7046 = vrot.slane %v7044, 1
        %v7047 = vor.u32 %v7042, %v7046
        %v7049 = vshll.u32 %v6890, 16
        %v7051 = vrot.slane %v7049, 1
        %v7052 = vsel %vm1244, %v7047, %v7051
        %v7054 = vshrl.u32 %v6891, 16
        %v7056 = vshll.u32 %v6891, 16
        %v7058 = vrot.slane %v7056, 1
        %v7059 = vor.u32 %v7054, %v7058
        %v7061 = vshll.u32 %v6892, 16
        %v7063 = vrot.slane %v7061, 1
        %v7064 = vsel %vm1244, %v7059, %v7063
        %v7066 = vshrl.u32 %v6893, 16
        %v7068 = vshll.u32 %v6893, 16
        %v7070 = vrot.slane %v7068, 1
        %v7071 = vor.u32 %v7066, %v7070
        %v7073 = vshll.u32 %v6894, 16
        %v7075 = vrot.slane %v7073, 1
        %v7076 = vsel %vm1244, %v7071, %v7075
        %v7078 = vshrl.u32 %v6895, 16
        %v7080 = vshll.u32 %v6895, 16
        %v7082 = vrot.slane %v7080, 1
        %v7083 = vor.u32 %v7078, %v7082
        %v7085 = vshll.u32 %v6896, 16
        %v7087 = vrot.slane %v7085, 1
        %v7088 = vsel %vm1244, %v7083, %v7087
        %7089 = vrot.lane.b32.xlu0 %v6908, 96
        %v7090 = vpop.permute.xlu0 %7089
        %7091 = vrot.lane.b32.xlu0 %v6920, 96
        %v7092 = vpop.permute.xlu0 %7091
        %7093 = vrot.lane.b32.xlu0 %v6932, 96
        %v7094 = vpop.permute.xlu0 %7093
        %7095 = vrot.lane.b32.xlu0 %v6944, 96
        %v7096 = vpop.permute.xlu0 %7095
        %7097 = vrot.lane.b32.xlu0 %v6956, 96
        %v7098 = vpop.permute.xlu0 %7097
        %7099 = vrot.lane.b32.xlu0 %v6968, 96
        %v7100 = vpop.permute.xlu0 %7099
        %7101 = vrot.lane.b32.xlu0 %v6980, 96
        %v7102 = vpop.permute.xlu0 %7101
        %7103 = vrot.lane.b32.xlu0 %v6992, 96
        %v7104 = vpop.permute.xlu0 %7103
        %7105 = vrot.lane.b32.xlu0 %v7004, 96
        %v7106 = vpop.permute.xlu0 %7105
        %7107 = vrot.lane.b32.xlu0 %v7016, 96
        %v7108 = vpop.permute.xlu0 %7107
        %7109 = vrot.lane.b32.xlu0 %v7028, 96
        %v7110 = vpop.permute.xlu0 %7109
        %7111 = vrot.lane.b32.xlu0 %v7040, 96
        %v7112 = vpop.permute.xlu0 %7111
        %7113 = vrot.lane.b32.xlu0 %v7052, 96
        %v7114 = vpop.permute.xlu0 %7113
        %7115 = vrot.lane.b32.xlu0 %v7064, 96
        %v7116 = vpop.permute.xlu0 %7115
        %7117 = vrot.lane.b32.xlu0 %v7076, 96
        %v7118 = vpop.permute.xlu0 %7117
        %7119 = vrot.lane.b32.xlu0 %v7088, 96
        %v7120 = vpop.permute.xlu0 %7119
        %7137 = vst.msk [vmem:[#allocation3 + $0x8] sm:$0xff] %vm1952, %v7090
        %7138 = vst.msk [vmem:[#allocation3 + $0x20] sm:$0xff] %vm1952, %v7092
        %7139 = vst.msk [vmem:[#allocation3 + $0x38] sm:$0xff] %vm1952, %v7094
        %7140 = vst.msk [vmem:[#allocation3 + $0x50] sm:$0xff] %vm1952, %v7096
        %7141 = vst.msk [vmem:[#allocation3 + $0x68] sm:$0xff] %vm1952, %v7098
        %7142 = vst.msk [vmem:[#allocation3 + $0x80] sm:$0xff] %vm1952, %v7100
        %7143 = vst.msk [vmem:[#allocation3 + $0x98] sm:$0xff] %vm1952, %v7102
        %7144 = vst.msk [vmem:[#allocation3 + $0xb0] sm:$0xff] %vm1952, %v7104
        %7145 = vst.msk [vmem:[#allocation3 + $0xc8] sm:$0xff] %vm1952, %v7106
        %7146 = vst.msk [vmem:[#allocation3 + $0xe0] sm:$0xff] %vm1952, %v7108
        %7147 = vst.msk [vmem:[#allocation3 + $0xf8] sm:$0xff] %vm1952, %v7110
        %7148 = vst.msk [vmem:[#allocation3 + $0x110] sm:$0xff] %vm1952, %v7112
        %7149 = vst.msk [vmem:[#allocation3 + $0x128] sm:$0xff] %vm1952, %v7114
        %7150 = vst.msk [vmem:[#allocation3 + $0x140] sm:$0xff] %vm1952, %v7116
        %7151 = vst.msk [vmem:[#allocation3 + $0x158] sm:$0xff] %vm1952, %v7118
        %7152 = vst.msk [vmem:[#allocation3 + $0x170] sm:$0xff] %vm1952, %v7120
        %v7153 = vld [vmem:[%s2657] sm:$0xe]
        %v7154 = vld [vmem:[%s2657 + $0x4] sm:$0xf]
        %v7155 = vld [vmem:[%s2657 + $0x8] sm:$0x1]
        %v7156 = vld [vmem:[%s2657 + $0xc] sm:$0xe]
        %v7157 = vld [vmem:[%s2657 + $0x10] sm:$0xf]
        %v7158 = vld [vmem:[%s2657 + $0x14] sm:$0x1]
        %v7159 = vld [vmem:[%s2657 + $0x18] sm:$0xe]
        %v7160 = vld [vmem:[%s2657 + $0x1c] sm:$0xf]
        %v7161 = vld [vmem:[%s2657 + $0x20] sm:$0x1]
        %v7162 = vld [vmem:[%s2657 + $0x24] sm:$0xe]
        %v7163 = vld [vmem:[%s2657 + $0x28] sm:$0xf]
        %v7164 = vld [vmem:[%s2657 + $0x2c] sm:$0x1]
        %v7165 = vld [vmem:[%s2657 + $0x30] sm:$0xe]
        %v7166 = vld [vmem:[%s2657 + $0x34] sm:$0xf]
        %v7167 = vld [vmem:[%s2657 + $0x38] sm:$0x1]
        %v7168 = vld [vmem:[%s2657 + $0x3c] sm:$0xe]
        %v7169 = vld [vmem:[%s2657 + $0x40] sm:$0xf]
        %v7170 = vld [vmem:[%s2657 + $0x44] sm:$0x1]
        %v7171 = vld [vmem:[%s2657 + $0x48] sm:$0xe]
        %v7172 = vld [vmem:[%s2657 + $0x4c] sm:$0xf]
        %v7173 = vld [vmem:[%s2657 + $0x50] sm:$0x1]
        %v7174 = vld [vmem:[%s2657 + $0x54] sm:$0xe]
        %v7175 = vld [vmem:[%s2657 + $0x58] sm:$0xf]
        %v7176 = vld [vmem:[%s2657 + $0x5c] sm:$0x1]
        %v7177 = vld [vmem:[%s2657 + $0x60] sm:$0xe]
        %v7178 = vld [vmem:[%s2657 + $0x64] sm:$0xf]
        %v7179 = vld [vmem:[%s2657 + $0x68] sm:$0x1]
        %v7180 = vld [vmem:[%s2657 + $0x6c] sm:$0xe]
        %v7181 = vld [vmem:[%s2657 + $0x70] sm:$0xf]
        %v7182 = vld [vmem:[%s2657 + $0x74] sm:$0x1]
        %v7183 = vld [vmem:[%s2657 + $0x78] sm:$0xe]
        %v7184 = vld [vmem:[%s2657 + $0x7c] sm:$0xf]
        %v7185 = vld [vmem:[%s2657 + $0x80] sm:$0x1]
        %v7186 = vld [vmem:[%s2657 + $0x84] sm:$0xe]
        %v7187 = vld [vmem:[%s2657 + $0x88] sm:$0xf]
        %v7188 = vld [vmem:[%s2657 + $0x8c] sm:$0x1]
        %v7189 = vld [vmem:[%s2657 + $0x90] sm:$0xe]
        %v7190 = vld [vmem:[%s2657 + $0x94] sm:$0xf]
        %v7191 = vld [vmem:[%s2657 + $0x98] sm:$0x1]
        %v7192 = vld [vmem:[%s2657 + $0x9c] sm:$0xe]
        %v7193 = vld [vmem:[%s2657 + $0xa0] sm:$0xf]
        %v7194 = vld [vmem:[%s2657 + $0xa4] sm:$0x1]
        %v7195 = vld [vmem:[%s2657 + $0xa8] sm:$0xe]
        %v7196 = vld [vmem:[%s2657 + $0xac] sm:$0xf]
        %v7197 = vld [vmem:[%s2657 + $0xb0] sm:$0x1]
        %v7198 = vld [vmem:[%s2657 + $0xb4] sm:$0xe]
        %v7199 = vld [vmem:[%s2657 + $0xb8] sm:$0xf]
        %v7200 = vld [vmem:[%s2657 + $0xbc] sm:$0x1]
        %v7249 = vunpack.c.l.b16 %v7153
        %v7250 = vunpack.c.l.b16 %v7154
        %v7251 = vunpack.c.l.b16 %v7155
        %v7252 = vunpack.c.l.b16 %v7156
        %v7253 = vunpack.c.l.b16 %v7157
        %v7254 = vunpack.c.l.b16 %v7158
        %v7255 = vunpack.c.l.b16 %v7159
        %v7256 = vunpack.c.l.b16 %v7160
        %v7257 = vunpack.c.l.b16 %v7161
        %v7258 = vunpack.c.l.b16 %v7162
        %v7259 = vunpack.c.l.b16 %v7163
        %v7260 = vunpack.c.l.b16 %v7164
        %v7261 = vunpack.c.l.b16 %v7165
        %v7262 = vunpack.c.l.b16 %v7166
        %v7263 = vunpack.c.l.b16 %v7167
        %v7264 = vunpack.c.l.b16 %v7168
        %v7265 = vunpack.c.l.b16 %v7169
        %v7266 = vunpack.c.l.b16 %v7170
        %v7267 = vunpack.c.l.b16 %v7171
        %v7268 = vunpack.c.l.b16 %v7172
        %v7269 = vunpack.c.l.b16 %v7173
        %v7270 = vunpack.c.l.b16 %v7174
        %v7271 = vunpack.c.l.b16 %v7175
        %v7272 = vunpack.c.l.b16 %v7176
        %v7273 = vunpack.c.l.b16 %v7177
        %v7274 = vunpack.c.l.b16 %v7178
        %v7275 = vunpack.c.l.b16 %v7179
        %v7276 = vunpack.c.l.b16 %v7180
        %v7277 = vunpack.c.l.b16 %v7181
        %v7278 = vunpack.c.l.b16 %v7182
        %v7279 = vunpack.c.l.b16 %v7183
        %v7280 = vunpack.c.l.b16 %v7184
        %v7281 = vunpack.c.l.b16 %v7185
        %v7282 = vunpack.c.l.b16 %v7186
        %v7283 = vunpack.c.l.b16 %v7187
        %v7284 = vunpack.c.l.b16 %v7188
        %v7285 = vunpack.c.l.b16 %v7189
        %v7286 = vunpack.c.l.b16 %v7190
        %v7287 = vunpack.c.l.b16 %v7191
        %v7288 = vunpack.c.l.b16 %v7192
        %v7289 = vunpack.c.l.b16 %v7193
        %v7290 = vunpack.c.l.b16 %v7194
        %v7291 = vunpack.c.l.b16 %v7195
        %v7292 = vunpack.c.l.b16 %v7196
        %v7293 = vunpack.c.l.b16 %v7197
        %v7294 = vunpack.c.l.b16 %v7198
        %v7295 = vunpack.c.l.b16 %v7199
        %v7296 = vunpack.c.l.b16 %v7200
        %v7297 = vpack.c.b16 %v7250, %v7249
        %v7298 = vpack.c.b16 %v7251, %v7251
        %v7299 = vpack.c.b16 %v7253, %v7252
        %v7300 = vpack.c.b16 %v7254, %v7254
        %v7301 = vpack.c.b16 %v7256, %v7255
        %v7302 = vpack.c.b16 %v7257, %v7257
        %v7303 = vpack.c.b16 %v7259, %v7258
        %v7304 = vpack.c.b16 %v7260, %v7260
        %v7305 = vpack.c.b16 %v7262, %v7261
        %v7306 = vpack.c.b16 %v7263, %v7263
        %v7307 = vpack.c.b16 %v7265, %v7264
        %v7308 = vpack.c.b16 %v7266, %v7266
        %v7309 = vpack.c.b16 %v7268, %v7267
        %v7310 = vpack.c.b16 %v7269, %v7269
        %v7311 = vpack.c.b16 %v7271, %v7270
        %v7312 = vpack.c.b16 %v7272, %v7272
        %v7313 = vpack.c.b16 %v7274, %v7273
        %v7314 = vpack.c.b16 %v7275, %v7275
        %v7315 = vpack.c.b16 %v7277, %v7276
        %v7316 = vpack.c.b16 %v7278, %v7278
        %v7317 = vpack.c.b16 %v7280, %v7279
        %v7318 = vpack.c.b16 %v7281, %v7281
        %v7319 = vpack.c.b16 %v7283, %v7282
        %v7320 = vpack.c.b16 %v7284, %v7284
        %v7321 = vpack.c.b16 %v7286, %v7285
        %v7322 = vpack.c.b16 %v7287, %v7287
        %v7323 = vpack.c.b16 %v7289, %v7288
        %v7324 = vpack.c.b16 %v7290, %v7290
        %v7325 = vpack.c.b16 %v7292, %v7291
        %v7326 = vpack.c.b16 %v7293, %v7293
        %v7327 = vpack.c.b16 %v7295, %v7294
        %v7328 = vpack.c.b16 %v7296, %v7296
        %v7329 = vrot.slane %v7297, 1
        %v7330 = vrot.slane %v7298, 1
        %v7331 = vsel %vm1678, %v7329, %v7330
        %v7332 = vrot.slane %v7299, 1
        %v7333 = vrot.slane %v7300, 1
        %v7334 = vsel %vm1678, %v7332, %v7333
        %v7335 = vrot.slane %v7301, 1
        %v7336 = vrot.slane %v7302, 1
        %v7337 = vsel %vm1678, %v7335, %v7336
        %v7338 = vrot.slane %v7303, 1
        %v7339 = vrot.slane %v7304, 1
        %v7340 = vsel %vm1678, %v7338, %v7339
        %v7341 = vrot.slane %v7305, 1
        %v7342 = vrot.slane %v7306, 1
        %v7343 = vsel %vm1678, %v7341, %v7342
        %v7344 = vrot.slane %v7307, 1
        %v7345 = vrot.slane %v7308, 1
        %v7346 = vsel %vm1678, %v7344, %v7345
        %v7347 = vrot.slane %v7309, 1
        %v7348 = vrot.slane %v7310, 1
        %v7349 = vsel %vm1678, %v7347, %v7348
        %v7350 = vrot.slane %v7311, 1
        %v7351 = vrot.slane %v7312, 1
        %v7352 = vsel %vm1678, %v7350, %v7351
        %v7353 = vrot.slane %v7313, 1
        %v7354 = vrot.slane %v7314, 1
        %v7355 = vsel %vm1678, %v7353, %v7354
        %v7356 = vrot.slane %v7315, 1
        %v7357 = vrot.slane %v7316, 1
        %v7358 = vsel %vm1678, %v7356, %v7357
        %v7359 = vrot.slane %v7317, 1
        %v7360 = vrot.slane %v7318, 1
        %v7361 = vsel %vm1678, %v7359, %v7360
        %v7362 = vrot.slane %v7319, 1
        %v7363 = vrot.slane %v7320, 1
        %v7364 = vsel %vm1678, %v7362, %v7363
        %v7365 = vrot.slane %v7321, 1
        %v7366 = vrot.slane %v7322, 1
        %v7367 = vsel %vm1678, %v7365, %v7366
        %v7368 = vrot.slane %v7323, 1
        %v7369 = vrot.slane %v7324, 1
        %v7370 = vsel %vm1678, %v7368, %v7369
        %v7371 = vrot.slane %v7325, 1
        %v7372 = vrot.slane %v7326, 1
        %v7373 = vsel %vm1678, %v7371, %v7372
        %v7374 = vrot.slane %v7327, 1
        %v7375 = vrot.slane %v7328, 1
        %v7376 = vsel %vm1678, %v7374, %v7375
        %7393 = vst.msk [vmem:[#allocation3 + $0x10] sm:$0xff] %vm1051, %v7331
        %7394 = vst.msk [vmem:[#allocation3 + $0x28] sm:$0xff] %vm1051, %v7334
        %7395 = vst.msk [vmem:[#allocation3 + $0x40] sm:$0xff] %vm1051, %v7337
        %7396 = vst.msk [vmem:[#allocation3 + $0x58] sm:$0xff] %vm1051, %v7340
        %7397 = vst.msk [vmem:[#allocation3 + $0x70] sm:$0xff] %vm1051, %v7343
        %7398 = vst.msk [vmem:[#allocation3 + $0x88] sm:$0xff] %vm1051, %v7346
        %7399 = vst.msk [vmem:[#allocation3 + $0xa0] sm:$0xff] %vm1051, %v7349
        %7400 = vst.msk [vmem:[#allocation3 + $0xb8] sm:$0xff] %vm1051, %v7352
        %7401 = vst.msk [vmem:[#allocation3 + $0xd0] sm:$0xff] %vm1051, %v7355
        %7402 = vst.msk [vmem:[#allocation3 + $0xe8] sm:$0xff] %vm1051, %v7358
        %7403 = vst.msk [vmem:[#allocation3 + $0x100] sm:$0xff] %vm1051, %v7361
        %7404 = vst.msk [vmem:[#allocation3 + $0x118] sm:$0xff] %vm1051, %v7364
        %7405 = vst.msk [vmem:[#allocation3 + $0x130] sm:$0xff] %vm1051, %v7367
        %7406 = vst.msk [vmem:[#allocation3 + $0x148] sm:$0xff] %vm1051, %v7370
        %7407 = vst.msk [vmem:[#allocation3 + $0x160] sm:$0xff] %vm1051, %v7373
        %7408 = vst.msk [vmem:[#allocation3 + $0x178] sm:$0xff] %vm1051, %v7376
        %v7409 = vld [vmem:[#allocation3] sm:$0xff]
        %v7410 = vld [vmem:[#allocation3 + $0x8] sm:$0xff]
        %v7411 = vld [vmem:[#allocation3 + $0x10] sm:$0xff]
        %v7412 = vld [vmem:[#allocation3 + $0x18] sm:$0xff]
        %v7413 = vld [vmem:[#allocation3 + $0x20] sm:$0xff]
        %v7414 = vld [vmem:[#allocation3 + $0x28] sm:$0xff]
        %v7415 = vld [vmem:[#allocation3 + $0x30] sm:$0xff]
        %v7416 = vld [vmem:[#allocation3 + $0x38] sm:$0xff]
        %v7417 = vld [vmem:[#allocation3 + $0x40] sm:$0xff]
        %v7418 = vld [vmem:[#allocation3 + $0x48] sm:$0xff]
        %v7419 = vld [vmem:[#allocation3 + $0x50] sm:$0xff]
        %v7420 = vld [vmem:[#allocation3 + $0x58] sm:$0xff]
        %v7421 = vld [vmem:[#allocation3 + $0x60] sm:$0xff]
        %v7422 = vld [vmem:[#allocation3 + $0x68] sm:$0xff]
        %v7423 = vld [vmem:[#allocation3 + $0x70] sm:$0xff]
        %v7424 = vld [vmem:[#allocation3 + $0x78] sm:$0xff]
        %v7425 = vld [vmem:[#allocation3 + $0x80] sm:$0xff]
        %v7426 = vld [vmem:[#allocation3 + $0x88] sm:$0xff]
        %v7427 = vld [vmem:[#allocation3 + $0x90] sm:$0xff]
        %v7428 = vld [vmem:[#allocation3 + $0x98] sm:$0xff]
        %v7429 = vld [vmem:[#allocation3 + $0xa0] sm:$0xff]
        %v7430 = vld [vmem:[#allocation3 + $0xa8] sm:$0xff]
        %v7431 = vld [vmem:[#allocation3 + $0xb0] sm:$0xff]
        %v7432 = vld [vmem:[#allocation3 + $0xb8] sm:$0xff]
        %v7433 = vld [vmem:[#allocation3 + $0xc0] sm:$0xff]
        %v7434 = vld [vmem:[#allocation3 + $0xc8] sm:$0xff]
        %v7435 = vld [vmem:[#allocation3 + $0xd0] sm:$0xff]
        %v7436 = vld [vmem:[#allocation3 + $0xd8] sm:$0xff]
        %v7437 = vld [vmem:[#allocation3 + $0xe0] sm:$0xff]
        %v7438 = vld [vmem:[#allocation3 + $0xe8] sm:$0xff]
        %v7439 = vld [vmem:[#allocation3 + $0xf0] sm:$0xff]
        %v7440 = vld [vmem:[#allocation3 + $0xf8] sm:$0xff]
        %v7441 = vld [vmem:[#allocation3 + $0x100] sm:$0xff]
        %v7442 = vld [vmem:[#allocation3 + $0x108] sm:$0xff]
        %v7443 = vld [vmem:[#allocation3 + $0x110] sm:$0xff]
        %v7444 = vld [vmem:[#allocation3 + $0x118] sm:$0xff]
        %v7445 = vld [vmem:[#allocation3 + $0x120] sm:$0xff]
        %v7446 = vld [vmem:[#allocation3 + $0x128] sm:$0xff]
        %v7447 = vld [vmem:[#allocation3 + $0x130] sm:$0xff]
        %v7448 = vld [vmem:[#allocation3 + $0x138] sm:$0xff]
        %v7449 = vld [vmem:[#allocation3 + $0x140] sm:$0xff]
        %v7450 = vld [vmem:[#allocation3 + $0x148] sm:$0xff]
        %v7451 = vld [vmem:[#allocation3 + $0x150] sm:$0xff]
        %v7452 = vld [vmem:[#allocation3 + $0x158] sm:$0xff]
        %v7453 = vld [vmem:[#allocation3 + $0x160] sm:$0xff]
        %v7454 = vld [vmem:[#allocation3 + $0x168] sm:$0xff]
        %v7455 = vld [vmem:[#allocation3 + $0x170] sm:$0xff]
        %v7456 = vld [vmem:[#allocation3 + $0x178] sm:$0xff]
        %v7457 = vld [vmem:[%s3] sm:$0xf]
        %v7458 = vld [vmem:[%s3 + $0x4] sm:$0xf]
        %v7459 = vld [vmem:[%s3 + $0x8] sm:$0xf]
        %v7460 = vld [vmem:[%s3 + $0xc] sm:$0xf]
        %v7461 = vld [vmem:[%s3 + $0x10] sm:$0xf]
        %v7462 = vld [vmem:[%s3 + $0x14] sm:$0xf]
        %v7463 = vld [vmem:[%s3 + $0x18] sm:$0xf]
        %v7464 = vld [vmem:[%s3 + $0x1c] sm:$0xf]
        %v7465 = vld [vmem:[%s3 + $0x20] sm:$0xf]
        %v7466 = vld [vmem:[%s3 + $0x24] sm:$0xf]
        %v7467 = vld [vmem:[%s3 + $0x28] sm:$0xf]
        %v7468 = vld [vmem:[%s3 + $0x2c] sm:$0xf]
        %v7469 = vld [vmem:[%s3 + $0x30] sm:$0xf]
        %v7470 = vld [vmem:[%s3 + $0x34] sm:$0xf]
        %v7471 = vld [vmem:[%s3 + $0x38] sm:$0xf]
        %v7472 = vld [vmem:[%s3 + $0x3c] sm:$0xf]
        %v7473 = vld [vmem:[%s3 + $0x40] sm:$0xf]
        %v7474 = vld [vmem:[%s3 + $0x44] sm:$0xf]
        %v7475 = vld [vmem:[%s3 + $0x48] sm:$0xf]
        %v7476 = vld [vmem:[%s3 + $0x4c] sm:$0xf]
        %v7477 = vld [vmem:[%s3 + $0x50] sm:$0xf]
        %v7478 = vld [vmem:[%s3 + $0x54] sm:$0xf]
        %v7479 = vld [vmem:[%s3 + $0x58] sm:$0xf]
        %v7480 = vld [vmem:[%s3 + $0x5c] sm:$0xf]
        %v7481 = vld [vmem:[%s3 + $0x60] sm:$0xf]
        %v7482 = vld [vmem:[%s3 + $0x64] sm:$0xf]
        %v7483 = vld [vmem:[%s3 + $0x68] sm:$0xf]
        %v7484 = vld [vmem:[%s3 + $0x6c] sm:$0xf]
        %v7485 = vld [vmem:[%s3 + $0x70] sm:$0xf]
        %v7486 = vld [vmem:[%s3 + $0x74] sm:$0xf]
        %v7487 = vld [vmem:[%s3 + $0x78] sm:$0xf]
        %v7488 = vld [vmem:[%s3 + $0x7c] sm:$0xf]
        %v7489 = vld [vmem:[%s3 + $0x80] sm:$0xf]
        %v7490 = vld [vmem:[%s3 + $0x84] sm:$0xf]
        %v7491 = vld [vmem:[%s3 + $0x88] sm:$0xf]
        %v7492 = vld [vmem:[%s3 + $0x8c] sm:$0xf]
        %v7493 = vld [vmem:[%s4] sm:$0x1]
        %v7495 = vlaneseq
        %v7496 = vshrl.u32 %v7495, 7
        %v7497 = vsub.s32 0, %v7496
        %v7498 = vrot.slane %v7493, %v7497
        %v7536 = vunpack.c.l.b16 %v7457
        %v7537 = vunpack.c.l.b16 %v7458
        %v7538 = vunpack.c.l.b16 %v7459
        %v7539 = vunpack.c.l.b16 %v7460
        %v7540 = vunpack.c.l.b16 %v7461
        %v7541 = vunpack.c.l.b16 %v7462
        %v7542 = vunpack.c.l.b16 %v7463
        %v7543 = vunpack.c.l.b16 %v7464
        %v7544 = vunpack.c.l.b16 %v7465
        %v7545 = vunpack.c.l.b16 %v7466
        %v7546 = vunpack.c.l.b16 %v7467
        %v7547 = vunpack.c.l.b16 %v7468
        %v7548 = vunpack.c.l.b16 %v7469
        %v7549 = vunpack.c.l.b16 %v7470
        %v7550 = vunpack.c.l.b16 %v7471
        %v7551 = vunpack.c.l.b16 %v7472
        %v7552 = vunpack.c.l.b16 %v7473
        %v7553 = vunpack.c.l.b16 %v7474
        %v7554 = vunpack.c.l.b16 %v7475
        %v7555 = vunpack.c.l.b16 %v7476
        %v7556 = vunpack.c.l.b16 %v7477
        %v7557 = vunpack.c.l.b16 %v7478
        %v7558 = vunpack.c.l.b16 %v7479
        %v7559 = vunpack.c.l.b16 %v7480
        %v7560 = vunpack.c.l.b16 %v7481
        %v7561 = vunpack.c.l.b16 %v7482
        %v7562 = vunpack.c.l.b16 %v7483
        %v7563 = vunpack.c.l.b16 %v7484
        %v7564 = vunpack.c.l.b16 %v7485
        %v7565 = vunpack.c.l.b16 %v7486
        %v7566 = vunpack.c.l.b16 %v7487
        %v7567 = vunpack.c.l.b16 %v7488
        %v7568 = vunpack.c.l.b16 %v7489
        %v7569 = vunpack.c.l.b16 %v7490
        %v7570 = vunpack.c.l.b16 %v7491
        %v7571 = vunpack.c.l.b16 %v7492
        %v7572 = vpack.c.b16 %v7537, %v7536
        %v7573 = vpack.c.b16 %v7539, %v7538
        %v7574 = vpack.c.b16 %v7541, %v7540
        %v7575 = vpack.c.b16 %v7543, %v7542
        %v7576 = vpack.c.b16 %v7545, %v7544
        %v7577 = vpack.c.b16 %v7547, %v7546
        %v7578 = vpack.c.b16 %v7549, %v7548
        %v7579 = vpack.c.b16 %v7551, %v7550
        %v7580 = vpack.c.b16 %v7553, %v7552
        %v7581 = vpack.c.b16 %v7555, %v7554
        %v7582 = vpack.c.b16 %v7557, %v7556
        %v7583 = vpack.c.b16 %v7559, %v7558
        %v7584 = vpack.c.b16 %v7561, %v7560
        %v7585 = vpack.c.b16 %v7563, %v7562
        %v7586 = vpack.c.b16 %v7565, %v7564
        %v7587 = vpack.c.b16 %v7567, %v7566
        %v7588 = vpack.c.b16 %v7569, %v7568
        %v7589 = vpack.c.b16 %v7571, %v7570
        %v7609 = vsel %vm1051, %v7411, 0
        %v7612 = vsel %vm1051, %v7414, 0
        %v7615 = vsel %vm1051, %v7417, 0
        %v7618 = vsel %vm1051, %v7420, 0
        %v7621 = vsel %vm1051, %v7423, 0
        %v7624 = vsel %vm1051, %v7426, 0
        %v7627 = vsel %vm1051, %v7429, 0
        %v7630 = vsel %vm1051, %v7432, 0
        %v7633 = vsel %vm1051, %v7435, 0
        %v7636 = vsel %vm1051, %v7438, 0
        %v7639 = vsel %vm1051, %v7441, 0
        %v7642 = vsel %vm1051, %v7444, 0
        %v7645 = vsel %vm1051, %v7447, 0
        %v7648 = vsel %vm1051, %v7450, 0
        %v7651 = vsel %vm1051, %v7453, 0
        %v7654 = vsel %vm1051, %v7456, 0
        %7656 = vmatprep.subr.bf16.mxu0 0
        %7657 = vmatpush1.bf16.msra.mxu0 %v7572
        %7658 = vmatprep.subr.bf16.mxu0 0
        %7659 = vmatpush1.bf16.msra.mxu0 %v7573
        %7660 = vmatprep.subr.bf16.mxu0 0
        %7661 = vmatpush1.bf16.msra.mxu0 %v7574
        %7662 = vmatprep.subr.bf16.mxu0 0
        %7663 = vmatpush1.bf16.msra.mxu0 %v7575
        %7664 = vmatprep.subr.bf16.mxu0 0
        %7665 = vmatpush1.bf16.msra.mxu0 %v7576
        %7666 = vmatprep.subr.bf16.mxu0 0
        %7667 = vmatpush1.bf16.msra.mxu0 %v7577
        %7668 = vmatprep.subr.bf16.mxu0 0
        %7669 = vmatpush1.bf16.msra.mxu0 %v7578
        %7670 = vmatprep.subr.bf16.mxu0 0
        %7671 = vmatpush1.bf16.msra.mxu0 %v7579
        %7672 = vmatprep.subr.bf16.mxu0 0
        %7673 = vmatpush1.bf16.msra.mxu0 %v7580
        %7674 = vmatprep.subr.bf16.mxu0 0
        %7675 = vmatpush1.bf16.msra.mxu0 %v7581
        %7676 = vmatprep.subr.bf16.mxu0 0
        %7677 = vmatpush1.bf16.msra.mxu0 %v7582
        %7678 = vmatprep.subr.bf16.mxu0 0
        %7679 = vmatpush1.bf16.msra.mxu0 %v7583
        %7680 = vmatprep.subr.bf16.mxu0 0
        %7681 = vmatpush1.bf16.msra.mxu0 %v7584
        %7682 = vmatprep.subr.bf16.mxu0 0
        %7683 = vmatpush1.bf16.msra.mxu0 %v7585
        %7684 = vmatprep.subr.bf16.mxu0 0
        %7685 = vmatpush1.bf16.msra.mxu0 %v7586
        %7686 = vmatprep.subr.bf16.mxu0 0
        %7687 = vmatpush1.bf16.msra.mxu0 %v7587
        %7688 = vmatprep.mubr.bf16.mxu0 %v7410
        %7689 = vmatmul.mubr.bf16.gmra.mrb[0].mxu0 %v7409
        %v7690 = vpop.f32.mrb[0].mxu0
        %v7691 = vadd.f32 %v7498, %v7690
        %v7692 = vpop.f32.mrb[0].mxu0
        %v7693 = vpop.f32.mrb[0].mxu0
        %v7694 = vadd.f32 %v7498, %v7693
        %v7695 = vpop.f32.mrb[0].mxu0
        %7696 = vmatprep.mubr.bf16.mxu0 %v7413
        %7697 = vmatmul.mubr.bf16.gmra.mrb[0].mxu0 %v7412
        %v7698 = vpop.f32.mrb[0].mxu0
        %v7699 = vadd.f32 %v7498, %v7698
        %v7700 = vpop.f32.mrb[0].mxu0
        %v7701 = vpop.f32.mrb[0].mxu0
        %v7702 = vadd.f32 %v7498, %v7701
        %v7703 = vpop.f32.mrb[0].mxu0
        %7704 = vmatprep.mubr.bf16.mxu0 %v7416
        %7705 = vmatmul.mubr.bf16.gmra.mrb[0].mxu0 %v7415
        %v7706 = vpop.f32.mrb[0].mxu0
        %v7707 = vadd.f32 %v7498, %v7706
        %v7708 = vpop.f32.mrb[0].mxu0
        %v7709 = vpop.f32.mrb[0].mxu0
        %v7710 = vadd.f32 %v7498, %v7709
        %v7711 = vpop.f32.mrb[0].mxu0
        %7712 = vmatprep.mubr.bf16.mxu0 %v7419
        %7713 = vmatmul.mubr.bf16.gmra.mrb[0].mxu0 %v7418
        %v7714 = vpop.f32.mrb[0].mxu0
        %v7715 = vadd.f32 %v7498, %v7714
        %v7716 = vpop.f32.mrb[0].mxu0
        %v7717 = vpop.f32.mrb[0].mxu0
        %v7718 = vadd.f32 %v7498, %v7717
        %v7719 = vpop.f32.mrb[0].mxu0
        %7720 = vmatprep.mubr.bf16.mxu0 %v7422
        %7721 = vmatmul.mubr.bf16.gmra.mrb[0].mxu0 %v7421
        %v7722 = vpop.f32.mrb[0].mxu0
        %v7723 = vadd.f32 %v7498, %v7722
        %v7724 = vpop.f32.mrb[0].mxu0
        %v7725 = vpop.f32.mrb[0].mxu0
        %v7726 = vadd.f32 %v7498, %v7725
        %v7727 = vpop.f32.mrb[0].mxu0
        %7728 = vmatprep.mubr.bf16.mxu0 %v7425
        %7729 = vmatmul.mubr.bf16.gmra.mrb[0].mxu0 %v7424
        %v7730 = vpop.f32.mrb[0].mxu0
        %v7731 = vadd.f32 %v7498, %v7730
        %v7732 = vpop.f32.mrb[0].mxu0
        %v7733 = vpop.f32.mrb[0].mxu0
        %v7734 = vadd.f32 %v7498, %v7733
        %v7735 = vpop.f32.mrb[0].mxu0
        %7736 = vmatprep.mubr.bf16.mxu0 %v7428
        %7737 = vmatmul.mubr.bf16.gmra.mrb[0].mxu0 %v7427
        %v7738 = vpop.f32.mrb[0].mxu0
        %v7739 = vadd.f32 %v7498, %v7738
        %v7740 = vpop.f32.mrb[0].mxu0
        %v7741 = vpop.f32.mrb[0].mxu0
        %v7742 = vadd.f32 %v7498, %v7741
        %v7743 = vpop.f32.mrb[0].mxu0
        %7744 = vmatprep.mubr.bf16.mxu0 %v7431
        %7745 = vmatmul.mubr.bf16.gmra.mrb[0].mxu0 %v7430
        %v7746 = vpop.f32.mrb[0].mxu0
        %v7747 = vadd.f32 %v7498, %v7746
        %v7748 = vpop.f32.mrb[0].mxu0
        %v7749 = vpop.f32.mrb[0].mxu0
        %v7750 = vadd.f32 %v7498, %v7749
        %v7751 = vpop.f32.mrb[0].mxu0
        %7752 = vmatprep.mubr.bf16.mxu0 %v7434
        %7753 = vmatmul.mubr.bf16.gmra.mrb[0].mxu0 %v7433
        %v7754 = vpop.f32.mrb[0].mxu0
        %v7755 = vadd.f32 %v7498, %v7754
        %v7756 = vpop.f32.mrb[0].mxu0
        %v7757 = vpop.f32.mrb[0].mxu0
        %v7758 = vadd.f32 %v7498, %v7757
        %v7759 = vpop.f32.mrb[0].mxu0
        %7760 = vmatprep.mubr.bf16.mxu0 %v7437
        %7761 = vmatmul.mubr.bf16.gmra.mrb[0].mxu0 %v7436
        %v7762 = vpop.f32.mrb[0].mxu0
        %v7763 = vadd.f32 %v7498, %v7762
        %v7764 = vpop.f32.mrb[0].mxu0
        %v7765 = vpop.f32.mrb[0].mxu0
        %v7766 = vadd.f32 %v7498, %v7765
        %v7767 = vpop.f32.mrb[0].mxu0
        %7768 = vmatprep.mubr.bf16.mxu0 %v7440
        %7769 = vmatmul.mubr.bf16.gmra.mrb[0].mxu0 %v7439
        %v7770 = vpop.f32.mrb[0].mxu0
        %v7771 = vadd.f32 %v7498, %v7770
        %v7772 = vpop.f32.mrb[0].mxu0
        %v7773 = vpop.f32.mrb[0].mxu0
        %v7774 = vadd.f32 %v7498, %v7773
        %v7775 = vpop.f32.mrb[0].mxu0
        %7776 = vmatprep.mubr.bf16.mxu0 %v7443
        %7777 = vmatmul.mubr.bf16.gmra.mrb[0].mxu0 %v7442
        %v7778 = vpop.f32.mrb[0].mxu0
        %v7779 = vadd.f32 %v7498, %v7778
        %v7780 = vpop.f32.mrb[0].mxu0
        %v7781 = vpop.f32.mrb[0].mxu0
        %v7782 = vadd.f32 %v7498, %v7781
        %v7783 = vpop.f32.mrb[0].mxu0
        %7784 = vmatprep.mubr.bf16.mxu0 %v7446
        %7785 = vmatmul.mubr.bf16.gmra.mrb[0].mxu0 %v7445
        %v7786 = vpop.f32.mrb[0].mxu0
        %v7787 = vadd.f32 %v7498, %v7786
        %v7788 = vpop.f32.mrb[0].mxu0
        %v7789 = vpop.f32.mrb[0].mxu0
        %v7790 = vadd.f32 %v7498, %v7789
        %v7791 = vpop.f32.mrb[0].mxu0
        %7792 = vmatprep.mubr.bf16.mxu0 %v7449
        %7793 = vmatmul.mubr.bf16.gmra.mrb[0].mxu0 %v7448
        %v7794 = vpop.f32.mrb[0].mxu0
        %v7795 = vadd.f32 %v7498, %v7794
        %v7796 = vpop.f32.mrb[0].mxu0
        %v7797 = vpop.f32.mrb[0].mxu0
        %v7798 = vadd.f32 %v7498, %v7797
        %v7799 = vpop.f32.mrb[0].mxu0
        %7800 = vmatprep.mubr.bf16.mxu0 %v7452
        %7801 = vmatmul.mubr.bf16.gmra.mrb[0].mxu0 %v7451
        %v7802 = vpop.f32.mrb[0].mxu0
        %v7803 = vadd.f32 %v7498, %v7802
        %v7804 = vpop.f32.mrb[0].mxu0
        %v7805 = vpop.f32.mrb[0].mxu0
        %v7806 = vadd.f32 %v7498, %v7805
        %v7807 = vpop.f32.mrb[0].mxu0
        %7808 = vmatprep.mubr.bf16.mxu0 %v7455
        %7809 = vmatmul.mubr.bf16.gmra.mrb[0].mxu0 %v7454
        %v7810 = vpop.f32.mrb[0].mxu0
        %v7811 = vadd.f32 %v7498, %v7810
        %v7812 = vpop.f32.mrb[0].mxu0
        %v7813 = vpop.f32.mrb[0].mxu0
        %v7814 = vadd.f32 %v7498, %v7813
        %v7815 = vpop.f32.mrb[0].mxu0
        %7816 = vdwg.mxu0
        %7817 = vmatprep.subr.bf16.mxu0 0
        %7818 = vmatpush1.bf16.msra.mxu0 %v7588
        %7819 = vmatprep.subr.bf16.mxu0 0
        %7820 = vmatpush1.bf16.msra.mxu0 %v7589
        %7821 = vmatprep.subr.bf16.mxu0 0
        %7822 = vmatpush1.bf16.msra.mxu0 0
        %7823 = vmatprep.subr.bf16.mxu0 0
        %7824 = vmatpush1.bf16.msra.mxu0 0
        %7825 = vmatprep.subr.bf16.mxu0 0
        %7826 = vmatpush1.bf16.msra.mxu0 0
        %7827 = vmatprep.subr.bf16.mxu0 0
        %7828 = vmatpush1.bf16.msra.mxu0 0
        %7829 = vmatprep.subr.bf16.mxu0 0
        %7830 = vmatpush1.bf16.msra.mxu0 0
        %7831 = vmatprep.subr.bf16.mxu0 0
        %7832 = vmatpush1.bf16.msra.mxu0 0
        %7833 = vmatprep.subr.bf16.mxu0 0
        %7834 = vmatpush1.bf16.msra.mxu0 0
        %7835 = vmatprep.subr.bf16.mxu0 0
        %7836 = vmatpush1.bf16.msra.mxu0 0
        %7837 = vmatprep.subr.bf16.mxu0 0
        %7838 = vmatpush1.bf16.msra.mxu0 0
        %7839 = vmatprep.subr.bf16.mxu0 0
        %7840 = vmatpush1.bf16.msra.mxu0 0
        %7841 = vmatprep.subr.bf16.mxu0 0
        %7842 = vmatpush1.bf16.msra.mxu0 0
        %7843 = vmatprep.subr.bf16.mxu0 0
        %7844 = vmatpush1.bf16.msra.mxu0 0
        %7845 = vmatprep.subr.bf16.mxu0 0
        %7846 = vmatpush1.bf16.msra.mxu0 0
        %7847 = vmatprep.subr.bf16.mxu0 0
        %7848 = vmatpush1.bf16.msra.mxu0 0
        %7849 = vmatprep.mubr.bf16.mxu0 0
        %7850 = vmatmul.mubr.bf16.gmra.mrb[0].mxu0 %v7609
        %v7851 = vpop.f32.mrb[0].mxu0
        %v7852 = vadd.f32 %v7691, %v7851
        %v7853 = vpop.f32.mrb[0].mxu0
        %v7854 = vpop.f32.mrb[0].mxu0
        %v7855 = vadd.f32 %v7694, %v7854
        %v7856 = vpop.f32.mrb[0].mxu0
        %7857 = vmatprep.mubr.bf16.mxu0 0
        %7858 = vmatmul.mubr.bf16.gmra.mrb[0].mxu0 %v7612
        %v7859 = vpop.f32.mrb[0].mxu0
        %v7860 = vadd.f32 %v7699, %v7859
        %v7861 = vpop.f32.mrb[0].mxu0
        %v7862 = vpop.f32.mrb[0].mxu0
        %v7863 = vadd.f32 %v7702, %v7862
        %v7864 = vpop.f32.mrb[0].mxu0
        %7865 = vmatprep.mubr.bf16.mxu0 0
        %7866 = vmatmul.mubr.bf16.gmra.mrb[0].mxu0 %v7615
        %v7867 = vpop.f32.mrb[0].mxu0
        %v7868 = vadd.f32 %v7707, %v7867
        %v7869 = vpop.f32.mrb[0].mxu0
        %v7870 = vpop.f32.mrb[0].mxu0
        %v7871 = vadd.f32 %v7710, %v7870
        %v7872 = vpop.f32.mrb[0].mxu0
        %7873 = vmatprep.mubr.bf16.mxu0 0
        %7874 = vmatmul.mubr.bf16.gmra.mrb[0].mxu0 %v7618
        %v7875 = vpop.f32.mrb[0].mxu0
        %v7876 = vadd.f32 %v7715, %v7875
        %v7877 = vpop.f32.mrb[0].mxu0
        %v7878 = vpop.f32.mrb[0].mxu0
        %v7879 = vadd.f32 %v7718, %v7878
        %v7880 = vpop.f32.mrb[0].mxu0
        %7881 = vmatprep.mubr.bf16.mxu0 0
        %7882 = vmatmul.mubr.bf16.gmra.mrb[0].mxu0 %v7621
        %v7883 = vpop.f32.mrb[0].mxu0
        %v7884 = vadd.f32 %v7723, %v7883
        %v7885 = vpop.f32.mrb[0].mxu0
        %v7886 = vpop.f32.mrb[0].mxu0
        %v7887 = vadd.f32 %v7726, %v7886
        %v7888 = vpop.f32.mrb[0].mxu0
        %7889 = vmatprep.mubr.bf16.mxu0 0
        %7890 = vmatmul.mubr.bf16.gmra.mrb[0].mxu0 %v7624
        %v7891 = vpop.f32.mrb[0].mxu0
        %v7892 = vadd.f32 %v7731, %v7891
        %v7893 = vpop.f32.mrb[0].mxu0
        %v7894 = vpop.f32.mrb[0].mxu0
        %v7895 = vadd.f32 %v7734, %v7894
        %v7896 = vpop.f32.mrb[0].mxu0
        %7897 = vmatprep.mubr.bf16.mxu0 0
        %7898 = vmatmul.mubr.bf16.gmra.mrb[0].mxu0 %v7627
        %v7899 = vpop.f32.mrb[0].mxu0
        %v7900 = vadd.f32 %v7739, %v7899
        %v7901 = vpop.f32.mrb[0].mxu0
        %v7902 = vpop.f32.mrb[0].mxu0
        %v7903 = vadd.f32 %v7742, %v7902
        %v7904 = vpop.f32.mrb[0].mxu0
        %7905 = vmatprep.mubr.bf16.mxu0 0
        %7906 = vmatmul.mubr.bf16.gmra.mrb[0].mxu0 %v7630
        %v7907 = vpop.f32.mrb[0].mxu0
        %v7908 = vadd.f32 %v7747, %v7907
        %v7909 = vpop.f32.mrb[0].mxu0
        %v7910 = vpop.f32.mrb[0].mxu0
        %v7911 = vadd.f32 %v7750, %v7910
        %v7912 = vpop.f32.mrb[0].mxu0
        %7913 = vmatprep.mubr.bf16.mxu0 0
        %7914 = vmatmul.mubr.bf16.gmra.mrb[0].mxu0 %v7633
        %v7915 = vpop.f32.mrb[0].mxu0
        %v7916 = vadd.f32 %v7755, %v7915
        %v7917 = vpop.f32.mrb[0].mxu0
        %v7918 = vpop.f32.mrb[0].mxu0
        %v7919 = vadd.f32 %v7758, %v7918
        %v7920 = vpop.f32.mrb[0].mxu0
        %7921 = vmatprep.mubr.bf16.mxu0 0
        %7922 = vmatmul.mubr.bf16.gmra.mrb[0].mxu0 %v7636
        %v7923 = vpop.f32.mrb[0].mxu0
        %v7924 = vadd.f32 %v7763, %v7923
        %v7925 = vpop.f32.mrb[0].mxu0
        %v7926 = vpop.f32.mrb[0].mxu0
        %v7927 = vadd.f32 %v7766, %v7926
        %v7928 = vpop.f32.mrb[0].mxu0
        %7929 = vmatprep.mubr.bf16.mxu0 0
        %7930 = vmatmul.mubr.bf16.gmra.mrb[0].mxu0 %v7639
        %v7931 = vpop.f32.mrb[0].mxu0
        %v7932 = vadd.f32 %v7771, %v7931
        %v7933 = vpop.f32.mrb[0].mxu0
        %v7934 = vpop.f32.mrb[0].mxu0
        %v7935 = vadd.f32 %v7774, %v7934
        %v7936 = vpop.f32.mrb[0].mxu0
        %7937 = vmatprep.mubr.bf16.mxu0 0
        %7938 = vmatmul.mubr.bf16.gmra.mrb[0].mxu0 %v7642
        %v7939 = vpop.f32.mrb[0].mxu0
        %v7940 = vadd.f32 %v7779, %v7939
        %v7941 = vpop.f32.mrb[0].mxu0
        %v7942 = vpop.f32.mrb[0].mxu0
        %v7943 = vadd.f32 %v7782, %v7942
        %v7944 = vpop.f32.mrb[0].mxu0
        %7945 = vmatprep.mubr.bf16.mxu0 0
        %7946 = vmatmul.mubr.bf16.gmra.mrb[0].mxu0 %v7645
        %v7947 = vpop.f32.mrb[0].mxu0
        %v7948 = vadd.f32 %v7787, %v7947
        %v7949 = vpop.f32.mrb[0].mxu0
        %v7950 = vpop.f32.mrb[0].mxu0
        %v7951 = vadd.f32 %v7790, %v7950
        %v7952 = vpop.f32.mrb[0].mxu0
        %7953 = vmatprep.mubr.bf16.mxu0 0
        %7954 = vmatmul.mubr.bf16.gmra.mrb[0].mxu0 %v7648
        %v7955 = vpop.f32.mrb[0].mxu0
        %v7956 = vadd.f32 %v7795, %v7955
        %v7957 = vpop.f32.mrb[0].mxu0
        %v7958 = vpop.f32.mrb[0].mxu0
        %v7959 = vadd.f32 %v7798, %v7958
        %v7960 = vpop.f32.mrb[0].mxu0
        %7961 = vmatprep.mubr.bf16.mxu0 0
        %7962 = vmatmul.mubr.bf16.gmra.mrb[0].mxu0 %v7651
        %v7963 = vpop.f32.mrb[0].mxu0
        %v7964 = vadd.f32 %v7803, %v7963
        %v7965 = vpop.f32.mrb[0].mxu0
        %v7966 = vpop.f32.mrb[0].mxu0
        %v7967 = vadd.f32 %v7806, %v7966
        %v7968 = vpop.f32.mrb[0].mxu0
        %7969 = vmatprep.mubr.bf16.mxu0 0
        %7970 = vmatmul.mubr.bf16.gmra.mrb[0].mxu0 %v7654
        %v7971 = vpop.f32.mrb[0].mxu0
        %v7972 = vadd.f32 %v7811, %v7971
        %v7973 = vpop.f32.mrb[0].mxu0
        %v7974 = vpop.f32.mrb[0].mxu0
        %v7975 = vadd.f32 %v7814, %v7974
        %v7976 = vpop.f32.mrb[0].mxu0
        %7977 = vdwg.mxu0
        %v7978 = vmax.f32 %v7852, 0.0
        %v7979 = vmax.f32 %v7855, 0.0
        %v7980 = vmax.f32 %v7860, 0.0
        %v7981 = vmax.f32 %v7863, 0.0
        %v7982 = vmax.f32 %v7868, 0.0
        %v7983 = vmax.f32 %v7871, 0.0
        %v7984 = vmax.f32 %v7876, 0.0
        %v7985 = vmax.f32 %v7879, 0.0
        %v7986 = vmax.f32 %v7884, 0.0
        %v7987 = vmax.f32 %v7887, 0.0
        %v7988 = vmax.f32 %v7892, 0.0
        %v7989 = vmax.f32 %v7895, 0.0
        %v7990 = vmax.f32 %v7900, 0.0
        %v7991 = vmax.f32 %v7903, 0.0
        %v7992 = vmax.f32 %v7908, 0.0
        %v7993 = vmax.f32 %v7911, 0.0
        %v7994 = vmax.f32 %v7916, 0.0
        %v7995 = vmax.f32 %v7919, 0.0
        %v7996 = vmax.f32 %v7924, 0.0
        %v7997 = vmax.f32 %v7927, 0.0
        %v7998 = vmax.f32 %v7932, 0.0
        %v7999 = vmax.f32 %v7935, 0.0
        %v8000 = vmax.f32 %v7940, 0.0
        %v8001 = vmax.f32 %v7943, 0.0
        %v8002 = vmax.f32 %v7948, 0.0
        %v8003 = vmax.f32 %v7951, 0.0
        %v8004 = vmax.f32 %v7956, 0.0
        %v8005 = vmax.f32 %v7959, 0.0
        %v8006 = vmax.f32 %v7964, 0.0
        %v8007 = vmax.f32 %v7967, 0.0
        %v8008 = vmax.f32 %v7972, 0.0
        %v8009 = vmax.f32 %v7975, 0.0
        %v8010 = vsel %vm1051, %v7978, 0.0
        %v8011 = vsel %vm1051, %v7979, 0.0
        %v8012 = vadd.f32 %v8010, %v8011
        %v8013 = vsel %vm1051, %v7980, 0.0
        %v8014 = vadd.f32 %v8012, %v8013
        %v8015 = vsel %vm1051, %v7981, 0.0
        %v8016 = vadd.f32 %v8014, %v8015
        %v8017 = vsel %vm1051, %v7982, 0.0
        %v8018 = vadd.f32 %v8016, %v8017
        %v8019 = vsel %vm1051, %v7983, 0.0
        %v8020 = vadd.f32 %v8018, %v8019
        %v8021 = vsel %vm1051, %v7984, 0.0
        %v8022 = vadd.f32 %v8020, %v8021
        %v8023 = vsel %vm1051, %v7985, 0.0
        %v8024 = vadd.f32 %v8022, %v8023
        %v8025 = vsel %vm1051, %v7986, 0.0
        %v8026 = vadd.f32 %v8024, %v8025
        %v8027 = vsel %vm1051, %v7987, 0.0
        %v8028 = vadd.f32 %v8026, %v8027
        %v8029 = vsel %vm1051, %v7988, 0.0
        %v8030 = vadd.f32 %v8028, %v8029
        %v8031 = vsel %vm1051, %v7989, 0.0
        %v8032 = vadd.f32 %v8030, %v8031
        %v8033 = vsel %vm1051, %v7990, 0.0
        %v8034 = vadd.f32 %v8032, %v8033
        %v8035 = vsel %vm1051, %v7991, 0.0
        %v8036 = vadd.f32 %v8034, %v8035
        %v8037 = vsel %vm1051, %v7992, 0.0
        %v8038 = vadd.f32 %v8036, %v8037
        %v8039 = vsel %vm1051, %v7993, 0.0
        %v8040 = vadd.f32 %v8038, %v8039
        %v8041 = vsel %vm1051, %v7994, 0.0
        %v8042 = vadd.f32 %v8040, %v8041
        %v8043 = vsel %vm1051, %v7995, 0.0
        %v8044 = vadd.f32 %v8042, %v8043
        %v8045 = vsel %vm1051, %v7996, 0.0
        %v8046 = vadd.f32 %v8044, %v8045
        %v8047 = vsel %vm1051, %v7997, 0.0
        %v8048 = vadd.f32 %v8046, %v8047
        %v8049 = vsel %vm1051, %v7998, 0.0
        %v8050 = vadd.f32 %v8048, %v8049
        %v8051 = vsel %vm1051, %v7999, 0.0
        %v8052 = vadd.f32 %v8050, %v8051
        %v8053 = vsel %vm1051, %v8000, 0.0
        %v8054 = vadd.f32 %v8052, %v8053
        %v8055 = vsel %vm1051, %v8001, 0.0
        %v8056 = vadd.f32 %v8054, %v8055
        %v8057 = vsel %vm1051, %v8002, 0.0
        %v8058 = vadd.f32 %v8056, %v8057
        %v8059 = vsel %vm1051, %v8003, 0.0
        %v8060 = vadd.f32 %v8058, %v8059
        %v8061 = vsel %vm1051, %v8004, 0.0
        %v8062 = vadd.f32 %v8060, %v8061
        %v8063 = vsel %vm1051, %v8005, 0.0
        %v8064 = vadd.f32 %v8062, %v8063
        %v8065 = vsel %vm1051, %v8006, 0.0
        %v8066 = vadd.f32 %v8064, %v8065
        %v8067 = vsel %vm1051, %v8007, 0.0
        %v8068 = vadd.f32 %v8066, %v8067
        %v8069 = vsel %vm1051, %v8008, 0.0
        %v8070 = vadd.f32 %v8068, %v8069
        %v8071 = vsel %vm1051, %v8009, 0.0
        %v8072 = vadd.f32 %v8070, %v8071
        %v8073 = vrot.slane %v8072, 4
        %v8074 = vadd.f32 %v8072, %v8073
        %v8075 = vrot.slane %v8074, 2
        %v8076 = vadd.f32 %v8074, %v8075
        %v8077 = vrot.slane %v8076, 1
        %v8078 = vadd.f32 %v8076, %v8077
        %v8079 = vadd.f32 %v4192, %v8078
        %v8080 = vpack.c.bf16 %v7979, %v7978
        %v8081 = vpack.c.bf16 %v7981, %v7980
        %v8082 = vpack.c.bf16 %v7983, %v7982
        %v8083 = vpack.c.bf16 %v7985, %v7984
        %v8084 = vpack.c.bf16 %v7987, %v7986
        %v8085 = vpack.c.bf16 %v7989, %v7988
        %v8086 = vpack.c.bf16 %v7991, %v7990
        %v8087 = vpack.c.bf16 %v7993, %v7992
        %v8088 = vpack.c.bf16 %v7995, %v7994
        %v8089 = vpack.c.bf16 %v7997, %v7996
        %v8090 = vpack.c.bf16 %v7999, %v7998
        %v8091 = vpack.c.bf16 %v8001, %v8000
        %v8092 = vpack.c.bf16 %v8003, %v8002
        %v8093 = vpack.c.bf16 %v8005, %v8004
        %v8094 = vpack.c.bf16 %v8007, %v8006
        %v8095 = vpack.c.bf16 %v8009, %v8008
        %v8096 = vmul.f32 %v8079, 0.00390625
        %v8097 = vld [vmem:[%s5] sm:$0xff]
        %v8098 = vld [vmem:[%s5 + $0x8] sm:$0xff]
        %v8099 = vld [vmem:[%s5 + $0x10] sm:$0xff]
        %v8100 = vld [vmem:[%s5 + $0x18] sm:$0xff]
        %v8101 = vld [vmem:[%s6] sm:$0x1]
        %v8103 = vsel %vm1051, %v8096, 0
        %8105 = vmatprep.subr.mxu0 0.0
        %8106 = vmatpush1.msra.mxu0 %v8097
        %8107 = vmatprep.subr.mxu0 0.0
        %8108 = vmatpush1.msra.mxu0 %v8098
        %8109 = vmatprep.subr.mxu0 0.0
        %8110 = vmatpush1.msra.mxu0 %v8099
        %8111 = vmatprep.subr.mxu0 0.0
        %8112 = vmatpush1.msra.mxu0 %v8100
        %8113 = vmatprep.subr.mxu0 0.0
        %8114 = vmatpush1.msra.mxu0 0.0
        %8115 = vmatprep.subr.mxu0 0.0
        %8116 = vmatpush1.msra.mxu0 0.0
        %8117 = vmatprep.subr.mxu0 0.0
        %8118 = vmatpush1.msra.mxu0 0.0
        %8119 = vmatprep.subr.mxu0 0.0
        %8120 = vmatpush1.msra.mxu0 0.0
        %8121 = vmatprep.subr.mxu0 0.0
        %8122 = vmatpush1.msra.mxu0 0.0
        %8123 = vmatprep.subr.mxu0 0.0
        %8124 = vmatpush1.msra.mxu0 0.0
        %8125 = vmatprep.subr.mxu0 0.0
        %8126 = vmatpush1.msra.mxu0 0.0
        %8127 = vmatprep.subr.mxu0 0.0
        %8128 = vmatpush1.msra.mxu0 0.0
        %8129 = vmatprep.subr.mxu0 0.0
        %8130 = vmatpush1.msra.mxu0 0.0
        %8131 = vmatprep.subr.mxu0 0.0
        %8132 = vmatpush1.msra.mxu0 0.0
        %8133 = vmatprep.subr.mxu0 0.0
        %8134 = vmatpush1.msra.mxu0 0.0
        %8135 = vmatprep.subr.mxu0 0.0
        %8136 = vmatpush1.msra.mxu0 0.0
        %8137 = vmatprep.subr.mxu0 0.0
        %8138 = vmatpush1.msra.mxu0 0.0
        %8139 = vmatprep.subr.mxu0 0.0
        %8140 = vmatpush1.msra.mxu0 0.0
        %8141 = vmatprep.subr.mxu0 0.0
        %8142 = vmatpush1.msra.mxu0 0.0
        %8143 = vmatprep.subr.mxu0 0.0
        %8144 = vmatpush1.msra.mxu0 0.0
        %8145 = vmatprep.subr.mxu0 0.0
        %8146 = vmatpush1.msra.mxu0 0.0
        %8147 = vmatprep.subr.mxu0 0.0
        %8148 = vmatpush1.msra.mxu0 0.0
        %8149 = vmatprep.subr.mxu0 0.0
        %8150 = vmatpush1.msra.mxu0 0.0
        %8151 = vmatprep.subr.mxu0 0.0
        %8152 = vmatpush1.msra.mxu0 0.0
        %8153 = vmatprep.subr.mxu0 0.0
        %8154 = vmatpush1.msra.mxu0 0.0
        %8155 = vmatprep.subr.mxu0 0.0
        %8156 = vmatpush1.msra.mxu0 0.0
        %8157 = vmatprep.subr.mxu0 0.0
        %8158 = vmatpush1.msra.mxu0 0.0
        %8159 = vmatprep.subr.mxu0 0.0
        %8160 = vmatpush1.msra.mxu0 0.0
        %8161 = vmatprep.subr.mxu0 0.0
        %8162 = vmatpush1.msra.mxu0 0.0
        %8163 = vmatprep.subr.mxu0 0.0
        %8164 = vmatpush1.msra.mxu0 0.0
        %8165 = vmatprep.subr.mxu0 0.0
        %8166 = vmatpush1.msra.mxu0 0.0
        %8167 = vmatprep.subr.mxu0 0.0
        %8168 = vmatpush1.msra.mxu0 0.0
        %8169 = vmatprep.mubr.f32.mxu0 0.0
        %8170 = vmatmul.mubr.f32.gmra.mrb[0].mxu0 %v8103
        %v8171 = vpop.f32.mrb[0].mxu0
        %v8172 = vadd.f32 %v8101, %v8171
        %v8173 = vpop.f32.mrb[0].mxu0
        %8174 = vdwg.mxu0
        %v8175 = vld [vmem:[%s7] sm:$0xff]
        %v8176 = vld [vmem:[%s7 + $0x8] sm:$0xff]
        %v8177 = vld [vmem:[%s7 + $0x10] sm:$0xff]
        %v8178 = vld [vmem:[%s7 + $0x18] sm:$0xff]
        %v8179 = vld [vmem:[%s8] sm:$0x1]
        %v8181 = vsel %vm1051, %v8172, 0
        %8183 = vmatprep.subr.mxu0 0.0
        %8184 = vmatpush1.msra.mxu0 %v8175
        %8185 = vmatprep.subr.mxu0 0.0
        %8186 = vmatpush1.msra.mxu0 %v8176
        %8187 = vmatprep.subr.mxu0 0.0
        %8188 = vmatpush1.msra.mxu0 %v8177
        %8189 = vmatprep.subr.mxu0 0.0
        %8190 = vmatpush1.msra.mxu0 %v8178
        %8191 = vmatprep.subr.mxu0 0.0
        %8192 = vmatpush1.msra.mxu0 0.0
        %8193 = vmatprep.subr.mxu0 0.0
        %8194 = vmatpush1.msra.mxu0 0.0
        %8195 = vmatprep.subr.mxu0 0.0
        %8196 = vmatpush1.msra.mxu0 0.0
        %8197 = vmatprep.subr.mxu0 0.0
        %8198 = vmatpush1.msra.mxu0 0.0
        %8199 = vmatprep.subr.mxu0 0.0
        %8200 = vmatpush1.msra.mxu0 0.0
        %8201 = vmatprep.subr.mxu0 0.0
        %8202 = vmatpush1.msra.mxu0 0.0
        %8203 = vmatprep.subr.mxu0 0.0
        %8204 = vmatpush1.msra.mxu0 0.0
        %8205 = vmatprep.subr.mxu0 0.0
        %8206 = vmatpush1.msra.mxu0 0.0
        %8207 = vmatprep.subr.mxu0 0.0
        %8208 = vmatpush1.msra.mxu0 0.0
        %8209 = vmatprep.subr.mxu0 0.0
        %8210 = vmatpush1.msra.mxu0 0.0
        %8211 = vmatprep.subr.mxu0 0.0
        %8212 = vmatpush1.msra.mxu0 0.0
        %8213 = vmatprep.subr.mxu0 0.0
        %8214 = vmatpush1.msra.mxu0 0.0
        %8215 = vmatprep.subr.mxu0 0.0
        %8216 = vmatpush1.msra.mxu0 0.0
        %8217 = vmatprep.subr.mxu0 0.0
        %8218 = vmatpush1.msra.mxu0 0.0
        %8219 = vmatprep.subr.mxu0 0.0
        %8220 = vmatpush1.msra.mxu0 0.0
        %8221 = vmatprep.subr.mxu0 0.0
        %8222 = vmatpush1.msra.mxu0 0.0
        %8223 = vmatprep.subr.mxu0 0.0
        %8224 = vmatpush1.msra.mxu0 0.0
        %8225 = vmatprep.subr.mxu0 0.0
        %8226 = vmatpush1.msra.mxu0 0.0
        %8227 = vmatprep.subr.mxu0 0.0
        %8228 = vmatpush1.msra.mxu0 0.0
        %8229 = vmatprep.subr.mxu0 0.0
        %8230 = vmatpush1.msra.mxu0 0.0
        %8231 = vmatprep.subr.mxu0 0.0
        %8232 = vmatpush1.msra.mxu0 0.0
        %8233 = vmatprep.subr.mxu0 0.0
        %8234 = vmatpush1.msra.mxu0 0.0
        %8235 = vmatprep.subr.mxu0 0.0
        %8236 = vmatpush1.msra.mxu0 0.0
        %8237 = vmatprep.subr.mxu0 0.0
        %8238 = vmatpush1.msra.mxu0 0.0
        %8239 = vmatprep.subr.mxu0 0.0
        %8240 = vmatpush1.msra.mxu0 0.0
        %8241 = vmatprep.subr.mxu0 0.0
        %8242 = vmatpush1.msra.mxu0 0.0
        %8243 = vmatprep.subr.mxu0 0.0
        %8244 = vmatpush1.msra.mxu0 0.0
        %8245 = vmatprep.subr.mxu0 0.0
        %8246 = vmatpush1.msra.mxu0 0.0
        %8247 = vmatprep.mubr.f32.mxu0 0.0
        %8248 = vmatmul.mubr.f32.gmra.mrb[0].mxu0 %v8181
        %v8249 = vpop.f32.mrb[0].mxu0
        %v8250 = vadd.f32 %v8179, %v8249
        %v8251 = vpop.f32.mrb[0].mxu0
        %8252 = vdwg.mxu0
        %s8253 = scalar_lea.vmem %s7, 32
        %v8254 = vld [vmem:[%s8253] sm:$0xff]
        %v8255 = vld [vmem:[%s8253 + $0x8] sm:$0xff]
        %v8256 = vld [vmem:[%s8253 + $0x10] sm:$0xff]
        %v8257 = vld [vmem:[%s8253 + $0x18] sm:$0xff]
        %s8258 = scalar_lea.vmem %s8, 1
        %v8259 = vld [vmem:[%s8258] sm:$0x1]
        %8260 = vmatprep.subr.mxu0 0.0
        %8261 = vmatpush1.msra.mxu0 %v8254
        %8262 = vmatprep.subr.mxu0 0.0
        %8263 = vmatpush1.msra.mxu0 %v8255
        %8264 = vmatprep.subr.mxu0 0.0
        %8265 = vmatpush1.msra.mxu0 %v8256
        %8266 = vmatprep.subr.mxu0 0.0
        %8267 = vmatpush1.msra.mxu0 %v8257
        %8268 = vmatprep.subr.mxu0 0.0
        %8269 = vmatpush1.msra.mxu0 0.0
        %8270 = vmatprep.subr.mxu0 0.0
        %8271 = vmatpush1.msra.mxu0 0.0
        %8272 = vmatprep.subr.mxu0 0.0
        %8273 = vmatpush1.msra.mxu0 0.0
        %8274 = vmatprep.subr.mxu0 0.0
        %8275 = vmatpush1.msra.mxu0 0.0
        %8276 = vmatprep.subr.mxu0 0.0
        %8277 = vmatpush1.msra.mxu0 0.0
        %8278 = vmatprep.subr.mxu0 0.0
        %8279 = vmatpush1.msra.mxu0 0.0
        %8280 = vmatprep.subr.mxu0 0.0
        %8281 = vmatpush1.msra.mxu0 0.0
        %8282 = vmatprep.subr.mxu0 0.0
        %8283 = vmatpush1.msra.mxu0 0.0
        %8284 = vmatprep.subr.mxu0 0.0
        %8285 = vmatpush1.msra.mxu0 0.0
        %8286 = vmatprep.subr.mxu0 0.0
        %8287 = vmatpush1.msra.mxu0 0.0
        %8288 = vmatprep.subr.mxu0 0.0
        %8289 = vmatpush1.msra.mxu0 0.0
        %8290 = vmatprep.subr.mxu0 0.0
        %8291 = vmatpush1.msra.mxu0 0.0
        %8292 = vmatprep.subr.mxu0 0.0
        %8293 = vmatpush1.msra.mxu0 0.0
        %8294 = vmatprep.subr.mxu0 0.0
        %8295 = vmatpush1.msra.mxu0 0.0
        %8296 = vmatprep.subr.mxu0 0.0
        %8297 = vmatpush1.msra.mxu0 0.0
        %8298 = vmatprep.subr.mxu0 0.0
        %8299 = vmatpush1.msra.mxu0 0.0
        %8300 = vmatprep.subr.mxu0 0.0
        %8301 = vmatpush1.msra.mxu0 0.0
        %8302 = vmatprep.subr.mxu0 0.0
        %8303 = vmatpush1.msra.mxu0 0.0
        %8304 = vmatprep.subr.mxu0 0.0
        %8305 = vmatpush1.msra.mxu0 0.0
        %8306 = vmatprep.subr.mxu0 0.0
        %8307 = vmatpush1.msra.mxu0 0.0
        %8308 = vmatprep.subr.mxu0 0.0
        %8309 = vmatpush1.msra.mxu0 0.0
        %8310 = vmatprep.subr.mxu0 0.0
        %8311 = vmatpush1.msra.mxu0 0.0
        %8312 = vmatprep.subr.mxu0 0.0
        %8313 = vmatpush1.msra.mxu0 0.0
        %8314 = vmatprep.subr.mxu0 0.0
        %8315 = vmatpush1.msra.mxu0 0.0
        %8316 = vmatprep.subr.mxu0 0.0
        %8317 = vmatpush1.msra.mxu0 0.0
        %8318 = vmatprep.subr.mxu0 0.0
        %8319 = vmatpush1.msra.mxu0 0.0
        %8320 = vmatprep.subr.mxu0 0.0
        %8321 = vmatpush1.msra.mxu0 0.0
        %8322 = vmatprep.subr.mxu0 0.0
        %8323 = vmatpush1.msra.mxu0 0.0
        %8324 = vmatprep.mubr.f32.mxu0 0.0
        %8325 = vmatmul.mubr.f32.gmra.mrb[0].mxu0 %v8181
        %v8326 = vpop.f32.mrb[0].mxu0
        %v8327 = vadd.f32 %v8259, %v8326
        %v8328 = vpop.f32.mrb[0].mxu0
        %8329 = vdwg.mxu0
        %v8330 = vmax.f32 %v8250, %v8327
        %v8331 = vsub.f32 %v8250, %v8330
        %v8332 = vmul.f32 %v8331, 1.442695
        %v8333 = vpow.pop %v8332
        %v8334 = vsub.f32 %v8327, %v8330
        %v8335 = vmul.f32 %v8334, 1.442695
        %v8336 = vpow.pop %v8335
        %v8337 = vadd.f32 %v8333, %v8336
        %v8338 = vrcp.pop %v8337
        %v8339 = vmul.f32 1.0, %v8338
        %v8340 = vmul.f32 %v8333, %v8339
        %v8341 = vunpack.c.l.bf16 %v4193
        %v8342 = vunpack.c.h.bf16 %v4193
        %v8343 = vunpack.c.l.bf16 %v4194
        %v8344 = vunpack.c.h.bf16 %v4194
        %v8345 = vunpack.c.l.bf16 %v4195
        %v8346 = vunpack.c.h.bf16 %v4195
        %v8347 = vunpack.c.l.bf16 %v4196
        %v8348 = vunpack.c.h.bf16 %v4196
        %v8349 = vunpack.c.l.bf16 %v4197
        %v8350 = vunpack.c.h.bf16 %v4197
        %v8351 = vunpack.c.l.bf16 %v4198
        %v8352 = vunpack.c.h.bf16 %v4198
        %v8353 = vunpack.c.l.bf16 %v4199
        %v8354 = vunpack.c.h.bf16 %v4199
        %v8355 = vunpack.c.l.bf16 %v4200
        %v8356 = vunpack.c.h.bf16 %v4200
        %v8357 = vunpack.c.l.bf16 %v4201
        %v8358 = vunpack.c.h.bf16 %v4201
        %v8359 = vunpack.c.l.bf16 %v4202
        %v8360 = vunpack.c.h.bf16 %v4202
        %v8361 = vunpack.c.l.bf16 %v4203
        %v8362 = vunpack.c.h.bf16 %v4203
        %v8363 = vunpack.c.l.bf16 %v4204
        %v8364 = vunpack.c.h.bf16 %v4204
        %v8365 = vunpack.c.l.bf16 %v4205
        %v8366 = vunpack.c.h.bf16 %v4205
        %v8367 = vunpack.c.l.bf16 %v4206
        %v8368 = vunpack.c.h.bf16 %v4206
        %v8369 = vunpack.c.l.bf16 %v4207
        %v8370 = vunpack.c.h.bf16 %v4207
        %v8371 = vunpack.c.l.bf16 %v4208
        %v8372 = vunpack.c.h.bf16 %v4208
        %v8373 = vlaneseq
        %v8374 = vshrl.u32 %v8373, 7
        %v8375 = vsub.s32 0, %v8374
        %v8376 = vrot.slane %v8340, %v8375
        %v8377 = vmul.f32 %v8341, %v8376
        %v8378 = vmul.f32 %v8342, %v8376
        %v8379 = vmul.f32 %v8343, %v8376
        %v8380 = vmul.f32 %v8344, %v8376
        %v8381 = vmul.f32 %v8345, %v8376
        %v8382 = vmul.f32 %v8346, %v8376
        %v8383 = vmul.f32 %v8347, %v8376
        %v8384 = vmul.f32 %v8348, %v8376
        %v8385 = vmul.f32 %v8349, %v8376
        %v8386 = vmul.f32 %v8350, %v8376
        %v8387 = vmul.f32 %v8351, %v8376
        %v8388 = vmul.f32 %v8352, %v8376
        %v8389 = vmul.f32 %v8353, %v8376
        %v8390 = vmul.f32 %v8354, %v8376
        %v8391 = vmul.f32 %v8355, %v8376
        %v8392 = vmul.f32 %v8356, %v8376
        %v8393 = vmul.f32 %v8357, %v8376
        %v8394 = vmul.f32 %v8358, %v8376
        %v8395 = vmul.f32 %v8359, %v8376
        %v8396 = vmul.f32 %v8360, %v8376
        %v8397 = vmul.f32 %v8361, %v8376
        %v8398 = vmul.f32 %v8362, %v8376
        %v8399 = vmul.f32 %v8363, %v8376
        %v8400 = vmul.f32 %v8364, %v8376
        %v8401 = vmul.f32 %v8365, %v8376
        %v8402 = vmul.f32 %v8366, %v8376
        %v8403 = vmul.f32 %v8367, %v8376
        %v8404 = vmul.f32 %v8368, %v8376
        %v8405 = vmul.f32 %v8369, %v8376
        %v8406 = vmul.f32 %v8370, %v8376
        %v8407 = vmul.f32 %v8371, %v8376
        %v8408 = vmul.f32 %v8372, %v8376
        %v8409 = vmul.f32 %v8336, %v8339
        %v8410 = vunpack.c.l.bf16 %v8080
        %v8411 = vunpack.c.h.bf16 %v8080
        %v8412 = vunpack.c.l.bf16 %v8081
        %v8413 = vunpack.c.h.bf16 %v8081
        %v8414 = vunpack.c.l.bf16 %v8082
        %v8415 = vunpack.c.h.bf16 %v8082
        %v8416 = vunpack.c.l.bf16 %v8083
        %v8417 = vunpack.c.h.bf16 %v8083
        %v8418 = vunpack.c.l.bf16 %v8084
        %v8419 = vunpack.c.h.bf16 %v8084
        %v8420 = vunpack.c.l.bf16 %v8085
        %v8421 = vunpack.c.h.bf16 %v8085
        %v8422 = vunpack.c.l.bf16 %v8086
        %v8423 = vunpack.c.h.bf16 %v8086
        %v8424 = vunpack.c.l.bf16 %v8087
        %v8425 = vunpack.c.h.bf16 %v8087
        %v8426 = vunpack.c.l.bf16 %v8088
        %v8427 = vunpack.c.h.bf16 %v8088
        %v8428 = vunpack.c.l.bf16 %v8089
        %v8429 = vunpack.c.h.bf16 %v8089
        %v8430 = vunpack.c.l.bf16 %v8090
        %v8431 = vunpack.c.h.bf16 %v8090
        %v8432 = vunpack.c.l.bf16 %v8091
        %v8433 = vunpack.c.h.bf16 %v8091
        %v8434 = vunpack.c.l.bf16 %v8092
        %v8435 = vunpack.c.h.bf16 %v8092
        %v8436 = vunpack.c.l.bf16 %v8093
        %v8437 = vunpack.c.h.bf16 %v8093
        %v8438 = vunpack.c.l.bf16 %v8094
        %v8439 = vunpack.c.h.bf16 %v8094
        %v8440 = vunpack.c.l.bf16 %v8095
        %v8441 = vunpack.c.h.bf16 %v8095
        %v8442 = vlaneseq
        %v8443 = vshrl.u32 %v8442, 7
        %v8444 = vsub.s32 0, %v8443
        %v8445 = vrot.slane %v8409, %v8444
        %v8446 = vmul.f32 %v8410, %v8445
        %v8447 = vmul.f32 %v8411, %v8445
        %v8448 = vmul.f32 %v8412, %v8445
        %v8449 = vmul.f32 %v8413, %v8445
        %v8450 = vmul.f32 %v8414, %v8445
        %v8451 = vmul.f32 %v8415, %v8445
        %v8452 = vmul.f32 %v8416, %v8445
        %v8453 = vmul.f32 %v8417, %v8445
        %v8454 = vmul.f32 %v8418, %v8445
        %v8455 = vmul.f32 %v8419, %v8445
        %v8456 = vmul.f32 %v8420, %v8445
        %v8457 = vmul.f32 %v8421, %v8445
        %v8458 = vmul.f32 %v8422, %v8445
        %v8459 = vmul.f32 %v8423, %v8445
        %v8460 = vmul.f32 %v8424, %v8445
        %v8461 = vmul.f32 %v8425, %v8445
        %v8462 = vmul.f32 %v8426, %v8445
        %v8463 = vmul.f32 %v8427, %v8445
        %v8464 = vmul.f32 %v8428, %v8445
        %v8465 = vmul.f32 %v8429, %v8445
        %v8466 = vmul.f32 %v8430, %v8445
        %v8467 = vmul.f32 %v8431, %v8445
        %v8468 = vmul.f32 %v8432, %v8445
        %v8469 = vmul.f32 %v8433, %v8445
        %v8470 = vmul.f32 %v8434, %v8445
        %v8471 = vmul.f32 %v8435, %v8445
        %v8472 = vmul.f32 %v8436, %v8445
        %v8473 = vmul.f32 %v8437, %v8445
        %v8474 = vmul.f32 %v8438, %v8445
        %v8475 = vmul.f32 %v8439, %v8445
        %v8476 = vmul.f32 %v8440, %v8445
        %v8477 = vmul.f32 %v8441, %v8445
        %v8478 = vadd.f32 %v8377, %v8446
        %v8479 = vadd.f32 %v8378, %v8447
        %v8480 = vadd.f32 %v8379, %v8448
        %v8481 = vadd.f32 %v8380, %v8449
        %v8482 = vadd.f32 %v8381, %v8450
        %v8483 = vadd.f32 %v8382, %v8451
        %v8484 = vadd.f32 %v8383, %v8452
        %v8485 = vadd.f32 %v8384, %v8453
        %v8486 = vadd.f32 %v8385, %v8454
        %v8487 = vadd.f32 %v8386, %v8455
        %v8488 = vadd.f32 %v8387, %v8456
        %v8489 = vadd.f32 %v8388, %v8457
        %v8490 = vadd.f32 %v8389, %v8458
        %v8491 = vadd.f32 %v8390, %v8459
        %v8492 = vadd.f32 %v8391, %v8460
        %v8493 = vadd.f32 %v8392, %v8461
        %v8494 = vadd.f32 %v8393, %v8462
        %v8495 = vadd.f32 %v8394, %v8463
        %v8496 = vadd.f32 %v8395, %v8464
        %v8497 = vadd.f32 %v8396, %v8465
        %v8498 = vadd.f32 %v8397, %v8466
        %v8499 = vadd.f32 %v8398, %v8467
        %v8500 = vadd.f32 %v8399, %v8468
        %v8501 = vadd.f32 %v8400, %v8469
        %v8502 = vadd.f32 %v8401, %v8470
        %v8503 = vadd.f32 %v8402, %v8471
        %v8504 = vadd.f32 %v8403, %v8472
        %v8505 = vadd.f32 %v8404, %v8473
        %v8506 = vadd.f32 %v8405, %v8474
        %v8507 = vadd.f32 %v8406, %v8475
        %v8508 = vadd.f32 %v8407, %v8476
        %v8509 = vadd.f32 %v8408, %v8477
        %8510 = vst.msk [vmem:[%s325] sm:$0xff] %vm1051, %v8478
        %8511 = vst.msk [vmem:[%s325 + $0x8] sm:$0xff] %vm1051, %v8479
        %8512 = vst.msk [vmem:[%s325 + $0x10] sm:$0xff] %vm1051, %v8480
        %8513 = vst.msk [vmem:[%s325 + $0x18] sm:$0xff] %vm1051, %v8481
        %8514 = vst.msk [vmem:[%s325 + $0x20] sm:$0xff] %vm1051, %v8482
        %8515 = vst.msk [vmem:[%s325 + $0x28] sm:$0xff] %vm1051, %v8483
        %8516 = vst.msk [vmem:[%s325 + $0x30] sm:$0xff] %vm1051, %v8484
        %8517 = vst.msk [vmem:[%s325 + $0x38] sm:$0xff] %vm1051, %v8485
        %8518 = vst.msk [vmem:[%s325 + $0x40] sm:$0xff] %vm1051, %v8486
        %8519 = vst.msk [vmem:[%s325 + $0x48] sm:$0xff] %vm1051, %v8487
        %8520 = vst.msk [vmem:[%s325 + $0x50] sm:$0xff] %vm1051, %v8488
        %8521 = vst.msk [vmem:[%s325 + $0x58] sm:$0xff] %vm1051, %v8489
        %8522 = vst.msk [vmem:[%s325 + $0x60] sm:$0xff] %vm1051, %v8490
        %8523 = vst.msk [vmem:[%s325 + $0x68] sm:$0xff] %vm1051, %v8491
        %8524 = vst.msk [vmem:[%s325 + $0x70] sm:$0xff] %vm1051, %v8492
        %8525 = vst.msk [vmem:[%s325 + $0x78] sm:$0xff] %vm1051, %v8493
        %8526 = vst.msk [vmem:[%s325 + $0x80] sm:$0xff] %vm1051, %v8494
        %8527 = vst.msk [vmem:[%s325 + $0x88] sm:$0xff] %vm1051, %v8495
        %8528 = vst.msk [vmem:[%s325 + $0x90] sm:$0xff] %vm1051, %v8496
        %8529 = vst.msk [vmem:[%s325 + $0x98] sm:$0xff] %vm1051, %v8497
        %8530 = vst.msk [vmem:[%s325 + $0xa0] sm:$0xff] %vm1051, %v8498
        %8531 = vst.msk [vmem:[%s325 + $0xa8] sm:$0xff] %vm1051, %v8499
        %8532 = vst.msk [vmem:[%s325 + $0xb0] sm:$0xff] %vm1051, %v8500
        %8533 = vst.msk [vmem:[%s325 + $0xb8] sm:$0xff] %vm1051, %v8501
        %8534 = vst.msk [vmem:[%s325 + $0xc0] sm:$0xff] %vm1051, %v8502
        %8535 = vst.msk [vmem:[%s325 + $0xc8] sm:$0xff] %vm1051, %v8503
        %8536 = vst.msk [vmem:[%s325 + $0xd0] sm:$0xff] %vm1051, %v8504
        %8537 = vst.msk [vmem:[%s325 + $0xd8] sm:$0xff] %vm1051, %v8505
        %8538 = vst.msk [vmem:[%s325 + $0xe0] sm:$0xff] %vm1051, %v8506
        %8539 = vst.msk [vmem:[%s325 + $0xe8] sm:$0xff] %vm1051, %v8507
        %8540 = vst.msk [vmem:[%s325 + $0xf0] sm:$0xff] %vm1051, %v8508
        %8541 = vst.msk [vmem:[%s325 + $0xf8] sm:$0xff] %vm1051, %v8509
        %s8542 = sand.u32 %s225, 1
        %s8543 = scalar_lea.sflag [#allocation5], %s8542
        %s8544 = sand.u32 %s225, 1
        %s8545 = smul.addr %s8544, 256
        %s8546 = scalar_lea.vmem [#allocation4], %s8545
        // Predicated region
        $region57: #{_lambda_.1} parent=55 // pred_check
          %p8547 = pneg %p235
        $region58: #{_lambda_.1} parent=55 // pred_check_branch
          %8549 = sbr.rel (%p8547) target = $region60
        $region59: #{_lambda_.1} parent=55 // pred_region
          %s8551 = ssub.s32 4096, 4096
          %8552 = vsyncadd %s8543, %s8551
          %s8553 = smul.addr %s23, 32
          %s8554 = smul.addr %s8553, 128
          %s8555 = scalar_lea.hbm %s9, %s8554
          %s8556 = sshll.u32 %s8546, 4
          %s8557 = int_to_ptr.vmem [resolvable:$true] %s8556
          %8562 = dma.vmem_to_hbm [thread:$0]  %s8557, 4096, %s8555, %s8543, 128, 128, 8
        $region60: #{_lambda_.1} parent=55 // pred_fallthru
          _
      $region56: #{_lambda_.1} parent=5 // pred_fallthru
        _
      %p8563 = scmp.le.s32.totalorder 2, %s18
      // Predicated region
      $region61: #{_lambda_.1} parent=5 // pred_check
        %p8564 = pneg %p8563
      $region62: #{_lambda_.1} parent=5 // pred_check_branch
        %8566 = sbr.rel (%p8564) target = $region64
      $region63: #{_lambda_.1} parent=5 // pred_region
        %s8567 = ssub.s32 %s18, 2
        // Predicated region
        $region65: #{_lambda_.1} parent=63 // pred_check
          %p8568 = pneg %p241
        $region66: #{_lambda_.1} parent=63 // pred_check_branch
          %8570 = sbr.rel (%p8568) target = $region68
        $region67: #{_lambda_.1} parent=63 // pred_region
          %s8571 = sand.u32 %s226, 1
          %s8572 = scalar_lea.sflag [#allocation5], %s8571
          %s8573 = sand.u32 %s226, 1
          %s8574 = smul.addr %s8573, 256
          %s8575 = scalar_lea.vmem [#allocation4], %s8574
          %8576 = dma.done %s8572, 4096
        $region68: #{_lambda_.1} parent=63 // pred_fallthru
          _
      $region64: #{_lambda_.1} parent=5 // pred_fallthru
        _
    $region6: #{_lambda_.1} parent=1 // loop_footer
      %s22 = sadd.s32 1, %s18
    $region7: #{_lambda_.1} parent=1 // loop_footer_branch
      %17 = sbr.rel target = $region3
    $region8: #{_lambda_.1} parent=1 // loop_exit
      _
    %8577 = vsyncpa [#allocation5], 1
    %s8578 = scalar_lea.sflag [#allocation5], 1
    %8579 = vsyncpa %s8578, 1

</llo_original>
